<compile_context>
chip_gen: v7x
topology: tpu7x:2x2x1
jax: 0.10.0
libtpu: 0.0.40
codegen_flags: <defaults>
</compile_context>

<pallas_src>
import jax
import jax.numpy as jnp
from jax.experimental import pallas as pl
from jax.experimental.pallas import tpu as pltpu

_VMEM_LIMIT_BYTES = 48 * 1024 * 1024  # safe on v5e/v6e (128 MiB) and v7x (64 MiB)


def _pair(v):
    return (v, v) if isinstance(v, int) else tuple(v)


# ----------------------------------------------------------------------------
# Pallas kernel factory: direct conv (tap-unrolled GEMMs) + BN + residual + act
#   x_ref : (N, sh*Hq*Wo, kw*Cin)   bf16   width-im2col'd, H-phase-folded input
#   w_ref : (kh, kw*Cin, BC)        bf16   one output-channel block of weights
#   o_ref : (N, Ho*Wo, BC)          bf16
# ----------------------------------------------------------------------------
def _make_conv_kernel(*, n_img, kh, sh, Wo, Ho, hq_wo, has_bn, has_res, act):
    ho_wo = Ho * Wo

    def kernel(*refs):
        i = 0
        x_ref = refs[i]; i += 1
        w_ref = refs[i]; i += 1
        if has_bn:
            g_ref = refs[i]; i += 1
            be_ref = refs[i]; i += 1
        else:
            b_ref = refs[i]; i += 1
        if has_res:
            r_ref = refs[i]; i += 1
        o_ref = refs[i]

        # ---- accumulate the KH kernel-row taps (static slices, MXU dots) ----
        accs = []
        for n in range(n_img):
            acc = None
            for dh in range(kh):
                start = (dh % sh) * hq_wo + (dh // sh) * Wo
                lhs = x_ref[n, start:start + ho_wo, :]
                part = jnp.dot(lhs, w_ref[dh],
                               preferred_element_type=jnp.float32)
                acc = part if acc is None else acc + part
            accs.append(acc)

        # ---- BatchNorm (training-mode batch stats over all N*Ho*Wo rows) ----
        if has_bn:
            inv_cnt = 1.0 / float(n_img * ho_wo)
            ssum = accs[0].sum(axis=0, keepdims=True)
            for n in range(1, n_img):
                ssum = ssum + accs[n].sum(axis=0, keepdims=True)
            mean = ssum * inv_cnt
            vsum = jnp.square(accs[0] - mean).sum(axis=0, keepdims=True)
            for n in range(1, n_img):
                vsum = vsum + jnp.square(accs[n] - mean).sum(axis=0,
                                                             keepdims=True)
            var = vsum * inv_cnt
            scale = g_ref[...] * jax.lax.rsqrt(var + 1e-5)
            shift = be_ref[...] - mean * scale

        # ---- epilogue: affine / bias, residual, activation, store ----
        for n in range(n_img):
            a = accs[n]
            if has_bn:
                a = a * scale + shift            # conv bias cancels under BN
            else:
                a = a + b_ref[...]
            if has_res:
                a = a + r_ref[n, :, :].astype(jnp.float32)
            if act == "relu":
                a = jnp.maximum(a, 0.0)
            elif act == "leaky":
                a = jnp.where(a >= 0.0, a, 0.01 * a)
            o_ref[n, :, :] = a.astype(o_ref.dtype)

    return kernel


# ----------------------------------------------------------------------------
# JAX glue for one (un-fused) conv layer
# ----------------------------------------------------------------------------
def conv_layer(x, prm, *, k, s, p, has_bn, has_res, act):
    """x: (N, H, W, Cin) bf16 NHWC  ->  (N, Ho, Wo, Cout) bf16."""
    kh, kw = _pair(k)
    sh, sw = _pair(s)
    ph, pw = _pair(p)
    n_img, H, W, cin = x.shape
    Ho = (H + 2 * ph - kh) // sh + 1
    Wo = (W + 2 * pw - kw) // sw + 1
    Hp = H + 2 * ph

    w = prm["w"].astype(jnp.bfloat16)                 # (kh, kw, Cin, Cout)
    cout = w.shape[-1]
    if has_res:
        assert (sh, sw) == (1, 1) and cin == cout and (Ho, Wo) == (H, W)

    # -- padding (H-phase extension folded in) + width-only im2col -----------
    Hq = -(-Hp // sh)
    extra_h = Hq * sh - Hp
    xp = jnp.pad(x, ((0, 0), (ph, ph + extra_h), (pw, pw), (0, 0)))
    if kw == 1 and sw == 1:
        xw = xp
    else:
        cols = [xp[:, :, dw:dw + sw * (Wo - 1) + 1:sw, :] for dw in range(kw)]
        xw = jnp.concatenate(cols, axis=-1)           # (N, Hq*sh, Wo, kw*Cin)
    K = kw * cin

    # -- fold H-stride phases into the row axis: rows ordered (phase, hq, wo)
    if sh > 1:
        xw = xw.reshape(n_img, Hq, sh, Wo, K).transpose(0, 2, 1, 3, 4)
    x2 = xw.reshape(n_img, sh * Hq * Wo, K)

    w3 = w.reshape(kh, K, cout)

    # -- output-channel tiling: parallel grid, weight/output streaming -------
    bc = 128 if (cout % 128 == 0 and cout > 128) else cout
    grid = (cout // bc,)

    inputs = [x2, w3]
    in_specs = [
        pl.BlockSpec(x2.shape, lambda j: (0, 0, 0)),       # resident input
        pl.BlockSpec((kh, K, bc), lambda j: (0, 0, j)),    # streamed weights
    ]
    if has_bn:
        inputs += [prm["gamma"].reshape(1, cout).astype(jnp.float32),
                   prm["beta"].reshape(1, cout).astype(jnp.float32)]
        in_specs += [pl.BlockSpec((1, bc), lambda j: (0, j)),
                     pl.BlockSpec((1, bc), lambda j: (0, j))]
    else:
        inputs += [prm["b"].reshape(1, cout).astype(jnp.float32)]
        in_specs += [pl.BlockSpec((1, bc), lambda j: (0, j))]
    if has_res:
        inputs += [x.reshape(n_img, H * W, cin)]
        in_specs += [pl.BlockSpec((n_img, Ho * Wo, bc), lambda j: (0, 0, j))]

    kernel = _make_conv_kernel(n_img=n_img, kh=kh, sh=sh, Wo=Wo, Ho=Ho,
                               hq_wo=Hq * Wo, has_bn=has_bn, has_res=has_res,
                               act=act)
    out = pl.pallas_call(
        kernel,
        out_shape=jax.ShapeDtypeStruct((n_img, Ho * Wo, cout), jnp.bfloat16),
        grid=grid,
        in_specs=in_specs,
        out_specs=pl.BlockSpec((n_img, Ho * Wo, bc), lambda j: (0, 0, j)),
        compiler_params=pltpu.CompilerParams(
            dimension_semantics=("parallel",),
            vmem_limit_bytes=_VMEM_LIMIT_BYTES),
    )(*inputs)
    return out.reshape(n_img, Ho, Wo, cout)


# ----------------------------------------------------------------------------
# Fused residual chain: R consecutive (3x3, s=1, p=1, C->C, BN, +res, ReLU)
# layers in ONE pallas_call.  The padded input lives flattened as (Hp*Wp, C);
# every 3x3 tap (dh, dw) is a *contiguous* row window at offset dh*Wp+dw, so
# all 9 taps accumulate onto the same output row index r = h*Wp + w.  The two
# wrap columns per row (r % Wp >= W) are masked out of the BN statistics and
# zeroed before the store; their store targets are exactly the pad columns of
# the next layer's buffer, so the zero border is maintained for free.
# ----------------------------------------------------------------------------
def _make_res_chain_kernel(*, n_img, n_layers, H, W, C):
    Wp = W + 2
    L = (H - 1) * Wp + W          # rows spanned by one tap window
    res_off = Wp + 1              # flat index of interior position (h=0, w=0)
    inv_cnt = 1.0 / float(n_img * H * W)

    def kernel(x_ref, w_ref, g_ref, b_ref, m_ref, o_ref, s0, s1):
        # x_ref : (N, Hp*Wp, C) bf16   padded, flattened chain input
        # w_ref : (R*9, C, C)   bf16   per-layer, per-tap weights
        # g_ref : (R, 1, C)     f32    BN gamma
        # b_ref : (R, 1, C)     f32    BN beta
        # m_ref : (L, 1)        f32    1.0 on valid rows, 0.0 on wrap rows
        # o_ref : (N, Hp*Wp, C) bf16   padded output (interior block written)
        # s0/s1 : VMEM ping-pong buffers, same layout as x_ref
        s0[...] = jnp.zeros_like(s0)
        if n_layers >= 3:
            s1[...] = jnp.zeros_like(s1)
        mask = m_ref[...]

        srcs = [x_ref] + [s0, s1] * n_layers
        for r in range(n_layers):
            src = srcs[r]
            dst = o_ref if r == n_layers - 1 else srcs[r + 1]

            # 9 tap GEMMs, f32 accumulation
            accs = []
            for n in range(n_img):
                acc = None
                for t in range(9):
                    dh, dw = divmod(t, 3)
                    off = dh * Wp + dw
                    part = jnp.dot(src[n, off:off + L, :],
                                   w_ref[r * 9 + t],
                                   preferred_element_type=jnp.float32)
                    acc = part if acc is None else acc + part
                accs.append(acc)

            # masked training-mode BatchNorm statistics
            ssum = (accs[0] * mask).sum(axis=0, keepdims=True)
            for n in range(1, n_img):
                ssum = ssum + (accs[n] * mask).sum(axis=0, keepdims=True)
            mean = ssum * inv_cnt
            vsum = (jnp.square(accs[0] - mean) * mask).sum(axis=0,
                                                           keepdims=True)
            for n in range(1, n_img):
                vsum = vsum + (jnp.square(accs[n] - mean) * mask).sum(
                    axis=0, keepdims=True)
            var = vsum * inv_cnt
            scale = g_ref[r] * jax.lax.rsqrt(var + 1e-5)
            shift = b_ref[r] - mean * scale

            # BN affine + residual + ReLU, mask wrap rows, store interior
            for n in range(n_img):
                a = accs[n] * scale + shift
                a = a + src[n, res_off:res_off + L, :].astype(jnp.float32)
                a = jnp.maximum(a, 0.0) * mask
                dst[n, res_off:res_off + L, :] = a.astype(dst.dtype)

    return kernel


def residual_chain(x, prms, *, C):
    """x: (N, H, W, C) bf16 -> (N, H, W, C) bf16 through len(prms) fused
    residual Conv2d(3x3, s=1, p=1) + BN + residual + ReLU layers."""
    n_img, H, W, _ = x.shape
    Hp, Wp = H + 2, W + 2
    L = (H - 1) * Wp + W
    R = len(prms)

    xp = jnp.pad(x, ((0, 0), (1, 1), (1, 1), (0, 0))).reshape(
        n_img, Hp * Wp, C).astype(jnp.bfloat16)
    w = jnp.stack([p["w"].reshape(9, C, C) for p in prms], axis=0)
    w = w.reshape(R * 9, C, C).astype(jnp.bfloat16)
    g = jnp.stack([p["gamma"] for p in prms], axis=0).reshape(R, 1, C)
    g = g.astype(jnp.float32)
    b = jnp.stack([p["beta"] for p in prms], axis=0).reshape(R, 1, C)
    b = b.astype(jnp.float32)
    mask = (jnp.arange(L) % Wp < W).astype(jnp.float32).reshape(L, 1)

    kernel = _make_res_chain_kernel(n_img=n_img, n_layers=R, H=H, W=W, C=C)
    out = pl.pallas_call(
        kernel,
        out_shape=jax.ShapeDtypeStruct((n_img, Hp * Wp, C), jnp.bfloat16),
        grid=(1,),
        in_specs=[pl.BlockSpec(xp.shape, lambda i: (0, 0, 0)),
                  pl.BlockSpec(w.shape, lambda i: (0, 0, 0)),
                  pl.BlockSpec(g.shape, lambda i: (0, 0, 0)),
                  pl.BlockSpec(b.shape, lambda i: (0, 0, 0)),
                  pl.BlockSpec(mask.shape, lambda i: (0, 0))],
        out_specs=pl.BlockSpec((n_img, Hp * Wp, C), lambda i: (0, 0, 0)),
        scratch_shapes=[pltpu.VMEM((n_img, Hp * Wp, C), jnp.bfloat16),
                        pltpu.VMEM((n_img, Hp * Wp, C), jnp.bfloat16)],
        compiler_params=pltpu.CompilerParams(
            dimension_semantics=("arbitrary",),
            vmem_limit_bytes=_VMEM_LIMIT_BYTES),
    )(xp, w, g, b, mask)
    out = out.reshape(n_img, Hp, Wp, C)[:, 1:1 + H, 1:1 + W, :]
    return out


# ----------------------------------------------------------------------------
# Fused head: full_pred (1x1 conv + BN + LeakyReLU) + binary_pred (1x1 + sigmoid)
# ----------------------------------------------------------------------------
def _head_kernel(x_ref, w1_ref, g_ref, be_ref, w2_ref, b2_ref, o_ref):
    h = jnp.dot(x_ref[...], w1_ref[...], preferred_element_type=jnp.float32)
    mean = jnp.mean(h, axis=0, keepdims=True)
    var = jnp.mean(jnp.square(h - mean), axis=0, keepdims=True)
    h = (h - mean) * jax.lax.rsqrt(var + 1e-5)
    h = h * g_ref[...] + be_ref[...]
    h = jnp.where(h >= 0.0, h, 0.01 * h)
    y = jnp.sum(h * w2_ref[...], axis=1, keepdims=True) + b2_ref[...]
    o_ref[...] = jax.nn.sigmoid(y)


def head(x, full_prm, bin_prm):
    """x: (N, 1536) bf16 -> (N, 1) f32."""
    n_img, cin = x.shape
    c_mid = full_prm["w"].shape[-1]
    w1 = full_prm["w"].reshape(cin, c_mid).astype(jnp.bfloat16)
    g = full_prm["gamma"].reshape(1, c_mid).astype(jnp.float32)
    be = full_prm["beta"].reshape(1, c_mid).astype(jnp.float32)
    w2 = bin_prm["w"].reshape(c_mid, 1).T.astype(jnp.float32)   # (1, c_mid)
    b2 = bin_prm["b"].reshape(1, 1).astype(jnp.float32)
    in_specs = [pl.BlockSpec(x.shape, lambda i: (0, 0)),
                pl.BlockSpec(w1.shape, lambda i: (0, 0)),
                pl.BlockSpec(g.shape, lambda i: (0, 0)),
                pl.BlockSpec(be.shape, lambda i: (0, 0)),
                pl.BlockSpec(w2.shape, lambda i: (0, 0)),
                pl.BlockSpec(b2.shape, lambda i: (0, 0))]
    return pl.pallas_call(
        _head_kernel,
        out_shape=jax.ShapeDtypeStruct((n_img, 1), jnp.float32),
        grid=(1,),
        in_specs=in_specs,
        out_specs=pl.BlockSpec((n_img, 1), lambda i: (0, 0)),
        compiler_params=pltpu.CompilerParams(
            dimension_semantics=("arbitrary",),
            vmem_limit_bytes=_VMEM_LIMIT_BYTES),
    )(x, w1, g, be, w2, b2)


# ----------------------------------------------------------------------------
# Architecture configuration (cin, cout, kernel, stride, padding[, residual])
# ----------------------------------------------------------------------------
AUDIO_CFG = [
    (1, 32, 3, 1, 1, False), (32, 32, 3, 1, 1, True), (32, 32, 3, 1, 1, True),
    (32, 64, 3, (3, 1), 1, False), (64, 64, 3, 1, 1, True), (64, 64, 3, 1, 1, True),
    (64, 128, 3, 3, 1, False), (128, 128, 3, 1, 1, True), (128, 128, 3, 1, 1, True),
    (128, 256, 3, (3, 2), 1, False), (256, 256, 3, 1, 1, True),
    (256, 512, 3, 1, 0, False), (512, 512, 1, 1, 0, False),
]

PERSON_CFG = [
    [(3, 16, 7, 1, 3, False)],
    [(16, 32, 3, 2, 1, False), (32, 32, 3, 1, 1, True), (32, 32, 3, 1, 1, True)],
    [(32, 64, 3, 2, 1, False), (64, 64, 3, 1, 1, True), (64, 64, 3, 1, 1, True),
     (64, 64, 3, 1, 1, True)],
    [(64, 128, 3, 2, 1, False), (128, 128, 3, 1, 1, True), (128, 128, 3, 1, 1, True)],
    [(128, 256, 3, 2, 1, False), (256, 256, 3, 1, 1, True), (256, 256, 3, 1, 1, True)],
    [(256, 512, 3, 2, 1, False), (512, 512, 3, 1, 1, True)],
    [(512, 512, 3, 1, 0, False), (512, 512, 1, 1, 0, False)],
]

FACE_CFG = [  # nonorm_Conv2d: no BN, no residual, LeakyReLU(0.01)
    [(3, 32, 7, 1, 3)],
    [(32, 64, 5, (1, 2), 2), (64, 64, 5, 1, 2)],
    [(64, 128, 5, 2, 2), (128, 128, 5, 1, 2)],
    [(128, 256, 5, 2, 2), (256, 256, 5, 1, 2)],
    [(256, 512, 3, 2, 1), (512, 512, 3, 1, 1)],
    [(512, 512, 3, 2, 1), (512, 512, 3, 1, 1)],
    [(512, 512, 3, 1, 0), (512, 512, 1, 1, 0)],
]


def _init_layer(key, cfg, has_bn):
    cin, cout, k = cfg[0], cfg[1], cfg[2]
    kh, kw = _pair(k)
    kw_key, kb_key = jax.random.split(key)
    fan_in = kh * kw * cin
    prm = {
        "w": jax.random.normal(kw_key, (kh, kw, cin, cout), jnp.float32)
             * (2.0 / fan_in) ** 0.5,
        "b": jax.random.normal(kb_key, (cout,), jnp.float32) * 0.01,
    }
    if has_bn:
        prm["gamma"] = jnp.ones((cout,), jnp.float32)
        prm["beta"] = jnp.zeros((cout,), jnp.float32)
    return prm


def init_params(key):
    keys = iter(jax.random.split(key, 64))
    return {
        "audio": [_init_layer(next(keys), c, True) for c in AUDIO_CFG],
        "person": [[_init_layer(next(keys), c, True) for c in blk]
                   for blk in PERSON_CFG],
        "face": [[_init_layer(next(keys), c, False) for c in blk]
                 for blk in FACE_CFG],
        "full_pred": _init_layer(next(keys), (1536, 512, 1), True),
        "binary_pred": _init_layer(next(keys), (512, 1, 1), False),
    }


# ----------------------------------------------------------------------------
# Encoder runner: greedily fuses runs of identical residual layers
# ----------------------------------------------------------------------------
def _is_res_unit(cfg):
    return (len(cfg) > 5 and cfg[5] and cfg[0] == cfg[1]
            and cfg[2] == 3 and cfg[3] == 1 and cfg[4] == 1)


def _run_encoder(x, cfgs, prms, *, has_bn, act):
    i, n = 0, len(cfgs)
    while i < n:
        cfg = cfgs[i]
        if has_bn and _is_res_unit(cfg):
            j = i
            while j < n and _is_res_unit(cfgs[j]) and cfgs[j][1] == cfg[1]:
                j += 1
            if j - i >= 2:
                x = residual_chain(x, prms[i:j], C=cfg[1])
                i = j
                continue
        res = cfg[5] if len(cfg) > 5 else False
        x = conv_layer(x, prms[i], k=cfg[2], s=cfg[3], p=cfg[4],
                       has_bn=has_bn, has_res=res, act=act)
        i += 1
    return x


# ----------------------------------------------------------------------------
# Forward pass (matches Wav2Lip_disc_qual.forward)
# ----------------------------------------------------------------------------
def wav2lip_disc_qual_forward(params, audio_sequences, person_sequences,
                              face_sequences):
    # audio_sequences : (B, T, 1, 80, 16)      (NCHW per frame)
    # person/face     : (B, 3, T, 96, 96)
    T = face_sequences.shape[2]

    # to_2d: concat over time along the batch dim (NCHW)
    face = jnp.concatenate([face_sequences[:, :, i] for i in range(T)], axis=0)
    face = face[:, :, face.shape[2] // 2:]            # get_lower_half
    person = jnp.concatenate([person_sequences[:, :, i] for i in range(T)], axis=0)
    audio = jnp.concatenate([audio_sequences[:, i] for i in range(T)], axis=0)

    # NCHW -> NHWC, bf16 for the MXU (accumulation/BN/activation stay f32)
    face = jnp.transpose(face, (0, 2, 3, 1)).astype(jnp.bfloat16)
    person = jnp.transpose(person, (0, 2, 3, 1)).astype(jnp.bfloat16)
    audio = jnp.transpose(audio, (0, 2, 3, 1)).astype(jnp.bfloat16)

    # audio encoder (Conv2d = conv + BN + [residual] + ReLU)
    a = _run_encoder(audio, AUDIO_CFG, params["audio"], has_bn=True,
                     act="relu")

    # person encoder
    p_cfgs = [c for blk in PERSON_CFG for c in blk]
    p_prms = [p for blk in params["person"] for p in blk]
    pe = _run_encoder(person, p_cfgs, p_prms, has_bn=True, act="relu")

    # face encoder (nonorm_Conv2d = conv + LeakyReLU(0.01))
    f_cfgs = [c for blk in FACE_CFG for c in blk]
    f_prms = [p for blk in params["face"] for p in blk]
    fe = _run_encoder(face, f_cfgs, f_prms, has_bn=False, act="leaky")

    # concat along channels: [face_feats, person_embedding, audio_embedding]
    n_img = fe.shape[0]
    feats = jnp.concatenate([fe.reshape(n_img, -1),
                             pe.reshape(n_img, -1),
                             a.reshape(n_img, -1)], axis=-1)   # (B*T, 1536)

    # fused full_pred + binary_pred
    return head(feats, params["full_pred"], params["binary_pred"])  # (B*T, 1)


if __name__ == "__main__":
    key = jax.random.PRNGKey(0)
    kp, k1, k2, k3, k4, k5 = jax.random.split(key, 6)
    params = init_params(kp)

    # ---- self-check: fused residual chain vs. sequential per-layer path ----
    C, Hc, Wc, Rc = 32, 8, 6, 3
    xt = jax.random.normal(k4, (2, Hc, Wc, C), jnp.float32).astype(jnp.bfloat16)
    chain_prms = [_init_layer(jax.random.fold_in(k5, r), (C, C, 3), True)
                  for r in range(Rc)]
    fused = residual_chain(xt, chain_prms, C=C)
    ref = xt
    for prm in chain_prms:
        ref = conv_layer(ref, prm, k=3, s=1, p=1, has_bn=True, has_res=True,
                         act="relu")
    err = float(jnp.max(jnp.abs(fused.astype(jnp.float32)
                                - ref.astype(jnp.float32))))
    assert err < 0.1, f"fused residual chain mismatch: max abs err = {err}"

    # ---- full forward ----
    B, T = 1, 2  # spatial sizes are fixed by the architecture
    audio = jax.random.normal(k1, (B, T, 1, 80, 16), jnp.float32)
    person = jax.random.normal(k2, (B, 3, T, 96, 96), jnp.float32)
    face = jax.random.normal(k3, (B, 3, T, 96, 96), jnp.float32)

    fwd = jax.jit(wav2lip_disc_qual_forward)
    out = jax.block_until_ready(fwd(params, audio, person, face))

    assert out.shape == (B * T, 1)
    assert bool(jnp.all(jnp.isfinite(out)))
    assert bool(jnp.all((out >= 0.0) & (out <= 1.0)))
    print("KERNEL_OK")
</pallas_src>

<mosaic_0001>
module attributes {stable_mosaic.version = 11 : i64} {
  func.func @kernel(%arg0: i32, %arg1: memref<2x80x32xbf16, #tpu.memory_space<vmem>>, %arg2: memref<27x32x32xbf16, #tpu.memory_space<vmem>>, %arg3: memref<3x1x32xf32, #tpu.memory_space<vmem>>, %arg4: memref<3x1x32xf32, #tpu.memory_space<vmem>>, %arg5: memref<62x1xf32, #tpu.memory_space<vmem>>, %arg6: memref<2x80x32xbf16, #tpu.memory_space<vmem>>, %arg7: memref<2x80x32xbf16, #tpu.memory_space<vmem>>, %arg8: memref<2x80x32xbf16, #tpu.memory_space<vmem>>) attributes {dimension_semantics = [#tpu.dimension_semantics<arbitrary>], iteration_bounds = array<i64: 1>, scalar_prefetch = 0 : i64, scratch_operands = 2 : i64, tpu.core_type = #tpu.core_type<tc>, window_params = [{pipeline_mode = #tpu.pipeline_mode<synchronous>, transform_indices = @transform_0, window_bounds = array<i64: 2, 80, 32>}, {pipeline_mode = #tpu.pipeline_mode<synchronous>, transform_indices = @transform_1, window_bounds = array<i64: 27, 32, 32>}, {pipeline_mode = #tpu.pipeline_mode<synchronous>, transform_indices = @transform_2, window_bounds = array<i64: 3, 1, 32>}, {pipeline_mode = #tpu.pipeline_mode<synchronous>, transform_indices = @transform_3, window_bounds = array<i64: 3, 1, 32>}, {pipeline_mode = #tpu.pipeline_mode<synchronous>, transform_indices = @transform_4, window_bounds = array<i64: 62, 1>}, {pipeline_mode = #tpu.pipeline_mode<synchronous>, transform_indices = @transform_5, window_bounds = array<i64: 2, 80, 32>}]} {
    %cst = arith.constant 0.000000e+00 : bf16
    %0 = vector.broadcast %cst : bf16 to vector<2x80x32xbf16>
    %c0 = arith.constant 0 : index
    %c0_0 = arith.constant 0 : index
    %c0_1 = arith.constant 0 : index
    %1 = vector.load %arg7[%c0, %c0_0, %c0_1] : memref<2x80x32xbf16, #tpu.memory_space<vmem>>, vector<2x80x32xbf16>
    tpu.vector_store %arg7[%c0, %c0_0, %c0_1], %0 {strides = array<i32>} : memref<2x80x32xbf16, #tpu.memory_space<vmem>>, vector<2x80x32xbf16>,
    %cst_2 = arith.constant 0.000000e+00 : bf16
    %2 = vector.broadcast %cst_2 : bf16 to vector<2x80x32xbf16>
    %c0_3 = arith.constant 0 : index
    %c0_4 = arith.constant 0 : index
    %c0_5 = arith.constant 0 : index
    %3 = vector.load %arg8[%c0_3, %c0_4, %c0_5] : memref<2x80x32xbf16, #tpu.memory_space<vmem>>, vector<2x80x32xbf16>
    tpu.vector_store %arg8[%c0_3, %c0_4, %c0_5], %2 {strides = array<i32>} : memref<2x80x32xbf16, #tpu.memory_space<vmem>>, vector<2x80x32xbf16>,
    %c0_6 = arith.constant 0 : index
    %c0_7 = arith.constant 0 : index
    %4 = vector.load %arg5[%c0_6, %c0_7] : memref<62x1xf32, #tpu.memory_space<vmem>>, vector<62x1xf32>
    %c0_8 = arith.constant 0 : index
    %c0_9 = arith.constant 0 : index
    %c0_10 = arith.constant 0 : index
    %5 = vector.load %arg1[%c0_8, %c0_9, %c0_10] : memref<2x80x32xbf16, #tpu.memory_space<vmem>>, vector<1x62x32xbf16>
    %6 = vector.shape_cast %5 : vector<1x62x32xbf16> to vector<62x32xbf16>
    %c0_11 = arith.constant 0 : index
    %c0_12 = arith.constant 0 : index
    %c0_13 = arith.constant 0 : index
    %7 = vector.load %arg2[%c0_11, %c0_12, %c0_13] : memref<27x32x32xbf16, #tpu.memory_space<vmem>>, vector<1x32x32xbf16>
    %8 = vector.shape_cast %7 : vector<1x32x32xbf16> to vector<32x32xbf16>
    %cst_14 = arith.constant dense<0.000000e+00> : vector<62x32xf32>
    %9 = tpu.matmul %6, %8, %cst_14 {dimension_numbers = #tpu.dot_dimension_numbers<[1], [0], [0], [1], [0, 0, 1, 1], [], []>} : vector<62x32xbf16>, vector<32x32xbf16>, vector<62x32xf32> -> vector<62x32xf32>
    %c0_15 = arith.constant 0 : index
    %c1 = arith.constant 1 : index
    %c0_16 = arith.constant 0 : index
    %10 = vector.load %arg1[%c0_15, %c1, %c0_16] : memref<2x80x32xbf16, #tpu.memory_space<vmem>>, vector<1x62x32xbf16>
    %11 = vector.shape_cast %10 : vector<1x62x32xbf16> to vector<62x32xbf16>
    %c1_17 = arith.constant 1 : index
    %c0_18 = arith.constant 0 : index
    %c0_19 = arith.constant 0 : index
    %12 = vector.load %arg2[%c1_17, %c0_18, %c0_19] : memref<27x32x32xbf16, #tpu.memory_space<vmem>>, vector<1x32x32xbf16>
    %13 = vector.shape_cast %12 : vector<1x32x32xbf16> to vector<32x32xbf16>
    %cst_20 = arith.constant dense<0.000000e+00> : vector<62x32xf32>
    %14 = tpu.matmul %11, %13, %cst_20 {dimension_numbers = #tpu.dot_dimension_numbers<[1], [0], [0], [1], [0, 0, 1, 1], [], []>} : vector<62x32xbf16>, vector<32x32xbf16>, vector<62x32xf32> -> vector<62x32xf32>
    %15 = arith.addf %9, %14 : vector<62x32xf32>
    %c0_21 = arith.constant 0 : index
    %c2 = arith.constant 2 : index
    %c0_22 = arith.constant 0 : index
    %16 = vector.load %arg1[%c0_21, %c2, %c0_22] : memref<2x80x32xbf16, #tpu.memory_space<vmem>>, vector<1x62x32xbf16>
    %17 = vector.shape_cast %16 : vector<1x62x32xbf16> to vector<62x32xbf16>
    %c2_23 = arith.constant 2 : index
    %c0_24 = arith.constant 0 : index
    %c0_25 = arith.constant 0 : index
    %18 = vector.load %arg2[%c2_23, %c0_24, %c0_25] : memref<27x32x32xbf16, #tpu.memory_space<vmem>>, vector<1x32x32xbf16>
    %19 = vector.shape_cast %18 : vector<1x32x32xbf16> to vector<32x32xbf16>
    %cst_26 = arith.constant dense<0.000000e+00> : vector<62x32xf32>
    %20 = tpu.matmul %17, %19, %cst_26 {dimension_numbers = #tpu.dot_dimension_numbers<[1], [0], [0], [1], [0, 0, 1, 1], [], []>} : vector<62x32xbf16>, vector<32x32xbf16>, vector<62x32xf32> -> vector<62x32xf32>
    %21 = arith.addf %15, %20 : vector<62x32xf32>
    %c0_27 = arith.constant 0 : index
    %c8 = arith.constant 8 : index
    %c0_28 = arith.constant 0 : index
    %22 = vector.load %arg1[%c0_27, %c8, %c0_28] : memref<2x80x32xbf16, #tpu.memory_space<vmem>>, vector<1x62x32xbf16>
    %23 = vector.shape_cast %22 : vector<1x62x32xbf16> to vector<62x32xbf16>
    %c3 = arith.constant 3 : index
    %c0_29 = arith.constant 0 : index
    %c0_30 = arith.constant 0 : index
    %24 = vector.load %arg2[%c3, %c0_29, %c0_30] : memref<27x32x32xbf16, #tpu.memory_space<vmem>>, vector<1x32x32xbf16>
    %25 = vector.shape_cast %24 : vector<1x32x32xbf16> to vector<32x32xbf16>
    %cst_31 = arith.constant dense<0.000000e+00> : vector<62x32xf32>
    %26 = tpu.matmul %23, %25, %cst_31 {dimension_numbers = #tpu.dot_dimension_numbers<[1], [0], [0], [1], [0, 0, 1, 1], [], []>} : vector<62x32xbf16>, vector<32x32xbf16>, vector<62x32xf32> -> vector<62x32xf32>
    %27 = arith.addf %21, %26 : vector<62x32xf32>
    %c0_32 = arith.constant 0 : index
    %c9 = arith.constant 9 : index
    %c0_33 = arith.constant 0 : index
    %28 = vector.load %arg1[%c0_32, %c9, %c0_33] : memref<2x80x32xbf16, #tpu.memory_space<vmem>>, vector<1x62x32xbf16>
    %29 = vector.shape_cast %28 : vector<1x62x32xbf16> to vector<62x32xbf16>
    %c4 = arith.constant 4 : index
    %c0_34 = arith.constant 0 : index
    %c0_35 = arith.constant 0 : index
    %30 = vector.load %arg2[%c4, %c0_34, %c0_35] : memref<27x32x32xbf16, #tpu.memory_space<vmem>>, vector<1x32x32xbf16>
    %31 = vector.shape_cast %30 : vector<1x32x32xbf16> to vector<32x32xbf16>
    %cst_36 = arith.constant dense<0.000000e+00> : vector<62x32xf32>
    %32 = tpu.matmul %29, %31, %cst_36 {dimension_numbers = #tpu.dot_dimension_numbers<[1], [0], [0], [1], [0, 0, 1, 1], [], []>} : vector<62x32xbf16>, vector<32x32xbf16>, vector<62x32xf32> -> vector<62x32xf32>
    %33 = arith.addf %27, %32 : vector<62x32xf32>
    %c0_37 = arith.constant 0 : index
    %c10 = arith.constant 10 : index
    %c0_38 = arith.constant 0 : index
    %34 = vector.load %arg1[%c0_37, %c10, %c0_38] : memref<2x80x32xbf16, #tpu.memory_space<vmem>>, vector<1x62x32xbf16>
    %35 = vector.shape_cast %34 : vector<1x62x32xbf16> to vector<62x32xbf16>
    %c5 = arith.constant 5 : index
    %c0_39 = arith.constant 0 : index
    %c0_40 = arith.constant 0 : index
    %36 = vector.load %arg2[%c5, %c0_39, %c0_40] : memref<27x32x32xbf16, #tpu.memory_space<vmem>>, vector<1x32x32xbf16>
    %37 = vector.shape_cast %36 : vector<1x32x32xbf16> to vector<32x32xbf16>
    %cst_41 = arith.constant dense<0.000000e+00> : vector<62x32xf32>
    %38 = tpu.matmul %35, %37, %cst_41 {dimension_numbers = #tpu.dot_dimension_numbers<[1], [0], [0], [1], [0, 0, 1, 1], [], []>} : vector<62x32xbf16>, vector<32x32xbf16>, vector<62x32xf32> -> vector<62x32xf32>
    %39 = arith.addf %33, %38 : vector<62x32xf32>
    %c0_42 = arith.constant 0 : index
    %c16 = arith.constant 16 : index
    %c0_43 = arith.constant 0 : index
    %40 = vector.load %arg1[%c0_42, %c16, %c0_43] : memref<2x80x32xbf16, #tpu.memory_space<vmem>>, vector<1x62x32xbf16>
    %41 = vector.shape_cast %40 : vector<1x62x32xbf16> to vector<62x32xbf16>
    %c6 = arith.constant 6 : index
    %c0_44 = arith.constant 0 : index
    %c0_45 = arith.constant 0 : index
    %42 = vector.load %arg2[%c6, %c0_44, %c0_45] : memref<27x32x32xbf16, #tpu.memory_space<vmem>>, vector<1x32x32xbf16>
    %43 = vector.shape_cast %42 : vector<1x32x32xbf16> to vector<32x32xbf16>
    %cst_46 = arith.constant dense<0.000000e+00> : vector<62x32xf32>
    %44 = tpu.matmul %41, %43, %cst_46 {dimension_numbers = #tpu.dot_dimension_numbers<[1], [0], [0], [1], [0, 0, 1, 1], [], []>} : vector<62x32xbf16>, vector<32x32xbf16>, vector<62x32xf32> -> vector<62x32xf32>
    %45 = arith.addf %39, %44 : vector<62x32xf32>
    %c0_47 = arith.constant 0 : index
    %c17 = arith.constant 17 : index
    %c0_48 = arith.constant 0 : index
    %46 = vector.load %arg1[%c0_47, %c17, %c0_48] : memref<2x80x32xbf16, #tpu.memory_space<vmem>>, vector<1x62x32xbf16>
    %47 = vector.shape_cast %46 : vector<1x62x32xbf16> to vector<62x32xbf16>
    %c7 = arith.constant 7 : index
    %c0_49 = arith.constant 0 : index
    %c0_50 = arith.constant 0 : index
    %48 = vector.load %arg2[%c7, %c0_49, %c0_50] : memref<27x32x32xbf16, #tpu.memory_space<vmem>>, vector<1x32x32xbf16>
    %49 = vector.shape_cast %48 : vector<1x32x32xbf16> to vector<32x32xbf16>
    %cst_51 = arith.constant dense<0.000000e+00> : vector<62x32xf32>
    %50 = tpu.matmul %47, %49, %cst_51 {dimension_numbers = #tpu.dot_dimension_numbers<[1], [0], [0], [1], [0, 0, 1, 1], [], []>} : vector<62x32xbf16>, vector<32x32xbf16>, vector<62x32xf32> -> vector<62x32xf32>
    %51 = arith.addf %45, %50 : vector<62x32xf32>
    %c0_52 = arith.constant 0 : index
    %c18 = arith.constant 18 : index
    %c0_53 = arith.constant 0 : index
    %52 = vector.load %arg1[%c0_52, %c18, %c0_53] : memref<2x80x32xbf16, #tpu.memory_space<vmem>>, vector<1x62x32xbf16>
    %53 = vector.shape_cast %52 : vector<1x62x32xbf16> to vector<62x32xbf16>
    %c8_54 = arith.constant 8 : index
    %c0_55 = arith.constant 0 : index
    %c0_56 = arith.constant 0 : index
    %54 = vector.load %arg2[%c8_54, %c0_55, %c0_56] : memref<27x32x32xbf16, #tpu.memory_space<vmem>>, vector<1x32x32xbf16>
    %55 = vector.shape_cast %54 : vector<1x32x32xbf16> to vector<32x32xbf16>
    %cst_57 = arith.constant dense<0.000000e+00> : vector<62x32xf32>
    %56 = tpu.matmul %53, %55, %cst_57 {dimension_numbers = #tpu.dot_dimension_numbers<[1], [0], [0], [1], [0, 0, 1, 1], [], []>} : vector<62x32xbf16>, vector<32x32xbf16>, vector<62x32xf32> -> vector<62x32xf32>
    %57 = arith.addf %51, %56 : vector<62x32xf32>
    %c1_58 = arith.constant 1 : index
    %c0_59 = arith.constant 0 : index
    %c0_60 = arith.constant 0 : index
    %58 = vector.load %arg1[%c1_58, %c0_59, %c0_60] : memref<2x80x32xbf16, #tpu.memory_space<vmem>>, vector<1x62x32xbf16>
    %59 = vector.shape_cast %58 : vector<1x62x32xbf16> to vector<62x32xbf16>
    %c0_61 = arith.constant 0 : index
    %c0_62 = arith.constant 0 : index
    %c0_63 = arith.constant 0 : index
    %60 = vector.load %arg2[%c0_61, %c0_62, %c0_63] : memref<27x32x32xbf16, #tpu.memory_space<vmem>>, vector<1x32x32xbf16>
    %61 = vector.shape_cast %60 : vector<1x32x32xbf16> to vector<32x32xbf16>
    %cst_64 = arith.constant dense<0.000000e+00> : vector<62x32xf32>
    %62 = tpu.matmul %59, %61, %cst_64 {dimension_numbers = #tpu.dot_dimension_numbers<[1], [0], [0], [1], [0, 0, 1, 1], [], []>} : vector<62x32xbf16>, vector<32x32xbf16>, vector<62x32xf32> -> vector<62x32xf32>
    %c1_65 = arith.constant 1 : index
    %c1_66 = arith.constant 1 : index
    %c0_67 = arith.constant 0 : index
    %63 = vector.load %arg1[%c1_65, %c1_66, %c0_67] : memref<2x80x32xbf16, #tpu.memory_space<vmem>>, vector<1x62x32xbf16>
    %64 = vector.shape_cast %63 : vector<1x62x32xbf16> to vector<62x32xbf16>
    %c1_68 = arith.constant 1 : index
    %c0_69 = arith.constant 0 : index
    %c0_70 = arith.constant 0 : index
    %65 = vector.load %arg2[%c1_68, %c0_69, %c0_70] : memref<27x32x32xbf16, #tpu.memory_space<vmem>>, vector<1x32x32xbf16>
    %66 = vector.shape_cast %65 : vector<1x32x32xbf16> to vector<32x32xbf16>
    %cst_71 = arith.constant dense<0.000000e+00> : vector<62x32xf32>
    %67 = tpu.matmul %64, %66, %cst_71 {dimension_numbers = #tpu.dot_dimension_numbers<[1], [0], [0], [1], [0, 0, 1, 1], [], []>} : vector<62x32xbf16>, vector<32x32xbf16>, vector<62x32xf32> -> vector<62x32xf32>
    %68 = arith.addf %62, %67 : vector<62x32xf32>
    %c1_72 = arith.constant 1 : index
    %c2_73 = arith.constant 2 : index
    %c0_74 = arith.constant 0 : index
    %69 = vector.load %arg1[%c1_72, %c2_73, %c0_74] : memref<2x80x32xbf16, #tpu.memory_space<vmem>>, vector<1x62x32xbf16>
    %70 = vector.shape_cast %69 : vector<1x62x32xbf16> to vector<62x32xbf16>
    %c2_75 = arith.constant 2 : index
    %c0_76 = arith.constant 0 : index
    %c0_77 = arith.constant 0 : index
    %71 = vector.load %arg2[%c2_75, %c0_76, %c0_77] : memref<27x32x32xbf16, #tpu.memory_space<vmem>>, vector<1x32x32xbf16>
    %72 = vector.shape_cast %71 : vector<1x32x32xbf16> to vector<32x32xbf16>
    %cst_78 = arith.constant dense<0.000000e+00> : vector<62x32xf32>
    %73 = tpu.matmul %70, %72, %cst_78 {dimension_numbers = #tpu.dot_dimension_numbers<[1], [0], [0], [1], [0, 0, 1, 1], [], []>} : vector<62x32xbf16>, vector<32x32xbf16>, vector<62x32xf32> -> vector<62x32xf32>
    %74 = arith.addf %68, %73 : vector<62x32xf32>
    %c1_79 = arith.constant 1 : index
    %c8_80 = arith.constant 8 : index
    %c0_81 = arith.constant 0 : index
    %75 = vector.load %arg1[%c1_79, %c8_80, %c0_81] : memref<2x80x32xbf16, #tpu.memory_space<vmem>>, vector<1x62x32xbf16>
    %76 = vector.shape_cast %75 : vector<1x62x32xbf16> to vector<62x32xbf16>
    %c3_82 = arith.constant 3 : index
    %c0_83 = arith.constant 0 : index
    %c0_84 = arith.constant 0 : index
    %77 = vector.load %arg2[%c3_82, %c0_83, %c0_84] : memref<27x32x32xbf16, #tpu.memory_space<vmem>>, vector<1x32x32xbf16>
    %78 = vector.shape_cast %77 : vector<1x32x32xbf16> to vector<32x32xbf16>
    %cst_85 = arith.constant dense<0.000000e+00> : vector<62x32xf32>
    %79 = tpu.matmul %76, %78, %cst_85 {dimension_numbers = #tpu.dot_dimension_numbers<[1], [0], [0], [1], [0, 0, 1, 1], [], []>} : vector<62x32xbf16>, vector<32x32xbf16>, vector<62x32xf32> -> vector<62x32xf32>
    %80 = arith.addf %74, %79 : vector<62x32xf32>
    %c1_86 = arith.constant 1 : index
    %c9_87 = arith.constant 9 : index
    %c0_88 = arith.constant 0 : index
    %81 = vector.load %arg1[%c1_86, %c9_87, %c0_88] : memref<2x80x32xbf16, #tpu.memory_space<vmem>>, vector<1x62x32xbf16>
    %82 = vector.shape_cast %81 : vector<1x62x32xbf16> to vector<62x32xbf16>
    %c4_89 = arith.constant 4 : index
    %c0_90 = arith.constant 0 : index
    %c0_91 = arith.constant 0 : index
    %83 = vector.load %arg2[%c4_89, %c0_90, %c0_91] : memref<27x32x32xbf16, #tpu.memory_space<vmem>>, vector<1x32x32xbf16>
    %84 = vector.shape_cast %83 : vector<1x32x32xbf16> to vector<32x32xbf16>
    %cst_92 = arith.constant dense<0.000000e+00> : vector<62x32xf32>
    %85 = tpu.matmul %82, %84, %cst_92 {dimension_numbers = #tpu.dot_dimension_numbers<[1], [0], [0], [1], [0, 0, 1, 1], [], []>} : vector<62x32xbf16>, vector<32x32xbf16>, vector<62x32xf32> -> vector<62x32xf32>
    %86 = arith.addf %80, %85 : vector<62x32xf32>
    %c1_93 = arith.constant 1 : index
    %c10_94 = arith.constant 10 : index
    %c0_95 = arith.constant 0 : index
    %87 = vector.load %arg1[%c1_93, %c10_94, %c0_95] : memref<2x80x32xbf16, #tpu.memory_space<vmem>>, vector<1x62x32xbf16>
    %88 = vector.shape_cast %87 : vector<1x62x32xbf16> to vector<62x32xbf16>
    %c5_96 = arith.constant 5 : index
    %c0_97 = arith.constant 0 : index
    %c0_98 = arith.constant 0 : index
    %89 = vector.load %arg2[%c5_96, %c0_97, %c0_98] : memref<27x32x32xbf16, #tpu.memory_space<vmem>>, vector<1x32x32xbf16>
    %90 = vector.shape_cast %89 : vector<1x32x32xbf16> to vector<32x32xbf16>
    %cst_99 = arith.constant dense<0.000000e+00> : vector<62x32xf32>
    %91 = tpu.matmul %88, %90, %cst_99 {dimension_numbers = #tpu.dot_dimension_numbers<[1], [0], [0], [1], [0, 0, 1, 1], [], []>} : vector<62x32xbf16>, vector<32x32xbf16>, vector<62x32xf32> -> vector<62x32xf32>
    %92 = arith.addf %86, %91 : vector<62x32xf32>
    %c1_100 = arith.constant 1 : index
    %c16_101 = arith.constant 16 : index
    %c0_102 = arith.constant 0 : index
    %93 = vector.load %arg1[%c1_100, %c16_101, %c0_102] : memref<2x80x32xbf16, #tpu.memory_space<vmem>>, vector<1x62x32xbf16>
    %94 = vector.shape_cast %93 : vector<1x62x32xbf16> to vector<62x32xbf16>
    %c6_103 = arith.constant 6 : index
    %c0_104 = arith.constant 0 : index
    %c0_105 = arith.constant 0 : index
    %95 = vector.load %arg2[%c6_103, %c0_104, %c0_105] : memref<27x32x32xbf16, #tpu.memory_space<vmem>>, vector<1x32x32xbf16>
    %96 = vector.shape_cast %95 : vector<1x32x32xbf16> to vector<32x32xbf16>
    %cst_106 = arith.constant dense<0.000000e+00> : vector<62x32xf32>
    %97 = tpu.matmul %94, %96, %cst_106 {dimension_numbers = #tpu.dot_dimension_numbers<[1], [0], [0], [1], [0, 0, 1, 1], [], []>} : vector<62x32xbf16>, vector<32x32xbf16>, vector<62x32xf32> -> vector<62x32xf32>
    %98 = arith.addf %92, %97 : vector<62x32xf32>
    %c1_107 = arith.constant 1 : index
    %c17_108 = arith.constant 17 : index
    %c0_109 = arith.constant 0 : index
    %99 = vector.load %arg1[%c1_107, %c17_108, %c0_109] : memref<2x80x32xbf16, #tpu.memory_space<vmem>>, vector<1x62x32xbf16>
    %100 = vector.shape_cast %99 : vector<1x62x32xbf16> to vector<62x32xbf16>
    %c7_110 = arith.constant 7 : index
    %c0_111 = arith.constant 0 : index
    %c0_112 = arith.constant 0 : index
    %101 = vector.load %arg2[%c7_110, %c0_111, %c0_112] : memref<27x32x32xbf16, #tpu.memory_space<vmem>>, vector<1x32x32xbf16>
    %102 = vector.shape_cast %101 : vector<1x32x32xbf16> to vector<32x32xbf16>
    %cst_113 = arith.constant dense<0.000000e+00> : vector<62x32xf32>
    %103 = tpu.matmul %100, %102, %cst_113 {dimension_numbers = #tpu.dot_dimension_numbers<[1], [0], [0], [1], [0, 0, 1, 1], [], []>} : vector<62x32xbf16>, vector<32x32xbf16>, vector<62x32xf32> -> vector<62x32xf32>
    %104 = arith.addf %98, %103 : vector<62x32xf32>
    %c1_114 = arith.constant 1 : index
    %c18_115 = arith.constant 18 : index
    %c0_116 = arith.constant 0 : index
    %105 = vector.load %arg1[%c1_114, %c18_115, %c0_116] : memref<2x80x32xbf16, #tpu.memory_space<vmem>>, vector<1x62x32xbf16>
    %106 = vector.shape_cast %105 : vector<1x62x32xbf16> to vector<62x32xbf16>
    %c8_117 = arith.constant 8 : index
    %c0_118 = arith.constant 0 : index
    %c0_119 = arith.constant 0 : index
    %107 = vector.load %arg2[%c8_117, %c0_118, %c0_119] : memref<27x32x32xbf16, #tpu.memory_space<vmem>>, vector<1x32x32xbf16>
    %108 = vector.shape_cast %107 : vector<1x32x32xbf16> to vector<32x32xbf16>
    %cst_120 = arith.constant dense<0.000000e+00> : vector<62x32xf32>
    %109 = tpu.matmul %106, %108, %cst_120 {dimension_numbers = #tpu.dot_dimension_numbers<[1], [0], [0], [1], [0, 0, 1, 1], [], []>} : vector<62x32xbf16>, vector<32x32xbf16>, vector<62x32xf32> -> vector<62x32xf32>
    %110 = arith.addf %104, %109 : vector<62x32xf32>
    %111 = vector.broadcast %4 : vector<62x1xf32> to vector<62x32xf32>
    %112 = arith.mulf %57, %111 : vector<62x32xf32>
    %cst_121 = arith.constant dense<0.000000e+00> : vector<32xf32>
    %113 = vector.multi_reduction <add>, %112, %cst_121 [0] : vector<62x32xf32> to vector<32xf32>
    %114 = vector.shape_cast %113 : vector<32xf32> to vector<1x32xf32>
    %115 = vector.broadcast %4 : vector<62x1xf32> to vector<62x32xf32>
    %116 = arith.mulf %110, %115 : vector<62x32xf32>
    %cst_122 = arith.constant dense<0.000000e+00> : vector<32xf32>
    %117 = vector.multi_reduction <add>, %116, %cst_122 [0] : vector<62x32xf32> to vector<32xf32>
    %118 = vector.shape_cast %117 : vector<32xf32> to vector<1x32xf32>
    %119 = arith.addf %114, %118 : vector<1x32xf32>
    %cst_123 = arith.constant 0.010416667 : f32
    %120 = vector.broadcast %cst_123 : f32 to vector<1x32xf32>
    %121 = arith.mulf %119, %120 : vector<1x32xf32>
    %122 = vector.broadcast %121 : vector<1x32xf32> to vector<62x32xf32>
    %123 = arith.subf %57, %122 : vector<62x32xf32>
    %124 = arith.mulf %123, %123 : vector<62x32xf32>
    %125 = vector.broadcast %4 : vector<62x1xf32> to vector<62x32xf32>
    %126 = arith.mulf %124, %125 : vector<62x32xf32>
    %cst_124 = arith.constant dense<0.000000e+00> : vector<32xf32>
    %127 = vector.multi_reduction <add>, %126, %cst_124 [0] : vector<62x32xf32> to vector<32xf32>
    %128 = vector.shape_cast %127 : vector<32xf32> to vector<1x32xf32>
    %129 = vector.broadcast %121 : vector<1x32xf32> to vector<62x32xf32>
    %130 = arith.subf %110, %129 : vector<62x32xf32>
    %131 = arith.mulf %130, %130 : vector<62x32xf32>
    %132 = vector.broadcast %4 : vector<62x1xf32> to vector<62x32xf32>
    %133 = arith.mulf %131, %132 : vector<62x32xf32>
    %cst_125 = arith.constant dense<0.000000e+00> : vector<32xf32>
    %134 = vector.multi_reduction <add>, %133, %cst_125 [0] : vector<62x32xf32> to vector<32xf32>
    %135 = vector.shape_cast %134 : vector<32xf32> to vector<1x32xf32>
    %136 = arith.addf %128, %135 : vector<1x32xf32>
    %cst_126 = arith.constant 0.010416667 : f32
    %137 = vector.broadcast %cst_126 : f32 to vector<1x32xf32>
    %138 = arith.mulf %136, %137 : vector<1x32xf32>
    %c0_127 = arith.constant 0 : index
    %c0_128 = arith.constant 0 : index
    %c0_129 = arith.constant 0 : index
    %139 = vector.load %arg3[%c0_127, %c0_128, %c0_129] : memref<3x1x32xf32, #tpu.memory_space<vmem>>, vector<1x1x32xf32>
    %140 = vector.shape_cast %139 : vector<1x1x32xf32> to vector<1x32xf32>
    %cst_130 = arith.constant 9.99999974E-6 : f32
    %141 = vector.broadcast %cst_130 : f32 to vector<1x32xf32>
    %142 = arith.addf %138, %141 : vector<1x32xf32>
    %143 = math.rsqrt %142 : vector<1x32xf32>
    %144 = arith.mulf %140, %143 : vector<1x32xf32>
    %c0_131 = arith.constant 0 : index
    %c0_132 = arith.constant 0 : index
    %c0_133 = arith.constant 0 : index
    %145 = vector.load %arg4[%c0_131, %c0_132, %c0_133] : memref<3x1x32xf32, #tpu.memory_space<vmem>>, vector<1x1x32xf32>
    %146 = vector.shape_cast %145 : vector<1x1x32xf32> to vector<1x32xf32>
    %147 = arith.mulf %121, %144 : vector<1x32xf32>
    %148 = arith.subf %146, %147 : vector<1x32xf32>
    %149 = vector.broadcast %144 : vector<1x32xf32> to vector<62x32xf32>
    %150 = arith.mulf %57, %149 : vector<62x32xf32>
    %151 = vector.broadcast %148 : vector<1x32xf32> to vector<62x32xf32>
    %152 = arith.addf %150, %151 : vector<62x32xf32>
    %c0_134 = arith.constant 0 : index
    %c9_135 = arith.constant 9 : index
    %c0_136 = arith.constant 0 : index
    %153 = vector.load %arg1[%c0_134, %c9_135, %c0_136] : memref<2x80x32xbf16, #tpu.memory_space<vmem>>, vector<1x62x32xbf16>
    %154 = vector.shape_cast %153 : vector<1x62x32xbf16> to vector<62x32xbf16>
    %155 = arith.extf %154 : vector<62x32xbf16> to vector<62x32xf32>
    %156 = arith.addf %152, %155 : vector<62x32xf32>
    %cst_137 = arith.constant 0.000000e+00 : f32
    %157 = vector.broadcast %cst_137 : f32 to vector<62x32xf32>
    %158 = arith.maximumf %156, %157 : vector<62x32xf32>
    %159 = vector.broadcast %4 : vector<62x1xf32> to vector<62x32xf32>
    %160 = arith.mulf %158, %159 : vector<62x32xf32>
    %161 = arith.truncf %160 : vector<62x32xf32> to vector<62x32xbf16>
    %c0_138 = arith.constant 0 : index
    %c9_139 = arith.constant 9 : index
    %c0_140 = arith.constant 0 : index
    %162 = vector.load %arg7[%c0_138, %c9_139, %c0_140] : memref<2x80x32xbf16, #tpu.memory_space<vmem>>, vector<1x62x32xbf16>
    %163 = vector.shape_cast %162 : vector<1x62x32xbf16> to vector<62x32xbf16>
    %164 = vector.shape_cast %161 : vector<62x32xbf16> to vector<1x62x32xbf16>
    tpu.vector_store %arg7[%c0_138, %c9_139, %c0_140], %164 {strides = array<i32>} : memref<2x80x32xbf16, #tpu.memory_space<vmem>>, vector<1x62x32xbf16>,
    %165 = vector.broadcast %144 : vector<1x32xf32> to vector<62x32xf32>
    %166 = arith.mulf %110, %165 : vector<62x32xf32>
    %167 = vector.broadcast %148 : vector<1x32xf32> to vector<62x32xf32>
    %168 = arith.addf %166, %167 : vector<62x32xf32>
    %c1_141 = arith.constant 1 : index
    %c9_142 = arith.constant 9 : index
    %c0_143 = arith.constant 0 : index
    %169 = vector.load %arg1[%c1_141, %c9_142, %c0_143] : memref<2x80x32xbf16, #tpu.memory_space<vmem>>, vector<1x62x32xbf16>
    %170 = vector.shape_cast %169 : vector<1x62x32xbf16> to vector<62x32xbf16>
    %171 = arith.extf %170 : vector<62x32xbf16> to vector<62x32xf32>
    %172 = arith.addf %168, %171 : vector<62x32xf32>
    %cst_144 = arith.constant 0.000000e+00 : f32
    %173 = vector.broadcast %cst_144 : f32 to vector<62x32xf32>
    %174 = arith.maximumf %172, %173 : vector<62x32xf32>
    %175 = vector.broadcast %4 : vector<62x1xf32> to vector<62x32xf32>
    %176 = arith.mulf %174, %175 : vector<62x32xf32>
    %177 = arith.truncf %176 : vector<62x32xf32> to vector<62x32xbf16>
    %c1_145 = arith.constant 1 : index
    %c9_146 = arith.constant 9 : index
    %c0_147 = arith.constant 0 : index
    %178 = vector.load %arg7[%c1_145, %c9_146, %c0_147] : memref<2x80x32xbf16, #tpu.memory_space<vmem>>, vector<1x62x32xbf16>
    %179 = vector.shape_cast %178 : vector<1x62x32xbf16> to vector<62x32xbf16>
    %180 = vector.shape_cast %177 : vector<62x32xbf16> to vector<1x62x32xbf16>
    tpu.vector_store %arg7[%c1_145, %c9_146, %c0_147], %180 {strides = array<i32>} : memref<2x80x32xbf16, #tpu.memory_space<vmem>>, vector<1x62x32xbf16>,
    %c0_148 = arith.constant 0 : index
    %c0_149 = arith.constant 0 : index
    %c0_150 = arith.constant 0 : index
    %181 = vector.load %arg7[%c0_148, %c0_149, %c0_150] : memref<2x80x32xbf16, #tpu.memory_space<vmem>>, vector<1x62x32xbf16>
    %182 = vector.shape_cast %181 : vector<1x62x32xbf16> to vector<62x32xbf16>
    %c9_151 = arith.constant 9 : index
    %c0_152 = arith.constant 0 : index
    %c0_153 = arith.constant 0 : index
    %183 = vector.load %arg2[%c9_151, %c0_152, %c0_153] : memref<27x32x32xbf16, #tpu.memory_space<vmem>>, vector<1x32x32xbf16>
    %184 = vector.shape_cast %183 : vector<1x32x32xbf16> to vector<32x32xbf16>
    %cst_154 = arith.constant dense<0.000000e+00> : vector<62x32xf32>
    %185 = tpu.matmul %182, %184, %cst_154 {dimension_numbers = #tpu.dot_dimension_numbers<[1], [0], [0], [1], [0, 0, 1, 1], [], []>} : vector<62x32xbf16>, vector<32x32xbf16>, vector<62x32xf32> -> vector<62x32xf32>
    %c0_155 = arith.constant 0 : index
    %c1_156 = arith.constant 1 : index
    %c0_157 = arith.constant 0 : index
    %186 = vector.load %arg7[%c0_155, %c1_156, %c0_157] : memref<2x80x32xbf16, #tpu.memory_space<vmem>>, vector<1x62x32xbf16>
    %187 = vector.shape_cast %186 : vector<1x62x32xbf16> to vector<62x32xbf16>
    %c10_158 = arith.constant 10 : index
    %c0_159 = arith.constant 0 : index
    %c0_160 = arith.constant 0 : index
    %188 = vector.load %arg2[%c10_158, %c0_159, %c0_160] : memref<27x32x32xbf16, #tpu.memory_space<vmem>>, vector<1x32x32xbf16>
    %189 = vector.shape_cast %188 : vector<1x32x32xbf16> to vector<32x32xbf16>
    %cst_161 = arith.constant dense<0.000000e+00> : vector<62x32xf32>
    %190 = tpu.matmul %187, %189, %cst_161 {dimension_numbers = #tpu.dot_dimension_numbers<[1], [0], [0], [1], [0, 0, 1, 1], [], []>} : vector<62x32xbf16>, vector<32x32xbf16>, vector<62x32xf32> -> vector<62x32xf32>
    %191 = arith.addf %185, %190 : vector<62x32xf32>
    %c0_162 = arith.constant 0 : index
    %c2_163 = arith.constant 2 : index
    %c0_164 = arith.constant 0 : index
    %192 = vector.load %arg7[%c0_162, %c2_163, %c0_164] : memref<2x80x32xbf16, #tpu.memory_space<vmem>>, vector<1x62x32xbf16>
    %193 = vector.shape_cast %192 : vector<1x62x32xbf16> to vector<62x32xbf16>
    %c11 = arith.constant 11 : index
    %c0_165 = arith.constant 0 : index
    %c0_166 = arith.constant 0 : index
    %194 = vector.load %arg2[%c11, %c0_165, %c0_166] : memref<27x32x32xbf16, #tpu.memory_space<vmem>>, vector<1x32x32xbf16>
    %195 = vector.shape_cast %194 : vector<1x32x32xbf16> to vector<32x32xbf16>
    %cst_167 = arith.constant dense<0.000000e+00> : vector<62x32xf32>
    %196 = tpu.matmul %193, %195, %cst_167 {dimension_numbers = #tpu.dot_dimension_numbers<[1], [0], [0], [1], [0, 0, 1, 1], [], []>} : vector<62x32xbf16>, vector<32x32xbf16>, vector<62x32xf32> -> vector<62x32xf32>
    %197 = arith.addf %191, %196 : vector<62x32xf32>
    %c0_168 = arith.constant 0 : index
    %c8_169 = arith.constant 8 : index
    %c0_170 = arith.constant 0 : index
    %198 = vector.load %arg7[%c0_168, %c8_169, %c0_170] : memref<2x80x32xbf16, #tpu.memory_space<vmem>>, vector<1x62x32xbf16>
    %199 = vector.shape_cast %198 : vector<1x62x32xbf16> to vector<62x32xbf16>
    %c12 = arith.constant 12 : index
    %c0_171 = arith.constant 0 : index
    %c0_172 = arith.constant 0 : index
    %200 = vector.load %arg2[%c12, %c0_171, %c0_172] : memref<27x32x32xbf16, #tpu.memory_space<vmem>>, vector<1x32x32xbf16>
    %201 = vector.shape_cast %200 : vector<1x32x32xbf16> to vector<32x32xbf16>
    %cst_173 = arith.constant dense<0.000000e+00> : vector<62x32xf32>
    %202 = tpu.matmul %199, %201, %cst_173 {dimension_numbers = #tpu.dot_dimension_numbers<[1], [0], [0], [1], [0, 0, 1, 1], [], []>} : vector<62x32xbf16>, vector<32x32xbf16>, vector<62x32xf32> -> vector<62x32xf32>
    %203 = arith.addf %197, %202 : vector<62x32xf32>
    %c0_174 = arith.constant 0 : index
    %c9_175 = arith.constant 9 : index
    %c0_176 = arith.constant 0 : index
    %204 = vector.load %arg7[%c0_174, %c9_175, %c0_176] : memref<2x80x32xbf16, #tpu.memory_space<vmem>>, vector<1x62x32xbf16>
    %205 = vector.shape_cast %204 : vector<1x62x32xbf16> to vector<62x32xbf16>
    %c13 = arith.constant 13 : index
    %c0_177 = arith.constant 0 : index
    %c0_178 = arith.constant 0 : index
    %206 = vector.load %arg2[%c13, %c0_177, %c0_178] : memref<27x32x32xbf16, #tpu.memory_space<vmem>>, vector<1x32x32xbf16>
    %207 = vector.shape_cast %206 : vector<1x32x32xbf16> to vector<32x32xbf16>
    %cst_179 = arith.constant dense<0.000000e+00> : vector<62x32xf32>
    %208 = tpu.matmul %205, %207, %cst_179 {dimension_numbers = #tpu.dot_dimension_numbers<[1], [0], [0], [1], [0, 0, 1, 1], [], []>} : vector<62x32xbf16>, vector<32x32xbf16>, vector<62x32xf32> -> vector<62x32xf32>
    %209 = arith.addf %203, %208 : vector<62x32xf32>
    %c0_180 = arith.constant 0 : index
    %c10_181 = arith.constant 10 : index
    %c0_182 = arith.constant 0 : index
    %210 = vector.load %arg7[%c0_180, %c10_181, %c0_182] : memref<2x80x32xbf16, #tpu.memory_space<vmem>>, vector<1x62x32xbf16>
    %211 = vector.shape_cast %210 : vector<1x62x32xbf16> to vector<62x32xbf16>
    %c14 = arith.constant 14 : index
    %c0_183 = arith.constant 0 : index
    %c0_184 = arith.constant 0 : index
    %212 = vector.load %arg2[%c14, %c0_183, %c0_184] : memref<27x32x32xbf16, #tpu.memory_space<vmem>>, vector<1x32x32xbf16>
    %213 = vector.shape_cast %212 : vector<1x32x32xbf16> to vector<32x32xbf16>
    %cst_185 = arith.constant dense<0.000000e+00> : vector<62x32xf32>
    %214 = tpu.matmul %211, %213, %cst_185 {dimension_numbers = #tpu.dot_dimension_numbers<[1], [0], [0], [1], [0, 0, 1, 1], [], []>} : vector<62x32xbf16>, vector<32x32xbf16>, vector<62x32xf32> -> vector<62x32xf32>
    %215 = arith.addf %209, %214 : vector<62x32xf32>
    %c0_186 = arith.constant 0 : index
    %c16_187 = arith.constant 16 : index
    %c0_188 = arith.constant 0 : index
    %216 = vector.load %arg7[%c0_186, %c16_187, %c0_188] : memref<2x80x32xbf16, #tpu.memory_space<vmem>>, vector<1x62x32xbf16>
    %217 = vector.shape_cast %216 : vector<1x62x32xbf16> to vector<62x32xbf16>
    %c15 = arith.constant 15 : index
    %c0_189 = arith.constant 0 : index
    %c0_190 = arith.constant 0 : index
    %218 = vector.load %arg2[%c15, %c0_189, %c0_190] : memref<27x32x32xbf16, #tpu.memory_space<vmem>>, vector<1x32x32xbf16>
    %219 = vector.shape_cast %218 : vector<1x32x32xbf16> to vector<32x32xbf16>
    %cst_191 = arith.constant dense<0.000000e+00> : vector<62x32xf32>
    %220 = tpu.matmul %217, %219, %cst_191 {dimension_numbers = #tpu.dot_dimension_numbers<[1], [0], [0], [1], [0, 0, 1, 1], [], []>} : vector<62x32xbf16>, vector<32x32xbf16>, vector<62x32xf32> -> vector<62x32xf32>
    %221 = arith.addf %215, %220 : vector<62x32xf32>
    %c0_192 = arith.constant 0 : index
    %c17_193 = arith.constant 17 : index
    %c0_194 = arith.constant 0 : index
    %222 = vector.load %arg7[%c0_192, %c17_193, %c0_194] : memref<2x80x32xbf16, #tpu.memory_space<vmem>>, vector<1x62x32xbf16>
    %223 = vector.shape_cast %222 : vector<1x62x32xbf16> to vector<62x32xbf16>
    %c16_195 = arith.constant 16 : index
    %c0_196 = arith.constant 0 : index
    %c0_197 = arith.constant 0 : index
    %224 = vector.load %arg2[%c16_195, %c0_196, %c0_197] : memref<27x32x32xbf16, #tpu.memory_space<vmem>>, vector<1x32x32xbf16>
    %225 = vector.shape_cast %224 : vector<1x32x32xbf16> to vector<32x32xbf16>
    %cst_198 = arith.constant dense<0.000000e+00> : vector<62x32xf32>
    %226 = tpu.matmul %223, %225, %cst_198 {dimension_numbers = #tpu.dot_dimension_numbers<[1], [0], [0], [1], [0, 0, 1, 1], [], []>} : vector<62x32xbf16>, vector<32x32xbf16>, vector<62x32xf32> -> vector<62x32xf32>
    %227 = arith.addf %221, %226 : vector<62x32xf32>
    %c0_199 = arith.constant 0 : index
    %c18_200 = arith.constant 18 : index
    %c0_201 = arith.constant 0 : index
    %228 = vector.load %arg7[%c0_199, %c18_200, %c0_201] : memref<2x80x32xbf16, #tpu.memory_space<vmem>>, vector<1x62x32xbf16>
    %229 = vector.shape_cast %228 : vector<1x62x32xbf16> to vector<62x32xbf16>
    %c17_202 = arith.constant 17 : index
    %c0_203 = arith.constant 0 : index
    %c0_204 = arith.constant 0 : index
    %230 = vector.load %arg2[%c17_202, %c0_203, %c0_204] : memref<27x32x32xbf16, #tpu.memory_space<vmem>>, vector<1x32x32xbf16>
    %231 = vector.shape_cast %230 : vector<1x32x32xbf16> to vector<32x32xbf16>
    %cst_205 = arith.constant dense<0.000000e+00> : vector<62x32xf32>
    %232 = tpu.matmul %229, %231, %cst_205 {dimension_numbers = #tpu.dot_dimension_numbers<[1], [0], [0], [1], [0, 0, 1, 1], [], []>} : vector<62x32xbf16>, vector<32x32xbf16>, vector<62x32xf32> -> vector<62x32xf32>
    %233 = arith.addf %227, %232 : vector<62x32xf32>
    %c1_206 = arith.constant 1 : index
    %c0_207 = arith.constant 0 : index
    %c0_208 = arith.constant 0 : index
    %234 = vector.load %arg7[%c1_206, %c0_207, %c0_208] : memref<2x80x32xbf16, #tpu.memory_space<vmem>>, vector<1x62x32xbf16>
    %235 = vector.shape_cast %234 : vector<1x62x32xbf16> to vector<62x32xbf16>
    %c9_209 = arith.constant 9 : index
    %c0_210 = arith.constant 0 : index
    %c0_211 = arith.constant 0 : index
    %236 = vector.load %arg2[%c9_209, %c0_210, %c0_211] : memref<27x32x32xbf16, #tpu.memory_space<vmem>>, vector<1x32x32xbf16>
    %237 = vector.shape_cast %236 : vector<1x32x32xbf16> to vector<32x32xbf16>
    %cst_212 = arith.constant dense<0.000000e+00> : vector<62x32xf32>
    %238 = tpu.matmul %235, %237, %cst_212 {dimension_numbers = #tpu.dot_dimension_numbers<[1], [0], [0], [1], [0, 0, 1, 1], [], []>} : vector<62x32xbf16>, vector<32x32xbf16>, vector<62x32xf32> -> vector<62x32xf32>
    %c1_213 = arith.constant 1 : index
    %c1_214 = arith.constant 1 : index
    %c0_215 = arith.constant 0 : index
    %239 = vector.load %arg7[%c1_213, %c1_214, %c0_215] : memref<2x80x32xbf16, #tpu.memory_space<vmem>>, vector<1x62x32xbf16>
    %240 = vector.shape_cast %239 : vector<1x62x32xbf16> to vector<62x32xbf16>
    %c10_216 = arith.constant 10 : index
    %c0_217 = arith.constant 0 : index
    %c0_218 = arith.constant 0 : index
    %241 = vector.load %arg2[%c10_216, %c0_217, %c0_218] : memref<27x32x32xbf16, #tpu.memory_space<vmem>>, vector<1x32x32xbf16>
    %242 = vector.shape_cast %241 : vector<1x32x32xbf16> to vector<32x32xbf16>
    %cst_219 = arith.constant dense<0.000000e+00> : vector<62x32xf32>
    %243 = tpu.matmul %240, %242, %cst_219 {dimension_numbers = #tpu.dot_dimension_numbers<[1], [0], [0], [1], [0, 0, 1, 1], [], []>} : vector<62x32xbf16>, vector<32x32xbf16>, vector<62x32xf32> -> vector<62x32xf32>
    %244 = arith.addf %238, %243 : vector<62x32xf32>
    %c1_220 = arith.constant 1 : index
    %c2_221 = arith.constant 2 : index
    %c0_222 = arith.constant 0 : index
    %245 = vector.load %arg7[%c1_220, %c2_221, %c0_222] : memref<2x80x32xbf16, #tpu.memory_space<vmem>>, vector<1x62x32xbf16>
    %246 = vector.shape_cast %245 : vector<1x62x32xbf16> to vector<62x32xbf16>
    %c11_223 = arith.constant 11 : index
    %c0_224 = arith.constant 0 : index
    %c0_225 = arith.constant 0 : index
    %247 = vector.load %arg2[%c11_223, %c0_224, %c0_225] : memref<27x32x32xbf16, #tpu.memory_space<vmem>>, vector<1x32x32xbf16>
    %248 = vector.shape_cast %247 : vector<1x32x32xbf16> to vector<32x32xbf16>
    %cst_226 = arith.constant dense<0.000000e+00> : vector<62x32xf32>
    %249 = tpu.matmul %246, %248, %cst_226 {dimension_numbers = #tpu.dot_dimension_numbers<[1], [0], [0], [1], [0, 0, 1, 1], [], []>} : vector<62x32xbf16>, vector<32x32xbf16>, vector<62x32xf32> -> vector<62x32xf32>
    %250 = arith.addf %244, %249 : vector<62x32xf32>
    %c1_227 = arith.constant 1 : index
    %c8_228 = arith.constant 8 : index
    %c0_229 = arith.constant 0 : index
    %251 = vector.load %arg7[%c1_227, %c8_228, %c0_229] : memref<2x80x32xbf16, #tpu.memory_space<vmem>>, vector<1x62x32xbf16>
    %252 = vector.shape_cast %251 : vector<1x62x32xbf16> to vector<62x32xbf16>
    %c12_230 = arith.constant 12 : index
    %c0_231 = arith.constant 0 : index
    %c0_232 = arith.constant 0 : index
    %253 = vector.load %arg2[%c12_230, %c0_231, %c0_232] : memref<27x32x32xbf16, #tpu.memory_space<vmem>>, vector<1x32x32xbf16>
    %254 = vector.shape_cast %253 : vector<1x32x32xbf16> to vector<32x32xbf16>
    %cst_233 = arith.constant dense<0.000000e+00> : vector<62x32xf32>
    %255 = tpu.matmul %252, %254, %cst_233 {dimension_numbers = #tpu.dot_dimension_numbers<[1], [0], [0], [1], [0, 0, 1, 1], [], []>} : vector<62x32xbf16>, vector<32x32xbf16>, vector<62x32xf32> -> vector<62x32xf32>
    %256 = arith.addf %250, %255 : vector<62x32xf32>
    %c1_234 = arith.constant 1 : index
    %c9_235 = arith.constant 9 : index
    %c0_236 = arith.constant 0 : index
    %257 = vector.load %arg7[%c1_234, %c9_235, %c0_236] : memref<2x80x32xbf16, #tpu.memory_space<vmem>>, vector<1x62x32xbf16>
    %258 = vector.shape_cast %257 : vector<1x62x32xbf16> to vector<62x32xbf16>
    %c13_237 = arith.constant 13 : index
    %c0_238 = arith.constant 0 : index
    %c0_239 = arith.constant 0 : index
    %259 = vector.load %arg2[%c13_237, %c0_238, %c0_239] : memref<27x32x32xbf16, #tpu.memory_space<vmem>>, vector<1x32x32xbf16>
    %260 = vector.shape_cast %259 : vector<1x32x32xbf16> to vector<32x32xbf16>
    %cst_240 = arith.constant dense<0.000000e+00> : vector<62x32xf32>
    %261 = tpu.matmul %258, %260, %cst_240 {dimension_numbers = #tpu.dot_dimension_numbers<[1], [0], [0], [1], [0, 0, 1, 1], [], []>} : vector<62x32xbf16>, vector<32x32xbf16>, vector<62x32xf32> -> vector<62x32xf32>
    %262 = arith.addf %256, %261 : vector<62x32xf32>
    %c1_241 = arith.constant 1 : index
    %c10_242 = arith.constant 10 : index
    %c0_243 = arith.constant 0 : index
    %263 = vector.load %arg7[%c1_241, %c10_242, %c0_243] : memref<2x80x32xbf16, #tpu.memory_space<vmem>>, vector<1x62x32xbf16>
    %264 = vector.shape_cast %263 : vector<1x62x32xbf16> to vector<62x32xbf16>
    %c14_244 = arith.constant 14 : index
    %c0_245 = arith.constant 0 : index
    %c0_246 = arith.constant 0 : index
    %265 = vector.load %arg2[%c14_244, %c0_245, %c0_246] : memref<27x32x32xbf16, #tpu.memory_space<vmem>>, vector<1x32x32xbf16>
    %266 = vector.shape_cast %265 : vector<1x32x32xbf16> to vector<32x32xbf16>
    %cst_247 = arith.constant dense<0.000000e+00> : vector<62x32xf32>
    %267 = tpu.matmul %264, %266, %cst_247 {dimension_numbers = #tpu.dot_dimension_numbers<[1], [0], [0], [1], [0, 0, 1, 1], [], []>} : vector<62x32xbf16>, vector<32x32xbf16>, vector<62x32xf32> -> vector<62x32xf32>
    %268 = arith.addf %262, %267 : vector<62x32xf32>
    %c1_248 = arith.constant 1 : index
    %c16_249 = arith.constant 16 : index
    %c0_250 = arith.constant 0 : index
    %269 = vector.load %arg7[%c1_248, %c16_249, %c0_250] : memref<2x80x32xbf16, #tpu.memory_space<vmem>>, vector<1x62x32xbf16>
    %270 = vector.shape_cast %269 : vector<1x62x32xbf16> to vector<62x32xbf16>
    %c15_251 = arith.constant 15 : index
    %c0_252 = arith.constant 0 : index
    %c0_253 = arith.constant 0 : index
    %271 = vector.load %arg2[%c15_251, %c0_252, %c0_253] : memref<27x32x32xbf16, #tpu.memory_space<vmem>>, vector<1x32x32xbf16>
    %272 = vector.shape_cast %271 : vector<1x32x32xbf16> to vector<32x32xbf16>
    %cst_254 = arith.constant dense<0.000000e+00> : vector<62x32xf32>
    %273 = tpu.matmul %270, %272, %cst_254 {dimension_numbers = #tpu.dot_dimension_numbers<[1], [0], [0], [1], [0, 0, 1, 1], [], []>} : vector<62x32xbf16>, vector<32x32xbf16>, vector<62x32xf32> -> vector<62x32xf32>
    %274 = arith.addf %268, %273 : vector<62x32xf32>
    %c1_255 = arith.constant 1 : index
    %c17_256 = arith.constant 17 : index
    %c0_257 = arith.constant 0 : index
    %275 = vector.load %arg7[%c1_255, %c17_256, %c0_257] : memref<2x80x32xbf16, #tpu.memory_space<vmem>>, vector<1x62x32xbf16>
    %276 = vector.shape_cast %275 : vector<1x62x32xbf16> to vector<62x32xbf16>
    %c16_258 = arith.constant 16 : index
    %c0_259 = arith.constant 0 : index
    %c0_260 = arith.constant 0 : index
    %277 = vector.load %arg2[%c16_258, %c0_259, %c0_260] : memref<27x32x32xbf16, #tpu.memory_space<vmem>>, vector<1x32x32xbf16>
    %278 = vector.shape_cast %277 : vector<1x32x32xbf16> to vector<32x32xbf16>
    %cst_261 = arith.constant dense<0.000000e+00> : vector<62x32xf32>
    %279 = tpu.matmul %276, %278, %cst_261 {dimension_numbers = #tpu.dot_dimension_numbers<[1], [0], [0], [1], [0, 0, 1, 1], [], []>} : vector<62x32xbf16>, vector<32x32xbf16>, vector<62x32xf32> -> vector<62x32xf32>
    %280 = arith.addf %274, %279 : vector<62x32xf32>
    %c1_262 = arith.constant 1 : index
    %c18_263 = arith.constant 18 : index
    %c0_264 = arith.constant 0 : index
    %281 = vector.load %arg7[%c1_262, %c18_263, %c0_264] : memref<2x80x32xbf16, #tpu.memory_space<vmem>>, vector<1x62x32xbf16>
    %282 = vector.shape_cast %281 : vector<1x62x32xbf16> to vector<62x32xbf16>
    %c17_265 = arith.constant 17 : index
    %c0_266 = arith.constant 0 : index
    %c0_267 = arith.constant 0 : index
    %283 = vector.load %arg2[%c17_265, %c0_266, %c0_267] : memref<27x32x32xbf16, #tpu.memory_space<vmem>>, vector<1x32x32xbf16>
    %284 = vector.shape_cast %283 : vector<1x32x32xbf16> to vector<32x32xbf16>
    %cst_268 = arith.constant dense<0.000000e+00> : vector<62x32xf32>
    %285 = tpu.matmul %282, %284, %cst_268 {dimension_numbers = #tpu.dot_dimension_numbers<[1], [0], [0], [1], [0, 0, 1, 1], [], []>} : vector<62x32xbf16>, vector<32x32xbf16>, vector<62x32xf32> -> vector<62x32xf32>
    %286 = arith.addf %280, %285 : vector<62x32xf32>
    %287 = vector.broadcast %4 : vector<62x1xf32> to vector<62x32xf32>
    %288 = arith.mulf %233, %287 : vector<62x32xf32>
    %cst_269 = arith.constant dense<0.000000e+00> : vector<32xf32>
    %289 = vector.multi_reduction <add>, %288, %cst_269 [0] : vector<62x32xf32> to vector<32xf32>
    %290 = vector.shape_cast %289 : vector<32xf32> to vector<1x32xf32>
    %291 = vector.broadcast %4 : vector<62x1xf32> to vector<62x32xf32>
    %292 = arith.mulf %286, %291 : vector<62x32xf32>
    %cst_270 = arith.constant dense<0.000000e+00> : vector<32xf32>
    %293 = vector.multi_reduction <add>, %292, %cst_270 [0] : vector<62x32xf32> to vector<32xf32>
    %294 = vector.shape_cast %293 : vector<32xf32> to vector<1x32xf32>
    %295 = arith.addf %290, %294 : vector<1x32xf32>
    %cst_271 = arith.constant 0.010416667 : f32
    %296 = vector.broadcast %cst_271 : f32 to vector<1x32xf32>
    %297 = arith.mulf %295, %296 : vector<1x32xf32>
    %298 = vector.broadcast %297 : vector<1x32xf32> to vector<62x32xf32>
    %299 = arith.subf %233, %298 : vector<62x32xf32>
    %300 = arith.mulf %299, %299 : vector<62x32xf32>
    %301 = vector.broadcast %4 : vector<62x1xf32> to vector<62x32xf32>
    %302 = arith.mulf %300, %301 : vector<62x32xf32>
    %cst_272 = arith.constant dense<0.000000e+00> : vector<32xf32>
    %303 = vector.multi_reduction <add>, %302, %cst_272 [0] : vector<62x32xf32> to vector<32xf32>
    %304 = vector.shape_cast %303 : vector<32xf32> to vector<1x32xf32>
    %305 = vector.broadcast %297 : vector<1x32xf32> to vector<62x32xf32>
    %306 = arith.subf %286, %305 : vector<62x32xf32>
    %307 = arith.mulf %306, %306 : vector<62x32xf32>
    %308 = vector.broadcast %4 : vector<62x1xf32> to vector<62x32xf32>
    %309 = arith.mulf %307, %308 : vector<62x32xf32>
    %cst_273 = arith.constant dense<0.000000e+00> : vector<32xf32>
    %310 = vector.multi_reduction <add>, %309, %cst_273 [0] : vector<62x32xf32> to vector<32xf32>
    %311 = vector.shape_cast %310 : vector<32xf32> to vector<1x32xf32>
    %312 = arith.addf %304, %311 : vector<1x32xf32>
    %cst_274 = arith.constant 0.010416667 : f32
    %313 = vector.broadcast %cst_274 : f32 to vector<1x32xf32>
    %314 = arith.mulf %312, %313 : vector<1x32xf32>
    %c1_275 = arith.constant 1 : index
    %c0_276 = arith.constant 0 : index
    %c0_277 = arith.constant 0 : index
    %315 = vector.load %arg3[%c1_275, %c0_276, %c0_277] : memref<3x1x32xf32, #tpu.memory_space<vmem>>, vector<1x1x32xf32>
    %316 = vector.shape_cast %315 : vector<1x1x32xf32> to vector<1x32xf32>
    %cst_278 = arith.constant 9.99999974E-6 : f32
    %317 = vector.broadcast %cst_278 : f32 to vector<1x32xf32>
    %318 = arith.addf %314, %317 : vector<1x32xf32>
    %319 = math.rsqrt %318 : vector<1x32xf32>
    %320 = arith.mulf %316, %319 : vector<1x32xf32>
    %c1_279 = arith.constant 1 : index
    %c0_280 = arith.constant 0 : index
    %c0_281 = arith.constant 0 : index
    %321 = vector.load %arg4[%c1_279, %c0_280, %c0_281] : memref<3x1x32xf32, #tpu.memory_space<vmem>>, vector<1x1x32xf32>
    %322 = vector.shape_cast %321 : vector<1x1x32xf32> to vector<1x32xf32>
    %323 = arith.mulf %297, %320 : vector<1x32xf32>
    %324 = arith.subf %322, %323 : vector<1x32xf32>
    %325 = vector.broadcast %320 : vector<1x32xf32> to vector<62x32xf32>
    %326 = arith.mulf %233, %325 : vector<62x32xf32>
    %327 = vector.broadcast %324 : vector<1x32xf32> to vector<62x32xf32>
    %328 = arith.addf %326, %327 : vector<62x32xf32>
    %c0_282 = arith.constant 0 : index
    %c9_283 = arith.constant 9 : index
    %c0_284 = arith.constant 0 : index
    %329 = vector.load %arg7[%c0_282, %c9_283, %c0_284] : memref<2x80x32xbf16, #tpu.memory_space<vmem>>, vector<1x62x32xbf16>
    %330 = vector.shape_cast %329 : vector<1x62x32xbf16> to vector<62x32xbf16>
    %331 = arith.extf %330 : vector<62x32xbf16> to vector<62x32xf32>
    %332 = arith.addf %328, %331 : vector<62x32xf32>
    %cst_285 = arith.constant 0.000000e+00 : f32
    %333 = vector.broadcast %cst_285 : f32 to vector<62x32xf32>
    %334 = arith.maximumf %332, %333 : vector<62x32xf32>
    %335 = vector.broadcast %4 : vector<62x1xf32> to vector<62x32xf32>
    %336 = arith.mulf %334, %335 : vector<62x32xf32>
    %337 = arith.truncf %336 : vector<62x32xf32> to vector<62x32xbf16>
    %c0_286 = arith.constant 0 : index
    %c9_287 = arith.constant 9 : index
    %c0_288 = arith.constant 0 : index
    %338 = vector.load %arg8[%c0_286, %c9_287, %c0_288] : memref<2x80x32xbf16, #tpu.memory_space<vmem>>, vector<1x62x32xbf16>
    %339 = vector.shape_cast %338 : vector<1x62x32xbf16> to vector<62x32xbf16>
    %340 = vector.shape_cast %337 : vector<62x32xbf16> to vector<1x62x32xbf16>
    tpu.vector_store %arg8[%c0_286, %c9_287, %c0_288], %340 {strides = array<i32>} : memref<2x80x32xbf16, #tpu.memory_space<vmem>>, vector<1x62x32xbf16>,
    %341 = vector.broadcast %320 : vector<1x32xf32> to vector<62x32xf32>
    %342 = arith.mulf %286, %341 : vector<62x32xf32>
    %343 = vector.broadcast %324 : vector<1x32xf32> to vector<62x32xf32>
    %344 = arith.addf %342, %343 : vector<62x32xf32>
    %c1_289 = arith.constant 1 : index
    %c9_290 = arith.constant 9 : index
    %c0_291 = arith.constant 0 : index
    %345 = vector.load %arg7[%c1_289, %c9_290, %c0_291] : memref<2x80x32xbf16, #tpu.memory_space<vmem>>, vector<1x62x32xbf16>
    %346 = vector.shape_cast %345 : vector<1x62x32xbf16> to vector<62x32xbf16>
    %347 = arith.extf %346 : vector<62x32xbf16> to vector<62x32xf32>
    %348 = arith.addf %344, %347 : vector<62x32xf32>
    %cst_292 = arith.constant 0.000000e+00 : f32
    %349 = vector.broadcast %cst_292 : f32 to vector<62x32xf32>
    %350 = arith.maximumf %348, %349 : vector<62x32xf32>
    %351 = vector.broadcast %4 : vector<62x1xf32> to vector<62x32xf32>
    %352 = arith.mulf %350, %351 : vector<62x32xf32>
    %353 = arith.truncf %352 : vector<62x32xf32> to vector<62x32xbf16>
    %c1_293 = arith.constant 1 : index
    %c9_294 = arith.constant 9 : index
    %c0_295 = arith.constant 0 : index
    %354 = vector.load %arg8[%c1_293, %c9_294, %c0_295] : memref<2x80x32xbf16, #tpu.memory_space<vmem>>, vector<1x62x32xbf16>
    %355 = vector.shape_cast %354 : vector<1x62x32xbf16> to vector<62x32xbf16>
    %356 = vector.shape_cast %353 : vector<62x32xbf16> to vector<1x62x32xbf16>
    tpu.vector_store %arg8[%c1_293, %c9_294, %c0_295], %356 {strides = array<i32>} : memref<2x80x32xbf16, #tpu.memory_space<vmem>>, vector<1x62x32xbf16>,
    %c0_296 = arith.constant 0 : index
    %c0_297 = arith.constant 0 : index
    %c0_298 = arith.constant 0 : index
    %357 = vector.load %arg8[%c0_296, %c0_297, %c0_298] : memref<2x80x32xbf16, #tpu.memory_space<vmem>>, vector<1x62x32xbf16>
    %358 = vector.shape_cast %357 : vector<1x62x32xbf16> to vector<62x32xbf16>
    %c18_299 = arith.constant 18 : index
    %c0_300 = arith.constant 0 : index
    %c0_301 = arith.constant 0 : index
    %359 = vector.load %arg2[%c18_299, %c0_300, %c0_301] : memref<27x32x32xbf16, #tpu.memory_space<vmem>>, vector<1x32x32xbf16>
    %360 = vector.shape_cast %359 : vector<1x32x32xbf16> to vector<32x32xbf16>
    %cst_302 = arith.constant dense<0.000000e+00> : vector<62x32xf32>
    %361 = tpu.matmul %358, %360, %cst_302 {dimension_numbers = #tpu.dot_dimension_numbers<[1], [0], [0], [1], [0, 0, 1, 1], [], []>} : vector<62x32xbf16>, vector<32x32xbf16>, vector<62x32xf32> -> vector<62x32xf32>
    %c0_303 = arith.constant 0 : index
    %c1_304 = arith.constant 1 : index
    %c0_305 = arith.constant 0 : index
    %362 = vector.load %arg8[%c0_303, %c1_304, %c0_305] : memref<2x80x32xbf16, #tpu.memory_space<vmem>>, vector<1x62x32xbf16>
    %363 = vector.shape_cast %362 : vector<1x62x32xbf16> to vector<62x32xbf16>
    %c19 = arith.constant 19 : index
    %c0_306 = arith.constant 0 : index
    %c0_307 = arith.constant 0 : index
    %364 = vector.load %arg2[%c19, %c0_306, %c0_307] : memref<27x32x32xbf16, #tpu.memory_space<vmem>>, vector<1x32x32xbf16>
    %365 = vector.shape_cast %364 : vector<1x32x32xbf16> to vector<32x32xbf16>
    %cst_308 = arith.constant dense<0.000000e+00> : vector<62x32xf32>
    %366 = tpu.matmul %363, %365, %cst_308 {dimension_numbers = #tpu.dot_dimension_numbers<[1], [0], [0], [1], [0, 0, 1, 1], [], []>} : vector<62x32xbf16>, vector<32x32xbf16>, vector<62x32xf32> -> vector<62x32xf32>
    %367 = arith.addf %361, %366 : vector<62x32xf32>
    %c0_309 = arith.constant 0 : index
    %c2_310 = arith.constant 2 : index
    %c0_311 = arith.constant 0 : index
    %368 = vector.load %arg8[%c0_309, %c2_310, %c0_311] : memref<2x80x32xbf16, #tpu.memory_space<vmem>>, vector<1x62x32xbf16>
    %369 = vector.shape_cast %368 : vector<1x62x32xbf16> to vector<62x32xbf16>
    %c20 = arith.constant 20 : index
    %c0_312 = arith.constant 0 : index
    %c0_313 = arith.constant 0 : index
    %370 = vector.load %arg2[%c20, %c0_312, %c0_313] : memref<27x32x32xbf16, #tpu.memory_space<vmem>>, vector<1x32x32xbf16>
    %371 = vector.shape_cast %370 : vector<1x32x32xbf16> to vector<32x32xbf16>
    %cst_314 = arith.constant dense<0.000000e+00> : vector<62x32xf32>
    %372 = tpu.matmul %369, %371, %cst_314 {dimension_numbers = #tpu.dot_dimension_numbers<[1], [0], [0], [1], [0, 0, 1, 1], [], []>} : vector<62x32xbf16>, vector<32x32xbf16>, vector<62x32xf32> -> vector<62x32xf32>
    %373 = arith.addf %367, %372 : vector<62x32xf32>
    %c0_315 = arith.constant 0 : index
    %c8_316 = arith.constant 8 : index
    %c0_317 = arith.constant 0 : index
    %374 = vector.load %arg8[%c0_315, %c8_316, %c0_317] : memref<2x80x32xbf16, #tpu.memory_space<vmem>>, vector<1x62x32xbf16>
    %375 = vector.shape_cast %374 : vector<1x62x32xbf16> to vector<62x32xbf16>
    %c21 = arith.constant 21 : index
    %c0_318 = arith.constant 0 : index
    %c0_319 = arith.constant 0 : index
    %376 = vector.load %arg2[%c21, %c0_318, %c0_319] : memref<27x32x32xbf16, #tpu.memory_space<vmem>>, vector<1x32x32xbf16>
    %377 = vector.shape_cast %376 : vector<1x32x32xbf16> to vector<32x32xbf16>
    %cst_320 = arith.constant dense<0.000000e+00> : vector<62x32xf32>
    %378 = tpu.matmul %375, %377, %cst_320 {dimension_numbers = #tpu.dot_dimension_numbers<[1], [0], [0], [1], [0, 0, 1, 1], [], []>} : vector<62x32xbf16>, vector<32x32xbf16>, vector<62x32xf32> -> vector<62x32xf32>
    %379 = arith.addf %373, %378 : vector<62x32xf32>
    %c0_321 = arith.constant 0 : index
    %c9_322 = arith.constant 9 : index
    %c0_323 = arith.constant 0 : index
    %380 = vector.load %arg8[%c0_321, %c9_322, %c0_323] : memref<2x80x32xbf16, #tpu.memory_space<vmem>>, vector<1x62x32xbf16>
    %381 = vector.shape_cast %380 : vector<1x62x32xbf16> to vector<62x32xbf16>
    %c22 = arith.constant 22 : index
    %c0_324 = arith.constant 0 : index
    %c0_325 = arith.constant 0 : index
    %382 = vector.load %arg2[%c22, %c0_324, %c0_325] : memref<27x32x32xbf16, #tpu.memory_space<vmem>>, vector<1x32x32xbf16>
    %383 = vector.shape_cast %382 : vector<1x32x32xbf16> to vector<32x32xbf16>
    %cst_326 = arith.constant dense<0.000000e+00> : vector<62x32xf32>
    %384 = tpu.matmul %381, %383, %cst_326 {dimension_numbers = #tpu.dot_dimension_numbers<[1], [0], [0], [1], [0, 0, 1, 1], [], []>} : vector<62x32xbf16>, vector<32x32xbf16>, vector<62x32xf32> -> vector<62x32xf32>
    %385 = arith.addf %379, %384 : vector<62x32xf32>
    %c0_327 = arith.constant 0 : index
    %c10_328 = arith.constant 10 : index
    %c0_329 = arith.constant 0 : index
    %386 = vector.load %arg8[%c0_327, %c10_328, %c0_329] : memref<2x80x32xbf16, #tpu.memory_space<vmem>>, vector<1x62x32xbf16>
    %387 = vector.shape_cast %386 : vector<1x62x32xbf16> to vector<62x32xbf16>
    %c23 = arith.constant 23 : index
    %c0_330 = arith.constant 0 : index
    %c0_331 = arith.constant 0 : index
    %388 = vector.load %arg2[%c23, %c0_330, %c0_331] : memref<27x32x32xbf16, #tpu.memory_space<vmem>>, vector<1x32x32xbf16>
    %389 = vector.shape_cast %388 : vector<1x32x32xbf16> to vector<32x32xbf16>
    %cst_332 = arith.constant dense<0.000000e+00> : vector<62x32xf32>
    %390 = tpu.matmul %387, %389, %cst_332 {dimension_numbers = #tpu.dot_dimension_numbers<[1], [0], [0], [1], [0, 0, 1, 1], [], []>} : vector<62x32xbf16>, vector<32x32xbf16>, vector<62x32xf32> -> vector<62x32xf32>
    %391 = arith.addf %385, %390 : vector<62x32xf32>
    %c0_333 = arith.constant 0 : index
    %c16_334 = arith.constant 16 : index
    %c0_335 = arith.constant 0 : index
    %392 = vector.load %arg8[%c0_333, %c16_334, %c0_335] : memref<2x80x32xbf16, #tpu.memory_space<vmem>>, vector<1x62x32xbf16>
    %393 = vector.shape_cast %392 : vector<1x62x32xbf16> to vector<62x32xbf16>
    %c24 = arith.constant 24 : index
    %c0_336 = arith.constant 0 : index
    %c0_337 = arith.constant 0 : index
    %394 = vector.load %arg2[%c24, %c0_336, %c0_337] : memref<27x32x32xbf16, #tpu.memory_space<vmem>>, vector<1x32x32xbf16>
    %395 = vector.shape_cast %394 : vector<1x32x32xbf16> to vector<32x32xbf16>
    %cst_338 = arith.constant dense<0.000000e+00> : vector<62x32xf32>
    %396 = tpu.matmul %393, %395, %cst_338 {dimension_numbers = #tpu.dot_dimension_numbers<[1], [0], [0], [1], [0, 0, 1, 1], [], []>} : vector<62x32xbf16>, vector<32x32xbf16>, vector<62x32xf32> -> vector<62x32xf32>
    %397 = arith.addf %391, %396 : vector<62x32xf32>
    %c0_339 = arith.constant 0 : index
    %c17_340 = arith.constant 17 : index
    %c0_341 = arith.constant 0 : index
    %398 = vector.load %arg8[%c0_339, %c17_340, %c0_341] : memref<2x80x32xbf16, #tpu.memory_space<vmem>>, vector<1x62x32xbf16>
    %399 = vector.shape_cast %398 : vector<1x62x32xbf16> to vector<62x32xbf16>
    %c25 = arith.constant 25 : index
    %c0_342 = arith.constant 0 : index
    %c0_343 = arith.constant 0 : index
    %400 = vector.load %arg2[%c25, %c0_342, %c0_343] : memref<27x32x32xbf16, #tpu.memory_space<vmem>>, vector<1x32x32xbf16>
    %401 = vector.shape_cast %400 : vector<1x32x32xbf16> to vector<32x32xbf16>
    %cst_344 = arith.constant dense<0.000000e+00> : vector<62x32xf32>
    %402 = tpu.matmul %399, %401, %cst_344 {dimension_numbers = #tpu.dot_dimension_numbers<[1], [0], [0], [1], [0, 0, 1, 1], [], []>} : vector<62x32xbf16>, vector<32x32xbf16>, vector<62x32xf32> -> vector<62x32xf32>
    %403 = arith.addf %397, %402 : vector<62x32xf32>
    %c0_345 = arith.constant 0 : index
    %c18_346 = arith.constant 18 : index
    %c0_347 = arith.constant 0 : index
    %404 = vector.load %arg8[%c0_345, %c18_346, %c0_347] : memref<2x80x32xbf16, #tpu.memory_space<vmem>>, vector<1x62x32xbf16>
    %405 = vector.shape_cast %404 : vector<1x62x32xbf16> to vector<62x32xbf16>
    %c26 = arith.constant 26 : index
    %c0_348 = arith.constant 0 : index
    %c0_349 = arith.constant 0 : index
    %406 = vector.load %arg2[%c26, %c0_348, %c0_349] : memref<27x32x32xbf16, #tpu.memory_space<vmem>>, vector<1x32x32xbf16>
    %407 = vector.shape_cast %406 : vector<1x32x32xbf16> to vector<32x32xbf16>
    %cst_350 = arith.constant dense<0.000000e+00> : vector<62x32xf32>
    %408 = tpu.matmul %405, %407, %cst_350 {dimension_numbers = #tpu.dot_dimension_numbers<[1], [0], [0], [1], [0, 0, 1, 1], [], []>} : vector<62x32xbf16>, vector<32x32xbf16>, vector<62x32xf32> -> vector<62x32xf32>
    %409 = arith.addf %403, %408 : vector<62x32xf32>
    %c1_351 = arith.constant 1 : index
    %c0_352 = arith.constant 0 : index
    %c0_353 = arith.constant 0 : index
    %410 = vector.load %arg8[%c1_351, %c0_352, %c0_353] : memref<2x80x32xbf16, #tpu.memory_space<vmem>>, vector<1x62x32xbf16>
    %411 = vector.shape_cast %410 : vector<1x62x32xbf16> to vector<62x32xbf16>
    %c18_354 = arith.constant 18 : index
    %c0_355 = arith.constant 0 : index
    %c0_356 = arith.constant 0 : index
    %412 = vector.load %arg2[%c18_354, %c0_355, %c0_356] : memref<27x32x32xbf16, #tpu.memory_space<vmem>>, vector<1x32x32xbf16>
    %413 = vector.shape_cast %412 : vector<1x32x32xbf16> to vector<32x32xbf16>
    %cst_357 = arith.constant dense<0.000000e+00> : vector<62x32xf32>
    %414 = tpu.matmul %411, %413, %cst_357 {dimension_numbers = #tpu.dot_dimension_numbers<[1], [0], [0], [1], [0, 0, 1, 1], [], []>} : vector<62x32xbf16>, vector<32x32xbf16>, vector<62x32xf32> -> vector<62x32xf32>
    %c1_358 = arith.constant 1 : index
    %c1_359 = arith.constant 1 : index
    %c0_360 = arith.constant 0 : index
    %415 = vector.load %arg8[%c1_358, %c1_359, %c0_360] : memref<2x80x32xbf16, #tpu.memory_space<vmem>>, vector<1x62x32xbf16>
    %416 = vector.shape_cast %415 : vector<1x62x32xbf16> to vector<62x32xbf16>
    %c19_361 = arith.constant 19 : index
    %c0_362 = arith.constant 0 : index
    %c0_363 = arith.constant 0 : index
    %417 = vector.load %arg2[%c19_361, %c0_362, %c0_363] : memref<27x32x32xbf16, #tpu.memory_space<vmem>>, vector<1x32x32xbf16>
    %418 = vector.shape_cast %417 : vector<1x32x32xbf16> to vector<32x32xbf16>
    %cst_364 = arith.constant dense<0.000000e+00> : vector<62x32xf32>
    %419 = tpu.matmul %416, %418, %cst_364 {dimension_numbers = #tpu.dot_dimension_numbers<[1], [0], [0], [1], [0, 0, 1, 1], [], []>} : vector<62x32xbf16>, vector<32x32xbf16>, vector<62x32xf32> -> vector<62x32xf32>
    %420 = arith.addf %414, %419 : vector<62x32xf32>
    %c1_365 = arith.constant 1 : index
    %c2_366 = arith.constant 2 : index
    %c0_367 = arith.constant 0 : index
    %421 = vector.load %arg8[%c1_365, %c2_366, %c0_367] : memref<2x80x32xbf16, #tpu.memory_space<vmem>>, vector<1x62x32xbf16>
    %422 = vector.shape_cast %421 : vector<1x62x32xbf16> to vector<62x32xbf16>
    %c20_368 = arith.constant 20 : index
    %c0_369 = arith.constant 0 : index
    %c0_370 = arith.constant 0 : index
    %423 = vector.load %arg2[%c20_368, %c0_369, %c0_370] : memref<27x32x32xbf16, #tpu.memory_space<vmem>>, vector<1x32x32xbf16>
    %424 = vector.shape_cast %423 : vector<1x32x32xbf16> to vector<32x32xbf16>
    %cst_371 = arith.constant dense<0.000000e+00> : vector<62x32xf32>
    %425 = tpu.matmul %422, %424, %cst_371 {dimension_numbers = #tpu.dot_dimension_numbers<[1], [0], [0], [1], [0, 0, 1, 1], [], []>} : vector<62x32xbf16>, vector<32x32xbf16>, vector<62x32xf32> -> vector<62x32xf32>
    %426 = arith.addf %420, %425 : vector<62x32xf32>
    %c1_372 = arith.constant 1 : index
    %c8_373 = arith.constant 8 : index
    %c0_374 = arith.constant 0 : index
    %427 = vector.load %arg8[%c1_372, %c8_373, %c0_374] : memref<2x80x32xbf16, #tpu.memory_space<vmem>>, vector<1x62x32xbf16>
    %428 = vector.shape_cast %427 : vector<1x62x32xbf16> to vector<62x32xbf16>
    %c21_375 = arith.constant 21 : index
    %c0_376 = arith.constant 0 : index
    %c0_377 = arith.constant 0 : index
    %429 = vector.load %arg2[%c21_375, %c0_376, %c0_377] : memref<27x32x32xbf16, #tpu.memory_space<vmem>>, vector<1x32x32xbf16>
    %430 = vector.shape_cast %429 : vector<1x32x32xbf16> to vector<32x32xbf16>
    %cst_378 = arith.constant dense<0.000000e+00> : vector<62x32xf32>
    %431 = tpu.matmul %428, %430, %cst_378 {dimension_numbers = #tpu.dot_dimension_numbers<[1], [0], [0], [1], [0, 0, 1, 1], [], []>} : vector<62x32xbf16>, vector<32x32xbf16>, vector<62x32xf32> -> vector<62x32xf32>
    %432 = arith.addf %426, %431 : vector<62x32xf32>
    %c1_379 = arith.constant 1 : index
    %c9_380 = arith.constant 9 : index
    %c0_381 = arith.constant 0 : index
    %433 = vector.load %arg8[%c1_379, %c9_380, %c0_381] : memref<2x80x32xbf16, #tpu.memory_space<vmem>>, vector<1x62x32xbf16>
    %434 = vector.shape_cast %433 : vector<1x62x32xbf16> to vector<62x32xbf16>
    %c22_382 = arith.constant 22 : index
    %c0_383 = arith.constant 0 : index
    %c0_384 = arith.constant 0 : index
    %435 = vector.load %arg2[%c22_382, %c0_383, %c0_384] : memref<27x32x32xbf16, #tpu.memory_space<vmem>>, vector<1x32x32xbf16>
    %436 = vector.shape_cast %435 : vector<1x32x32xbf16> to vector<32x32xbf16>
    %cst_385 = arith.constant dense<0.000000e+00> : vector<62x32xf32>
    %437 = tpu.matmul %434, %436, %cst_385 {dimension_numbers = #tpu.dot_dimension_numbers<[1], [0], [0], [1], [0, 0, 1, 1], [], []>} : vector<62x32xbf16>, vector<32x32xbf16>, vector<62x32xf32> -> vector<62x32xf32>
    %438 = arith.addf %432, %437 : vector<62x32xf32>
    %c1_386 = arith.constant 1 : index
    %c10_387 = arith.constant 10 : index
    %c0_388 = arith.constant 0 : index
    %439 = vector.load %arg8[%c1_386, %c10_387, %c0_388] : memref<2x80x32xbf16, #tpu.memory_space<vmem>>, vector<1x62x32xbf16>
    %440 = vector.shape_cast %439 : vector<1x62x32xbf16> to vector<62x32xbf16>
    %c23_389 = arith.constant 23 : index
    %c0_390 = arith.constant 0 : index
    %c0_391 = arith.constant 0 : index
    %441 = vector.load %arg2[%c23_389, %c0_390, %c0_391] : memref<27x32x32xbf16, #tpu.memory_space<vmem>>, vector<1x32x32xbf16>
    %442 = vector.shape_cast %441 : vector<1x32x32xbf16> to vector<32x32xbf16>
    %cst_392 = arith.constant dense<0.000000e+00> : vector<62x32xf32>
    %443 = tpu.matmul %440, %442, %cst_392 {dimension_numbers = #tpu.dot_dimension_numbers<[1], [0], [0], [1], [0, 0, 1, 1], [], []>} : vector<62x32xbf16>, vector<32x32xbf16>, vector<62x32xf32> -> vector<62x32xf32>
    %444 = arith.addf %438, %443 : vector<62x32xf32>
    %c1_393 = arith.constant 1 : index
    %c16_394 = arith.constant 16 : index
    %c0_395 = arith.constant 0 : index
    %445 = vector.load %arg8[%c1_393, %c16_394, %c0_395] : memref<2x80x32xbf16, #tpu.memory_space<vmem>>, vector<1x62x32xbf16>
    %446 = vector.shape_cast %445 : vector<1x62x32xbf16> to vector<62x32xbf16>
    %c24_396 = arith.constant 24 : index
    %c0_397 = arith.constant 0 : index
    %c0_398 = arith.constant 0 : index
    %447 = vector.load %arg2[%c24_396, %c0_397, %c0_398] : memref<27x32x32xbf16, #tpu.memory_space<vmem>>, vector<1x32x32xbf16>
    %448 = vector.shape_cast %447 : vector<1x32x32xbf16> to vector<32x32xbf16>
    %cst_399 = arith.constant dense<0.000000e+00> : vector<62x32xf32>
    %449 = tpu.matmul %446, %448, %cst_399 {dimension_numbers = #tpu.dot_dimension_numbers<[1], [0], [0], [1], [0, 0, 1, 1], [], []>} : vector<62x32xbf16>, vector<32x32xbf16>, vector<62x32xf32> -> vector<62x32xf32>
    %450 = arith.addf %444, %449 : vector<62x32xf32>
    %c1_400 = arith.constant 1 : index
    %c17_401 = arith.constant 17 : index
    %c0_402 = arith.constant 0 : index
    %451 = vector.load %arg8[%c1_400, %c17_401, %c0_402] : memref<2x80x32xbf16, #tpu.memory_space<vmem>>, vector<1x62x32xbf16>
    %452 = vector.shape_cast %451 : vector<1x62x32xbf16> to vector<62x32xbf16>
    %c25_403 = arith.constant 25 : index
    %c0_404 = arith.constant 0 : index
    %c0_405 = arith.constant 0 : index
    %453 = vector.load %arg2[%c25_403, %c0_404, %c0_405] : memref<27x32x32xbf16, #tpu.memory_space<vmem>>, vector<1x32x32xbf16>
    %454 = vector.shape_cast %453 : vector<1x32x32xbf16> to vector<32x32xbf16>
    %cst_406 = arith.constant dense<0.000000e+00> : vector<62x32xf32>
    %455 = tpu.matmul %452, %454, %cst_406 {dimension_numbers = #tpu.dot_dimension_numbers<[1], [0], [0], [1], [0, 0, 1, 1], [], []>} : vector<62x32xbf16>, vector<32x32xbf16>, vector<62x32xf32> -> vector<62x32xf32>
    %456 = arith.addf %450, %455 : vector<62x32xf32>
    %c1_407 = arith.constant 1 : index
    %c18_408 = arith.constant 18 : index
    %c0_409 = arith.constant 0 : index
    %457 = vector.load %arg8[%c1_407, %c18_408, %c0_409] : memref<2x80x32xbf16, #tpu.memory_space<vmem>>, vector<1x62x32xbf16>
    %458 = vector.shape_cast %457 : vector<1x62x32xbf16> to vector<62x32xbf16>
    %c26_410 = arith.constant 26 : index
    %c0_411 = arith.constant 0 : index
    %c0_412 = arith.constant 0 : index
    %459 = vector.load %arg2[%c26_410, %c0_411, %c0_412] : memref<27x32x32xbf16, #tpu.memory_space<vmem>>, vector<1x32x32xbf16>
    %460 = vector.shape_cast %459 : vector<1x32x32xbf16> to vector<32x32xbf16>
    %cst_413 = arith.constant dense<0.000000e+00> : vector<62x32xf32>
    %461 = tpu.matmul %458, %460, %cst_413 {dimension_numbers = #tpu.dot_dimension_numbers<[1], [0], [0], [1], [0, 0, 1, 1], [], []>} : vector<62x32xbf16>, vector<32x32xbf16>, vector<62x32xf32> -> vector<62x32xf32>
    %462 = arith.addf %456, %461 : vector<62x32xf32>
    %463 = vector.broadcast %4 : vector<62x1xf32> to vector<62x32xf32>
    %464 = arith.mulf %409, %463 : vector<62x32xf32>
    %cst_414 = arith.constant dense<0.000000e+00> : vector<32xf32>
    %465 = vector.multi_reduction <add>, %464, %cst_414 [0] : vector<62x32xf32> to vector<32xf32>
    %466 = vector.shape_cast %465 : vector<32xf32> to vector<1x32xf32>
    %467 = vector.broadcast %4 : vector<62x1xf32> to vector<62x32xf32>
    %468 = arith.mulf %462, %467 : vector<62x32xf32>
    %cst_415 = arith.constant dense<0.000000e+00> : vector<32xf32>
    %469 = vector.multi_reduction <add>, %468, %cst_415 [0] : vector<62x32xf32> to vector<32xf32>
    %470 = vector.shape_cast %469 : vector<32xf32> to vector<1x32xf32>
    %471 = arith.addf %466, %470 : vector<1x32xf32>
    %cst_416 = arith.constant 0.010416667 : f32
    %472 = vector.broadcast %cst_416 : f32 to vector<1x32xf32>
    %473 = arith.mulf %471, %472 : vector<1x32xf32>
    %474 = vector.broadcast %473 : vector<1x32xf32> to vector<62x32xf32>
    %475 = arith.subf %409, %474 : vector<62x32xf32>
    %476 = arith.mulf %475, %475 : vector<62x32xf32>
    %477 = vector.broadcast %4 : vector<62x1xf32> to vector<62x32xf32>
    %478 = arith.mulf %476, %477 : vector<62x32xf32>
    %cst_417 = arith.constant dense<0.000000e+00> : vector<32xf32>
    %479 = vector.multi_reduction <add>, %478, %cst_417 [0] : vector<62x32xf32> to vector<32xf32>
    %480 = vector.shape_cast %479 : vector<32xf32> to vector<1x32xf32>
    %481 = vector.broadcast %473 : vector<1x32xf32> to vector<62x32xf32>
    %482 = arith.subf %462, %481 : vector<62x32xf32>
    %483 = arith.mulf %482, %482 : vector<62x32xf32>
    %484 = vector.broadcast %4 : vector<62x1xf32> to vector<62x32xf32>
    %485 = arith.mulf %483, %484 : vector<62x32xf32>
    %cst_418 = arith.constant dense<0.000000e+00> : vector<32xf32>
    %486 = vector.multi_reduction <add>, %485, %cst_418 [0] : vector<62x32xf32> to vector<32xf32>
    %487 = vector.shape_cast %486 : vector<32xf32> to vector<1x32xf32>
    %488 = arith.addf %480, %487 : vector<1x32xf32>
    %cst_419 = arith.constant 0.010416667 : f32
    %489 = vector.broadcast %cst_419 : f32 to vector<1x32xf32>
    %490 = arith.mulf %488, %489 : vector<1x32xf32>
    %c2_420 = arith.constant 2 : index
    %c0_421 = arith.constant 0 : index
    %c0_422 = arith.constant 0 : index
    %491 = vector.load %arg3[%c2_420, %c0_421, %c0_422] : memref<3x1x32xf32, #tpu.memory_space<vmem>>, vector<1x1x32xf32>
    %492 = vector.shape_cast %491 : vector<1x1x32xf32> to vector<1x32xf32>
    %cst_423 = arith.constant 9.99999974E-6 : f32
    %493 = vector.broadcast %cst_423 : f32 to vector<1x32xf32>
    %494 = arith.addf %490, %493 : vector<1x32xf32>
    %495 = math.rsqrt %494 : vector<1x32xf32>
    %496 = arith.mulf %492, %495 : vector<1x32xf32>
    %c2_424 = arith.constant 2 : index
    %c0_425 = arith.constant 0 : index
    %c0_426 = arith.constant 0 : index
    %497 = vector.load %arg4[%c2_424, %c0_425, %c0_426] : memref<3x1x32xf32, #tpu.memory_space<vmem>>, vector<1x1x32xf32>
    %498 = vector.shape_cast %497 : vector<1x1x32xf32> to vector<1x32xf32>
    %499 = arith.mulf %473, %496 : vector<1x32xf32>
    %500 = arith.subf %498, %499 : vector<1x32xf32>
    %501 = vector.broadcast %496 : vector<1x32xf32> to vector<62x32xf32>
    %502 = arith.mulf %409, %501 : vector<62x32xf32>
    %503 = vector.broadcast %500 : vector<1x32xf32> to vector<62x32xf32>
    %504 = arith.addf %502, %503 : vector<62x32xf32>
    %c0_427 = arith.constant 0 : index
    %c9_428 = arith.constant 9 : index
    %c0_429 = arith.constant 0 : index
    %505 = vector.load %arg8[%c0_427, %c9_428, %c0_429] : memref<2x80x32xbf16, #tpu.memory_space<vmem>>, vector<1x62x32xbf16>
    %506 = vector.shape_cast %505 : vector<1x62x32xbf16> to vector<62x32xbf16>
    %507 = arith.extf %506 : vector<62x32xbf16> to vector<62x32xf32>
    %508 = arith.addf %504, %507 : vector<62x32xf32>
    %cst_430 = arith.constant 0.000000e+00 : f32
    %509 = vector.broadcast %cst_430 : f32 to vector<62x32xf32>
    %510 = arith.maximumf %508, %509 : vector<62x32xf32>
    %511 = vector.broadcast %4 : vector<62x1xf32> to vector<62x32xf32>
    %512 = arith.mulf %510, %511 : vector<62x32xf32>
    %513 = arith.truncf %512 : vector<62x32xf32> to vector<62x32xbf16>
    %c0_431 = arith.constant 0 : index
    %c9_432 = arith.constant 9 : index
    %c0_433 = arith.constant 0 : index
    %514 = vector.load %arg6[%c0_431, %c9_432, %c0_433] : memref<2x80x32xbf16, #tpu.memory_space<vmem>>, vector<1x62x32xbf16>
    %515 = vector.shape_cast %514 : vector<1x62x32xbf16> to vector<62x32xbf16>
    %516 = vector.shape_cast %513 : vector<62x32xbf16> to vector<1x62x32xbf16>
    tpu.vector_store %arg6[%c0_431, %c9_432, %c0_433], %516 {strides = array<i32>} : memref<2x80x32xbf16, #tpu.memory_space<vmem>>, vector<1x62x32xbf16>,
    %517 = vector.broadcast %496 : vector<1x32xf32> to vector<62x32xf32>
    %518 = arith.mulf %462, %517 : vector<62x32xf32>
    %519 = vector.broadcast %500 : vector<1x32xf32> to vector<62x32xf32>
    %520 = arith.addf %518, %519 : vector<62x32xf32>
    %c1_434 = arith.constant 1 : index
    %c9_435 = arith.constant 9 : index
    %c0_436 = arith.constant 0 : index
    %521 = vector.load %arg8[%c1_434, %c9_435, %c0_436] : memref<2x80x32xbf16, #tpu.memory_space<vmem>>, vector<1x62x32xbf16>
    %522 = vector.shape_cast %521 : vector<1x62x32xbf16> to vector<62x32xbf16>
    %523 = arith.extf %522 : vector<62x32xbf16> to vector<62x32xf32>
    %524 = arith.addf %520, %523 : vector<62x32xf32>
    %cst_437 = arith.constant 0.000000e+00 : f32
    %525 = vector.broadcast %cst_437 : f32 to vector<62x32xf32>
    %526 = arith.maximumf %524, %525 : vector<62x32xf32>
    %527 = vector.broadcast %4 : vector<62x1xf32> to vector<62x32xf32>
    %528 = arith.mulf %526, %527 : vector<62x32xf32>
    %529 = arith.truncf %528 : vector<62x32xf32> to vector<62x32xbf16>
    %c1_438 = arith.constant 1 : index
    %c9_439 = arith.constant 9 : index
    %c0_440 = arith.constant 0 : index
    %530 = vector.load %arg6[%c1_438, %c9_439, %c0_440] : memref<2x80x32xbf16, #tpu.memory_space<vmem>>, vector<1x62x32xbf16>
    %531 = vector.shape_cast %530 : vector<1x62x32xbf16> to vector<62x32xbf16>
    %532 = vector.shape_cast %529 : vector<62x32xbf16> to vector<1x62x32xbf16>
    tpu.vector_store %arg6[%c1_438, %c9_439, %c0_440], %532 {strides = array<i32>} : memref<2x80x32xbf16, #tpu.memory_space<vmem>>, vector<1x62x32xbf16>,
    return
  }
  func.func @transform_0(%arg0: i32) -> (i32, i32, i32) {
    %c0_i32 = arith.constant 0 : i32
    %c0_i32_0 = arith.constant 0 : i32
    %c0_i32_1 = arith.constant 0 : i32
    %c0_i32_2 = arith.constant 0 : i32
    return %c0_i32, %c0_i32_0, %c0_i32_1 : i32, i32, i32
  }
  func.func @transform_1(%arg0: i32) -> (i32, i32, i32) {
    %c0_i32 = arith.constant 0 : i32
    %c0_i32_0 = arith.constant 0 : i32
    %c0_i32_1 = arith.constant 0 : i32
    %c0_i32_2 = arith.constant 0 : i32
    return %c0_i32, %c0_i32_0, %c0_i32_1 : i32, i32, i32
  }
  func.func @transform_2(%arg0: i32) -> (i32, i32, i32) {
    %c0_i32 = arith.constant 0 : i32
    %c0_i32_0 = arith.constant 0 : i32
    %c0_i32_1 = arith.constant 0 : i32
    %c0_i32_2 = arith.constant 0 : i32
    return %c0_i32, %c0_i32_0, %c0_i32_1 : i32, i32, i32
  }
  func.func @transform_3(%arg0: i32) -> (i32, i32, i32) {
    %c0_i32 = arith.constant 0 : i32
    %c0_i32_0 = arith.constant 0 : i32
    %c0_i32_1 = arith.constant 0 : i32
    %c0_i32_2 = arith.constant 0 : i32
    return %c0_i32, %c0_i32_0, %c0_i32_1 : i32, i32, i32
  }
  func.func @transform_4(%arg0: i32) -> (i32, i32) {
    %c0_i32 = arith.constant 0 : i32
    %c0_i32_0 = arith.constant 0 : i32
    %c0_i32_1 = arith.constant 0 : i32
    return %c0_i32, %c0_i32_0 : i32, i32
  }
  func.func @transform_5(%arg0: i32) -> (i32, i32, i32) {
    %c0_i32 = arith.constant 0 : i32
    %c0_i32_0 = arith.constant 0 : i32
    %c0_i32_1 = arith.constant 0 : i32
    %c0_i32_2 = arith.constant 0 : i32
    return %c0_i32, %c0_i32_0, %c0_i32_1 : i32, i32, i32
  }
}

</mosaic_0001>

<llo_original>
// kernel: tpu_custom_call.1
$region0: #{tpu_custom_call.1}
  #allocation0 [shape = 'u32[]', space=smem, size = 0x4, offset = 0x4, fixed_abs, tag = 'smem constant byte address 0x4 - core index']
  #allocation1 [shape = 'u32[144,128]{1,0:T(1,128)}', space=vmem, size = 0x12000, scoped, tag = 'internal scratch']
  #allocation2 [shape = 'bf16[2,80,32]{2,1,0:T(16,128)(2,1)}', space=vmem, size = 0xa000, scoped, tag = 'scratch operand']
  #allocation3 [shape = 'bf16[2,80,32]{2,1,0:T(16,128)(2,1)}', space=vmem, size = 0xa000, scoped, tag = 'scratch operand']
  %s0 = inlined_call_operand.vmem [shape: bf16[2,80,32], index: 0, kind: input, shape index: {}]
  %s1 = inlined_call_operand.hbm [shape: bf16[27,32,32], index: 1, kind: input, shape index: {}]
  %s2 = inlined_call_operand.vmem [shape: f32[3,1,32], index: 2, kind: input, shape index: {}]
  %s3 = inlined_call_operand.vmem [shape: f32[3,1,32], index: 3, kind: input, shape index: {}]
  %s4 = inlined_call_operand.vmem [shape: f32[62,1], index: 4, kind: input, shape index: {}]
  %s5 = inlined_call_operand.vmem [shape: bf16[2,80,32], index: 5, kind: output, shape index: {}]
  %s6 = sld [smem:[#allocation0]]
  $region34: #{tpu_custom_call.1} parent=0
    _
  %s8 = ssub.s32 1, %s6
  %s9 = scalar_select 0, %s8, %s6
  $region1: #{tpu_custom_call.1} parent=0
    #allocation4 [shape = 'u8[221184]{0}', space=vmem, size = 0x36000, scoped, tag = 'input window, operand 1, single buffered']
    #allocation5 [shape = 's32[1]{0}', space=sflag, size = 0x4, scoped, tag = 'scoped memory for tpu_custom_call.1']
    %10 = vsyncpa [#allocation5], 0
    // Predicated region
    $region2: #{tpu_custom_call.1} parent=1 // pred_check
      _
    $region3: #{tpu_custom_call.1} parent=1 // pred_check_branch
      %12 = sbr.rel (0) target = $region5
    $region4: #{tpu_custom_call.1} parent=1 // pred_region
      _
    $region5: #{tpu_custom_call.1} parent=1 // pred_fallthru
      _
    // Predicated region
    $region6: #{tpu_custom_call.1} parent=1 // pred_check
      _
    $region7: #{tpu_custom_call.1} parent=1 // pred_check_branch
      %14 = sbr.rel (0) target = $region9
    $region8: #{tpu_custom_call.1} parent=1 // pred_region
      %s16 = ssub.s32 6912, 6912
      %17 = vsyncadd [#allocation5], %s16
      %s18 = sshll.u32 [#allocation4], 4
      %s19 = int_to_ptr.vmem [resolvable:$true] %s18
      %24 = dma.hbm_to_vmem [thread:$0]  %s1, 6912, %s19, [#allocation5], 64, 64, 4
    $region9: #{tpu_custom_call.1} parent=1 // pred_fallthru
      _
    // Predicated region
    $region10: #{tpu_custom_call.1} parent=1 // pred_check
      _
    $region11: #{tpu_custom_call.1} parent=1 // pred_check_branch
      %26 = sbr.rel (0) target = $region13
    $region12: #{tpu_custom_call.1} parent=1 // pred_region
      _
    $region13: #{tpu_custom_call.1} parent=1 // pred_fallthru
      _
    // Predicated region
    $region14: #{tpu_custom_call.1} parent=1 // pred_check
      _
    $region15: #{tpu_custom_call.1} parent=1 // pred_check_branch
      %28 = sbr.rel (0) target = $region17
    $region16: #{tpu_custom_call.1} parent=1 // pred_region
      _
    $region17: #{tpu_custom_call.1} parent=1 // pred_fallthru
      _
    // Predicated region
    $region18: #{tpu_custom_call.1} parent=1 // pred_check
      _
    $region19: #{tpu_custom_call.1} parent=1 // pred_check_branch
      %30 = sbr.rel (0) target = $region21
    $region20: #{tpu_custom_call.1} parent=1 // pred_region
      _
    $region21: #{tpu_custom_call.1} parent=1 // pred_fallthru
      _
    // Predicated region
    $region22: #{tpu_custom_call.1} parent=1 // pred_check
      _
    $region23: #{tpu_custom_call.1} parent=1 // pred_check_branch
      %32 = sbr.rel (0) target = $region25
    $region24: #{tpu_custom_call.1} parent=1 // pred_region
      %33 = dma.done [#allocation5], 6912
    $region25: #{tpu_custom_call.1} parent=1 // pred_fallthru
      _
    %vm35 = vcmask 261120
    %36 = vst.msk [vmem:[#allocation2] sm:$0xff] %vm35, 0
    %37 = vst.msk [vmem:[#allocation2 + $0x8] sm:$0xff] %vm35, 0
    %38 = vst.msk [vmem:[#allocation2 + $0x10] sm:$0xff] %vm35, 0
    %39 = vst.msk [vmem:[#allocation2 + $0x18] sm:$0xff] %vm35, 0
    %40 = vst.msk [vmem:[#allocation2 + $0x20] sm:$0xff] %vm35, 0
    %41 = vst.msk [vmem:[#allocation2 + $0x28] sm:$0xff] %vm35, 0
    %42 = vst.msk [vmem:[#allocation2 + $0x30] sm:$0xff] %vm35, 0
    %43 = vst.msk [vmem:[#allocation2 + $0x38] sm:$0xff] %vm35, 0
    %44 = vst.msk [vmem:[#allocation2 + $0x40] sm:$0xff] %vm35, 0
    %45 = vst.msk [vmem:[#allocation2 + $0x48] sm:$0xff] %vm35, 0
    %46 = vst.msk [vmem:[#allocation3] sm:$0xff] %vm35, 0
    %47 = vst.msk [vmem:[#allocation3 + $0x8] sm:$0xff] %vm35, 0
    %48 = vst.msk [vmem:[#allocation3 + $0x10] sm:$0xff] %vm35, 0
    %49 = vst.msk [vmem:[#allocation3 + $0x18] sm:$0xff] %vm35, 0
    %50 = vst.msk [vmem:[#allocation3 + $0x20] sm:$0xff] %vm35, 0
    %51 = vst.msk [vmem:[#allocation3 + $0x28] sm:$0xff] %vm35, 0
    %52 = vst.msk [vmem:[#allocation3 + $0x30] sm:$0xff] %vm35, 0
    %53 = vst.msk [vmem:[#allocation3 + $0x38] sm:$0xff] %vm35, 0
    %54 = vst.msk [vmem:[#allocation3 + $0x40] sm:$0xff] %vm35, 0
    %55 = vst.msk [vmem:[#allocation3 + $0x48] sm:$0xff] %vm35, 0
    %v56 = vld [vmem:[%s4] sm:$0xff]
    %v57 = vld [vmem:[%s4 + $0x8] sm:$0xff]
    %v58 = vld [vmem:[%s4 + $0x10] sm:$0xff]
    %v59 = vld [vmem:[%s4 + $0x18] sm:$0xff]
    %v60 = vld [vmem:[%s4 + $0x20] sm:$0xff]
    %v61 = vld [vmem:[%s4 + $0x28] sm:$0xff]
    %v62 = vld [vmem:[%s4 + $0x30] sm:$0xff]
    %v63 = vld [vmem:[%s4 + $0x38] sm:$0x3f]
    %v64 = vld [vmem:[%s0] sm:$0xf]
    %v65 = vld [vmem:[%s0 + $0x4] sm:$0xf]
    %v66 = vld [vmem:[%s0 + $0x8] sm:$0xf]
    %v67 = vld [vmem:[%s0 + $0xc] sm:$0xf]
    %v68 = vld [vmem:[%s0 + $0x10] sm:$0xf]
    %v69 = vld [vmem:[%s0 + $0x14] sm:$0xf]
    %v70 = vld [vmem:[%s0 + $0x18] sm:$0xf]
    %v71 = vld [vmem:[%s0 + $0x1c] sm:$0x7]
    %v72 = vld [vmem:[#allocation4] sm:$0xf]
    %v73 = vld [vmem:[#allocation4 + $0x4] sm:$0xf]
    %v74 = vld [vmem:[#allocation4 + $0x8] sm:$0xf]
    %v75 = vld [vmem:[#allocation4 + $0xc] sm:$0xf]
    %v76 = vld [vmem:[%s0 + $0x1c] sm:$0xf]
    %s77 = scalar_lea.vmem [#allocation4], 16
    %v78 = vld [vmem:[%s77] sm:$0xf]
    %v79 = vld [vmem:[%s77 + $0x4] sm:$0xf]
    %v80 = vld [vmem:[%s77 + $0x8] sm:$0xf]
    %v81 = vld [vmem:[%s77 + $0xc] sm:$0xf]
    %v90 = vunpack.c.l.b16 %v64
    %v91 = vunpack.c.l.b16 %v65
    %v92 = vunpack.c.l.b16 %v66
    %v93 = vunpack.c.l.b16 %v67
    %v94 = vunpack.c.l.b16 %v68
    %v95 = vunpack.c.l.b16 %v69
    %v96 = vunpack.c.l.b16 %v70
    %v97 = vunpack.c.l.b16 %v76
    %v98 = vpack.c.b16 %v91, %v90
    %v99 = vpack.c.b16 %v93, %v92
    %v100 = vpack.c.b16 %v95, %v94
    %v101 = vpack.c.b16 %v97, %v96
    %vm102 = vsmask.f32 7424
    %v104 = vshrl.u32 %v98, 16
    %v106 = vshll.u32 %v98, 16
    %v108 = vrot.slane %v106, 1
    %v109 = vor.u32 %v104, %v108
    %v111 = vshll.u32 %v99, 16
    %v113 = vrot.slane %v111, 1
    %v114 = vsel %vm102, %v109, %v113
    %v115 = vshrl.u32 %v99, 16
    %v117 = vor.u32 %v115, %v113
    %v119 = vshll.u32 %v100, 16
    %v121 = vrot.slane %v119, 1
    %v122 = vsel %vm102, %v117, %v121
    %v123 = vshrl.u32 %v100, 16
    %v125 = vor.u32 %v123, %v121
    %v127 = vshll.u32 %v101, 16
    %v129 = vrot.slane %v127, 1
    %v130 = vsel %vm102, %v125, %v129
    %v131 = vshrl.u32 %v101, 16
    %v133 = vor.u32 %v131, %v129
    %v138 = vunpack.c.l.b16 %v78
    %v139 = vunpack.c.l.b16 %v79
    %v140 = vunpack.c.l.b16 %v80
    %v141 = vunpack.c.l.b16 %v81
    %v142 = vpack.c.b16 %v139, %v138
    %v143 = vpack.c.b16 %v141, %v140
    %v147 = vsel %vm35, %v114, 0
    %v150 = vsel %vm35, %v122, 0
    %v153 = vsel %vm35, %v130, 0
    %v156 = vsel %vm35, %v133, 0
    %158 = vmatprep.subr.bf16.mxu0 0
    %159 = vmatpush1.bf16.msra.mxu0 %v142
    %160 = vmatprep.subr.bf16.mxu0 0
    %161 = vmatpush1.bf16.msra.mxu0 %v143
    %162 = vmatprep.subr.bf16.mxu0 0
    %163 = vmatpush1.bf16.msra.mxu0 0
    %164 = vmatprep.subr.bf16.mxu0 0
    %165 = vmatpush1.bf16.msra.mxu0 0
    %166 = vmatprep.subr.bf16.mxu0 0
    %167 = vmatpush1.bf16.msra.mxu0 0
    %168 = vmatprep.subr.bf16.mxu0 0
    %169 = vmatpush1.bf16.msra.mxu0 0
    %170 = vmatprep.subr.bf16.mxu0 0
    %171 = vmatpush1.bf16.msra.mxu0 0
    %172 = vmatprep.subr.bf16.mxu0 0
    %173 = vmatpush1.bf16.msra.mxu0 0
    %174 = vmatprep.subr.bf16.mxu0 0
    %175 = vmatpush1.bf16.msra.mxu0 0
    %176 = vmatprep.subr.bf16.mxu0 0
    %177 = vmatpush1.bf16.msra.mxu0 0
    %178 = vmatprep.subr.bf16.mxu0 0
    %179 = vmatpush1.bf16.msra.mxu0 0
    %180 = vmatprep.subr.bf16.mxu0 0
    %181 = vmatpush1.bf16.msra.mxu0 0
    %182 = vmatprep.subr.bf16.mxu0 0
    %183 = vmatpush1.bf16.msra.mxu0 0
    %184 = vmatprep.subr.bf16.mxu0 0
    %185 = vmatpush1.bf16.msra.mxu0 0
    %186 = vmatprep.subr.bf16.mxu0 0
    %187 = vmatpush1.bf16.msra.mxu0 0
    %188 = vmatprep.subr.bf16.mxu0 0
    %189 = vmatpush1.bf16.msra.mxu0 0
    %190 = vmatprep.mubr.bf16.mxu0 0
    %191 = vmatmul.mubr.bf16.gmra.mrb[0].mxu0 %v147
    %v192 = vpop.f32.mrb[0].mxu0
    %v193 = vadd.f32 0.0, %v192
    %v194 = vpop.f32.mrb[0].mxu0
    %v195 = vpop.f32.mrb[0].mxu0
    %v196 = vadd.f32 0.0, %v195
    %v197 = vpop.f32.mrb[0].mxu0
    %198 = vmatprep.mubr.bf16.mxu0 0
    %199 = vmatmul.mubr.bf16.gmra.mrb[0].mxu0 %v150
    %v200 = vpop.f32.mrb[0].mxu0
    %v201 = vadd.f32 0.0, %v200
    %v202 = vpop.f32.mrb[0].mxu0
    %v203 = vpop.f32.mrb[0].mxu0
    %v204 = vadd.f32 0.0, %v203
    %v205 = vpop.f32.mrb[0].mxu0
    %206 = vmatprep.mubr.bf16.mxu0 0
    %207 = vmatmul.mubr.bf16.gmra.mrb[0].mxu0 %v153
    %v208 = vpop.f32.mrb[0].mxu0
    %v209 = vadd.f32 0.0, %v208
    %v210 = vpop.f32.mrb[0].mxu0
    %v211 = vpop.f32.mrb[0].mxu0
    %v212 = vadd.f32 0.0, %v211
    %v213 = vpop.f32.mrb[0].mxu0
    %214 = vmatprep.mubr.bf16.mxu0 0
    %215 = vmatmul.mubr.bf16.gmra.mrb[0].mxu0 %v156
    %v216 = vpop.f32.mrb[0].mxu0
    %v217 = vadd.f32 0.0, %v216
    %v218 = vpop.f32.mrb[0].mxu0
    %v219 = vpop.f32.mrb[0].mxu0
    %v220 = vadd.f32 0.0, %v219
    %v221 = vpop.f32.mrb[0].mxu0
    %222 = vdwg.mxu0
    %v224 = vunpack.c.l.b16 %v71
    %v225 = vpack.c.b16 %v224, %v96
    %v230 = vunpack.c.l.b16 %v72
    %v231 = vunpack.c.l.b16 %v73
    %v232 = vunpack.c.l.b16 %v74
    %v233 = vunpack.c.l.b16 %v75
    %v234 = vpack.c.b16 %v231, %v230
    %v235 = vpack.c.b16 %v233, %v232
    %v238 = vsel %vm35, %v98, 0
    %v240 = vsel %vm35, %v99, 0
    %v242 = vsel %vm35, %v100, 0
    %v245 = vsel %vm35, %v225, 0
    %247 = vmatprep.subr.bf16.mxu0 0
    %248 = vmatpush1.bf16.msra.mxu0 %v234
    %249 = vmatprep.subr.bf16.mxu0 0
    %250 = vmatpush1.bf16.msra.mxu0 %v235
    %251 = vmatprep.subr.bf16.mxu0 0
    %252 = vmatpush1.bf16.msra.mxu0 0
    %253 = vmatprep.subr.bf16.mxu0 0
    %254 = vmatpush1.bf16.msra.mxu0 0
    %255 = vmatprep.subr.bf16.mxu0 0
    %256 = vmatpush1.bf16.msra.mxu0 0
    %257 = vmatprep.subr.bf16.mxu0 0
    %258 = vmatpush1.bf16.msra.mxu0 0
    %259 = vmatprep.subr.bf16.mxu0 0
    %260 = vmatpush1.bf16.msra.mxu0 0
    %261 = vmatprep.subr.bf16.mxu0 0
    %262 = vmatpush1.bf16.msra.mxu0 0
    %263 = vmatprep.subr.bf16.mxu0 0
    %264 = vmatpush1.bf16.msra.mxu0 0
    %265 = vmatprep.subr.bf16.mxu0 0
    %266 = vmatpush1.bf16.msra.mxu0 0
    %267 = vmatprep.subr.bf16.mxu0 0
    %268 = vmatpush1.bf16.msra.mxu0 0
    %269 = vmatprep.subr.bf16.mxu0 0
    %270 = vmatpush1.bf16.msra.mxu0 0
    %271 = vmatprep.subr.bf16.mxu0 0
    %272 = vmatpush1.bf16.msra.mxu0 0
    %273 = vmatprep.subr.bf16.mxu0 0
    %274 = vmatpush1.bf16.msra.mxu0 0
    %275 = vmatprep.subr.bf16.mxu0 0
    %276 = vmatpush1.bf16.msra.mxu0 0
    %277 = vmatprep.subr.bf16.mxu0 0
    %278 = vmatpush1.bf16.msra.mxu0 0
    %279 = vmatprep.mubr.bf16.mxu0 0
    %280 = vmatmul.mubr.bf16.gmra.mrb[0].mxu0 %v238
    %v281 = vpop.f32.mrb[0].mxu0
    %v282 = vadd.f32 %v193, %v281
    %v283 = vpop.f32.mrb[0].mxu0
    %v284 = vpop.f32.mrb[0].mxu0
    %v285 = vadd.f32 %v196, %v284
    %v286 = vpop.f32.mrb[0].mxu0
    %287 = vmatprep.mubr.bf16.mxu0 0
    %288 = vmatmul.mubr.bf16.gmra.mrb[0].mxu0 %v240
    %v289 = vpop.f32.mrb[0].mxu0
    %v290 = vadd.f32 %v201, %v289
    %v291 = vpop.f32.mrb[0].mxu0
    %v292 = vpop.f32.mrb[0].mxu0
    %v293 = vadd.f32 %v204, %v292
    %v294 = vpop.f32.mrb[0].mxu0
    %295 = vmatprep.mubr.bf16.mxu0 0
    %296 = vmatmul.mubr.bf16.gmra.mrb[0].mxu0 %v242
    %v297 = vpop.f32.mrb[0].mxu0
    %v298 = vadd.f32 %v209, %v297
    %v299 = vpop.f32.mrb[0].mxu0
    %v300 = vpop.f32.mrb[0].mxu0
    %v301 = vadd.f32 %v212, %v300
    %v302 = vpop.f32.mrb[0].mxu0
    %303 = vmatprep.mubr.bf16.mxu0 0
    %304 = vmatmul.mubr.bf16.gmra.mrb[0].mxu0 %v245
    %v305 = vpop.f32.mrb[0].mxu0
    %v306 = vadd.f32 %v217, %v305
    %v307 = vpop.f32.mrb[0].mxu0
    %v308 = vpop.f32.mrb[0].mxu0
    %v309 = vadd.f32 %v220, %v308
    %v310 = vpop.f32.mrb[0].mxu0
    %311 = vdwg.mxu0
    %v312 = vld [vmem:[%s0] sm:$0xe]
    %s313 = scalar_lea.vmem [#allocation4], 32
    %v314 = vld [vmem:[%s313] sm:$0xf]
    %v315 = vld [vmem:[%s313 + $0x4] sm:$0xf]
    %v316 = vld [vmem:[%s313 + $0x8] sm:$0xf]
    %v317 = vld [vmem:[%s313 + $0xc] sm:$0xf]
    %v319 = vunpack.c.l.b16 %v312
    %v320 = vpack.c.b16 %v91, %v319
    %vm321 = vcmask 1046528
    %v322 = vrot.slane %v320, 1
    %v323 = vrot.slane %v99, 1
    %v324 = vsel %vm321, %v322, %v323
    %v325 = vrot.slane %v100, 1
    %v326 = vsel %vm321, %v323, %v325
    %v327 = vrot.slane %v101, 1
    %v328 = vsel %vm321, %v325, %v327
    %v333 = vunpack.c.l.b16 %v314
    %v334 = vunpack.c.l.b16 %v315
    %v335 = vunpack.c.l.b16 %v316
    %v336 = vunpack.c.l.b16 %v317
    %v337 = vpack.c.b16 %v334, %v333
    %v338 = vpack.c.b16 %v336, %v335
    %v342 = vsel %vm35, %v324, 0
    %v345 = vsel %vm35, %v326, 0
    %v348 = vsel %vm35, %v328, 0
    %v351 = vsel %vm35, %v327, 0
    %353 = vmatprep.subr.bf16.mxu0 0
    %354 = vmatpush1.bf16.msra.mxu0 %v337
    %355 = vmatprep.subr.bf16.mxu0 0
    %356 = vmatpush1.bf16.msra.mxu0 %v338
    %357 = vmatprep.subr.bf16.mxu0 0
    %358 = vmatpush1.bf16.msra.mxu0 0
    %359 = vmatprep.subr.bf16.mxu0 0
    %360 = vmatpush1.bf16.msra.mxu0 0
    %361 = vmatprep.subr.bf16.mxu0 0
    %362 = vmatpush1.bf16.msra.mxu0 0
    %363 = vmatprep.subr.bf16.mxu0 0
    %364 = vmatpush1.bf16.msra.mxu0 0
    %365 = vmatprep.subr.bf16.mxu0 0
    %366 = vmatpush1.bf16.msra.mxu0 0
    %367 = vmatprep.subr.bf16.mxu0 0
    %368 = vmatpush1.bf16.msra.mxu0 0
    %369 = vmatprep.subr.bf16.mxu0 0
    %370 = vmatpush1.bf16.msra.mxu0 0
    %371 = vmatprep.subr.bf16.mxu0 0
    %372 = vmatpush1.bf16.msra.mxu0 0
    %373 = vmatprep.subr.bf16.mxu0 0
    %374 = vmatpush1.bf16.msra.mxu0 0
    %375 = vmatprep.subr.bf16.mxu0 0
    %376 = vmatpush1.bf16.msra.mxu0 0
    %377 = vmatprep.subr.bf16.mxu0 0
    %378 = vmatpush1.bf16.msra.mxu0 0
    %379 = vmatprep.subr.bf16.mxu0 0
    %380 = vmatpush1.bf16.msra.mxu0 0
    %381 = vmatprep.subr.bf16.mxu0 0
    %382 = vmatpush1.bf16.msra.mxu0 0
    %383 = vmatprep.subr.bf16.mxu0 0
    %384 = vmatpush1.bf16.msra.mxu0 0
    %385 = vmatprep.mubr.bf16.mxu0 0
    %386 = vmatmul.mubr.bf16.gmra.mrb[0].mxu0 %v342
    %v387 = vpop.f32.mrb[0].mxu0
    %v388 = vadd.f32 0.0, %v387
    %v389 = vpop.f32.mrb[0].mxu0
    %v390 = vpop.f32.mrb[0].mxu0
    %v391 = vadd.f32 0.0, %v390
    %v392 = vpop.f32.mrb[0].mxu0
    %393 = vmatprep.mubr.bf16.mxu0 0
    %394 = vmatmul.mubr.bf16.gmra.mrb[0].mxu0 %v345
    %v395 = vpop.f32.mrb[0].mxu0
    %v396 = vadd.f32 0.0, %v395
    %v397 = vpop.f32.mrb[0].mxu0
    %v398 = vpop.f32.mrb[0].mxu0
    %v399 = vadd.f32 0.0, %v398
    %v400 = vpop.f32.mrb[0].mxu0
    %401 = vmatprep.mubr.bf16.mxu0 0
    %402 = vmatmul.mubr.bf16.gmra.mrb[0].mxu0 %v348
    %v403 = vpop.f32.mrb[0].mxu0
    %v404 = vadd.f32 0.0, %v403
    %v405 = vpop.f32.mrb[0].mxu0
    %v406 = vpop.f32.mrb[0].mxu0
    %v407 = vadd.f32 0.0, %v406
    %v408 = vpop.f32.mrb[0].mxu0
    %409 = vmatprep.mubr.bf16.mxu0 0
    %410 = vmatmul.mubr.bf16.gmra.mrb[0].mxu0 %v351
    %v411 = vpop.f32.mrb[0].mxu0
    %v412 = vadd.f32 0.0, %v411
    %v413 = vpop.f32.mrb[0].mxu0
    %v414 = vpop.f32.mrb[0].mxu0
    %v415 = vadd.f32 0.0, %v414
    %v416 = vpop.f32.mrb[0].mxu0
    %417 = vdwg.mxu0
    %v418 = vadd.f32 %v282, %v388
    %v419 = vadd.f32 %v285, %v391
    %v420 = vadd.f32 %v290, %v396
    %v421 = vadd.f32 %v293, %v399
    %v422 = vadd.f32 %v298, %v404
    %v423 = vadd.f32 %v301, %v407
    %v424 = vadd.f32 %v306, %v412
    %v425 = vadd.f32 %v309, %v415
    %v426 = vld [vmem:[%s0 + $0x4] sm:$0xf]
    %v427 = vld [vmem:[%s0 + $0x8] sm:$0xf]
    %v428 = vld [vmem:[%s0 + $0xc] sm:$0xf]
    %v429 = vld [vmem:[%s0 + $0x10] sm:$0xf]
    %v430 = vld [vmem:[%s0 + $0x14] sm:$0xf]
    %v431 = vld [vmem:[%s0 + $0x18] sm:$0xf]
    %v432 = vld [vmem:[%s0 + $0x1c] sm:$0xf]
    %v433 = vld [vmem:[%s0 + $0x20] sm:$0x7]
    %s434 = scalar_lea.vmem [#allocation4], 48
    %v435 = vld [vmem:[%s434] sm:$0xf]
    %v436 = vld [vmem:[%s434 + $0x4] sm:$0xf]
    %v437 = vld [vmem:[%s434 + $0x8] sm:$0xf]
    %v438 = vld [vmem:[%s434 + $0xc] sm:$0xf]
    %v447 = vunpack.c.l.b16 %v426
    %v448 = vunpack.c.l.b16 %v427
    %v449 = vunpack.c.l.b16 %v428
    %v450 = vunpack.c.l.b16 %v429
    %v451 = vunpack.c.l.b16 %v430
    %v452 = vunpack.c.l.b16 %v431
    %v453 = vunpack.c.l.b16 %v432
    %v454 = vunpack.c.l.b16 %v433
    %v455 = vpack.c.b16 %v448, %v447
    %v456 = vpack.c.b16 %v450, %v449
    %v457 = vpack.c.b16 %v452, %v451
    %v458 = vpack.c.b16 %v454, %v453
    %v463 = vunpack.c.l.b16 %v435
    %v464 = vunpack.c.l.b16 %v436
    %v465 = vunpack.c.l.b16 %v437
    %v466 = vunpack.c.l.b16 %v438
    %v467 = vpack.c.b16 %v464, %v463
    %v468 = vpack.c.b16 %v466, %v465
    %v472 = vsel %vm35, %v455, 0
    %v475 = vsel %vm35, %v456, 0
    %v478 = vsel %vm35, %v457, 0
    %v481 = vsel %vm35, %v458, 0
    %483 = vmatprep.subr.bf16.mxu0 0
    %484 = vmatpush1.bf16.msra.mxu0 %v467
    %485 = vmatprep.subr.bf16.mxu0 0
    %486 = vmatpush1.bf16.msra.mxu0 %v468
    %487 = vmatprep.subr.bf16.mxu0 0
    %488 = vmatpush1.bf16.msra.mxu0 0
    %489 = vmatprep.subr.bf16.mxu0 0
    %490 = vmatpush1.bf16.msra.mxu0 0
    %491 = vmatprep.subr.bf16.mxu0 0
    %492 = vmatpush1.bf16.msra.mxu0 0
    %493 = vmatprep.subr.bf16.mxu0 0
    %494 = vmatpush1.bf16.msra.mxu0 0
    %495 = vmatprep.subr.bf16.mxu0 0
    %496 = vmatpush1.bf16.msra.mxu0 0
    %497 = vmatprep.subr.bf16.mxu0 0
    %498 = vmatpush1.bf16.msra.mxu0 0
    %499 = vmatprep.subr.bf16.mxu0 0
    %500 = vmatpush1.bf16.msra.mxu0 0
    %501 = vmatprep.subr.bf16.mxu0 0
    %502 = vmatpush1.bf16.msra.mxu0 0
    %503 = vmatprep.subr.bf16.mxu0 0
    %504 = vmatpush1.bf16.msra.mxu0 0
    %505 = vmatprep.subr.bf16.mxu0 0
    %506 = vmatpush1.bf16.msra.mxu0 0
    %507 = vmatprep.subr.bf16.mxu0 0
    %508 = vmatpush1.bf16.msra.mxu0 0
    %509 = vmatprep.subr.bf16.mxu0 0
    %510 = vmatpush1.bf16.msra.mxu0 0
    %511 = vmatprep.subr.bf16.mxu0 0
    %512 = vmatpush1.bf16.msra.mxu0 0
    %513 = vmatprep.subr.bf16.mxu0 0
    %514 = vmatpush1.bf16.msra.mxu0 0
    %515 = vmatprep.mubr.bf16.mxu0 0
    %516 = vmatmul.mubr.bf16.gmra.mrb[0].mxu0 %v472
    %v517 = vpop.f32.mrb[0].mxu0
    %v518 = vadd.f32 0.0, %v517
    %v519 = vpop.f32.mrb[0].mxu0
    %v520 = vpop.f32.mrb[0].mxu0
    %v521 = vadd.f32 0.0, %v520
    %v522 = vpop.f32.mrb[0].mxu0
    %523 = vmatprep.mubr.bf16.mxu0 0
    %524 = vmatmul.mubr.bf16.gmra.mrb[0].mxu0 %v475
    %v525 = vpop.f32.mrb[0].mxu0
    %v526 = vadd.f32 0.0, %v525
    %v527 = vpop.f32.mrb[0].mxu0
    %v528 = vpop.f32.mrb[0].mxu0
    %v529 = vadd.f32 0.0, %v528
    %v530 = vpop.f32.mrb[0].mxu0
    %531 = vmatprep.mubr.bf16.mxu0 0
    %532 = vmatmul.mubr.bf16.gmra.mrb[0].mxu0 %v478
    %v533 = vpop.f32.mrb[0].mxu0
    %v534 = vadd.f32 0.0, %v533
    %v535 = vpop.f32.mrb[0].mxu0
    %v536 = vpop.f32.mrb[0].mxu0
    %v537 = vadd.f32 0.0, %v536
    %v538 = vpop.f32.mrb[0].mxu0
    %539 = vmatprep.mubr.bf16.mxu0 0
    %540 = vmatmul.mubr.bf16.gmra.mrb[0].mxu0 %v481
    %v541 = vpop.f32.mrb[0].mxu0
    %v542 = vadd.f32 0.0, %v541
    %v543 = vpop.f32.mrb[0].mxu0
    %v544 = vpop.f32.mrb[0].mxu0
    %v545 = vadd.f32 0.0, %v544
    %v546 = vpop.f32.mrb[0].mxu0
    %547 = vdwg.mxu0
    %v548 = vadd.f32 %v418, %v518
    %v549 = vadd.f32 %v419, %v521
    %v550 = vadd.f32 %v420, %v526
    %v551 = vadd.f32 %v421, %v529
    %v552 = vadd.f32 %v422, %v534
    %v553 = vadd.f32 %v423, %v537
    %v554 = vadd.f32 %v424, %v542
    %v555 = vadd.f32 %v425, %v545
    %v556 = vld [vmem:[%s0 + $0x20] sm:$0xf]
    %s557 = scalar_lea.vmem [#allocation4], 64
    %v558 = vld [vmem:[%s557] sm:$0xf]
    %v559 = vld [vmem:[%s557 + $0x4] sm:$0xf]
    %v560 = vld [vmem:[%s557 + $0x8] sm:$0xf]
    %v561 = vld [vmem:[%s557 + $0xc] sm:$0xf]
    %v563 = vunpack.c.l.b16 %v556
    %v564 = vpack.c.b16 %v563, %v453
    %v565 = vshrl.u32 %v455, 16
    %v567 = vshll.u32 %v455, 16
    %v569 = vrot.slane %v567, 1
    %v570 = vor.u32 %v565, %v569
    %v571 = vshll.u32 %v456, 16
    %v573 = vrot.slane %v571, 1
    %v574 = vsel %vm102, %v570, %v573
    %v575 = vshrl.u32 %v456, 16
    %v577 = vor.u32 %v575, %v573
    %v578 = vshll.u32 %v457, 16
    %v580 = vrot.slane %v578, 1
    %v581 = vsel %vm102, %v577, %v580
    %v582 = vshrl.u32 %v457, 16
    %v584 = vor.u32 %v582, %v580
    %v586 = vshll.u32 %v564, 16
    %v588 = vrot.slane %v586, 1
    %v589 = vsel %vm102, %v584, %v588
    %v590 = vshrl.u32 %v564, 16
    %v592 = vor.u32 %v590, %v588
    %v597 = vunpack.c.l.b16 %v558
    %v598 = vunpack.c.l.b16 %v559
    %v599 = vunpack.c.l.b16 %v560
    %v600 = vunpack.c.l.b16 %v561
    %v601 = vpack.c.b16 %v598, %v597
    %v602 = vpack.c.b16 %v600, %v599
    %v606 = vsel %vm35, %v574, 0
    %v609 = vsel %vm35, %v581, 0
    %v612 = vsel %vm35, %v589, 0
    %v615 = vsel %vm35, %v592, 0
    %617 = vmatprep.subr.bf16.mxu0 0
    %618 = vmatpush1.bf16.msra.mxu0 %v601
    %619 = vmatprep.subr.bf16.mxu0 0
    %620 = vmatpush1.bf16.msra.mxu0 %v602
    %621 = vmatprep.subr.bf16.mxu0 0
    %622 = vmatpush1.bf16.msra.mxu0 0
    %623 = vmatprep.subr.bf16.mxu0 0
    %624 = vmatpush1.bf16.msra.mxu0 0
    %625 = vmatprep.subr.bf16.mxu0 0
    %626 = vmatpush1.bf16.msra.mxu0 0
    %627 = vmatprep.subr.bf16.mxu0 0
    %628 = vmatpush1.bf16.msra.mxu0 0
    %629 = vmatprep.subr.bf16.mxu0 0
    %630 = vmatpush1.bf16.msra.mxu0 0
    %631 = vmatprep.subr.bf16.mxu0 0
    %632 = vmatpush1.bf16.msra.mxu0 0
    %633 = vmatprep.subr.bf16.mxu0 0
    %634 = vmatpush1.bf16.msra.mxu0 0
    %635 = vmatprep.subr.bf16.mxu0 0
    %636 = vmatpush1.bf16.msra.mxu0 0
    %637 = vmatprep.subr.bf16.mxu0 0
    %638 = vmatpush1.bf16.msra.mxu0 0
    %639 = vmatprep.subr.bf16.mxu0 0
    %640 = vmatpush1.bf16.msra.mxu0 0
    %641 = vmatprep.subr.bf16.mxu0 0
    %642 = vmatpush1.bf16.msra.mxu0 0
    %643 = vmatprep.subr.bf16.mxu0 0
    %644 = vmatpush1.bf16.msra.mxu0 0
    %645 = vmatprep.subr.bf16.mxu0 0
    %646 = vmatpush1.bf16.msra.mxu0 0
    %647 = vmatprep.subr.bf16.mxu0 0
    %648 = vmatpush1.bf16.msra.mxu0 0
    %649 = vmatprep.mubr.bf16.mxu0 0
    %650 = vmatmul.mubr.bf16.gmra.mrb[0].mxu0 %v606
    %v651 = vpop.f32.mrb[0].mxu0
    %v652 = vadd.f32 0.0, %v651
    %v653 = vpop.f32.mrb[0].mxu0
    %v654 = vpop.f32.mrb[0].mxu0
    %v655 = vadd.f32 0.0, %v654
    %v656 = vpop.f32.mrb[0].mxu0
    %657 = vmatprep.mubr.bf16.mxu0 0
    %658 = vmatmul.mubr.bf16.gmra.mrb[0].mxu0 %v609
    %v659 = vpop.f32.mrb[0].mxu0
    %v660 = vadd.f32 0.0, %v659
    %v661 = vpop.f32.mrb[0].mxu0
    %v662 = vpop.f32.mrb[0].mxu0
    %v663 = vadd.f32 0.0, %v662
    %v664 = vpop.f32.mrb[0].mxu0
    %665 = vmatprep.mubr.bf16.mxu0 0
    %666 = vmatmul.mubr.bf16.gmra.mrb[0].mxu0 %v612
    %v667 = vpop.f32.mrb[0].mxu0
    %v668 = vadd.f32 0.0, %v667
    %v669 = vpop.f32.mrb[0].mxu0
    %v670 = vpop.f32.mrb[0].mxu0
    %v671 = vadd.f32 0.0, %v670
    %v672 = vpop.f32.mrb[0].mxu0
    %673 = vmatprep.mubr.bf16.mxu0 0
    %674 = vmatmul.mubr.bf16.gmra.mrb[0].mxu0 %v615
    %v675 = vpop.f32.mrb[0].mxu0
    %v676 = vadd.f32 0.0, %v675
    %v677 = vpop.f32.mrb[0].mxu0
    %v678 = vpop.f32.mrb[0].mxu0
    %v679 = vadd.f32 0.0, %v678
    %v680 = vpop.f32.mrb[0].mxu0
    %681 = vdwg.mxu0
    %v682 = vadd.f32 %v548, %v652
    %v683 = vadd.f32 %v549, %v655
    %v684 = vadd.f32 %v550, %v660
    %v685 = vadd.f32 %v551, %v663
    %v686 = vadd.f32 %v552, %v668
    %v687 = vadd.f32 %v553, %v671
    %v688 = vadd.f32 %v554, %v676
    %v689 = vadd.f32 %v555, %v679
    %v690 = vld [vmem:[%s0 + $0x4] sm:$0xe]
    %s691 = scalar_lea.vmem [#allocation4], 80
    %v692 = vld [vmem:[%s691] sm:$0xf]
    %v693 = vld [vmem:[%s691 + $0x4] sm:$0xf]
    %v694 = vld [vmem:[%s691 + $0x8] sm:$0xf]
    %v695 = vld [vmem:[%s691 + $0xc] sm:$0xf]
    %v697 = vunpack.c.l.b16 %v690
    %v698 = vpack.c.b16 %v448, %v697
    %v699 = vrot.slane %v698, 1
    %v700 = vrot.slane %v456, 1
    %v701 = vsel %vm321, %v699, %v700
    %v702 = vrot.slane %v457, 1
    %v703 = vsel %vm321, %v700, %v702
    %v704 = vrot.slane %v564, 1
    %v705 = vsel %vm321, %v702, %v704
    %v710 = vunpack.c.l.b16 %v692
    %v711 = vunpack.c.l.b16 %v693
    %v712 = vunpack.c.l.b16 %v694
    %v713 = vunpack.c.l.b16 %v695
    %v714 = vpack.c.b16 %v711, %v710
    %v715 = vpack.c.b16 %v713, %v712
    %v719 = vsel %vm35, %v701, 0
    %v722 = vsel %vm35, %v703, 0
    %v725 = vsel %vm35, %v705, 0
    %v728 = vsel %vm35, %v704, 0
    %730 = vmatprep.subr.bf16.mxu0 0
    %731 = vmatpush1.bf16.msra.mxu0 %v714
    %732 = vmatprep.subr.bf16.mxu0 0
    %733 = vmatpush1.bf16.msra.mxu0 %v715
    %734 = vmatprep.subr.bf16.mxu0 0
    %735 = vmatpush1.bf16.msra.mxu0 0
    %736 = vmatprep.subr.bf16.mxu0 0
    %737 = vmatpush1.bf16.msra.mxu0 0
    %738 = vmatprep.subr.bf16.mxu0 0
    %739 = vmatpush1.bf16.msra.mxu0 0
    %740 = vmatprep.subr.bf16.mxu0 0
    %741 = vmatpush1.bf16.msra.mxu0 0
    %742 = vmatprep.subr.bf16.mxu0 0
    %743 = vmatpush1.bf16.msra.mxu0 0
    %744 = vmatprep.subr.bf16.mxu0 0
    %745 = vmatpush1.bf16.msra.mxu0 0
    %746 = vmatprep.subr.bf16.mxu0 0
    %747 = vmatpush1.bf16.msra.mxu0 0
    %748 = vmatprep.subr.bf16.mxu0 0
    %749 = vmatpush1.bf16.msra.mxu0 0
    %750 = vmatprep.subr.bf16.mxu0 0
    %751 = vmatpush1.bf16.msra.mxu0 0
    %752 = vmatprep.subr.bf16.mxu0 0
    %753 = vmatpush1.bf16.msra.mxu0 0
    %754 = vmatprep.subr.bf16.mxu0 0
    %755 = vmatpush1.bf16.msra.mxu0 0
    %756 = vmatprep.subr.bf16.mxu0 0
    %757 = vmatpush1.bf16.msra.mxu0 0
    %758 = vmatprep.subr.bf16.mxu0 0
    %759 = vmatpush1.bf16.msra.mxu0 0
    %760 = vmatprep.subr.bf16.mxu0 0
    %761 = vmatpush1.bf16.msra.mxu0 0
    %762 = vmatprep.mubr.bf16.mxu0 0
    %763 = vmatmul.mubr.bf16.gmra.mrb[0].mxu0 %v719
    %v764 = vpop.f32.mrb[0].mxu0
    %v765 = vadd.f32 0.0, %v764
    %v766 = vpop.f32.mrb[0].mxu0
    %v767 = vpop.f32.mrb[0].mxu0
    %v768 = vadd.f32 0.0, %v767
    %v769 = vpop.f32.mrb[0].mxu0
    %770 = vmatprep.mubr.bf16.mxu0 0
    %771 = vmatmul.mubr.bf16.gmra.mrb[0].mxu0 %v722
    %v772 = vpop.f32.mrb[0].mxu0
    %v773 = vadd.f32 0.0, %v772
    %v774 = vpop.f32.mrb[0].mxu0
    %v775 = vpop.f32.mrb[0].mxu0
    %v776 = vadd.f32 0.0, %v775
    %v777 = vpop.f32.mrb[0].mxu0
    %778 = vmatprep.mubr.bf16.mxu0 0
    %779 = vmatmul.mubr.bf16.gmra.mrb[0].mxu0 %v725
    %v780 = vpop.f32.mrb[0].mxu0
    %v781 = vadd.f32 0.0, %v780
    %v782 = vpop.f32.mrb[0].mxu0
    %v783 = vpop.f32.mrb[0].mxu0
    %v784 = vadd.f32 0.0, %v783
    %v785 = vpop.f32.mrb[0].mxu0
    %786 = vmatprep.mubr.bf16.mxu0 0
    %787 = vmatmul.mubr.bf16.gmra.mrb[0].mxu0 %v728
    %v788 = vpop.f32.mrb[0].mxu0
    %v789 = vadd.f32 0.0, %v788
    %v790 = vpop.f32.mrb[0].mxu0
    %v791 = vpop.f32.mrb[0].mxu0
    %v792 = vadd.f32 0.0, %v791
    %v793 = vpop.f32.mrb[0].mxu0
    %794 = vdwg.mxu0
    %v795 = vadd.f32 %v682, %v765
    %v796 = vadd.f32 %v683, %v768
    %v797 = vadd.f32 %v684, %v773
    %v798 = vadd.f32 %v685, %v776
    %v799 = vadd.f32 %v686, %v781
    %v800 = vadd.f32 %v687, %v784
    %v801 = vadd.f32 %v688, %v789
    %v802 = vadd.f32 %v689, %v792
    %v803 = vld [vmem:[%s0 + $0x8] sm:$0xf]
    %v804 = vld [vmem:[%s0 + $0xc] sm:$0xf]
    %v805 = vld [vmem:[%s0 + $0x10] sm:$0xf]
    %v806 = vld [vmem:[%s0 + $0x14] sm:$0xf]
    %v807 = vld [vmem:[%s0 + $0x18] sm:$0xf]
    %v808 = vld [vmem:[%s0 + $0x1c] sm:$0xf]
    %v809 = vld [vmem:[%s0 + $0x20] sm:$0xf]
    %v810 = vld [vmem:[%s0 + $0x24] sm:$0x7]
    %s811 = scalar_lea.vmem [#allocation4], 96
    %v812 = vld [vmem:[%s811] sm:$0xf]
    %v813 = vld [vmem:[%s811 + $0x4] sm:$0xf]
    %v814 = vld [vmem:[%s811 + $0x8] sm:$0xf]
    %v815 = vld [vmem:[%s811 + $0xc] sm:$0xf]
    %v824 = vunpack.c.l.b16 %v803
    %v825 = vunpack.c.l.b16 %v804
    %v826 = vunpack.c.l.b16 %v805
    %v827 = vunpack.c.l.b16 %v806
    %v828 = vunpack.c.l.b16 %v807
    %v829 = vunpack.c.l.b16 %v808
    %v830 = vunpack.c.l.b16 %v809
    %v831 = vunpack.c.l.b16 %v810
    %v832 = vpack.c.b16 %v825, %v824
    %v833 = vpack.c.b16 %v827, %v826
    %v834 = vpack.c.b16 %v829, %v828
    %v835 = vpack.c.b16 %v831, %v830
    %v840 = vunpack.c.l.b16 %v812
    %v841 = vunpack.c.l.b16 %v813
    %v842 = vunpack.c.l.b16 %v814
    %v843 = vunpack.c.l.b16 %v815
    %v844 = vpack.c.b16 %v841, %v840
    %v845 = vpack.c.b16 %v843, %v842
    %v849 = vsel %vm35, %v832, 0
    %v852 = vsel %vm35, %v833, 0
    %v855 = vsel %vm35, %v834, 0
    %v858 = vsel %vm35, %v835, 0
    %860 = vmatprep.subr.bf16.mxu0 0
    %861 = vmatpush1.bf16.msra.mxu0 %v844
    %862 = vmatprep.subr.bf16.mxu0 0
    %863 = vmatpush1.bf16.msra.mxu0 %v845
    %864 = vmatprep.subr.bf16.mxu0 0
    %865 = vmatpush1.bf16.msra.mxu0 0
    %866 = vmatprep.subr.bf16.mxu0 0
    %867 = vmatpush1.bf16.msra.mxu0 0
    %868 = vmatprep.subr.bf16.mxu0 0
    %869 = vmatpush1.bf16.msra.mxu0 0
    %870 = vmatprep.subr.bf16.mxu0 0
    %871 = vmatpush1.bf16.msra.mxu0 0
    %872 = vmatprep.subr.bf16.mxu0 0
    %873 = vmatpush1.bf16.msra.mxu0 0
    %874 = vmatprep.subr.bf16.mxu0 0
    %875 = vmatpush1.bf16.msra.mxu0 0
    %876 = vmatprep.subr.bf16.mxu0 0
    %877 = vmatpush1.bf16.msra.mxu0 0
    %878 = vmatprep.subr.bf16.mxu0 0
    %879 = vmatpush1.bf16.msra.mxu0 0
    %880 = vmatprep.subr.bf16.mxu0 0
    %881 = vmatpush1.bf16.msra.mxu0 0
    %882 = vmatprep.subr.bf16.mxu0 0
    %883 = vmatpush1.bf16.msra.mxu0 0
    %884 = vmatprep.subr.bf16.mxu0 0
    %885 = vmatpush1.bf16.msra.mxu0 0
    %886 = vmatprep.subr.bf16.mxu0 0
    %887 = vmatpush1.bf16.msra.mxu0 0
    %888 = vmatprep.subr.bf16.mxu0 0
    %889 = vmatpush1.bf16.msra.mxu0 0
    %890 = vmatprep.subr.bf16.mxu0 0
    %891 = vmatpush1.bf16.msra.mxu0 0
    %892 = vmatprep.mubr.bf16.mxu0 0
    %893 = vmatmul.mubr.bf16.gmra.mrb[0].mxu0 %v849
    %v894 = vpop.f32.mrb[0].mxu0
    %v895 = vadd.f32 0.0, %v894
    %v896 = vpop.f32.mrb[0].mxu0
    %v897 = vpop.f32.mrb[0].mxu0
    %v898 = vadd.f32 0.0, %v897
    %v899 = vpop.f32.mrb[0].mxu0
    %900 = vmatprep.mubr.bf16.mxu0 0
    %901 = vmatmul.mubr.bf16.gmra.mrb[0].mxu0 %v852
    %v902 = vpop.f32.mrb[0].mxu0
    %v903 = vadd.f32 0.0, %v902
    %v904 = vpop.f32.mrb[0].mxu0
    %v905 = vpop.f32.mrb[0].mxu0
    %v906 = vadd.f32 0.0, %v905
    %v907 = vpop.f32.mrb[0].mxu0
    %908 = vmatprep.mubr.bf16.mxu0 0
    %909 = vmatmul.mubr.bf16.gmra.mrb[0].mxu0 %v855
    %v910 = vpop.f32.mrb[0].mxu0
    %v911 = vadd.f32 0.0, %v910
    %v912 = vpop.f32.mrb[0].mxu0
    %v913 = vpop.f32.mrb[0].mxu0
    %v914 = vadd.f32 0.0, %v913
    %v915 = vpop.f32.mrb[0].mxu0
    %916 = vmatprep.mubr.bf16.mxu0 0
    %917 = vmatmul.mubr.bf16.gmra.mrb[0].mxu0 %v858
    %v918 = vpop.f32.mrb[0].mxu0
    %v919 = vadd.f32 0.0, %v918
    %v920 = vpop.f32.mrb[0].mxu0
    %v921 = vpop.f32.mrb[0].mxu0
    %v922 = vadd.f32 0.0, %v921
    %v923 = vpop.f32.mrb[0].mxu0
    %924 = vdwg.mxu0
    %v925 = vadd.f32 %v795, %v895
    %v926 = vadd.f32 %v796, %v898
    %v927 = vadd.f32 %v797, %v903
    %v928 = vadd.f32 %v798, %v906
    %v929 = vadd.f32 %v799, %v911
    %v930 = vadd.f32 %v800, %v914
    %v931 = vadd.f32 %v801, %v919
    %v932 = vadd.f32 %v802, %v922
    %v933 = vld [vmem:[%s0 + $0x24] sm:$0xf]
    %s934 = scalar_lea.vmem [#allocation4], 112
    %v935 = vld [vmem:[%s934] sm:$0xf]
    %v936 = vld [vmem:[%s934 + $0x4] sm:$0xf]
    %v937 = vld [vmem:[%s934 + $0x8] sm:$0xf]
    %v938 = vld [vmem:[%s934 + $0xc] sm:$0xf]
    %v940 = vunpack.c.l.b16 %v933
    %v941 = vpack.c.b16 %v940, %v830
    %v942 = vshrl.u32 %v832, 16
    %v944 = vshll.u32 %v832, 16
    %v946 = vrot.slane %v944, 1
    %v947 = vor.u32 %v942, %v946
    %v948 = vshll.u32 %v833, 16
    %v950 = vrot.slane %v948, 1
    %v951 = vsel %vm102, %v947, %v950
    %v952 = vshrl.u32 %v833, 16
    %v954 = vor.u32 %v952, %v950
    %v955 = vshll.u32 %v834, 16
    %v957 = vrot.slane %v955, 1
    %v958 = vsel %vm102, %v954, %v957
    %v959 = vshrl.u32 %v834, 16
    %v961 = vor.u32 %v959, %v957
    %v963 = vshll.u32 %v941, 16
    %v965 = vrot.slane %v963, 1
    %v966 = vsel %vm102, %v961, %v965
    %v967 = vshrl.u32 %v941, 16
    %v969 = vor.u32 %v967, %v965
    %v974 = vunpack.c.l.b16 %v935
    %v975 = vunpack.c.l.b16 %v936
    %v976 = vunpack.c.l.b16 %v937
    %v977 = vunpack.c.l.b16 %v938
    %v978 = vpack.c.b16 %v975, %v974
    %v979 = vpack.c.b16 %v977, %v976
    %v983 = vsel %vm35, %v951, 0
    %v986 = vsel %vm35, %v958, 0
    %v989 = vsel %vm35, %v966, 0
    %v992 = vsel %vm35, %v969, 0
    %994 = vmatprep.subr.bf16.mxu0 0
    %995 = vmatpush1.bf16.msra.mxu0 %v978
    %996 = vmatprep.subr.bf16.mxu0 0
    %997 = vmatpush1.bf16.msra.mxu0 %v979
    %998 = vmatprep.subr.bf16.mxu0 0
    %999 = vmatpush1.bf16.msra.mxu0 0
    %1000 = vmatprep.subr.bf16.mxu0 0
    %1001 = vmatpush1.bf16.msra.mxu0 0
    %1002 = vmatprep.subr.bf16.mxu0 0
    %1003 = vmatpush1.bf16.msra.mxu0 0
    %1004 = vmatprep.subr.bf16.mxu0 0
    %1005 = vmatpush1.bf16.msra.mxu0 0
    %1006 = vmatprep.subr.bf16.mxu0 0
    %1007 = vmatpush1.bf16.msra.mxu0 0
    %1008 = vmatprep.subr.bf16.mxu0 0
    %1009 = vmatpush1.bf16.msra.mxu0 0
    %1010 = vmatprep.subr.bf16.mxu0 0
    %1011 = vmatpush1.bf16.msra.mxu0 0
    %1012 = vmatprep.subr.bf16.mxu0 0
    %1013 = vmatpush1.bf16.msra.mxu0 0
    %1014 = vmatprep.subr.bf16.mxu0 0
    %1015 = vmatpush1.bf16.msra.mxu0 0
    %1016 = vmatprep.subr.bf16.mxu0 0
    %1017 = vmatpush1.bf16.msra.mxu0 0
    %1018 = vmatprep.subr.bf16.mxu0 0
    %1019 = vmatpush1.bf16.msra.mxu0 0
    %1020 = vmatprep.subr.bf16.mxu0 0
    %1021 = vmatpush1.bf16.msra.mxu0 0
    %1022 = vmatprep.subr.bf16.mxu0 0
    %1023 = vmatpush1.bf16.msra.mxu0 0
    %1024 = vmatprep.subr.bf16.mxu0 0
    %1025 = vmatpush1.bf16.msra.mxu0 0
    %1026 = vmatprep.mubr.bf16.mxu0 0
    %1027 = vmatmul.mubr.bf16.gmra.mrb[0].mxu0 %v983
    %v1028 = vpop.f32.mrb[0].mxu0
    %v1029 = vadd.f32 0.0, %v1028
    %v1030 = vpop.f32.mrb[0].mxu0
    %v1031 = vpop.f32.mrb[0].mxu0
    %v1032 = vadd.f32 0.0, %v1031
    %v1033 = vpop.f32.mrb[0].mxu0
    %1034 = vmatprep.mubr.bf16.mxu0 0
    %1035 = vmatmul.mubr.bf16.gmra.mrb[0].mxu0 %v986
    %v1036 = vpop.f32.mrb[0].mxu0
    %v1037 = vadd.f32 0.0, %v1036
    %v1038 = vpop.f32.mrb[0].mxu0
    %v1039 = vpop.f32.mrb[0].mxu0
    %v1040 = vadd.f32 0.0, %v1039
    %v1041 = vpop.f32.mrb[0].mxu0
    %1042 = vmatprep.mubr.bf16.mxu0 0
    %1043 = vmatmul.mubr.bf16.gmra.mrb[0].mxu0 %v989
    %v1044 = vpop.f32.mrb[0].mxu0
    %v1045 = vadd.f32 0.0, %v1044
    %v1046 = vpop.f32.mrb[0].mxu0
    %v1047 = vpop.f32.mrb[0].mxu0
    %v1048 = vadd.f32 0.0, %v1047
    %v1049 = vpop.f32.mrb[0].mxu0
    %1050 = vmatprep.mubr.bf16.mxu0 0
    %1051 = vmatmul.mubr.bf16.gmra.mrb[0].mxu0 %v992
    %v1052 = vpop.f32.mrb[0].mxu0
    %v1053 = vadd.f32 0.0, %v1052
    %v1054 = vpop.f32.mrb[0].mxu0
    %v1055 = vpop.f32.mrb[0].mxu0
    %v1056 = vadd.f32 0.0, %v1055
    %v1057 = vpop.f32.mrb[0].mxu0
    %1058 = vdwg.mxu0
    %v1059 = vadd.f32 %v925, %v1029
    %v1060 = vadd.f32 %v926, %v1032
    %v1061 = vadd.f32 %v927, %v1037
    %v1062 = vadd.f32 %v928, %v1040
    %v1063 = vadd.f32 %v929, %v1045
    %v1064 = vadd.f32 %v930, %v1048
    %v1065 = vadd.f32 %v931, %v1053
    %v1066 = vadd.f32 %v932, %v1056
    %v1067 = vld [vmem:[%s0 + $0x8] sm:$0xe]
    %s1068 = scalar_lea.vmem [#allocation4], 128
    %v1069 = vld [vmem:[%s1068] sm:$0xf]
    %v1070 = vld [vmem:[%s1068 + $0x4] sm:$0xf]
    %v1071 = vld [vmem:[%s1068 + $0x8] sm:$0xf]
    %v1072 = vld [vmem:[%s1068 + $0xc] sm:$0xf]
    %v1074 = vunpack.c.l.b16 %v1067
    %v1075 = vpack.c.b16 %v825, %v1074
    %v1076 = vrot.slane %v1075, 1
    %v1077 = vrot.slane %v833, 1
    %v1078 = vsel %vm321, %v1076, %v1077
    %v1079 = vrot.slane %v834, 1
    %v1080 = vsel %vm321, %v1077, %v1079
    %v1081 = vrot.slane %v941, 1
    %v1082 = vsel %vm321, %v1079, %v1081
    %v1087 = vunpack.c.l.b16 %v1069
    %v1088 = vunpack.c.l.b16 %v1070
    %v1089 = vunpack.c.l.b16 %v1071
    %v1090 = vunpack.c.l.b16 %v1072
    %v1091 = vpack.c.b16 %v1088, %v1087
    %v1092 = vpack.c.b16 %v1090, %v1089
    %v1096 = vsel %vm35, %v1078, 0
    %v1099 = vsel %vm35, %v1080, 0
    %v1102 = vsel %vm35, %v1082, 0
    %v1105 = vsel %vm35, %v1081, 0
    %1107 = vmatprep.subr.bf16.mxu0 0
    %1108 = vmatpush1.bf16.msra.mxu0 %v1091
    %1109 = vmatprep.subr.bf16.mxu0 0
    %1110 = vmatpush1.bf16.msra.mxu0 %v1092
    %1111 = vmatprep.subr.bf16.mxu0 0
    %1112 = vmatpush1.bf16.msra.mxu0 0
    %1113 = vmatprep.subr.bf16.mxu0 0
    %1114 = vmatpush1.bf16.msra.mxu0 0
    %1115 = vmatprep.subr.bf16.mxu0 0
    %1116 = vmatpush1.bf16.msra.mxu0 0
    %1117 = vmatprep.subr.bf16.mxu0 0
    %1118 = vmatpush1.bf16.msra.mxu0 0
    %1119 = vmatprep.subr.bf16.mxu0 0
    %1120 = vmatpush1.bf16.msra.mxu0 0
    %1121 = vmatprep.subr.bf16.mxu0 0
    %1122 = vmatpush1.bf16.msra.mxu0 0
    %1123 = vmatprep.subr.bf16.mxu0 0
    %1124 = vmatpush1.bf16.msra.mxu0 0
    %1125 = vmatprep.subr.bf16.mxu0 0
    %1126 = vmatpush1.bf16.msra.mxu0 0
    %1127 = vmatprep.subr.bf16.mxu0 0
    %1128 = vmatpush1.bf16.msra.mxu0 0
    %1129 = vmatprep.subr.bf16.mxu0 0
    %1130 = vmatpush1.bf16.msra.mxu0 0
    %1131 = vmatprep.subr.bf16.mxu0 0
    %1132 = vmatpush1.bf16.msra.mxu0 0
    %1133 = vmatprep.subr.bf16.mxu0 0
    %1134 = vmatpush1.bf16.msra.mxu0 0
    %1135 = vmatprep.subr.bf16.mxu0 0
    %1136 = vmatpush1.bf16.msra.mxu0 0
    %1137 = vmatprep.subr.bf16.mxu0 0
    %1138 = vmatpush1.bf16.msra.mxu0 0
    %1139 = vmatprep.mubr.bf16.mxu0 0
    %1140 = vmatmul.mubr.bf16.gmra.mrb[0].mxu0 %v1096
    %v1141 = vpop.f32.mrb[0].mxu0
    %v1142 = vadd.f32 0.0, %v1141
    %v1143 = vpop.f32.mrb[0].mxu0
    %v1144 = vpop.f32.mrb[0].mxu0
    %v1145 = vadd.f32 0.0, %v1144
    %v1146 = vpop.f32.mrb[0].mxu0
    %1147 = vmatprep.mubr.bf16.mxu0 0
    %1148 = vmatmul.mubr.bf16.gmra.mrb[0].mxu0 %v1099
    %v1149 = vpop.f32.mrb[0].mxu0
    %v1150 = vadd.f32 0.0, %v1149
    %v1151 = vpop.f32.mrb[0].mxu0
    %v1152 = vpop.f32.mrb[0].mxu0
    %v1153 = vadd.f32 0.0, %v1152
    %v1154 = vpop.f32.mrb[0].mxu0
    %1155 = vmatprep.mubr.bf16.mxu0 0
    %1156 = vmatmul.mubr.bf16.gmra.mrb[0].mxu0 %v1102
    %v1157 = vpop.f32.mrb[0].mxu0
    %v1158 = vadd.f32 0.0, %v1157
    %v1159 = vpop.f32.mrb[0].mxu0
    %v1160 = vpop.f32.mrb[0].mxu0
    %v1161 = vadd.f32 0.0, %v1160
    %v1162 = vpop.f32.mrb[0].mxu0
    %1163 = vmatprep.mubr.bf16.mxu0 0
    %1164 = vmatmul.mubr.bf16.gmra.mrb[0].mxu0 %v1105
    %v1165 = vpop.f32.mrb[0].mxu0
    %v1166 = vadd.f32 0.0, %v1165
    %v1167 = vpop.f32.mrb[0].mxu0
    %v1168 = vpop.f32.mrb[0].mxu0
    %v1169 = vadd.f32 0.0, %v1168
    %v1170 = vpop.f32.mrb[0].mxu0
    %1171 = vdwg.mxu0
    %v1172 = vadd.f32 %v1059, %v1142
    %v1173 = vadd.f32 %v1060, %v1145
    %v1174 = vadd.f32 %v1061, %v1150
    %v1175 = vadd.f32 %v1062, %v1153
    %v1176 = vadd.f32 %v1063, %v1158
    %v1177 = vadd.f32 %v1064, %v1161
    %v1178 = vadd.f32 %v1065, %v1166
    %v1179 = vadd.f32 %v1066, %v1169
    %s1180 = scalar_lea.vmem %s0, 40
    %v1181 = vld [vmem:[%s1180] sm:$0xf]
    %v1182 = vld [vmem:[%s1180 + $0x4] sm:$0xf]
    %v1183 = vld [vmem:[%s1180 + $0x8] sm:$0xf]
    %v1184 = vld [vmem:[%s1180 + $0xc] sm:$0xf]
    %v1185 = vld [vmem:[%s1180 + $0x10] sm:$0xf]
    %v1186 = vld [vmem:[%s1180 + $0x14] sm:$0xf]
    %v1187 = vld [vmem:[%s1180 + $0x18] sm:$0xf]
    %v1188 = vld [vmem:[%s1180 + $0x1c] sm:$0x7]
    %v1189 = vld [vmem:[%s1180 + $0x1c] sm:$0xf]
    %v1198 = vunpack.c.l.b16 %v1181
    %v1199 = vunpack.c.l.b16 %v1182
    %v1200 = vunpack.c.l.b16 %v1183
    %v1201 = vunpack.c.l.b16 %v1184
    %v1202 = vunpack.c.l.b16 %v1185
    %v1203 = vunpack.c.l.b16 %v1186
    %v1204 = vunpack.c.l.b16 %v1187
    %v1205 = vunpack.c.l.b16 %v1189
    %v1206 = vpack.c.b16 %v1199, %v1198
    %v1207 = vpack.c.b16 %v1201, %v1200
    %v1208 = vpack.c.b16 %v1203, %v1202
    %v1209 = vpack.c.b16 %v1205, %v1204
    %v1211 = vshrl.u32 %v1206, 16
    %v1213 = vshll.u32 %v1206, 16
    %v1215 = vrot.slane %v1213, 1
    %v1216 = vor.u32 %v1211, %v1215
    %v1218 = vshll.u32 %v1207, 16
    %v1220 = vrot.slane %v1218, 1
    %v1221 = vsel %vm102, %v1216, %v1220
    %v1222 = vshrl.u32 %v1207, 16
    %v1224 = vor.u32 %v1222, %v1220
    %v1226 = vshll.u32 %v1208, 16
    %v1228 = vrot.slane %v1226, 1
    %v1229 = vsel %vm102, %v1224, %v1228
    %v1230 = vshrl.u32 %v1208, 16
    %v1232 = vor.u32 %v1230, %v1228
    %v1234 = vshll.u32 %v1209, 16
    %v1236 = vrot.slane %v1234, 1
    %v1237 = vsel %vm102, %v1232, %v1236
    %v1238 = vshrl.u32 %v1209, 16
    %v1240 = vor.u32 %v1238, %v1236
    %v1242 = vsel %vm35, %v1221, 0
    %v1245 = vsel %vm35, %v1229, 0
    %v1248 = vsel %vm35, %v1237, 0
    %v1251 = vsel %vm35, %v1240, 0
    %1253 = vmatprep.subr.bf16.mxu0 0
    %1254 = vmatpush1.bf16.msra.mxu0 %v142
    %1255 = vmatprep.subr.bf16.mxu0 0
    %1256 = vmatpush1.bf16.msra.mxu0 %v143
    %1257 = vmatprep.subr.bf16.mxu0 0
    %1258 = vmatpush1.bf16.msra.mxu0 0
    %1259 = vmatprep.subr.bf16.mxu0 0
    %1260 = vmatpush1.bf16.msra.mxu0 0
    %1261 = vmatprep.subr.bf16.mxu0 0
    %1262 = vmatpush1.bf16.msra.mxu0 0
    %1263 = vmatprep.subr.bf16.mxu0 0
    %1264 = vmatpush1.bf16.msra.mxu0 0
    %1265 = vmatprep.subr.bf16.mxu0 0
    %1266 = vmatpush1.bf16.msra.mxu0 0
    %1267 = vmatprep.subr.bf16.mxu0 0
    %1268 = vmatpush1.bf16.msra.mxu0 0
    %1269 = vmatprep.subr.bf16.mxu0 0
    %1270 = vmatpush1.bf16.msra.mxu0 0
    %1271 = vmatprep.subr.bf16.mxu0 0
    %1272 = vmatpush1.bf16.msra.mxu0 0
    %1273 = vmatprep.subr.bf16.mxu0 0
    %1274 = vmatpush1.bf16.msra.mxu0 0
    %1275 = vmatprep.subr.bf16.mxu0 0
    %1276 = vmatpush1.bf16.msra.mxu0 0
    %1277 = vmatprep.subr.bf16.mxu0 0
    %1278 = vmatpush1.bf16.msra.mxu0 0
    %1279 = vmatprep.subr.bf16.mxu0 0
    %1280 = vmatpush1.bf16.msra.mxu0 0
    %1281 = vmatprep.subr.bf16.mxu0 0
    %1282 = vmatpush1.bf16.msra.mxu0 0
    %1283 = vmatprep.subr.bf16.mxu0 0
    %1284 = vmatpush1.bf16.msra.mxu0 0
    %1285 = vmatprep.mubr.bf16.mxu0 0
    %1286 = vmatmul.mubr.bf16.gmra.mrb[0].mxu0 %v1242
    %v1287 = vpop.f32.mrb[0].mxu0
    %v1288 = vadd.f32 0.0, %v1287
    %v1289 = vpop.f32.mrb[0].mxu0
    %v1290 = vpop.f32.mrb[0].mxu0
    %v1291 = vadd.f32 0.0, %v1290
    %v1292 = vpop.f32.mrb[0].mxu0
    %1293 = vmatprep.mubr.bf16.mxu0 0
    %1294 = vmatmul.mubr.bf16.gmra.mrb[0].mxu0 %v1245
    %v1295 = vpop.f32.mrb[0].mxu0
    %v1296 = vadd.f32 0.0, %v1295
    %v1297 = vpop.f32.mrb[0].mxu0
    %v1298 = vpop.f32.mrb[0].mxu0
    %v1299 = vadd.f32 0.0, %v1298
    %v1300 = vpop.f32.mrb[0].mxu0
    %1301 = vmatprep.mubr.bf16.mxu0 0
    %1302 = vmatmul.mubr.bf16.gmra.mrb[0].mxu0 %v1248
    %v1303 = vpop.f32.mrb[0].mxu0
    %v1304 = vadd.f32 0.0, %v1303
    %v1305 = vpop.f32.mrb[0].mxu0
    %v1306 = vpop.f32.mrb[0].mxu0
    %v1307 = vadd.f32 0.0, %v1306
    %v1308 = vpop.f32.mrb[0].mxu0
    %1309 = vmatprep.mubr.bf16.mxu0 0
    %1310 = vmatmul.mubr.bf16.gmra.mrb[0].mxu0 %v1251
    %v1311 = vpop.f32.mrb[0].mxu0
    %v1312 = vadd.f32 0.0, %v1311
    %v1313 = vpop.f32.mrb[0].mxu0
    %v1314 = vpop.f32.mrb[0].mxu0
    %v1315 = vadd.f32 0.0, %v1314
    %v1316 = vpop.f32.mrb[0].mxu0
    %1317 = vdwg.mxu0
    %v1319 = vunpack.c.l.b16 %v1188
    %v1320 = vpack.c.b16 %v1319, %v1204
    %v1321 = vsel %vm35, %v1206, 0
    %v1323 = vsel %vm35, %v1207, 0
    %v1325 = vsel %vm35, %v1208, 0
    %v1328 = vsel %vm35, %v1320, 0
    %1330 = vmatprep.subr.bf16.mxu0 0
    %1331 = vmatpush1.bf16.msra.mxu0 %v234
    %1332 = vmatprep.subr.bf16.mxu0 0
    %1333 = vmatpush1.bf16.msra.mxu0 %v235
    %1334 = vmatprep.subr.bf16.mxu0 0
    %1335 = vmatpush1.bf16.msra.mxu0 0
    %1336 = vmatprep.subr.bf16.mxu0 0
    %1337 = vmatpush1.bf16.msra.mxu0 0
    %1338 = vmatprep.subr.bf16.mxu0 0
    %1339 = vmatpush1.bf16.msra.mxu0 0
    %1340 = vmatprep.subr.bf16.mxu0 0
    %1341 = vmatpush1.bf16.msra.mxu0 0
    %1342 = vmatprep.subr.bf16.mxu0 0
    %1343 = vmatpush1.bf16.msra.mxu0 0
    %1344 = vmatprep.subr.bf16.mxu0 0
    %1345 = vmatpush1.bf16.msra.mxu0 0
    %1346 = vmatprep.subr.bf16.mxu0 0
    %1347 = vmatpush1.bf16.msra.mxu0 0
    %1348 = vmatprep.subr.bf16.mxu0 0
    %1349 = vmatpush1.bf16.msra.mxu0 0
    %1350 = vmatprep.subr.bf16.mxu0 0
    %1351 = vmatpush1.bf16.msra.mxu0 0
    %1352 = vmatprep.subr.bf16.mxu0 0
    %1353 = vmatpush1.bf16.msra.mxu0 0
    %1354 = vmatprep.subr.bf16.mxu0 0
    %1355 = vmatpush1.bf16.msra.mxu0 0
    %1356 = vmatprep.subr.bf16.mxu0 0
    %1357 = vmatpush1.bf16.msra.mxu0 0
    %1358 = vmatprep.subr.bf16.mxu0 0
    %1359 = vmatpush1.bf16.msra.mxu0 0
    %1360 = vmatprep.subr.bf16.mxu0 0
    %1361 = vmatpush1.bf16.msra.mxu0 0
    %1362 = vmatprep.mubr.bf16.mxu0 0
    %1363 = vmatmul.mubr.bf16.gmra.mrb[0].mxu0 %v1321
    %v1364 = vpop.f32.mrb[0].mxu0
    %v1365 = vadd.f32 %v1288, %v1364
    %v1366 = vpop.f32.mrb[0].mxu0
    %v1367 = vpop.f32.mrb[0].mxu0
    %v1368 = vadd.f32 %v1291, %v1367
    %v1369 = vpop.f32.mrb[0].mxu0
    %1370 = vmatprep.mubr.bf16.mxu0 0
    %1371 = vmatmul.mubr.bf16.gmra.mrb[0].mxu0 %v1323
    %v1372 = vpop.f32.mrb[0].mxu0
    %v1373 = vadd.f32 %v1296, %v1372
    %v1374 = vpop.f32.mrb[0].mxu0
    %v1375 = vpop.f32.mrb[0].mxu0
    %v1376 = vadd.f32 %v1299, %v1375
    %v1377 = vpop.f32.mrb[0].mxu0
    %1378 = vmatprep.mubr.bf16.mxu0 0
    %1379 = vmatmul.mubr.bf16.gmra.mrb[0].mxu0 %v1325
    %v1380 = vpop.f32.mrb[0].mxu0
    %v1381 = vadd.f32 %v1304, %v1380
    %v1382 = vpop.f32.mrb[0].mxu0
    %v1383 = vpop.f32.mrb[0].mxu0
    %v1384 = vadd.f32 %v1307, %v1383
    %v1385 = vpop.f32.mrb[0].mxu0
    %1386 = vmatprep.mubr.bf16.mxu0 0
    %1387 = vmatmul.mubr.bf16.gmra.mrb[0].mxu0 %v1328
    %v1388 = vpop.f32.mrb[0].mxu0
    %v1389 = vadd.f32 %v1312, %v1388
    %v1390 = vpop.f32.mrb[0].mxu0
    %v1391 = vpop.f32.mrb[0].mxu0
    %v1392 = vadd.f32 %v1315, %v1391
    %v1393 = vpop.f32.mrb[0].mxu0
    %1394 = vdwg.mxu0
    %v1395 = vld [vmem:[%s1180] sm:$0xe]
    %v1397 = vunpack.c.l.b16 %v1395
    %v1398 = vpack.c.b16 %v1199, %v1397
    %v1399 = vrot.slane %v1398, 1
    %v1400 = vrot.slane %v1207, 1
    %v1401 = vsel %vm321, %v1399, %v1400
    %v1402 = vrot.slane %v1208, 1
    %v1403 = vsel %vm321, %v1400, %v1402
    %v1404 = vrot.slane %v1209, 1
    %v1405 = vsel %vm321, %v1402, %v1404
    %v1407 = vsel %vm35, %v1401, 0
    %v1410 = vsel %vm35, %v1403, 0
    %v1413 = vsel %vm35, %v1405, 0
    %v1416 = vsel %vm35, %v1404, 0
    %1418 = vmatprep.subr.bf16.mxu0 0
    %1419 = vmatpush1.bf16.msra.mxu0 %v337
    %1420 = vmatprep.subr.bf16.mxu0 0
    %1421 = vmatpush1.bf16.msra.mxu0 %v338
    %1422 = vmatprep.subr.bf16.mxu0 0
    %1423 = vmatpush1.bf16.msra.mxu0 0
    %1424 = vmatprep.subr.bf16.mxu0 0
    %1425 = vmatpush1.bf16.msra.mxu0 0
    %1426 = vmatprep.subr.bf16.mxu0 0
    %1427 = vmatpush1.bf16.msra.mxu0 0
    %1428 = vmatprep.subr.bf16.mxu0 0
    %1429 = vmatpush1.bf16.msra.mxu0 0
    %1430 = vmatprep.subr.bf16.mxu0 0
    %1431 = vmatpush1.bf16.msra.mxu0 0
    %1432 = vmatprep.subr.bf16.mxu0 0
    %1433 = vmatpush1.bf16.msra.mxu0 0
    %1434 = vmatprep.subr.bf16.mxu0 0
    %1435 = vmatpush1.bf16.msra.mxu0 0
    %1436 = vmatprep.subr.bf16.mxu0 0
    %1437 = vmatpush1.bf16.msra.mxu0 0
    %1438 = vmatprep.subr.bf16.mxu0 0
    %1439 = vmatpush1.bf16.msra.mxu0 0
    %1440 = vmatprep.subr.bf16.mxu0 0
    %1441 = vmatpush1.bf16.msra.mxu0 0
    %1442 = vmatprep.subr.bf16.mxu0 0
    %1443 = vmatpush1.bf16.msra.mxu0 0
    %1444 = vmatprep.subr.bf16.mxu0 0
    %1445 = vmatpush1.bf16.msra.mxu0 0
    %1446 = vmatprep.subr.bf16.mxu0 0
    %1447 = vmatpush1.bf16.msra.mxu0 0
    %1448 = vmatprep.subr.bf16.mxu0 0
    %1449 = vmatpush1.bf16.msra.mxu0 0
    %1450 = vmatprep.mubr.bf16.mxu0 0
    %1451 = vmatmul.mubr.bf16.gmra.mrb[0].mxu0 %v1407
    %v1452 = vpop.f32.mrb[0].mxu0
    %v1453 = vadd.f32 0.0, %v1452
    %v1454 = vpop.f32.mrb[0].mxu0
    %v1455 = vpop.f32.mrb[0].mxu0
    %v1456 = vadd.f32 0.0, %v1455
    %v1457 = vpop.f32.mrb[0].mxu0
    %1458 = vmatprep.mubr.bf16.mxu0 0
    %1459 = vmatmul.mubr.bf16.gmra.mrb[0].mxu0 %v1410
    %v1460 = vpop.f32.mrb[0].mxu0
    %v1461 = vadd.f32 0.0, %v1460
    %v1462 = vpop.f32.mrb[0].mxu0
    %v1463 = vpop.f32.mrb[0].mxu0
    %v1464 = vadd.f32 0.0, %v1463
    %v1465 = vpop.f32.mrb[0].mxu0
    %1466 = vmatprep.mubr.bf16.mxu0 0
    %1467 = vmatmul.mubr.bf16.gmra.mrb[0].mxu0 %v1413
    %v1468 = vpop.f32.mrb[0].mxu0
    %v1469 = vadd.f32 0.0, %v1468
    %v1470 = vpop.f32.mrb[0].mxu0
    %v1471 = vpop.f32.mrb[0].mxu0
    %v1472 = vadd.f32 0.0, %v1471
    %v1473 = vpop.f32.mrb[0].mxu0
    %1474 = vmatprep.mubr.bf16.mxu0 0
    %1475 = vmatmul.mubr.bf16.gmra.mrb[0].mxu0 %v1416
    %v1476 = vpop.f32.mrb[0].mxu0
    %v1477 = vadd.f32 0.0, %v1476
    %v1478 = vpop.f32.mrb[0].mxu0
    %v1479 = vpop.f32.mrb[0].mxu0
    %v1480 = vadd.f32 0.0, %v1479
    %v1481 = vpop.f32.mrb[0].mxu0
    %1482 = vdwg.mxu0
    %v1483 = vadd.f32 %v1365, %v1453
    %v1484 = vadd.f32 %v1368, %v1456
    %v1485 = vadd.f32 %v1373, %v1461
    %v1486 = vadd.f32 %v1376, %v1464
    %v1487 = vadd.f32 %v1381, %v1469
    %v1488 = vadd.f32 %v1384, %v1472
    %v1489 = vadd.f32 %v1389, %v1477
    %v1490 = vadd.f32 %v1392, %v1480
    %v1491 = vld [vmem:[%s1180 + $0x4] sm:$0xf]
    %v1492 = vld [vmem:[%s1180 + $0x8] sm:$0xf]
    %v1493 = vld [vmem:[%s1180 + $0xc] sm:$0xf]
    %v1494 = vld [vmem:[%s1180 + $0x10] sm:$0xf]
    %v1495 = vld [vmem:[%s1180 + $0x14] sm:$0xf]
    %v1496 = vld [vmem:[%s1180 + $0x18] sm:$0xf]
    %v1497 = vld [vmem:[%s1180 + $0x1c] sm:$0xf]
    %v1498 = vld [vmem:[%s1180 + $0x20] sm:$0x7]
    %v1507 = vunpack.c.l.b16 %v1491
    %v1508 = vunpack.c.l.b16 %v1492
    %v1509 = vunpack.c.l.b16 %v1493
    %v1510 = vunpack.c.l.b16 %v1494
    %v1511 = vunpack.c.l.b16 %v1495
    %v1512 = vunpack.c.l.b16 %v1496
    %v1513 = vunpack.c.l.b16 %v1497
    %v1514 = vunpack.c.l.b16 %v1498
    %v1515 = vpack.c.b16 %v1508, %v1507
    %v1516 = vpack.c.b16 %v1510, %v1509
    %v1517 = vpack.c.b16 %v1512, %v1511
    %v1518 = vpack.c.b16 %v1514, %v1513
    %v1520 = vsel %vm35, %v1515, 0
    %v1523 = vsel %vm35, %v1516, 0
    %v1526 = vsel %vm35, %v1517, 0
    %v1529 = vsel %vm35, %v1518, 0
    %1531 = vmatprep.subr.bf16.mxu0 0
    %1532 = vmatpush1.bf16.msra.mxu0 %v467
    %1533 = vmatprep.subr.bf16.mxu0 0
    %1534 = vmatpush1.bf16.msra.mxu0 %v468
    %1535 = vmatprep.subr.bf16.mxu0 0
    %1536 = vmatpush1.bf16.msra.mxu0 0
    %1537 = vmatprep.subr.bf16.mxu0 0
    %1538 = vmatpush1.bf16.msra.mxu0 0
    %1539 = vmatprep.subr.bf16.mxu0 0
    %1540 = vmatpush1.bf16.msra.mxu0 0
    %1541 = vmatprep.subr.bf16.mxu0 0
    %1542 = vmatpush1.bf16.msra.mxu0 0
    %1543 = vmatprep.subr.bf16.mxu0 0
    %1544 = vmatpush1.bf16.msra.mxu0 0
    %1545 = vmatprep.subr.bf16.mxu0 0
    %1546 = vmatpush1.bf16.msra.mxu0 0
    %1547 = vmatprep.subr.bf16.mxu0 0
    %1548 = vmatpush1.bf16.msra.mxu0 0
    %1549 = vmatprep.subr.bf16.mxu0 0
    %1550 = vmatpush1.bf16.msra.mxu0 0
    %1551 = vmatprep.subr.bf16.mxu0 0
    %1552 = vmatpush1.bf16.msra.mxu0 0
    %1553 = vmatprep.subr.bf16.mxu0 0
    %1554 = vmatpush1.bf16.msra.mxu0 0
    %1555 = vmatprep.subr.bf16.mxu0 0
    %1556 = vmatpush1.bf16.msra.mxu0 0
    %1557 = vmatprep.subr.bf16.mxu0 0
    %1558 = vmatpush1.bf16.msra.mxu0 0
    %1559 = vmatprep.subr.bf16.mxu0 0
    %1560 = vmatpush1.bf16.msra.mxu0 0
    %1561 = vmatprep.subr.bf16.mxu0 0
    %1562 = vmatpush1.bf16.msra.mxu0 0
    %1563 = vmatprep.mubr.bf16.mxu0 0
    %1564 = vmatmul.mubr.bf16.gmra.mrb[0].mxu0 %v1520
    %v1565 = vpop.f32.mrb[0].mxu0
    %v1566 = vadd.f32 0.0, %v1565
    %v1567 = vpop.f32.mrb[0].mxu0
    %v1568 = vpop.f32.mrb[0].mxu0
    %v1569 = vadd.f32 0.0, %v1568
    %v1570 = vpop.f32.mrb[0].mxu0
    %1571 = vmatprep.mubr.bf16.mxu0 0
    %1572 = vmatmul.mubr.bf16.gmra.mrb[0].mxu0 %v1523
    %v1573 = vpop.f32.mrb[0].mxu0
    %v1574 = vadd.f32 0.0, %v1573
    %v1575 = vpop.f32.mrb[0].mxu0
    %v1576 = vpop.f32.mrb[0].mxu0
    %v1577 = vadd.f32 0.0, %v1576
    %v1578 = vpop.f32.mrb[0].mxu0
    %1579 = vmatprep.mubr.bf16.mxu0 0
    %1580 = vmatmul.mubr.bf16.gmra.mrb[0].mxu0 %v1526
    %v1581 = vpop.f32.mrb[0].mxu0
    %v1582 = vadd.f32 0.0, %v1581
    %v1583 = vpop.f32.mrb[0].mxu0
    %v1584 = vpop.f32.mrb[0].mxu0
    %v1585 = vadd.f32 0.0, %v1584
    %v1586 = vpop.f32.mrb[0].mxu0
    %1587 = vmatprep.mubr.bf16.mxu0 0
    %1588 = vmatmul.mubr.bf16.gmra.mrb[0].mxu0 %v1529
    %v1589 = vpop.f32.mrb[0].mxu0
    %v1590 = vadd.f32 0.0, %v1589
    %v1591 = vpop.f32.mrb[0].mxu0
    %v1592 = vpop.f32.mrb[0].mxu0
    %v1593 = vadd.f32 0.0, %v1592
    %v1594 = vpop.f32.mrb[0].mxu0
    %1595 = vdwg.mxu0
    %v1596 = vadd.f32 %v1483, %v1566
    %v1597 = vadd.f32 %v1484, %v1569
    %v1598 = vadd.f32 %v1485, %v1574
    %v1599 = vadd.f32 %v1486, %v1577
    %v1600 = vadd.f32 %v1487, %v1582
    %v1601 = vadd.f32 %v1488, %v1585
    %v1602 = vadd.f32 %v1489, %v1590
    %v1603 = vadd.f32 %v1490, %v1593
    %v1604 = vld [vmem:[%s1180 + $0x20] sm:$0xf]
    %v1606 = vunpack.c.l.b16 %v1604
    %v1607 = vpack.c.b16 %v1606, %v1513
    %v1608 = vshrl.u32 %v1515, 16
    %v1610 = vshll.u32 %v1515, 16
    %v1612 = vrot.slane %v1610, 1
    %v1613 = vor.u32 %v1608, %v1612
    %v1614 = vshll.u32 %v1516, 16
    %v1616 = vrot.slane %v1614, 1
    %v1617 = vsel %vm102, %v1613, %v1616
    %v1618 = vshrl.u32 %v1516, 16
    %v1620 = vor.u32 %v1618, %v1616
    %v1621 = vshll.u32 %v1517, 16
    %v1623 = vrot.slane %v1621, 1
    %v1624 = vsel %vm102, %v1620, %v1623
    %v1625 = vshrl.u32 %v1517, 16
    %v1627 = vor.u32 %v1625, %v1623
    %v1629 = vshll.u32 %v1607, 16
    %v1631 = vrot.slane %v1629, 1
    %v1632 = vsel %vm102, %v1627, %v1631
    %v1633 = vshrl.u32 %v1607, 16
    %v1635 = vor.u32 %v1633, %v1631
    %v1637 = vsel %vm35, %v1617, 0
    %v1640 = vsel %vm35, %v1624, 0
    %v1643 = vsel %vm35, %v1632, 0
    %v1646 = vsel %vm35, %v1635, 0
    %1648 = vmatprep.subr.bf16.mxu0 0
    %1649 = vmatpush1.bf16.msra.mxu0 %v601
    %1650 = vmatprep.subr.bf16.mxu0 0
    %1651 = vmatpush1.bf16.msra.mxu0 %v602
    %1652 = vmatprep.subr.bf16.mxu0 0
    %1653 = vmatpush1.bf16.msra.mxu0 0
    %1654 = vmatprep.subr.bf16.mxu0 0
    %1655 = vmatpush1.bf16.msra.mxu0 0
    %1656 = vmatprep.subr.bf16.mxu0 0
    %1657 = vmatpush1.bf16.msra.mxu0 0
    %1658 = vmatprep.subr.bf16.mxu0 0
    %1659 = vmatpush1.bf16.msra.mxu0 0
    %1660 = vmatprep.subr.bf16.mxu0 0
    %1661 = vmatpush1.bf16.msra.mxu0 0
    %1662 = vmatprep.subr.bf16.mxu0 0
    %1663 = vmatpush1.bf16.msra.mxu0 0
    %1664 = vmatprep.subr.bf16.mxu0 0
    %1665 = vmatpush1.bf16.msra.mxu0 0
    %1666 = vmatprep.subr.bf16.mxu0 0
    %1667 = vmatpush1.bf16.msra.mxu0 0
    %1668 = vmatprep.subr.bf16.mxu0 0
    %1669 = vmatpush1.bf16.msra.mxu0 0
    %1670 = vmatprep.subr.bf16.mxu0 0
    %1671 = vmatpush1.bf16.msra.mxu0 0
    %1672 = vmatprep.subr.bf16.mxu0 0
    %1673 = vmatpush1.bf16.msra.mxu0 0
    %1674 = vmatprep.subr.bf16.mxu0 0
    %1675 = vmatpush1.bf16.msra.mxu0 0
    %1676 = vmatprep.subr.bf16.mxu0 0
    %1677 = vmatpush1.bf16.msra.mxu0 0
    %1678 = vmatprep.subr.bf16.mxu0 0
    %1679 = vmatpush1.bf16.msra.mxu0 0
    %1680 = vmatprep.mubr.bf16.mxu0 0
    %1681 = vmatmul.mubr.bf16.gmra.mrb[0].mxu0 %v1637
    %v1682 = vpop.f32.mrb[0].mxu0
    %v1683 = vadd.f32 0.0, %v1682
    %v1684 = vpop.f32.mrb[0].mxu0
    %v1685 = vpop.f32.mrb[0].mxu0
    %v1686 = vadd.f32 0.0, %v1685
    %v1687 = vpop.f32.mrb[0].mxu0
    %1688 = vmatprep.mubr.bf16.mxu0 0
    %1689 = vmatmul.mubr.bf16.gmra.mrb[0].mxu0 %v1640
    %v1690 = vpop.f32.mrb[0].mxu0
    %v1691 = vadd.f32 0.0, %v1690
    %v1692 = vpop.f32.mrb[0].mxu0
    %v1693 = vpop.f32.mrb[0].mxu0
    %v1694 = vadd.f32 0.0, %v1693
    %v1695 = vpop.f32.mrb[0].mxu0
    %1696 = vmatprep.mubr.bf16.mxu0 0
    %1697 = vmatmul.mubr.bf16.gmra.mrb[0].mxu0 %v1643
    %v1698 = vpop.f32.mrb[0].mxu0
    %v1699 = vadd.f32 0.0, %v1698
    %v1700 = vpop.f32.mrb[0].mxu0
    %v1701 = vpop.f32.mrb[0].mxu0
    %v1702 = vadd.f32 0.0, %v1701
    %v1703 = vpop.f32.mrb[0].mxu0
    %1704 = vmatprep.mubr.bf16.mxu0 0
    %1705 = vmatmul.mubr.bf16.gmra.mrb[0].mxu0 %v1646
    %v1706 = vpop.f32.mrb[0].mxu0
    %v1707 = vadd.f32 0.0, %v1706
    %v1708 = vpop.f32.mrb[0].mxu0
    %v1709 = vpop.f32.mrb[0].mxu0
    %v1710 = vadd.f32 0.0, %v1709
    %v1711 = vpop.f32.mrb[0].mxu0
    %1712 = vdwg.mxu0
    %v1713 = vadd.f32 %v1596, %v1683
    %v1714 = vadd.f32 %v1597, %v1686
    %v1715 = vadd.f32 %v1598, %v1691
    %v1716 = vadd.f32 %v1599, %v1694
    %v1717 = vadd.f32 %v1600, %v1699
    %v1718 = vadd.f32 %v1601, %v1702
    %v1719 = vadd.f32 %v1602, %v1707
    %v1720 = vadd.f32 %v1603, %v1710
    %v1721 = vld [vmem:[%s1180 + $0x4] sm:$0xe]
    %v1723 = vunpack.c.l.b16 %v1721
    %v1724 = vpack.c.b16 %v1508, %v1723
    %v1725 = vrot.slane %v1724, 1
    %v1726 = vrot.slane %v1516, 1
    %v1727 = vsel %vm321, %v1725, %v1726
    %v1728 = vrot.slane %v1517, 1
    %v1729 = vsel %vm321, %v1726, %v1728
    %v1730 = vrot.slane %v1607, 1
    %v1731 = vsel %vm321, %v1728, %v1730
    %v1733 = vsel %vm35, %v1727, 0
    %v1736 = vsel %vm35, %v1729, 0
    %v1739 = vsel %vm35, %v1731, 0
    %v1742 = vsel %vm35, %v1730, 0
    %1744 = vmatprep.subr.bf16.mxu0 0
    %1745 = vmatpush1.bf16.msra.mxu0 %v714
    %1746 = vmatprep.subr.bf16.mxu0 0
    %1747 = vmatpush1.bf16.msra.mxu0 %v715
    %1748 = vmatprep.subr.bf16.mxu0 0
    %1749 = vmatpush1.bf16.msra.mxu0 0
    %1750 = vmatprep.subr.bf16.mxu0 0
    %1751 = vmatpush1.bf16.msra.mxu0 0
    %1752 = vmatprep.subr.bf16.mxu0 0
    %1753 = vmatpush1.bf16.msra.mxu0 0
    %1754 = vmatprep.subr.bf16.mxu0 0
    %1755 = vmatpush1.bf16.msra.mxu0 0
    %1756 = vmatprep.subr.bf16.mxu0 0
    %1757 = vmatpush1.bf16.msra.mxu0 0
    %1758 = vmatprep.subr.bf16.mxu0 0
    %1759 = vmatpush1.bf16.msra.mxu0 0
    %1760 = vmatprep.subr.bf16.mxu0 0
    %1761 = vmatpush1.bf16.msra.mxu0 0
    %1762 = vmatprep.subr.bf16.mxu0 0
    %1763 = vmatpush1.bf16.msra.mxu0 0
    %1764 = vmatprep.subr.bf16.mxu0 0
    %1765 = vmatpush1.bf16.msra.mxu0 0
    %1766 = vmatprep.subr.bf16.mxu0 0
    %1767 = vmatpush1.bf16.msra.mxu0 0
    %1768 = vmatprep.subr.bf16.mxu0 0
    %1769 = vmatpush1.bf16.msra.mxu0 0
    %1770 = vmatprep.subr.bf16.mxu0 0
    %1771 = vmatpush1.bf16.msra.mxu0 0
    %1772 = vmatprep.subr.bf16.mxu0 0
    %1773 = vmatpush1.bf16.msra.mxu0 0
    %1774 = vmatprep.subr.bf16.mxu0 0
    %1775 = vmatpush1.bf16.msra.mxu0 0
    %1776 = vmatprep.mubr.bf16.mxu0 0
    %1777 = vmatmul.mubr.bf16.gmra.mrb[0].mxu0 %v1733
    %v1778 = vpop.f32.mrb[0].mxu0
    %v1779 = vadd.f32 0.0, %v1778
    %v1780 = vpop.f32.mrb[0].mxu0
    %v1781 = vpop.f32.mrb[0].mxu0
    %v1782 = vadd.f32 0.0, %v1781
    %v1783 = vpop.f32.mrb[0].mxu0
    %1784 = vmatprep.mubr.bf16.mxu0 0
    %1785 = vmatmul.mubr.bf16.gmra.mrb[0].mxu0 %v1736
    %v1786 = vpop.f32.mrb[0].mxu0
    %v1787 = vadd.f32 0.0, %v1786
    %v1788 = vpop.f32.mrb[0].mxu0
    %v1789 = vpop.f32.mrb[0].mxu0
    %v1790 = vadd.f32 0.0, %v1789
    %v1791 = vpop.f32.mrb[0].mxu0
    %1792 = vmatprep.mubr.bf16.mxu0 0
    %1793 = vmatmul.mubr.bf16.gmra.mrb[0].mxu0 %v1739
    %v1794 = vpop.f32.mrb[0].mxu0
    %v1795 = vadd.f32 0.0, %v1794
    %v1796 = vpop.f32.mrb[0].mxu0
    %v1797 = vpop.f32.mrb[0].mxu0
    %v1798 = vadd.f32 0.0, %v1797
    %v1799 = vpop.f32.mrb[0].mxu0
    %1800 = vmatprep.mubr.bf16.mxu0 0
    %1801 = vmatmul.mubr.bf16.gmra.mrb[0].mxu0 %v1742
    %v1802 = vpop.f32.mrb[0].mxu0
    %v1803 = vadd.f32 0.0, %v1802
    %v1804 = vpop.f32.mrb[0].mxu0
    %v1805 = vpop.f32.mrb[0].mxu0
    %v1806 = vadd.f32 0.0, %v1805
    %v1807 = vpop.f32.mrb[0].mxu0
    %1808 = vdwg.mxu0
    %v1809 = vadd.f32 %v1713, %v1779
    %v1810 = vadd.f32 %v1714, %v1782
    %v1811 = vadd.f32 %v1715, %v1787
    %v1812 = vadd.f32 %v1716, %v1790
    %v1813 = vadd.f32 %v1717, %v1795
    %v1814 = vadd.f32 %v1718, %v1798
    %v1815 = vadd.f32 %v1719, %v1803
    %v1816 = vadd.f32 %v1720, %v1806
    %v1817 = vld [vmem:[%s1180 + $0x8] sm:$0xf]
    %v1818 = vld [vmem:[%s1180 + $0xc] sm:$0xf]
    %v1819 = vld [vmem:[%s1180 + $0x10] sm:$0xf]
    %v1820 = vld [vmem:[%s1180 + $0x14] sm:$0xf]
    %v1821 = vld [vmem:[%s1180 + $0x18] sm:$0xf]
    %v1822 = vld [vmem:[%s1180 + $0x1c] sm:$0xf]
    %v1823 = vld [vmem:[%s1180 + $0x20] sm:$0xf]
    %v1824 = vld [vmem:[%s1180 + $0x24] sm:$0x7]
    %v1833 = vunpack.c.l.b16 %v1817
    %v1834 = vunpack.c.l.b16 %v1818
    %v1835 = vunpack.c.l.b16 %v1819
    %v1836 = vunpack.c.l.b16 %v1820
    %v1837 = vunpack.c.l.b16 %v1821
    %v1838 = vunpack.c.l.b16 %v1822
    %v1839 = vunpack.c.l.b16 %v1823
    %v1840 = vunpack.c.l.b16 %v1824
    %v1841 = vpack.c.b16 %v1834, %v1833
    %v1842 = vpack.c.b16 %v1836, %v1835
    %v1843 = vpack.c.b16 %v1838, %v1837
    %v1844 = vpack.c.b16 %v1840, %v1839
    %v1846 = vsel %vm35, %v1841, 0
    %v1849 = vsel %vm35, %v1842, 0
    %v1852 = vsel %vm35, %v1843, 0
    %v1855 = vsel %vm35, %v1844, 0
    %1857 = vmatprep.subr.bf16.mxu0 0
    %1858 = vmatpush1.bf16.msra.mxu0 %v844
    %1859 = vmatprep.subr.bf16.mxu0 0
    %1860 = vmatpush1.bf16.msra.mxu0 %v845
    %1861 = vmatprep.subr.bf16.mxu0 0
    %1862 = vmatpush1.bf16.msra.mxu0 0
    %1863 = vmatprep.subr.bf16.mxu0 0
    %1864 = vmatpush1.bf16.msra.mxu0 0
    %1865 = vmatprep.subr.bf16.mxu0 0
    %1866 = vmatpush1.bf16.msra.mxu0 0
    %1867 = vmatprep.subr.bf16.mxu0 0
    %1868 = vmatpush1.bf16.msra.mxu0 0
    %1869 = vmatprep.subr.bf16.mxu0 0
    %1870 = vmatpush1.bf16.msra.mxu0 0
    %1871 = vmatprep.subr.bf16.mxu0 0
    %1872 = vmatpush1.bf16.msra.mxu0 0
    %1873 = vmatprep.subr.bf16.mxu0 0
    %1874 = vmatpush1.bf16.msra.mxu0 0
    %1875 = vmatprep.subr.bf16.mxu0 0
    %1876 = vmatpush1.bf16.msra.mxu0 0
    %1877 = vmatprep.subr.bf16.mxu0 0
    %1878 = vmatpush1.bf16.msra.mxu0 0
    %1879 = vmatprep.subr.bf16.mxu0 0
    %1880 = vmatpush1.bf16.msra.mxu0 0
    %1881 = vmatprep.subr.bf16.mxu0 0
    %1882 = vmatpush1.bf16.msra.mxu0 0
    %1883 = vmatprep.subr.bf16.mxu0 0
    %1884 = vmatpush1.bf16.msra.mxu0 0
    %1885 = vmatprep.subr.bf16.mxu0 0
    %1886 = vmatpush1.bf16.msra.mxu0 0
    %1887 = vmatprep.subr.bf16.mxu0 0
    %1888 = vmatpush1.bf16.msra.mxu0 0
    %1889 = vmatprep.mubr.bf16.mxu0 0
    %1890 = vmatmul.mubr.bf16.gmra.mrb[0].mxu0 %v1846
    %v1891 = vpop.f32.mrb[0].mxu0
    %v1892 = vadd.f32 0.0, %v1891
    %v1893 = vpop.f32.mrb[0].mxu0
    %v1894 = vpop.f32.mrb[0].mxu0
    %v1895 = vadd.f32 0.0, %v1894
    %v1896 = vpop.f32.mrb[0].mxu0
    %1897 = vmatprep.mubr.bf16.mxu0 0
    %1898 = vmatmul.mubr.bf16.gmra.mrb[0].mxu0 %v1849
    %v1899 = vpop.f32.mrb[0].mxu0
    %v1900 = vadd.f32 0.0, %v1899
    %v1901 = vpop.f32.mrb[0].mxu0
    %v1902 = vpop.f32.mrb[0].mxu0
    %v1903 = vadd.f32 0.0, %v1902
    %v1904 = vpop.f32.mrb[0].mxu0
    %1905 = vmatprep.mubr.bf16.mxu0 0
    %1906 = vmatmul.mubr.bf16.gmra.mrb[0].mxu0 %v1852
    %v1907 = vpop.f32.mrb[0].mxu0
    %v1908 = vadd.f32 0.0, %v1907
    %v1909 = vpop.f32.mrb[0].mxu0
    %v1910 = vpop.f32.mrb[0].mxu0
    %v1911 = vadd.f32 0.0, %v1910
    %v1912 = vpop.f32.mrb[0].mxu0
    %1913 = vmatprep.mubr.bf16.mxu0 0
    %1914 = vmatmul.mubr.bf16.gmra.mrb[0].mxu0 %v1855
    %v1915 = vpop.f32.mrb[0].mxu0
    %v1916 = vadd.f32 0.0, %v1915
    %v1917 = vpop.f32.mrb[0].mxu0
    %v1918 = vpop.f32.mrb[0].mxu0
    %v1919 = vadd.f32 0.0, %v1918
    %v1920 = vpop.f32.mrb[0].mxu0
    %1921 = vdwg.mxu0
    %v1922 = vadd.f32 %v1809, %v1892
    %v1923 = vadd.f32 %v1810, %v1895
    %v1924 = vadd.f32 %v1811, %v1900
    %v1925 = vadd.f32 %v1812, %v1903
    %v1926 = vadd.f32 %v1813, %v1908
    %v1927 = vadd.f32 %v1814, %v1911
    %v1928 = vadd.f32 %v1815, %v1916
    %v1929 = vadd.f32 %v1816, %v1919
    %v1930 = vld [vmem:[%s1180 + $0x24] sm:$0xf]
    %v1932 = vunpack.c.l.b16 %v1930
    %v1933 = vpack.c.b16 %v1932, %v1839
    %v1934 = vshrl.u32 %v1841, 16
    %v1936 = vshll.u32 %v1841, 16
    %v1938 = vrot.slane %v1936, 1
    %v1939 = vor.u32 %v1934, %v1938
    %v1940 = vshll.u32 %v1842, 16
    %v1942 = vrot.slane %v1940, 1
    %v1943 = vsel %vm102, %v1939, %v1942
    %v1944 = vshrl.u32 %v1842, 16
    %v1946 = vor.u32 %v1944, %v1942
    %v1947 = vshll.u32 %v1843, 16
    %v1949 = vrot.slane %v1947, 1
    %v1950 = vsel %vm102, %v1946, %v1949
    %v1951 = vshrl.u32 %v1843, 16
    %v1953 = vor.u32 %v1951, %v1949
    %v1955 = vshll.u32 %v1933, 16
    %v1957 = vrot.slane %v1955, 1
    %v1958 = vsel %vm102, %v1953, %v1957
    %v1959 = vshrl.u32 %v1933, 16
    %v1961 = vor.u32 %v1959, %v1957
    %v1963 = vsel %vm35, %v1943, 0
    %v1966 = vsel %vm35, %v1950, 0
    %v1969 = vsel %vm35, %v1958, 0
    %v1972 = vsel %vm35, %v1961, 0
    %1974 = vmatprep.subr.bf16.mxu0 0
    %1975 = vmatpush1.bf16.msra.mxu0 %v978
    %1976 = vmatprep.subr.bf16.mxu0 0
    %1977 = vmatpush1.bf16.msra.mxu0 %v979
    %1978 = vmatprep.subr.bf16.mxu0 0
    %1979 = vmatpush1.bf16.msra.mxu0 0
    %1980 = vmatprep.subr.bf16.mxu0 0
    %1981 = vmatpush1.bf16.msra.mxu0 0
    %1982 = vmatprep.subr.bf16.mxu0 0
    %1983 = vmatpush1.bf16.msra.mxu0 0
    %1984 = vmatprep.subr.bf16.mxu0 0
    %1985 = vmatpush1.bf16.msra.mxu0 0
    %1986 = vmatprep.subr.bf16.mxu0 0
    %1987 = vmatpush1.bf16.msra.mxu0 0
    %1988 = vmatprep.subr.bf16.mxu0 0
    %1989 = vmatpush1.bf16.msra.mxu0 0
    %1990 = vmatprep.subr.bf16.mxu0 0
    %1991 = vmatpush1.bf16.msra.mxu0 0
    %1992 = vmatprep.subr.bf16.mxu0 0
    %1993 = vmatpush1.bf16.msra.mxu0 0
    %1994 = vmatprep.subr.bf16.mxu0 0
    %1995 = vmatpush1.bf16.msra.mxu0 0
    %1996 = vmatprep.subr.bf16.mxu0 0
    %1997 = vmatpush1.bf16.msra.mxu0 0
    %1998 = vmatprep.subr.bf16.mxu0 0
    %1999 = vmatpush1.bf16.msra.mxu0 0
    %2000 = vmatprep.subr.bf16.mxu0 0
    %2001 = vmatpush1.bf16.msra.mxu0 0
    %2002 = vmatprep.subr.bf16.mxu0 0
    %2003 = vmatpush1.bf16.msra.mxu0 0
    %2004 = vmatprep.subr.bf16.mxu0 0
    %2005 = vmatpush1.bf16.msra.mxu0 0
    %2006 = vmatprep.mubr.bf16.mxu0 0
    %2007 = vmatmul.mubr.bf16.gmra.mrb[0].mxu0 %v1963
    %v2008 = vpop.f32.mrb[0].mxu0
    %v2009 = vadd.f32 0.0, %v2008
    %v2010 = vpop.f32.mrb[0].mxu0
    %v2011 = vpop.f32.mrb[0].mxu0
    %v2012 = vadd.f32 0.0, %v2011
    %v2013 = vpop.f32.mrb[0].mxu0
    %2014 = vmatprep.mubr.bf16.mxu0 0
    %2015 = vmatmul.mubr.bf16.gmra.mrb[0].mxu0 %v1966
    %v2016 = vpop.f32.mrb[0].mxu0
    %v2017 = vadd.f32 0.0, %v2016
    %v2018 = vpop.f32.mrb[0].mxu0
    %v2019 = vpop.f32.mrb[0].mxu0
    %v2020 = vadd.f32 0.0, %v2019
    %v2021 = vpop.f32.mrb[0].mxu0
    %2022 = vmatprep.mubr.bf16.mxu0 0
    %2023 = vmatmul.mubr.bf16.gmra.mrb[0].mxu0 %v1969
    %v2024 = vpop.f32.mrb[0].mxu0
    %v2025 = vadd.f32 0.0, %v2024
    %v2026 = vpop.f32.mrb[0].mxu0
    %v2027 = vpop.f32.mrb[0].mxu0
    %v2028 = vadd.f32 0.0, %v2027
    %v2029 = vpop.f32.mrb[0].mxu0
    %2030 = vmatprep.mubr.bf16.mxu0 0
    %2031 = vmatmul.mubr.bf16.gmra.mrb[0].mxu0 %v1972
    %v2032 = vpop.f32.mrb[0].mxu0
    %v2033 = vadd.f32 0.0, %v2032
    %v2034 = vpop.f32.mrb[0].mxu0
    %v2035 = vpop.f32.mrb[0].mxu0
    %v2036 = vadd.f32 0.0, %v2035
    %v2037 = vpop.f32.mrb[0].mxu0
    %2038 = vdwg.mxu0
    %v2039 = vadd.f32 %v1922, %v2009
    %v2040 = vadd.f32 %v1923, %v2012
    %v2041 = vadd.f32 %v1924, %v2017
    %v2042 = vadd.f32 %v1925, %v2020
    %v2043 = vadd.f32 %v1926, %v2025
    %v2044 = vadd.f32 %v1927, %v2028
    %v2045 = vadd.f32 %v1928, %v2033
    %v2046 = vadd.f32 %v1929, %v2036
    %v2047 = vld [vmem:[%s1180 + $0x8] sm:$0xe]
    %v2049 = vunpack.c.l.b16 %v2047
    %v2050 = vpack.c.b16 %v1834, %v2049
    %v2051 = vrot.slane %v2050, 1
    %v2052 = vrot.slane %v1842, 1
    %v2053 = vsel %vm321, %v2051, %v2052
    %v2054 = vrot.slane %v1843, 1
    %v2055 = vsel %vm321, %v2052, %v2054
    %v2056 = vrot.slane %v1933, 1
    %v2057 = vsel %vm321, %v2054, %v2056
    %v2059 = vsel %vm35, %v2053, 0
    %v2062 = vsel %vm35, %v2055, 0
    %v2065 = vsel %vm35, %v2057, 0
    %v2068 = vsel %vm35, %v2056, 0
    %2070 = vmatprep.subr.bf16.mxu0 0
    %2071 = vmatpush1.bf16.msra.mxu0 %v1091
    %2072 = vmatprep.subr.bf16.mxu0 0
    %2073 = vmatpush1.bf16.msra.mxu0 %v1092
    %2074 = vmatprep.subr.bf16.mxu0 0
    %2075 = vmatpush1.bf16.msra.mxu0 0
    %2076 = vmatprep.subr.bf16.mxu0 0
    %2077 = vmatpush1.bf16.msra.mxu0 0
    %2078 = vmatprep.subr.bf16.mxu0 0
    %2079 = vmatpush1.bf16.msra.mxu0 0
    %2080 = vmatprep.subr.bf16.mxu0 0
    %2081 = vmatpush1.bf16.msra.mxu0 0
    %2082 = vmatprep.subr.bf16.mxu0 0
    %2083 = vmatpush1.bf16.msra.mxu0 0
    %2084 = vmatprep.subr.bf16.mxu0 0
    %2085 = vmatpush1.bf16.msra.mxu0 0
    %2086 = vmatprep.subr.bf16.mxu0 0
    %2087 = vmatpush1.bf16.msra.mxu0 0
    %2088 = vmatprep.subr.bf16.mxu0 0
    %2089 = vmatpush1.bf16.msra.mxu0 0
    %2090 = vmatprep.subr.bf16.mxu0 0
    %2091 = vmatpush1.bf16.msra.mxu0 0
    %2092 = vmatprep.subr.bf16.mxu0 0
    %2093 = vmatpush1.bf16.msra.mxu0 0
    %2094 = vmatprep.subr.bf16.mxu0 0
    %2095 = vmatpush1.bf16.msra.mxu0 0
    %2096 = vmatprep.subr.bf16.mxu0 0
    %2097 = vmatpush1.bf16.msra.mxu0 0
    %2098 = vmatprep.subr.bf16.mxu0 0
    %2099 = vmatpush1.bf16.msra.mxu0 0
    %2100 = vmatprep.subr.bf16.mxu0 0
    %2101 = vmatpush1.bf16.msra.mxu0 0
    %2102 = vmatprep.mubr.bf16.mxu0 0
    %2103 = vmatmul.mubr.bf16.gmra.mrb[0].mxu0 %v2059
    %v2104 = vpop.f32.mrb[0].mxu0
    %v2105 = vadd.f32 0.0, %v2104
    %v2106 = vpop.f32.mrb[0].mxu0
    %v2107 = vpop.f32.mrb[0].mxu0
    %v2108 = vadd.f32 0.0, %v2107
    %v2109 = vpop.f32.mrb[0].mxu0
    %2110 = vmatprep.mubr.bf16.mxu0 0
    %2111 = vmatmul.mubr.bf16.gmra.mrb[0].mxu0 %v2062
    %v2112 = vpop.f32.mrb[0].mxu0
    %v2113 = vadd.f32 0.0, %v2112
    %v2114 = vpop.f32.mrb[0].mxu0
    %v2115 = vpop.f32.mrb[0].mxu0
    %v2116 = vadd.f32 0.0, %v2115
    %v2117 = vpop.f32.mrb[0].mxu0
    %2118 = vmatprep.mubr.bf16.mxu0 0
    %2119 = vmatmul.mubr.bf16.gmra.mrb[0].mxu0 %v2065
    %v2120 = vpop.f32.mrb[0].mxu0
    %v2121 = vadd.f32 0.0, %v2120
    %v2122 = vpop.f32.mrb[0].mxu0
    %v2123 = vpop.f32.mrb[0].mxu0
    %v2124 = vadd.f32 0.0, %v2123
    %v2125 = vpop.f32.mrb[0].mxu0
    %2126 = vmatprep.mubr.bf16.mxu0 0
    %2127 = vmatmul.mubr.bf16.gmra.mrb[0].mxu0 %v2068
    %v2128 = vpop.f32.mrb[0].mxu0
    %v2129 = vadd.f32 0.0, %v2128
    %v2130 = vpop.f32.mrb[0].mxu0
    %v2131 = vpop.f32.mrb[0].mxu0
    %v2132 = vadd.f32 0.0, %v2131
    %v2133 = vpop.f32.mrb[0].mxu0
    %2134 = vdwg.mxu0
    %v2135 = vadd.f32 %v2039, %v2105
    %v2136 = vadd.f32 %v2040, %v2108
    %v2137 = vadd.f32 %v2041, %v2113
    %v2138 = vadd.f32 %v2042, %v2116
    %v2139 = vadd.f32 %v2043, %v2121
    %v2140 = vadd.f32 %v2044, %v2124
    %v2141 = vadd.f32 %v2045, %v2129
    %v2142 = vadd.f32 %v2046, %v2132
    %2144 = vset.pattern.permute.xlu0 0
    %2145 = vperm.xlu0 %2144, %v56
    %v2146 = vpop.permute.xlu0 %2145
    %2149 = vset.pattern.permute.xlu0 0
    %2150 = vperm.xlu0 %2149, %v57
    %v2151 = vpop.permute.xlu0 %2150
    %2154 = vset.pattern.permute.xlu0 0
    %2155 = vperm.xlu0 %2154, %v58
    %v2156 = vpop.permute.xlu0 %2155
    %2159 = vset.pattern.permute.xlu0 0
    %2160 = vperm.xlu0 %2159, %v59
    %v2161 = vpop.permute.xlu0 %2160
    %2164 = vset.pattern.permute.xlu0 0
    %2165 = vperm.xlu0 %2164, %v60
    %v2166 = vpop.permute.xlu0 %2165
    %2169 = vset.pattern.permute.xlu0 0
    %2170 = vperm.xlu0 %2169, %v61
    %v2171 = vpop.permute.xlu0 %2170
    %2174 = vset.pattern.permute.xlu0 0
    %2175 = vperm.xlu0 %2174, %v62
    %v2176 = vpop.permute.xlu0 %2175
    %2179 = vset.pattern.permute.xlu0 0
    %2180 = vperm.xlu0 %2179, %v63
    %v2181 = vpop.permute.xlu0 %2180
    %v2183 = vmul.f32 %v1172, %v2146
    %v2184 = vmul.f32 %v1173, %v2151
    %v2185 = vmul.f32 %v1174, %v2156
    %v2186 = vmul.f32 %v1175, %v2161
    %v2187 = vmul.f32 %v1176, %v2166
    %v2188 = vmul.f32 %v1177, %v2171
    %v2189 = vmul.f32 %v1178, %v2176
    %v2190 = vmul.f32 %v1179, %v2181
    %v2191 = vsel %vm35, %v2183, 0.0
    %v2192 = vsel %vm35, %v2184, 0.0
    %v2193 = vadd.f32 %v2191, %v2192
    %v2194 = vsel %vm35, %v2185, 0.0
    %v2195 = vadd.f32 %v2193, %v2194
    %v2196 = vsel %vm35, %v2186, 0.0
    %v2197 = vadd.f32 %v2195, %v2196
    %v2198 = vsel %vm35, %v2187, 0.0
    %v2199 = vadd.f32 %v2197, %v2198
    %v2200 = vsel %vm35, %v2188, 0.0
    %v2201 = vadd.f32 %v2199, %v2200
    %v2202 = vsel %vm35, %v2189, 0.0
    %v2203 = vadd.f32 %v2201, %v2202
    %vm2204 = vcmask 259072
    %v2205 = vsel %vm2204, %v2190, 0.0
    %v2206 = vadd.f32 %v2203, %v2205
    %v2207 = vrot.slane %v2206, 4
    %v2208 = vadd.f32 %v2206, %v2207
    %v2209 = vrot.slane %v2208, 2
    %v2210 = vadd.f32 %v2208, %v2209
    %v2211 = vrot.slane %v2210, 1
    %v2212 = vadd.f32 %v2210, %v2211
    %v2213 = vmul.f32 %v2135, %v2146
    %v2214 = vmul.f32 %v2136, %v2151
    %v2215 = vmul.f32 %v2137, %v2156
    %v2216 = vmul.f32 %v2138, %v2161
    %v2217 = vmul.f32 %v2139, %v2166
    %v2218 = vmul.f32 %v2140, %v2171
    %v2219 = vmul.f32 %v2141, %v2176
    %v2220 = vmul.f32 %v2142, %v2181
    %v2221 = vsel %vm35, %v2213, 0.0
    %v2222 = vsel %vm35, %v2214, 0.0
    %v2223 = vadd.f32 %v2221, %v2222
    %v2224 = vsel %vm35, %v2215, 0.0
    %v2225 = vadd.f32 %v2223, %v2224
    %v2226 = vsel %vm35, %v2216, 0.0
    %v2227 = vadd.f32 %v2225, %v2226
    %v2228 = vsel %vm35, %v2217, 0.0
    %v2229 = vadd.f32 %v2227, %v2228
    %v2230 = vsel %vm35, %v2218, 0.0
    %v2231 = vadd.f32 %v2229, %v2230
    %v2232 = vsel %vm35, %v2219, 0.0
    %v2233 = vadd.f32 %v2231, %v2232
    %v2234 = vsel %vm2204, %v2220, 0.0
    %v2235 = vadd.f32 %v2233, %v2234
    %v2236 = vrot.slane %v2235, 4
    %v2237 = vadd.f32 %v2235, %v2236
    %v2238 = vrot.slane %v2237, 2
    %v2239 = vadd.f32 %v2237, %v2238
    %v2240 = vrot.slane %v2239, 1
    %v2241 = vadd.f32 %v2239, %v2240
    %v2242 = vadd.f32 %v2212, %v2241
    %v2243 = vmul.f32 %v2242, 0.010416667
    %v2244 = vsub.f32 %v1172, %v2243
    %v2245 = vsub.f32 %v1173, %v2243
    %v2246 = vsub.f32 %v1174, %v2243
    %v2247 = vsub.f32 %v1175, %v2243
    %v2248 = vsub.f32 %v1176, %v2243
    %v2249 = vsub.f32 %v1177, %v2243
    %v2250 = vsub.f32 %v1178, %v2243
    %v2251 = vsub.f32 %v1179, %v2243
    %v2252 = vmul.f32 %v2244, %v2244
    %v2253 = vmul.f32 %v2245, %v2245
    %v2254 = vmul.f32 %v2246, %v2246
    %v2255 = vmul.f32 %v2247, %v2247
    %v2256 = vmul.f32 %v2248, %v2248
    %v2257 = vmul.f32 %v2249, %v2249
    %v2258 = vmul.f32 %v2250, %v2250
    %v2259 = vmul.f32 %v2251, %v2251
    %v2260 = vmul.f32 %v2252, %v2146
    %v2261 = vmul.f32 %v2253, %v2151
    %v2262 = vmul.f32 %v2254, %v2156
    %v2263 = vmul.f32 %v2255, %v2161
    %v2264 = vmul.f32 %v2256, %v2166
    %v2265 = vmul.f32 %v2257, %v2171
    %v2266 = vmul.f32 %v2258, %v2176
    %v2267 = vmul.f32 %v2259, %v2181
    %v2268 = vsel %vm35, %v2260, 0.0
    %v2269 = vsel %vm35, %v2261, 0.0
    %v2270 = vadd.f32 %v2268, %v2269
    %v2271 = vsel %vm35, %v2262, 0.0
    %v2272 = vadd.f32 %v2270, %v2271
    %v2273 = vsel %vm35, %v2263, 0.0
    %v2274 = vadd.f32 %v2272, %v2273
    %v2275 = vsel %vm35, %v2264, 0.0
    %v2276 = vadd.f32 %v2274, %v2275
    %v2277 = vsel %vm35, %v2265, 0.0
    %v2278 = vadd.f32 %v2276, %v2277
    %v2279 = vsel %vm35, %v2266, 0.0
    %v2280 = vadd.f32 %v2278, %v2279
    %v2281 = vsel %vm2204, %v2267, 0.0
    %v2282 = vadd.f32 %v2280, %v2281
    %v2283 = vrot.slane %v2282, 4
    %v2284 = vadd.f32 %v2282, %v2283
    %v2285 = vrot.slane %v2284, 2
    %v2286 = vadd.f32 %v2284, %v2285
    %v2287 = vrot.slane %v2286, 1
    %v2288 = vadd.f32 %v2286, %v2287
    %v2289 = vsub.f32 %v2135, %v2243
    %v2290 = vsub.f32 %v2136, %v2243
    %v2291 = vsub.f32 %v2137, %v2243
    %v2292 = vsub.f32 %v2138, %v2243
    %v2293 = vsub.f32 %v2139, %v2243
    %v2294 = vsub.f32 %v2140, %v2243
    %v2295 = vsub.f32 %v2141, %v2243
    %v2296 = vsub.f32 %v2142, %v2243
    %v2297 = vmul.f32 %v2289, %v2289
    %v2298 = vmul.f32 %v2290, %v2290
    %v2299 = vmul.f32 %v2291, %v2291
    %v2300 = vmul.f32 %v2292, %v2292
    %v2301 = vmul.f32 %v2293, %v2293
    %v2302 = vmul.f32 %v2294, %v2294
    %v2303 = vmul.f32 %v2295, %v2295
    %v2304 = vmul.f32 %v2296, %v2296
    %v2305 = vmul.f32 %v2297, %v2146
    %v2306 = vmul.f32 %v2298, %v2151
    %v2307 = vmul.f32 %v2299, %v2156
    %v2308 = vmul.f32 %v2300, %v2161
    %v2309 = vmul.f32 %v2301, %v2166
    %v2310 = vmul.f32 %v2302, %v2171
    %v2311 = vmul.f32 %v2303, %v2176
    %v2312 = vmul.f32 %v2304, %v2181
    %v2313 = vsel %vm35, %v2305, 0.0
    %v2314 = vsel %vm35, %v2306, 0.0
    %v2315 = vadd.f32 %v2313, %v2314
    %v2316 = vsel %vm35, %v2307, 0.0
    %v2317 = vadd.f32 %v2315, %v2316
    %v2318 = vsel %vm35, %v2308, 0.0
    %v2319 = vadd.f32 %v2317, %v2318
    %v2320 = vsel %vm35, %v2309, 0.0
    %v2321 = vadd.f32 %v2319, %v2320
    %v2322 = vsel %vm35, %v2310, 0.0
    %v2323 = vadd.f32 %v2321, %v2322
    %v2324 = vsel %vm35, %v2311, 0.0
    %v2325 = vadd.f32 %v2323, %v2324
    %v2326 = vsel %vm2204, %v2312, 0.0
    %v2327 = vadd.f32 %v2325, %v2326
    %v2328 = vrot.slane %v2327, 4
    %v2329 = vadd.f32 %v2327, %v2328
    %v2330 = vrot.slane %v2329, 2
    %v2331 = vadd.f32 %v2329, %v2330
    %v2332 = vrot.slane %v2331, 1
    %v2333 = vadd.f32 %v2331, %v2332
    %v2334 = vadd.f32 %v2288, %v2333
    %v2335 = vmul.f32 %v2334, 0.010416667
    %v2336 = vld [vmem:[%s2] sm:$0x1]
    %v2337 = vadd.f32 %v2335, 1e-05
    %v2338 = vrsqrt.pop %v2337
    %v2339 = vmul.f32 %v2336, %v2338
    %v2340 = vld [vmem:[%s3] sm:$0x1]
    %v2341 = vmul.f32 %v2243, %v2339
    %v2342 = vsub.f32 %v2340, %v2341
    %v2344 = vlaneseq
    %v2345 = vshrl.u32 %v2344, 7
    %v2346 = vsub.s32 0, %v2345
    %v2347 = vrot.slane %v2339, %v2346
    %v2349 = vmul.f32 %v1172, %v2347
    %v2350 = vmul.f32 %v1173, %v2347
    %v2351 = vmul.f32 %v1174, %v2347
    %v2352 = vmul.f32 %v1175, %v2347
    %v2353 = vmul.f32 %v1176, %v2347
    %v2354 = vmul.f32 %v1177, %v2347
    %v2355 = vmul.f32 %v1178, %v2347
    %v2356 = vmul.f32 %v1179, %v2347
    %v2358 = vlaneseq
    %v2359 = vshrl.u32 %v2358, 7
    %v2360 = vsub.s32 0, %v2359
    %v2361 = vrot.slane %v2342, %v2360
    %v2363 = vadd.f32 %v2349, %v2361
    %v2364 = vadd.f32 %v2350, %v2361
    %v2365 = vadd.f32 %v2351, %v2361
    %v2366 = vadd.f32 %v2352, %v2361
    %v2367 = vadd.f32 %v2353, %v2361
    %v2368 = vadd.f32 %v2354, %v2361
    %v2369 = vadd.f32 %v2355, %v2361
    %v2370 = vadd.f32 %v2356, %v2361
    %v2371 = vunpack.c.l.bf16 %v426
    %v2372 = vunpack.c.l.bf16 %v427
    %v2373 = vunpack.c.l.bf16 %v428
    %v2374 = vunpack.c.l.bf16 %v429
    %v2375 = vunpack.c.l.bf16 %v430
    %v2376 = vunpack.c.l.bf16 %v431
    %v2377 = vunpack.c.l.bf16 %v432
    %v2378 = vunpack.c.l.bf16 %v556
    %vm2387 = vcmask 1046528
    %v2388 = vrot.slane %v2371, 1
    %v2389 = vrot.slane %v2372, 1
    %v2390 = vsel %vm2387, %v2388, %v2389
    %v2391 = vrot.slane %v2373, 1
    %v2392 = vsel %vm2387, %v2389, %v2391
    %v2393 = vrot.slane %v2374, 1
    %v2394 = vsel %vm2387, %v2391, %v2393
    %v2395 = vrot.slane %v2375, 1
    %v2396 = vsel %vm2387, %v2393, %v2395
    %v2397 = vrot.slane %v2376, 1
    %v2398 = vsel %vm2387, %v2395, %v2397
    %v2399 = vrot.slane %v2377, 1
    %v2400 = vsel %vm2387, %v2397, %v2399
    %v2401 = vrot.slane %v2378, 1
    %v2402 = vsel %vm2387, %v2399, %v2401
    %v2411 = vadd.f32 %v2363, %v2390
    %v2412 = vadd.f32 %v2364, %v2392
    %v2413 = vadd.f32 %v2365, %v2394
    %v2414 = vadd.f32 %v2366, %v2396
    %v2415 = vadd.f32 %v2367, %v2398
    %v2416 = vadd.f32 %v2368, %v2400
    %v2417 = vadd.f32 %v2369, %v2402
    %v2418 = vadd.f32 %v2370, %v2401
    %v2419 = vmax.f32 %v2411, 0.0
    %v2420 = vmax.f32 %v2412, 0.0
    %v2421 = vmax.f32 %v2413, 0.0
    %v2422 = vmax.f32 %v2414, 0.0
    %v2423 = vmax.f32 %v2415, 0.0
    %v2424 = vmax.f32 %v2416, 0.0
    %v2425 = vmax.f32 %v2417, 0.0
    %v2426 = vmax.f32 %v2418, 0.0
    %v2427 = vmul.f32 %v2419, %v2146
    %v2428 = vmul.f32 %v2420, %v2151
    %v2429 = vmul.f32 %v2421, %v2156
    %v2430 = vmul.f32 %v2422, %v2161
    %v2431 = vmul.f32 %v2423, %v2166
    %v2432 = vmul.f32 %v2424, %v2171
    %v2433 = vmul.f32 %v2425, %v2176
    %v2434 = vmul.f32 %v2426, %v2181
    %v2435 = vpack.c.bf16 %v2428, %v2427
    %v2436 = vpack.c.bf16 %v2430, %v2429
    %v2437 = vpack.c.bf16 %v2432, %v2431
    %v2438 = vpack.c.bf16 %v2434, %v2433
    %vm2439 = vsmask.f32 4352
    %v2441 = vshrl.u32 %v2435, 16
    %v2443 = vrot.slane %v2441, 3
    %v2444 = vshll.u32 %v2435, 16
    %v2446 = vrot.slane %v2444, 4
    %v2447 = vor.u32 %v2443, %v2446
    %v2449 = vshrl.u32 %v2436, 16
    %v2451 = vrot.slane %v2449, 3
    %v2452 = vshll.u32 %v2436, 16
    %v2454 = vrot.slane %v2452, 4
    %v2455 = vor.u32 %v2451, %v2454
    %v2456 = vsel %vm2439, %v2447, %v2455
    %v2458 = vshrl.u32 %v2437, 16
    %v2460 = vrot.slane %v2458, 3
    %v2461 = vshll.u32 %v2437, 16
    %v2463 = vrot.slane %v2461, 4
    %v2464 = vor.u32 %v2460, %v2463
    %v2465 = vsel %vm2439, %v2455, %v2464
    %v2467 = vshrl.u32 %v2438, 16
    %v2469 = vrot.slane %v2467, 3
    %v2470 = vshll.u32 %v2438, 16
    %v2472 = vrot.slane %v2470, 4
    %v2473 = vor.u32 %v2469, %v2472
    %v2474 = vsel %vm2439, %v2464, %v2473
    %vm2480 = vcmask 261124
    %vm2481 = vsmask.f32 7954
    %vm2482 = vmand %vm2480, %vm2481
    %v2483 = vld [vmem:[#allocation2] sm:$0xf0]
    %v2484 = vsel %vm2482, %v2447, %v2483
    %2485 = vst [vmem:[#allocation2] sm:$0xf0] %v2484
    %2486 = vst.msk [vmem:[#allocation2 + $0x8] sm:$0xff] %vm35, %v2456
    %2487 = vst.msk [vmem:[#allocation2 + $0x10] sm:$0xff] %vm35, %v2465
    %2488 = vst.msk [vmem:[#allocation2 + $0x18] sm:$0xff] %vm35, %v2474
    %vm2489 = vcmask 257024
    %vm2490 = vsmask.f32 3328
    %vm2491 = vmand %vm2489, %vm2490
    %v2492 = vld [vmem:[#allocation2 + $0x20] sm:$0xf]
    %v2493 = vsel %vm2491, %v2473, %v2492
    %2494 = vst [vmem:[#allocation2 + $0x20] sm:$0xf] %v2493
    %v2495 = vmul.f32 %v2135, %v2347
    %v2496 = vmul.f32 %v2136, %v2347
    %v2497 = vmul.f32 %v2137, %v2347
    %v2498 = vmul.f32 %v2138, %v2347
    %v2499 = vmul.f32 %v2139, %v2347
    %v2500 = vmul.f32 %v2140, %v2347
    %v2501 = vmul.f32 %v2141, %v2347
    %v2502 = vmul.f32 %v2142, %v2347
    %v2503 = vadd.f32 %v2495, %v2361
    %v2504 = vadd.f32 %v2496, %v2361
    %v2505 = vadd.f32 %v2497, %v2361
    %v2506 = vadd.f32 %v2498, %v2361
    %v2507 = vadd.f32 %v2499, %v2361
    %v2508 = vadd.f32 %v2500, %v2361
    %v2509 = vadd.f32 %v2501, %v2361
    %v2510 = vadd.f32 %v2502, %v2361
    %v2511 = vld [vmem:[%s1180 + $0x4] sm:$0xf]
    %v2512 = vld [vmem:[%s1180 + $0x8] sm:$0xf]
    %v2513 = vld [vmem:[%s1180 + $0xc] sm:$0xf]
    %v2514 = vld [vmem:[%s1180 + $0x10] sm:$0xf]
    %v2515 = vld [vmem:[%s1180 + $0x14] sm:$0xf]
    %v2516 = vld [vmem:[%s1180 + $0x18] sm:$0xf]
    %v2517 = vld [vmem:[%s1180 + $0x1c] sm:$0xf]
    %v2518 = vld [vmem:[%s1180 + $0x20] sm:$0xf]
    %v2519 = vunpack.c.l.bf16 %v2511
    %v2520 = vunpack.c.l.bf16 %v2512
    %v2521 = vunpack.c.l.bf16 %v2513
    %v2522 = vunpack.c.l.bf16 %v2514
    %v2523 = vunpack.c.l.bf16 %v2515
    %v2524 = vunpack.c.l.bf16 %v2516
    %v2525 = vunpack.c.l.bf16 %v2517
    %v2526 = vunpack.c.l.bf16 %v2518
    %v2535 = vrot.slane %v2519, 1
    %v2536 = vrot.slane %v2520, 1
    %v2537 = vsel %vm2387, %v2535, %v2536
    %v2538 = vrot.slane %v2521, 1
    %v2539 = vsel %vm2387, %v2536, %v2538
    %v2540 = vrot.slane %v2522, 1
    %v2541 = vsel %vm2387, %v2538, %v2540
    %v2542 = vrot.slane %v2523, 1
    %v2543 = vsel %vm2387, %v2540, %v2542
    %v2544 = vrot.slane %v2524, 1
    %v2545 = vsel %vm2387, %v2542, %v2544
    %v2546 = vrot.slane %v2525, 1
    %v2547 = vsel %vm2387, %v2544, %v2546
    %v2548 = vrot.slane %v2526, 1
    %v2549 = vsel %vm2387, %v2546, %v2548
    %v2558 = vadd.f32 %v2503, %v2537
    %v2559 = vadd.f32 %v2504, %v2539
    %v2560 = vadd.f32 %v2505, %v2541
    %v2561 = vadd.f32 %v2506, %v2543
    %v2562 = vadd.f32 %v2507, %v2545
    %v2563 = vadd.f32 %v2508, %v2547
    %v2564 = vadd.f32 %v2509, %v2549
    %v2565 = vadd.f32 %v2510, %v2548
    %v2566 = vmax.f32 %v2558, 0.0
    %v2567 = vmax.f32 %v2559, 0.0
    %v2568 = vmax.f32 %v2560, 0.0
    %v2569 = vmax.f32 %v2561, 0.0
    %v2570 = vmax.f32 %v2562, 0.0
    %v2571 = vmax.f32 %v2563, 0.0
    %v2572 = vmax.f32 %v2564, 0.0
    %v2573 = vmax.f32 %v2565, 0.0
    %v2574 = vmul.f32 %v2566, %v2146
    %v2575 = vmul.f32 %v2567, %v2151
    %v2576 = vmul.f32 %v2568, %v2156
    %v2577 = vmul.f32 %v2569, %v2161
    %v2578 = vmul.f32 %v2570, %v2166
    %v2579 = vmul.f32 %v2571, %v2171
    %v2580 = vmul.f32 %v2572, %v2176
    %v2581 = vmul.f32 %v2573, %v2181
    %v2582 = vpack.c.bf16 %v2575, %v2574
    %v2583 = vpack.c.bf16 %v2577, %v2576
    %v2584 = vpack.c.bf16 %v2579, %v2578
    %v2585 = vpack.c.bf16 %v2581, %v2580
    %v2587 = vshrl.u32 %v2582, 16
    %v2589 = vrot.slane %v2587, 3
    %v2590 = vshll.u32 %v2582, 16
    %v2592 = vrot.slane %v2590, 4
    %v2593 = vor.u32 %v2589, %v2592
    %v2595 = vshrl.u32 %v2583, 16
    %v2597 = vrot.slane %v2595, 3
    %v2598 = vshll.u32 %v2583, 16
    %v2600 = vrot.slane %v2598, 4
    %v2601 = vor.u32 %v2597, %v2600
    %v2602 = vsel %vm2439, %v2593, %v2601
    %v2604 = vshrl.u32 %v2584, 16
    %v2606 = vrot.slane %v2604, 3
    %v2607 = vshll.u32 %v2584, 16
    %v2609 = vrot.slane %v2607, 4
    %v2610 = vor.u32 %v2606, %v2609
    %v2611 = vsel %vm2439, %v2601, %v2610
    %v2613 = vshrl.u32 %v2585, 16
    %v2615 = vrot.slane %v2613, 3
    %v2616 = vshll.u32 %v2585, 16
    %v2618 = vrot.slane %v2616, 4
    %v2619 = vor.u32 %v2615, %v2618
    %v2620 = vsel %vm2439, %v2610, %v2619
    %s2626 = scalar_lea.vmem [#allocation2], 40
    %v2627 = vld [vmem:[%s2626] sm:$0xf0]
    %v2628 = vsel %vm2482, %v2593, %v2627
    %2629 = vst [vmem:[%s2626] sm:$0xf0] %v2628
    %2630 = vst.msk [vmem:[%s2626 + $0x8] sm:$0xff] %vm35, %v2602
    %2631 = vst.msk [vmem:[%s2626 + $0x10] sm:$0xff] %vm35, %v2611
    %2632 = vst.msk [vmem:[%s2626 + $0x18] sm:$0xff] %vm35, %v2620
    %v2633 = vld [vmem:[%s2626 + $0x20] sm:$0xf]
    %v2634 = vsel %vm2491, %v2619, %v2633
    %2635 = vst [vmem:[%s2626 + $0x20] sm:$0xf] %v2634
    %v2636 = vld [vmem:[#allocation2] sm:$0xff]
    %v2637 = vld [vmem:[#allocation2 + $0x8] sm:$0xff]
    %v2638 = vld [vmem:[#allocation2 + $0x10] sm:$0xff]
    %v2639 = vld [vmem:[#allocation2 + $0x18] sm:$0x7f]
    %s2640 = scalar_lea.vmem [#allocation4], 144
    %v2641 = vld [vmem:[%s2640] sm:$0xf]
    %v2642 = vld [vmem:[%s2640 + $0x4] sm:$0xf]
    %v2643 = vld [vmem:[%s2640 + $0x8] sm:$0xf]
    %v2644 = vld [vmem:[%s2640 + $0xc] sm:$0xf]
    %v2645 = vld [vmem:[#allocation2 + $0x18] sm:$0xff]
    %s2646 = scalar_lea.vmem [#allocation4], 160
    %v2647 = vld [vmem:[%s2646] sm:$0xf]
    %v2648 = vld [vmem:[%s2646 + $0x4] sm:$0xf]
    %v2649 = vld [vmem:[%s2646 + $0x8] sm:$0xf]
    %v2650 = vld [vmem:[%s2646 + $0xc] sm:$0xf]
    %v2652 = vshrl.u32 %v2636, 16
    %v2654 = vshll.u32 %v2636, 16
    %v2656 = vrot.slane %v2654, 1
    %v2657 = vor.u32 %v2652, %v2656
    %v2659 = vshll.u32 %v2637, 16
    %v2661 = vrot.slane %v2659, 1
    %v2662 = vsel %vm102, %v2657, %v2661
    %v2663 = vshrl.u32 %v2637, 16
    %v2665 = vor.u32 %v2663, %v2661
    %v2667 = vshll.u32 %v2638, 16
    %v2669 = vrot.slane %v2667, 1
    %v2670 = vsel %vm102, %v2665, %v2669
    %v2671 = vshrl.u32 %v2638, 16
    %v2673 = vor.u32 %v2671, %v2669
    %v2675 = vshll.u32 %v2645, 16
    %v2677 = vrot.slane %v2675, 1
    %v2678 = vsel %vm102, %v2673, %v2677
    %v2679 = vshrl.u32 %v2645, 16
    %v2681 = vor.u32 %v2679, %v2677
    %v2686 = vunpack.c.l.b16 %v2647
    %v2687 = vunpack.c.l.b16 %v2648
    %v2688 = vunpack.c.l.b16 %v2649
    %v2689 = vunpack.c.l.b16 %v2650
    %v2690 = vpack.c.b16 %v2687, %v2686
    %v2691 = vpack.c.b16 %v2689, %v2688
    %v2695 = vsel %vm35, %v2662, 0
    %v2698 = vsel %vm35, %v2670, 0
    %v2701 = vsel %vm35, %v2678, 0
    %v2704 = vsel %vm35, %v2681, 0
    %2706 = vmatprep.subr.bf16.mxu0 0
    %2707 = vmatpush1.bf16.msra.mxu0 %v2690
    %2708 = vmatprep.subr.bf16.mxu0 0
    %2709 = vmatpush1.bf16.msra.mxu0 %v2691
    %2710 = vmatprep.subr.bf16.mxu0 0
    %2711 = vmatpush1.bf16.msra.mxu0 0
    %2712 = vmatprep.subr.bf16.mxu0 0
    %2713 = vmatpush1.bf16.msra.mxu0 0
    %2714 = vmatprep.subr.bf16.mxu0 0
    %2715 = vmatpush1.bf16.msra.mxu0 0
    %2716 = vmatprep.subr.bf16.mxu0 0
    %2717 = vmatpush1.bf16.msra.mxu0 0
    %2718 = vmatprep.subr.bf16.mxu0 0
    %2719 = vmatpush1.bf16.msra.mxu0 0
    %2720 = vmatprep.subr.bf16.mxu0 0
    %2721 = vmatpush1.bf16.msra.mxu0 0
    %2722 = vmatprep.subr.bf16.mxu0 0
    %2723 = vmatpush1.bf16.msra.mxu0 0
    %2724 = vmatprep.subr.bf16.mxu0 0
    %2725 = vmatpush1.bf16.msra.mxu0 0
    %2726 = vmatprep.subr.bf16.mxu0 0
    %2727 = vmatpush1.bf16.msra.mxu0 0
    %2728 = vmatprep.subr.bf16.mxu0 0
    %2729 = vmatpush1.bf16.msra.mxu0 0
    %2730 = vmatprep.subr.bf16.mxu0 0
    %2731 = vmatpush1.bf16.msra.mxu0 0
    %2732 = vmatprep.subr.bf16.mxu0 0
    %2733 = vmatpush1.bf16.msra.mxu0 0
    %2734 = vmatprep.subr.bf16.mxu0 0
    %2735 = vmatpush1.bf16.msra.mxu0 0
    %2736 = vmatprep.subr.bf16.mxu0 0
    %2737 = vmatpush1.bf16.msra.mxu0 0
    %2738 = vmatprep.mubr.bf16.mxu0 0
    %2739 = vmatmul.mubr.bf16.gmra.mrb[0].mxu0 %v2695
    %v2740 = vpop.f32.mrb[0].mxu0
    %v2741 = vadd.f32 0.0, %v2740
    %v2742 = vpop.f32.mrb[0].mxu0
    %v2743 = vpop.f32.mrb[0].mxu0
    %v2744 = vadd.f32 0.0, %v2743
    %v2745 = vpop.f32.mrb[0].mxu0
    %2746 = vmatprep.mubr.bf16.mxu0 0
    %2747 = vmatmul.mubr.bf16.gmra.mrb[0].mxu0 %v2698
    %v2748 = vpop.f32.mrb[0].mxu0
    %v2749 = vadd.f32 0.0, %v2748
    %v2750 = vpop.f32.mrb[0].mxu0
    %v2751 = vpop.f32.mrb[0].mxu0
    %v2752 = vadd.f32 0.0, %v2751
    %v2753 = vpop.f32.mrb[0].mxu0
    %2754 = vmatprep.mubr.bf16.mxu0 0
    %2755 = vmatmul.mubr.bf16.gmra.mrb[0].mxu0 %v2701
    %v2756 = vpop.f32.mrb[0].mxu0
    %v2757 = vadd.f32 0.0, %v2756
    %v2758 = vpop.f32.mrb[0].mxu0
    %v2759 = vpop.f32.mrb[0].mxu0
    %v2760 = vadd.f32 0.0, %v2759
    %v2761 = vpop.f32.mrb[0].mxu0
    %2762 = vmatprep.mubr.bf16.mxu0 0
    %2763 = vmatmul.mubr.bf16.gmra.mrb[0].mxu0 %v2704
    %v2764 = vpop.f32.mrb[0].mxu0
    %v2765 = vadd.f32 0.0, %v2764
    %v2766 = vpop.f32.mrb[0].mxu0
    %v2767 = vpop.f32.mrb[0].mxu0
    %v2768 = vadd.f32 0.0, %v2767
    %v2769 = vpop.f32.mrb[0].mxu0
    %2770 = vdwg.mxu0
    %v2775 = vunpack.c.l.b16 %v2641
    %v2776 = vunpack.c.l.b16 %v2642
    %v2777 = vunpack.c.l.b16 %v2643
    %v2778 = vunpack.c.l.b16 %v2644
    %v2779 = vpack.c.b16 %v2776, %v2775
    %v2780 = vpack.c.b16 %v2778, %v2777
    %v2783 = vsel %vm35, %v2636, 0
    %v2785 = vsel %vm35, %v2637, 0
    %v2787 = vsel %vm35, %v2638, 0
    %v2790 = vsel %vm35, %v2639, 0
    %2792 = vmatprep.subr.bf16.mxu0 0
    %2793 = vmatpush1.bf16.msra.mxu0 %v2779
    %2794 = vmatprep.subr.bf16.mxu0 0
    %2795 = vmatpush1.bf16.msra.mxu0 %v2780
    %2796 = vmatprep.subr.bf16.mxu0 0
    %2797 = vmatpush1.bf16.msra.mxu0 0
    %2798 = vmatprep.subr.bf16.mxu0 0
    %2799 = vmatpush1.bf16.msra.mxu0 0
    %2800 = vmatprep.subr.bf16.mxu0 0
    %2801 = vmatpush1.bf16.msra.mxu0 0
    %2802 = vmatprep.subr.bf16.mxu0 0
    %2803 = vmatpush1.bf16.msra.mxu0 0
    %2804 = vmatprep.subr.bf16.mxu0 0
    %2805 = vmatpush1.bf16.msra.mxu0 0
    %2806 = vmatprep.subr.bf16.mxu0 0
    %2807 = vmatpush1.bf16.msra.mxu0 0
    %2808 = vmatprep.subr.bf16.mxu0 0
    %2809 = vmatpush1.bf16.msra.mxu0 0
    %2810 = vmatprep.subr.bf16.mxu0 0
    %2811 = vmatpush1.bf16.msra.mxu0 0
    %2812 = vmatprep.subr.bf16.mxu0 0
    %2813 = vmatpush1.bf16.msra.mxu0 0
    %2814 = vmatprep.subr.bf16.mxu0 0
    %2815 = vmatpush1.bf16.msra.mxu0 0
    %2816 = vmatprep.subr.bf16.mxu0 0
    %2817 = vmatpush1.bf16.msra.mxu0 0
    %2818 = vmatprep.subr.bf16.mxu0 0
    %2819 = vmatpush1.bf16.msra.mxu0 0
    %2820 = vmatprep.subr.bf16.mxu0 0
    %2821 = vmatpush1.bf16.msra.mxu0 0
    %2822 = vmatprep.subr.bf16.mxu0 0
    %2823 = vmatpush1.bf16.msra.mxu0 0
    %2824 = vmatprep.mubr.bf16.mxu0 0
    %2825 = vmatmul.mubr.bf16.gmra.mrb[0].mxu0 %v2783
    %v2826 = vpop.f32.mrb[0].mxu0
    %v2827 = vadd.f32 %v2741, %v2826
    %v2828 = vpop.f32.mrb[0].mxu0
    %v2829 = vpop.f32.mrb[0].mxu0
    %v2830 = vadd.f32 %v2744, %v2829
    %v2831 = vpop.f32.mrb[0].mxu0
    %2832 = vmatprep.mubr.bf16.mxu0 0
    %2833 = vmatmul.mubr.bf16.gmra.mrb[0].mxu0 %v2785
    %v2834 = vpop.f32.mrb[0].mxu0
    %v2835 = vadd.f32 %v2749, %v2834
    %v2836 = vpop.f32.mrb[0].mxu0
    %v2837 = vpop.f32.mrb[0].mxu0
    %v2838 = vadd.f32 %v2752, %v2837
    %v2839 = vpop.f32.mrb[0].mxu0
    %2840 = vmatprep.mubr.bf16.mxu0 0
    %2841 = vmatmul.mubr.bf16.gmra.mrb[0].mxu0 %v2787
    %v2842 = vpop.f32.mrb[0].mxu0
    %v2843 = vadd.f32 %v2757, %v2842
    %v2844 = vpop.f32.mrb[0].mxu0
    %v2845 = vpop.f32.mrb[0].mxu0
    %v2846 = vadd.f32 %v2760, %v2845
    %v2847 = vpop.f32.mrb[0].mxu0
    %2848 = vmatprep.mubr.bf16.mxu0 0
    %2849 = vmatmul.mubr.bf16.gmra.mrb[0].mxu0 %v2790
    %v2850 = vpop.f32.mrb[0].mxu0
    %v2851 = vadd.f32 %v2765, %v2850
    %v2852 = vpop.f32.mrb[0].mxu0
    %v2853 = vpop.f32.mrb[0].mxu0
    %v2854 = vadd.f32 %v2768, %v2853
    %v2855 = vpop.f32.mrb[0].mxu0
    %2856 = vdwg.mxu0
    %v2857 = vld [vmem:[#allocation2] sm:$0xfe]
    %s2858 = scalar_lea.vmem [#allocation4], 176
    %v2859 = vld [vmem:[%s2858] sm:$0xf]
    %v2860 = vld [vmem:[%s2858 + $0x4] sm:$0xf]
    %v2861 = vld [vmem:[%s2858 + $0x8] sm:$0xf]
    %v2862 = vld [vmem:[%s2858 + $0xc] sm:$0xf]
    %v2867 = vrot.slane %v2857, 1
    %v2868 = vrot.slane %v2637, 1
    %v2869 = vsel %vm321, %v2867, %v2868
    %v2870 = vrot.slane %v2638, 1
    %v2871 = vsel %vm321, %v2868, %v2870
    %v2872 = vrot.slane %v2645, 1
    %v2873 = vsel %vm321, %v2870, %v2872
    %v2878 = vunpack.c.l.b16 %v2859
    %v2879 = vunpack.c.l.b16 %v2860
    %v2880 = vunpack.c.l.b16 %v2861
    %v2881 = vunpack.c.l.b16 %v2862
    %v2882 = vpack.c.b16 %v2879, %v2878
    %v2883 = vpack.c.b16 %v2881, %v2880
    %v2887 = vsel %vm35, %v2869, 0
    %v2890 = vsel %vm35, %v2871, 0
    %v2893 = vsel %vm35, %v2873, 0
    %v2896 = vsel %vm35, %v2872, 0
    %2898 = vmatprep.subr.bf16.mxu0 0
    %2899 = vmatpush1.bf16.msra.mxu0 %v2882
    %2900 = vmatprep.subr.bf16.mxu0 0
    %2901 = vmatpush1.bf16.msra.mxu0 %v2883
    %2902 = vmatprep.subr.bf16.mxu0 0
    %2903 = vmatpush1.bf16.msra.mxu0 0
    %2904 = vmatprep.subr.bf16.mxu0 0
    %2905 = vmatpush1.bf16.msra.mxu0 0
    %2906 = vmatprep.subr.bf16.mxu0 0
    %2907 = vmatpush1.bf16.msra.mxu0 0
    %2908 = vmatprep.subr.bf16.mxu0 0
    %2909 = vmatpush1.bf16.msra.mxu0 0
    %2910 = vmatprep.subr.bf16.mxu0 0
    %2911 = vmatpush1.bf16.msra.mxu0 0
    %2912 = vmatprep.subr.bf16.mxu0 0
    %2913 = vmatpush1.bf16.msra.mxu0 0
    %2914 = vmatprep.subr.bf16.mxu0 0
    %2915 = vmatpush1.bf16.msra.mxu0 0
    %2916 = vmatprep.subr.bf16.mxu0 0
    %2917 = vmatpush1.bf16.msra.mxu0 0
    %2918 = vmatprep.subr.bf16.mxu0 0
    %2919 = vmatpush1.bf16.msra.mxu0 0
    %2920 = vmatprep.subr.bf16.mxu0 0
    %2921 = vmatpush1.bf16.msra.mxu0 0
    %2922 = vmatprep.subr.bf16.mxu0 0
    %2923 = vmatpush1.bf16.msra.mxu0 0
    %2924 = vmatprep.subr.bf16.mxu0 0
    %2925 = vmatpush1.bf16.msra.mxu0 0
    %2926 = vmatprep.subr.bf16.mxu0 0
    %2927 = vmatpush1.bf16.msra.mxu0 0
    %2928 = vmatprep.subr.bf16.mxu0 0
    %2929 = vmatpush1.bf16.msra.mxu0 0
    %2930 = vmatprep.mubr.bf16.mxu0 0
    %2931 = vmatmul.mubr.bf16.gmra.mrb[0].mxu0 %v2887
    %v2932 = vpop.f32.mrb[0].mxu0
    %v2933 = vadd.f32 0.0, %v2932
    %v2934 = vpop.f32.mrb[0].mxu0
    %v2935 = vpop.f32.mrb[0].mxu0
    %v2936 = vadd.f32 0.0, %v2935
    %v2937 = vpop.f32.mrb[0].mxu0
    %2938 = vmatprep.mubr.bf16.mxu0 0
    %2939 = vmatmul.mubr.bf16.gmra.mrb[0].mxu0 %v2890
    %v2940 = vpop.f32.mrb[0].mxu0
    %v2941 = vadd.f32 0.0, %v2940
    %v2942 = vpop.f32.mrb[0].mxu0
    %v2943 = vpop.f32.mrb[0].mxu0
    %v2944 = vadd.f32 0.0, %v2943
    %v2945 = vpop.f32.mrb[0].mxu0
    %2946 = vmatprep.mubr.bf16.mxu0 0
    %2947 = vmatmul.mubr.bf16.gmra.mrb[0].mxu0 %v2893
    %v2948 = vpop.f32.mrb[0].mxu0
    %v2949 = vadd.f32 0.0, %v2948
    %v2950 = vpop.f32.mrb[0].mxu0
    %v2951 = vpop.f32.mrb[0].mxu0
    %v2952 = vadd.f32 0.0, %v2951
    %v2953 = vpop.f32.mrb[0].mxu0
    %2954 = vmatprep.mubr.bf16.mxu0 0
    %2955 = vmatmul.mubr.bf16.gmra.mrb[0].mxu0 %v2896
    %v2956 = vpop.f32.mrb[0].mxu0
    %v2957 = vadd.f32 0.0, %v2956
    %v2958 = vpop.f32.mrb[0].mxu0
    %v2959 = vpop.f32.mrb[0].mxu0
    %v2960 = vadd.f32 0.0, %v2959
    %v2961 = vpop.f32.mrb[0].mxu0
    %2962 = vdwg.mxu0
    %v2963 = vadd.f32 %v2827, %v2933
    %v2964 = vadd.f32 %v2830, %v2936
    %v2965 = vadd.f32 %v2835, %v2941
    %v2966 = vadd.f32 %v2838, %v2944
    %v2967 = vadd.f32 %v2843, %v2949
    %v2968 = vadd.f32 %v2846, %v2952
    %v2969 = vadd.f32 %v2851, %v2957
    %v2970 = vadd.f32 %v2854, %v2960
    %v2971 = vld [vmem:[#allocation2] sm:$0xf0]
    %v2972 = vld [vmem:[#allocation2 + $0x8] sm:$0xff]
    %v2973 = vld [vmem:[#allocation2 + $0x10] sm:$0xff]
    %v2974 = vld [vmem:[#allocation2 + $0x18] sm:$0xff]
    %v2975 = vld [vmem:[#allocation2 + $0x20] sm:$0x7]
    %s2976 = scalar_lea.vmem [#allocation4], 192
    %v2977 = vld [vmem:[%s2976] sm:$0xf]
    %v2978 = vld [vmem:[%s2976 + $0x4] sm:$0xf]
    %v2979 = vld [vmem:[%s2976 + $0x8] sm:$0xf]
    %v2980 = vld [vmem:[%s2976 + $0xc] sm:$0xf]
    %vm2986 = vcmask 1043456
    %v2987 = vrot.slane %v2971, 4
    %v2988 = vrot.slane %v2972, 4
    %v2989 = vsel %vm2986, %v2987, %v2988
    %v2990 = vrot.slane %v2973, 4
    %v2991 = vsel %vm2986, %v2988, %v2990
    %v2992 = vrot.slane %v2974, 4
    %v2993 = vsel %vm2986, %v2990, %v2992
    %v2994 = vrot.slane %v2975, 4
    %v2995 = vsel %vm2986, %v2992, %v2994
    %v3000 = vunpack.c.l.b16 %v2977
    %v3001 = vunpack.c.l.b16 %v2978
    %v3002 = vunpack.c.l.b16 %v2979
    %v3003 = vunpack.c.l.b16 %v2980
    %v3004 = vpack.c.b16 %v3001, %v3000
    %v3005 = vpack.c.b16 %v3003, %v3002
    %v3009 = vsel %vm35, %v2989, 0
    %v3012 = vsel %vm35, %v2991, 0
    %v3015 = vsel %vm35, %v2993, 0
    %v3018 = vsel %vm35, %v2995, 0
    %3020 = vmatprep.subr.bf16.mxu0 0
    %3021 = vmatpush1.bf16.msra.mxu0 %v3004
    %3022 = vmatprep.subr.bf16.mxu0 0
    %3023 = vmatpush1.bf16.msra.mxu0 %v3005
    %3024 = vmatprep.subr.bf16.mxu0 0
    %3025 = vmatpush1.bf16.msra.mxu0 0
    %3026 = vmatprep.subr.bf16.mxu0 0
    %3027 = vmatpush1.bf16.msra.mxu0 0
    %3028 = vmatprep.subr.bf16.mxu0 0
    %3029 = vmatpush1.bf16.msra.mxu0 0
    %3030 = vmatprep.subr.bf16.mxu0 0
    %3031 = vmatpush1.bf16.msra.mxu0 0
    %3032 = vmatprep.subr.bf16.mxu0 0
    %3033 = vmatpush1.bf16.msra.mxu0 0
    %3034 = vmatprep.subr.bf16.mxu0 0
    %3035 = vmatpush1.bf16.msra.mxu0 0
    %3036 = vmatprep.subr.bf16.mxu0 0
    %3037 = vmatpush1.bf16.msra.mxu0 0
    %3038 = vmatprep.subr.bf16.mxu0 0
    %3039 = vmatpush1.bf16.msra.mxu0 0
    %3040 = vmatprep.subr.bf16.mxu0 0
    %3041 = vmatpush1.bf16.msra.mxu0 0
    %3042 = vmatprep.subr.bf16.mxu0 0
    %3043 = vmatpush1.bf16.msra.mxu0 0
    %3044 = vmatprep.subr.bf16.mxu0 0
    %3045 = vmatpush1.bf16.msra.mxu0 0
    %3046 = vmatprep.subr.bf16.mxu0 0
    %3047 = vmatpush1.bf16.msra.mxu0 0
    %3048 = vmatprep.subr.bf16.mxu0 0
    %3049 = vmatpush1.bf16.msra.mxu0 0
    %3050 = vmatprep.subr.bf16.mxu0 0
    %3051 = vmatpush1.bf16.msra.mxu0 0
    %3052 = vmatprep.mubr.bf16.mxu0 0
    %3053 = vmatmul.mubr.bf16.gmra.mrb[0].mxu0 %v3009
    %v3054 = vpop.f32.mrb[0].mxu0
    %v3055 = vadd.f32 0.0, %v3054
    %v3056 = vpop.f32.mrb[0].mxu0
    %v3057 = vpop.f32.mrb[0].mxu0
    %v3058 = vadd.f32 0.0, %v3057
    %v3059 = vpop.f32.mrb[0].mxu0
    %3060 = vmatprep.mubr.bf16.mxu0 0
    %3061 = vmatmul.mubr.bf16.gmra.mrb[0].mxu0 %v3012
    %v3062 = vpop.f32.mrb[0].mxu0
    %v3063 = vadd.f32 0.0, %v3062
    %v3064 = vpop.f32.mrb[0].mxu0
    %v3065 = vpop.f32.mrb[0].mxu0
    %v3066 = vadd.f32 0.0, %v3065
    %v3067 = vpop.f32.mrb[0].mxu0
    %3068 = vmatprep.mubr.bf16.mxu0 0
    %3069 = vmatmul.mubr.bf16.gmra.mrb[0].mxu0 %v3015
    %v3070 = vpop.f32.mrb[0].mxu0
    %v3071 = vadd.f32 0.0, %v3070
    %v3072 = vpop.f32.mrb[0].mxu0
    %v3073 = vpop.f32.mrb[0].mxu0
    %v3074 = vadd.f32 0.0, %v3073
    %v3075 = vpop.f32.mrb[0].mxu0
    %3076 = vmatprep.mubr.bf16.mxu0 0
    %3077 = vmatmul.mubr.bf16.gmra.mrb[0].mxu0 %v3018
    %v3078 = vpop.f32.mrb[0].mxu0
    %v3079 = vadd.f32 0.0, %v3078
    %v3080 = vpop.f32.mrb[0].mxu0
    %v3081 = vpop.f32.mrb[0].mxu0
    %v3082 = vadd.f32 0.0, %v3081
    %v3083 = vpop.f32.mrb[0].mxu0
    %3084 = vdwg.mxu0
    %v3085 = vadd.f32 %v2963, %v3055
    %v3086 = vadd.f32 %v2964, %v3058
    %v3087 = vadd.f32 %v2965, %v3063
    %v3088 = vadd.f32 %v2966, %v3066
    %v3089 = vadd.f32 %v2967, %v3071
    %v3090 = vadd.f32 %v2968, %v3074
    %v3091 = vadd.f32 %v2969, %v3079
    %v3092 = vadd.f32 %v2970, %v3082
    %v3093 = vld [vmem:[#allocation2 + $0x20] sm:$0xf]
    %s3094 = scalar_lea.vmem [#allocation4], 208
    %v3095 = vld [vmem:[%s3094] sm:$0xf]
    %v3096 = vld [vmem:[%s3094 + $0x4] sm:$0xf]
    %v3097 = vld [vmem:[%s3094 + $0x8] sm:$0xf]
    %v3098 = vld [vmem:[%s3094 + $0xc] sm:$0xf]
    %v3100 = vshrl.u32 %v2971, 16
    %v3102 = vrot.slane %v3100, 4
    %v3103 = vshll.u32 %v2971, 16
    %v3105 = vrot.slane %v3103, 5
    %v3106 = vor.u32 %v3102, %v3105
    %v3108 = vshrl.u32 %v2972, 16
    %v3110 = vrot.slane %v3108, 4
    %v3111 = vshll.u32 %v2972, 16
    %v3113 = vrot.slane %v3111, 5
    %v3114 = vor.u32 %v3110, %v3113
    %v3115 = vsel %vm2490, %v3106, %v3114
    %v3117 = vshrl.u32 %v2973, 16
    %v3119 = vrot.slane %v3117, 4
    %v3120 = vshll.u32 %v2973, 16
    %v3122 = vrot.slane %v3120, 5
    %v3123 = vor.u32 %v3119, %v3122
    %v3124 = vsel %vm2490, %v3114, %v3123
    %v3126 = vshrl.u32 %v2974, 16
    %v3128 = vrot.slane %v3126, 4
    %v3129 = vshll.u32 %v2974, 16
    %v3131 = vrot.slane %v3129, 5
    %v3132 = vor.u32 %v3128, %v3131
    %v3133 = vsel %vm2490, %v3123, %v3132
    %v3135 = vshrl.u32 %v3093, 16
    %v3137 = vrot.slane %v3135, 4
    %v3138 = vshll.u32 %v3093, 16
    %v3140 = vrot.slane %v3138, 5
    %v3141 = vor.u32 %v3137, %v3140
    %v3142 = vsel %vm2490, %v3132, %v3141
    %v3147 = vunpack.c.l.b16 %v3095
    %v3148 = vunpack.c.l.b16 %v3096
    %v3149 = vunpack.c.l.b16 %v3097
    %v3150 = vunpack.c.l.b16 %v3098
    %v3151 = vpack.c.b16 %v3148, %v3147
    %v3152 = vpack.c.b16 %v3150, %v3149
    %v3156 = vsel %vm35, %v3115, 0
    %v3159 = vsel %vm35, %v3124, 0
    %v3162 = vsel %vm35, %v3133, 0
    %v3165 = vsel %vm35, %v3142, 0
    %3167 = vmatprep.subr.bf16.mxu0 0
    %3168 = vmatpush1.bf16.msra.mxu0 %v3151
    %3169 = vmatprep.subr.bf16.mxu0 0
    %3170 = vmatpush1.bf16.msra.mxu0 %v3152
    %3171 = vmatprep.subr.bf16.mxu0 0
    %3172 = vmatpush1.bf16.msra.mxu0 0
    %3173 = vmatprep.subr.bf16.mxu0 0
    %3174 = vmatpush1.bf16.msra.mxu0 0
    %3175 = vmatprep.subr.bf16.mxu0 0
    %3176 = vmatpush1.bf16.msra.mxu0 0
    %3177 = vmatprep.subr.bf16.mxu0 0
    %3178 = vmatpush1.bf16.msra.mxu0 0
    %3179 = vmatprep.subr.bf16.mxu0 0
    %3180 = vmatpush1.bf16.msra.mxu0 0
    %3181 = vmatprep.subr.bf16.mxu0 0
    %3182 = vmatpush1.bf16.msra.mxu0 0
    %3183 = vmatprep.subr.bf16.mxu0 0
    %3184 = vmatpush1.bf16.msra.mxu0 0
    %3185 = vmatprep.subr.bf16.mxu0 0
    %3186 = vmatpush1.bf16.msra.mxu0 0
    %3187 = vmatprep.subr.bf16.mxu0 0
    %3188 = vmatpush1.bf16.msra.mxu0 0
    %3189 = vmatprep.subr.bf16.mxu0 0
    %3190 = vmatpush1.bf16.msra.mxu0 0
    %3191 = vmatprep.subr.bf16.mxu0 0
    %3192 = vmatpush1.bf16.msra.mxu0 0
    %3193 = vmatprep.subr.bf16.mxu0 0
    %3194 = vmatpush1.bf16.msra.mxu0 0
    %3195 = vmatprep.subr.bf16.mxu0 0
    %3196 = vmatpush1.bf16.msra.mxu0 0
    %3197 = vmatprep.subr.bf16.mxu0 0
    %3198 = vmatpush1.bf16.msra.mxu0 0
    %3199 = vmatprep.mubr.bf16.mxu0 0
    %3200 = vmatmul.mubr.bf16.gmra.mrb[0].mxu0 %v3156
    %v3201 = vpop.f32.mrb[0].mxu0
    %v3202 = vadd.f32 0.0, %v3201
    %v3203 = vpop.f32.mrb[0].mxu0
    %v3204 = vpop.f32.mrb[0].mxu0
    %v3205 = vadd.f32 0.0, %v3204
    %v3206 = vpop.f32.mrb[0].mxu0
    %3207 = vmatprep.mubr.bf16.mxu0 0
    %3208 = vmatmul.mubr.bf16.gmra.mrb[0].mxu0 %v3159
    %v3209 = vpop.f32.mrb[0].mxu0
    %v3210 = vadd.f32 0.0, %v3209
    %v3211 = vpop.f32.mrb[0].mxu0
    %v3212 = vpop.f32.mrb[0].mxu0
    %v3213 = vadd.f32 0.0, %v3212
    %v3214 = vpop.f32.mrb[0].mxu0
    %3215 = vmatprep.mubr.bf16.mxu0 0
    %3216 = vmatmul.mubr.bf16.gmra.mrb[0].mxu0 %v3162
    %v3217 = vpop.f32.mrb[0].mxu0
    %v3218 = vadd.f32 0.0, %v3217
    %v3219 = vpop.f32.mrb[0].mxu0
    %v3220 = vpop.f32.mrb[0].mxu0
    %v3221 = vadd.f32 0.0, %v3220
    %v3222 = vpop.f32.mrb[0].mxu0
    %3223 = vmatprep.mubr.bf16.mxu0 0
    %3224 = vmatmul.mubr.bf16.gmra.mrb[0].mxu0 %v3165
    %v3225 = vpop.f32.mrb[0].mxu0
    %v3226 = vadd.f32 0.0, %v3225
    %v3227 = vpop.f32.mrb[0].mxu0
    %v3228 = vpop.f32.mrb[0].mxu0
    %v3229 = vadd.f32 0.0, %v3228
    %v3230 = vpop.f32.mrb[0].mxu0
    %3231 = vdwg.mxu0
    %v3232 = vadd.f32 %v3085, %v3202
    %v3233 = vadd.f32 %v3086, %v3205
    %v3234 = vadd.f32 %v3087, %v3210
    %v3235 = vadd.f32 %v3088, %v3213
    %v3236 = vadd.f32 %v3089, %v3218
    %v3237 = vadd.f32 %v3090, %v3221
    %v3238 = vadd.f32 %v3091, %v3226
    %v3239 = vadd.f32 %v3092, %v3229
    %v3240 = vld [vmem:[#allocation2] sm:$0xe0]
    %s3241 = scalar_lea.vmem [#allocation4], 224
    %v3242 = vld [vmem:[%s3241] sm:$0xf]
    %v3243 = vld [vmem:[%s3241 + $0x4] sm:$0xf]
    %v3244 = vld [vmem:[%s3241 + $0x8] sm:$0xf]
    %v3245 = vld [vmem:[%s3241 + $0xc] sm:$0xf]
    %vm3248 = vcmask 1042432
    %v3249 = vrot.slane %v3240, 5
    %v3250 = vrot.slane %v2972, 5
    %v3251 = vsel %vm3248, %v3249, %v3250
    %v3252 = vrot.slane %v2973, 5
    %v3253 = vsel %vm3248, %v3250, %v3252
    %v3254 = vrot.slane %v2974, 5
    %v3255 = vsel %vm3248, %v3252, %v3254
    %v3256 = vrot.slane %v3093, 5
    %v3257 = vsel %vm3248, %v3254, %v3256
    %v3262 = vunpack.c.l.b16 %v3242
    %v3263 = vunpack.c.l.b16 %v3243
    %v3264 = vunpack.c.l.b16 %v3244
    %v3265 = vunpack.c.l.b16 %v3245
    %v3266 = vpack.c.b16 %v3263, %v3262
    %v3267 = vpack.c.b16 %v3265, %v3264
    %v3271 = vsel %vm35, %v3251, 0
    %v3274 = vsel %vm35, %v3253, 0
    %v3277 = vsel %vm35, %v3255, 0
    %v3280 = vsel %vm35, %v3257, 0
    %3282 = vmatprep.subr.bf16.mxu0 0
    %3283 = vmatpush1.bf16.msra.mxu0 %v3266
    %3284 = vmatprep.subr.bf16.mxu0 0
    %3285 = vmatpush1.bf16.msra.mxu0 %v3267
    %3286 = vmatprep.subr.bf16.mxu0 0
    %3287 = vmatpush1.bf16.msra.mxu0 0
    %3288 = vmatprep.subr.bf16.mxu0 0
    %3289 = vmatpush1.bf16.msra.mxu0 0
    %3290 = vmatprep.subr.bf16.mxu0 0
    %3291 = vmatpush1.bf16.msra.mxu0 0
    %3292 = vmatprep.subr.bf16.mxu0 0
    %3293 = vmatpush1.bf16.msra.mxu0 0
    %3294 = vmatprep.subr.bf16.mxu0 0
    %3295 = vmatpush1.bf16.msra.mxu0 0
    %3296 = vmatprep.subr.bf16.mxu0 0
    %3297 = vmatpush1.bf16.msra.mxu0 0
    %3298 = vmatprep.subr.bf16.mxu0 0
    %3299 = vmatpush1.bf16.msra.mxu0 0
    %3300 = vmatprep.subr.bf16.mxu0 0
    %3301 = vmatpush1.bf16.msra.mxu0 0
    %3302 = vmatprep.subr.bf16.mxu0 0
    %3303 = vmatpush1.bf16.msra.mxu0 0
    %3304 = vmatprep.subr.bf16.mxu0 0
    %3305 = vmatpush1.bf16.msra.mxu0 0
    %3306 = vmatprep.subr.bf16.mxu0 0
    %3307 = vmatpush1.bf16.msra.mxu0 0
    %3308 = vmatprep.subr.bf16.mxu0 0
    %3309 = vmatpush1.bf16.msra.mxu0 0
    %3310 = vmatprep.subr.bf16.mxu0 0
    %3311 = vmatpush1.bf16.msra.mxu0 0
    %3312 = vmatprep.subr.bf16.mxu0 0
    %3313 = vmatpush1.bf16.msra.mxu0 0
    %3314 = vmatprep.mubr.bf16.mxu0 0
    %3315 = vmatmul.mubr.bf16.gmra.mrb[0].mxu0 %v3271
    %v3316 = vpop.f32.mrb[0].mxu0
    %v3317 = vadd.f32 0.0, %v3316
    %v3318 = vpop.f32.mrb[0].mxu0
    %v3319 = vpop.f32.mrb[0].mxu0
    %v3320 = vadd.f32 0.0, %v3319
    %v3321 = vpop.f32.mrb[0].mxu0
    %3322 = vmatprep.mubr.bf16.mxu0 0
    %3323 = vmatmul.mubr.bf16.gmra.mrb[0].mxu0 %v3274
    %v3324 = vpop.f32.mrb[0].mxu0
    %v3325 = vadd.f32 0.0, %v3324
    %v3326 = vpop.f32.mrb[0].mxu0
    %v3327 = vpop.f32.mrb[0].mxu0
    %v3328 = vadd.f32 0.0, %v3327
    %v3329 = vpop.f32.mrb[0].mxu0
    %3330 = vmatprep.mubr.bf16.mxu0 0
    %3331 = vmatmul.mubr.bf16.gmra.mrb[0].mxu0 %v3277
    %v3332 = vpop.f32.mrb[0].mxu0
    %v3333 = vadd.f32 0.0, %v3332
    %v3334 = vpop.f32.mrb[0].mxu0
    %v3335 = vpop.f32.mrb[0].mxu0
    %v3336 = vadd.f32 0.0, %v3335
    %v3337 = vpop.f32.mrb[0].mxu0
    %3338 = vmatprep.mubr.bf16.mxu0 0
    %3339 = vmatmul.mubr.bf16.gmra.mrb[0].mxu0 %v3280
    %v3340 = vpop.f32.mrb[0].mxu0
    %v3341 = vadd.f32 0.0, %v3340
    %v3342 = vpop.f32.mrb[0].mxu0
    %v3343 = vpop.f32.mrb[0].mxu0
    %v3344 = vadd.f32 0.0, %v3343
    %v3345 = vpop.f32.mrb[0].mxu0
    %3346 = vdwg.mxu0
    %v3347 = vadd.f32 %v3232, %v3317
    %v3348 = vadd.f32 %v3233, %v3320
    %v3349 = vadd.f32 %v3234, %v3325
    %v3350 = vadd.f32 %v3235, %v3328
    %v3351 = vadd.f32 %v3236, %v3333
    %v3352 = vadd.f32 %v3237, %v3336
    %v3353 = vadd.f32 %v3238, %v3341
    %v3354 = vadd.f32 %v3239, %v3344
    %v3355 = vld [vmem:[#allocation2 + $0x20] sm:$0x7f]
    %s3356 = scalar_lea.vmem [#allocation4], 240
    %v3357 = vld [vmem:[%s3356] sm:$0xf]
    %v3358 = vld [vmem:[%s3356 + $0x4] sm:$0xf]
    %v3359 = vld [vmem:[%s3356 + $0x8] sm:$0xf]
    %v3360 = vld [vmem:[%s3356 + $0xc] sm:$0xf]
    %v3365 = vunpack.c.l.b16 %v3357
    %v3366 = vunpack.c.l.b16 %v3358
    %v3367 = vunpack.c.l.b16 %v3359
    %v3368 = vunpack.c.l.b16 %v3360
    %v3369 = vpack.c.b16 %v3366, %v3365
    %v3370 = vpack.c.b16 %v3368, %v3367
    %v3373 = vsel %vm35, %v2972, 0
    %v3375 = vsel %vm35, %v2973, 0
    %v3377 = vsel %vm35, %v2974, 0
    %v3380 = vsel %vm35, %v3355, 0
    %3382 = vmatprep.subr.bf16.mxu0 0
    %3383 = vmatpush1.bf16.msra.mxu0 %v3369
    %3384 = vmatprep.subr.bf16.mxu0 0
    %3385 = vmatpush1.bf16.msra.mxu0 %v3370
    %3386 = vmatprep.subr.bf16.mxu0 0
    %3387 = vmatpush1.bf16.msra.mxu0 0
    %3388 = vmatprep.subr.bf16.mxu0 0
    %3389 = vmatpush1.bf16.msra.mxu0 0
    %3390 = vmatprep.subr.bf16.mxu0 0
    %3391 = vmatpush1.bf16.msra.mxu0 0
    %3392 = vmatprep.subr.bf16.mxu0 0
    %3393 = vmatpush1.bf16.msra.mxu0 0
    %3394 = vmatprep.subr.bf16.mxu0 0
    %3395 = vmatpush1.bf16.msra.mxu0 0
    %3396 = vmatprep.subr.bf16.mxu0 0
    %3397 = vmatpush1.bf16.msra.mxu0 0
    %3398 = vmatprep.subr.bf16.mxu0 0
    %3399 = vmatpush1.bf16.msra.mxu0 0
    %3400 = vmatprep.subr.bf16.mxu0 0
    %3401 = vmatpush1.bf16.msra.mxu0 0
    %3402 = vmatprep.subr.bf16.mxu0 0
    %3403 = vmatpush1.bf16.msra.mxu0 0
    %3404 = vmatprep.subr.bf16.mxu0 0
    %3405 = vmatpush1.bf16.msra.mxu0 0
    %3406 = vmatprep.subr.bf16.mxu0 0
    %3407 = vmatpush1.bf16.msra.mxu0 0
    %3408 = vmatprep.subr.bf16.mxu0 0
    %3409 = vmatpush1.bf16.msra.mxu0 0
    %3410 = vmatprep.subr.bf16.mxu0 0
    %3411 = vmatpush1.bf16.msra.mxu0 0
    %3412 = vmatprep.subr.bf16.mxu0 0
    %3413 = vmatpush1.bf16.msra.mxu0 0
    %3414 = vmatprep.mubr.bf16.mxu0 0
    %3415 = vmatmul.mubr.bf16.gmra.mrb[0].mxu0 %v3373
    %v3416 = vpop.f32.mrb[0].mxu0
    %v3417 = vadd.f32 0.0, %v3416
    %v3418 = vpop.f32.mrb[0].mxu0
    %v3419 = vpop.f32.mrb[0].mxu0
    %v3420 = vadd.f32 0.0, %v3419
    %v3421 = vpop.f32.mrb[0].mxu0
    %3422 = vmatprep.mubr.bf16.mxu0 0
    %3423 = vmatmul.mubr.bf16.gmra.mrb[0].mxu0 %v3375
    %v3424 = vpop.f32.mrb[0].mxu0
    %v3425 = vadd.f32 0.0, %v3424
    %v3426 = vpop.f32.mrb[0].mxu0
    %v3427 = vpop.f32.mrb[0].mxu0
    %v3428 = vadd.f32 0.0, %v3427
    %v3429 = vpop.f32.mrb[0].mxu0
    %3430 = vmatprep.mubr.bf16.mxu0 0
    %3431 = vmatmul.mubr.bf16.gmra.mrb[0].mxu0 %v3377
    %v3432 = vpop.f32.mrb[0].mxu0
    %v3433 = vadd.f32 0.0, %v3432
    %v3434 = vpop.f32.mrb[0].mxu0
    %v3435 = vpop.f32.mrb[0].mxu0
    %v3436 = vadd.f32 0.0, %v3435
    %v3437 = vpop.f32.mrb[0].mxu0
    %3438 = vmatprep.mubr.bf16.mxu0 0
    %3439 = vmatmul.mubr.bf16.gmra.mrb[0].mxu0 %v3380
    %v3440 = vpop.f32.mrb[0].mxu0
    %v3441 = vadd.f32 0.0, %v3440
    %v3442 = vpop.f32.mrb[0].mxu0
    %v3443 = vpop.f32.mrb[0].mxu0
    %v3444 = vadd.f32 0.0, %v3443
    %v3445 = vpop.f32.mrb[0].mxu0
    %3446 = vdwg.mxu0
    %v3447 = vadd.f32 %v3347, %v3417
    %v3448 = vadd.f32 %v3348, %v3420
    %v3449 = vadd.f32 %v3349, %v3425
    %v3450 = vadd.f32 %v3350, %v3428
    %v3451 = vadd.f32 %v3351, %v3433
    %v3452 = vadd.f32 %v3352, %v3436
    %v3453 = vadd.f32 %v3353, %v3441
    %v3454 = vadd.f32 %v3354, %v3444
    %v3455 = vld [vmem:[#allocation2 + $0x20] sm:$0xff]
    %s3456 = scalar_lea.vmem [#allocation4], 256
    %v3457 = vld [vmem:[%s3456] sm:$0xf]
    %v3458 = vld [vmem:[%s3456 + $0x4] sm:$0xf]
    %v3459 = vld [vmem:[%s3456 + $0x8] sm:$0xf]
    %v3460 = vld [vmem:[%s3456 + $0xc] sm:$0xf]
    %v3461 = vrot.slane %v3111, 1
    %v3462 = vor.u32 %v3108, %v3461
    %v3463 = vrot.slane %v3120, 1
    %v3464 = vsel %vm102, %v3462, %v3463
    %v3465 = vor.u32 %v3117, %v3463
    %v3466 = vrot.slane %v3129, 1
    %v3467 = vsel %vm102, %v3465, %v3466
    %v3468 = vor.u32 %v3126, %v3466
    %v3470 = vshll.u32 %v3455, 16
    %v3472 = vrot.slane %v3470, 1
    %v3473 = vsel %vm102, %v3468, %v3472
    %v3474 = vshrl.u32 %v3455, 16
    %v3476 = vor.u32 %v3474, %v3472
    %v3481 = vunpack.c.l.b16 %v3457
    %v3482 = vunpack.c.l.b16 %v3458
    %v3483 = vunpack.c.l.b16 %v3459
    %v3484 = vunpack.c.l.b16 %v3460
    %v3485 = vpack.c.b16 %v3482, %v3481
    %v3486 = vpack.c.b16 %v3484, %v3483
    %v3490 = vsel %vm35, %v3464, 0
    %v3493 = vsel %vm35, %v3467, 0
    %v3496 = vsel %vm35, %v3473, 0
    %v3499 = vsel %vm35, %v3476, 0
    %3501 = vmatprep.subr.bf16.mxu0 0
    %3502 = vmatpush1.bf16.msra.mxu0 %v3485
    %3503 = vmatprep.subr.bf16.mxu0 0
    %3504 = vmatpush1.bf16.msra.mxu0 %v3486
    %3505 = vmatprep.subr.bf16.mxu0 0
    %3506 = vmatpush1.bf16.msra.mxu0 0
    %3507 = vmatprep.subr.bf16.mxu0 0
    %3508 = vmatpush1.bf16.msra.mxu0 0
    %3509 = vmatprep.subr.bf16.mxu0 0
    %3510 = vmatpush1.bf16.msra.mxu0 0
    %3511 = vmatprep.subr.bf16.mxu0 0
    %3512 = vmatpush1.bf16.msra.mxu0 0
    %3513 = vmatprep.subr.bf16.mxu0 0
    %3514 = vmatpush1.bf16.msra.mxu0 0
    %3515 = vmatprep.subr.bf16.mxu0 0
    %3516 = vmatpush1.bf16.msra.mxu0 0
    %3517 = vmatprep.subr.bf16.mxu0 0
    %3518 = vmatpush1.bf16.msra.mxu0 0
    %3519 = vmatprep.subr.bf16.mxu0 0
    %3520 = vmatpush1.bf16.msra.mxu0 0
    %3521 = vmatprep.subr.bf16.mxu0 0
    %3522 = vmatpush1.bf16.msra.mxu0 0
    %3523 = vmatprep.subr.bf16.mxu0 0
    %3524 = vmatpush1.bf16.msra.mxu0 0
    %3525 = vmatprep.subr.bf16.mxu0 0
    %3526 = vmatpush1.bf16.msra.mxu0 0
    %3527 = vmatprep.subr.bf16.mxu0 0
    %3528 = vmatpush1.bf16.msra.mxu0 0
    %3529 = vmatprep.subr.bf16.mxu0 0
    %3530 = vmatpush1.bf16.msra.mxu0 0
    %3531 = vmatprep.subr.bf16.mxu0 0
    %3532 = vmatpush1.bf16.msra.mxu0 0
    %3533 = vmatprep.mubr.bf16.mxu0 0
    %3534 = vmatmul.mubr.bf16.gmra.mrb[0].mxu0 %v3490
    %v3535 = vpop.f32.mrb[0].mxu0
    %v3536 = vadd.f32 0.0, %v3535
    %v3537 = vpop.f32.mrb[0].mxu0
    %v3538 = vpop.f32.mrb[0].mxu0
    %v3539 = vadd.f32 0.0, %v3538
    %v3540 = vpop.f32.mrb[0].mxu0
    %3541 = vmatprep.mubr.bf16.mxu0 0
    %3542 = vmatmul.mubr.bf16.gmra.mrb[0].mxu0 %v3493
    %v3543 = vpop.f32.mrb[0].mxu0
    %v3544 = vadd.f32 0.0, %v3543
    %v3545 = vpop.f32.mrb[0].mxu0
    %v3546 = vpop.f32.mrb[0].mxu0
    %v3547 = vadd.f32 0.0, %v3546
    %v3548 = vpop.f32.mrb[0].mxu0
    %3549 = vmatprep.mubr.bf16.mxu0 0
    %3550 = vmatmul.mubr.bf16.gmra.mrb[0].mxu0 %v3496
    %v3551 = vpop.f32.mrb[0].mxu0
    %v3552 = vadd.f32 0.0, %v3551
    %v3553 = vpop.f32.mrb[0].mxu0
    %v3554 = vpop.f32.mrb[0].mxu0
    %v3555 = vadd.f32 0.0, %v3554
    %v3556 = vpop.f32.mrb[0].mxu0
    %3557 = vmatprep.mubr.bf16.mxu0 0
    %3558 = vmatmul.mubr.bf16.gmra.mrb[0].mxu0 %v3499
    %v3559 = vpop.f32.mrb[0].mxu0
    %v3560 = vadd.f32 0.0, %v3559
    %v3561 = vpop.f32.mrb[0].mxu0
    %v3562 = vpop.f32.mrb[0].mxu0
    %v3563 = vadd.f32 0.0, %v3562
    %v3564 = vpop.f32.mrb[0].mxu0
    %3565 = vdwg.mxu0
    %v3566 = vadd.f32 %v3447, %v3536
    %v3567 = vadd.f32 %v3448, %v3539
    %v3568 = vadd.f32 %v3449, %v3544
    %v3569 = vadd.f32 %v3450, %v3547
    %v3570 = vadd.f32 %v3451, %v3552
    %v3571 = vadd.f32 %v3452, %v3555
    %v3572 = vadd.f32 %v3453, %v3560
    %v3573 = vadd.f32 %v3454, %v3563
    %v3574 = vld [vmem:[#allocation2 + $0x8] sm:$0xfe]
    %s3575 = scalar_lea.vmem [#allocation4], 272
    %v3576 = vld [vmem:[%s3575] sm:$0xf]
    %v3577 = vld [vmem:[%s3575 + $0x4] sm:$0xf]
    %v3578 = vld [vmem:[%s3575 + $0x8] sm:$0xf]
    %v3579 = vld [vmem:[%s3575 + $0xc] sm:$0xf]
    %v3582 = vrot.slane %v3574, 1
    %v3583 = vrot.slane %v2973, 1
    %v3584 = vsel %vm321, %v3582, %v3583
    %v3585 = vrot.slane %v2974, 1
    %v3586 = vsel %vm321, %v3583, %v3585
    %v3587 = vrot.slane %v3455, 1
    %v3588 = vsel %vm321, %v3585, %v3587
    %v3593 = vunpack.c.l.b16 %v3576
    %v3594 = vunpack.c.l.b16 %v3577
    %v3595 = vunpack.c.l.b16 %v3578
    %v3596 = vunpack.c.l.b16 %v3579
    %v3597 = vpack.c.b16 %v3594, %v3593
    %v3598 = vpack.c.b16 %v3596, %v3595
    %v3602 = vsel %vm35, %v3584, 0
    %v3605 = vsel %vm35, %v3586, 0
    %v3608 = vsel %vm35, %v3588, 0
    %v3611 = vsel %vm35, %v3587, 0
    %3613 = vmatprep.subr.bf16.mxu0 0
    %3614 = vmatpush1.bf16.msra.mxu0 %v3597
    %3615 = vmatprep.subr.bf16.mxu0 0
    %3616 = vmatpush1.bf16.msra.mxu0 %v3598
    %3617 = vmatprep.subr.bf16.mxu0 0
    %3618 = vmatpush1.bf16.msra.mxu0 0
    %3619 = vmatprep.subr.bf16.mxu0 0
    %3620 = vmatpush1.bf16.msra.mxu0 0
    %3621 = vmatprep.subr.bf16.mxu0 0
    %3622 = vmatpush1.bf16.msra.mxu0 0
    %3623 = vmatprep.subr.bf16.mxu0 0
    %3624 = vmatpush1.bf16.msra.mxu0 0
    %3625 = vmatprep.subr.bf16.mxu0 0
    %3626 = vmatpush1.bf16.msra.mxu0 0
    %3627 = vmatprep.subr.bf16.mxu0 0
    %3628 = vmatpush1.bf16.msra.mxu0 0
    %3629 = vmatprep.subr.bf16.mxu0 0
    %3630 = vmatpush1.bf16.msra.mxu0 0
    %3631 = vmatprep.subr.bf16.mxu0 0
    %3632 = vmatpush1.bf16.msra.mxu0 0
    %3633 = vmatprep.subr.bf16.mxu0 0
    %3634 = vmatpush1.bf16.msra.mxu0 0
    %3635 = vmatprep.subr.bf16.mxu0 0
    %3636 = vmatpush1.bf16.msra.mxu0 0
    %3637 = vmatprep.subr.bf16.mxu0 0
    %3638 = vmatpush1.bf16.msra.mxu0 0
    %3639 = vmatprep.subr.bf16.mxu0 0
    %3640 = vmatpush1.bf16.msra.mxu0 0
    %3641 = vmatprep.subr.bf16.mxu0 0
    %3642 = vmatpush1.bf16.msra.mxu0 0
    %3643 = vmatprep.subr.bf16.mxu0 0
    %3644 = vmatpush1.bf16.msra.mxu0 0
    %3645 = vmatprep.mubr.bf16.mxu0 0
    %3646 = vmatmul.mubr.bf16.gmra.mrb[0].mxu0 %v3602
    %v3647 = vpop.f32.mrb[0].mxu0
    %v3648 = vadd.f32 0.0, %v3647
    %v3649 = vpop.f32.mrb[0].mxu0
    %v3650 = vpop.f32.mrb[0].mxu0
    %v3651 = vadd.f32 0.0, %v3650
    %v3652 = vpop.f32.mrb[0].mxu0
    %3653 = vmatprep.mubr.bf16.mxu0 0
    %3654 = vmatmul.mubr.bf16.gmra.mrb[0].mxu0 %v3605
    %v3655 = vpop.f32.mrb[0].mxu0
    %v3656 = vadd.f32 0.0, %v3655
    %v3657 = vpop.f32.mrb[0].mxu0
    %v3658 = vpop.f32.mrb[0].mxu0
    %v3659 = vadd.f32 0.0, %v3658
    %v3660 = vpop.f32.mrb[0].mxu0
    %3661 = vmatprep.mubr.bf16.mxu0 0
    %3662 = vmatmul.mubr.bf16.gmra.mrb[0].mxu0 %v3608
    %v3663 = vpop.f32.mrb[0].mxu0
    %v3664 = vadd.f32 0.0, %v3663
    %v3665 = vpop.f32.mrb[0].mxu0
    %v3666 = vpop.f32.mrb[0].mxu0
    %v3667 = vadd.f32 0.0, %v3666
    %v3668 = vpop.f32.mrb[0].mxu0
    %3669 = vmatprep.mubr.bf16.mxu0 0
    %3670 = vmatmul.mubr.bf16.gmra.mrb[0].mxu0 %v3611
    %v3671 = vpop.f32.mrb[0].mxu0
    %v3672 = vadd.f32 0.0, %v3671
    %v3673 = vpop.f32.mrb[0].mxu0
    %v3674 = vpop.f32.mrb[0].mxu0
    %v3675 = vadd.f32 0.0, %v3674
    %v3676 = vpop.f32.mrb[0].mxu0
    %3677 = vdwg.mxu0
    %v3678 = vadd.f32 %v3566, %v3648
    %v3679 = vadd.f32 %v3567, %v3651
    %v3680 = vadd.f32 %v3568, %v3656
    %v3681 = vadd.f32 %v3569, %v3659
    %v3682 = vadd.f32 %v3570, %v3664
    %v3683 = vadd.f32 %v3571, %v3667
    %v3684 = vadd.f32 %v3572, %v3672
    %v3685 = vadd.f32 %v3573, %v3675
    %v3686 = vld [vmem:[%s2626] sm:$0xff]
    %v3687 = vld [vmem:[%s2626 + $0x8] sm:$0xff]
    %v3688 = vld [vmem:[%s2626 + $0x10] sm:$0xff]
    %v3689 = vld [vmem:[%s2626 + $0x18] sm:$0x7f]
    %v3690 = vld [vmem:[%s2626 + $0x18] sm:$0xff]
    %v3692 = vshrl.u32 %v3686, 16
    %v3694 = vshll.u32 %v3686, 16
    %v3696 = vrot.slane %v3694, 1
    %v3697 = vor.u32 %v3692, %v3696
    %v3699 = vshll.u32 %v3687, 16
    %v3701 = vrot.slane %v3699, 1
    %v3702 = vsel %vm102, %v3697, %v3701
    %v3703 = vshrl.u32 %v3687, 16
    %v3705 = vor.u32 %v3703, %v3701
    %v3707 = vshll.u32 %v3688, 16
    %v3709 = vrot.slane %v3707, 1
    %v3710 = vsel %vm102, %v3705, %v3709
    %v3711 = vshrl.u32 %v3688, 16
    %v3713 = vor.u32 %v3711, %v3709
    %v3715 = vshll.u32 %v3690, 16
    %v3717 = vrot.slane %v3715, 1
    %v3718 = vsel %vm102, %v3713, %v3717
    %v3719 = vshrl.u32 %v3690, 16
    %v3721 = vor.u32 %v3719, %v3717
    %v3723 = vsel %vm35, %v3702, 0
    %v3726 = vsel %vm35, %v3710, 0
    %v3729 = vsel %vm35, %v3718, 0
    %v3732 = vsel %vm35, %v3721, 0
    %3734 = vmatprep.subr.bf16.mxu0 0
    %3735 = vmatpush1.bf16.msra.mxu0 %v2690
    %3736 = vmatprep.subr.bf16.mxu0 0
    %3737 = vmatpush1.bf16.msra.mxu0 %v2691
    %3738 = vmatprep.subr.bf16.mxu0 0
    %3739 = vmatpush1.bf16.msra.mxu0 0
    %3740 = vmatprep.subr.bf16.mxu0 0
    %3741 = vmatpush1.bf16.msra.mxu0 0
    %3742 = vmatprep.subr.bf16.mxu0 0
    %3743 = vmatpush1.bf16.msra.mxu0 0
    %3744 = vmatprep.subr.bf16.mxu0 0
    %3745 = vmatpush1.bf16.msra.mxu0 0
    %3746 = vmatprep.subr.bf16.mxu0 0
    %3747 = vmatpush1.bf16.msra.mxu0 0
    %3748 = vmatprep.subr.bf16.mxu0 0
    %3749 = vmatpush1.bf16.msra.mxu0 0
    %3750 = vmatprep.subr.bf16.mxu0 0
    %3751 = vmatpush1.bf16.msra.mxu0 0
    %3752 = vmatprep.subr.bf16.mxu0 0
    %3753 = vmatpush1.bf16.msra.mxu0 0
    %3754 = vmatprep.subr.bf16.mxu0 0
    %3755 = vmatpush1.bf16.msra.mxu0 0
    %3756 = vmatprep.subr.bf16.mxu0 0
    %3757 = vmatpush1.bf16.msra.mxu0 0
    %3758 = vmatprep.subr.bf16.mxu0 0
    %3759 = vmatpush1.bf16.msra.mxu0 0
    %3760 = vmatprep.subr.bf16.mxu0 0
    %3761 = vmatpush1.bf16.msra.mxu0 0
    %3762 = vmatprep.subr.bf16.mxu0 0
    %3763 = vmatpush1.bf16.msra.mxu0 0
    %3764 = vmatprep.subr.bf16.mxu0 0
    %3765 = vmatpush1.bf16.msra.mxu0 0
    %3766 = vmatprep.mubr.bf16.mxu0 0
    %3767 = vmatmul.mubr.bf16.gmra.mrb[0].mxu0 %v3723
    %v3768 = vpop.f32.mrb[0].mxu0
    %v3769 = vadd.f32 0.0, %v3768
    %v3770 = vpop.f32.mrb[0].mxu0
    %v3771 = vpop.f32.mrb[0].mxu0
    %v3772 = vadd.f32 0.0, %v3771
    %v3773 = vpop.f32.mrb[0].mxu0
    %3774 = vmatprep.mubr.bf16.mxu0 0
    %3775 = vmatmul.mubr.bf16.gmra.mrb[0].mxu0 %v3726
    %v3776 = vpop.f32.mrb[0].mxu0
    %v3777 = vadd.f32 0.0, %v3776
    %v3778 = vpop.f32.mrb[0].mxu0
    %v3779 = vpop.f32.mrb[0].mxu0
    %v3780 = vadd.f32 0.0, %v3779
    %v3781 = vpop.f32.mrb[0].mxu0
    %3782 = vmatprep.mubr.bf16.mxu0 0
    %3783 = vmatmul.mubr.bf16.gmra.mrb[0].mxu0 %v3729
    %v3784 = vpop.f32.mrb[0].mxu0
    %v3785 = vadd.f32 0.0, %v3784
    %v3786 = vpop.f32.mrb[0].mxu0
    %v3787 = vpop.f32.mrb[0].mxu0
    %v3788 = vadd.f32 0.0, %v3787
    %v3789 = vpop.f32.mrb[0].mxu0
    %3790 = vmatprep.mubr.bf16.mxu0 0
    %3791 = vmatmul.mubr.bf16.gmra.mrb[0].mxu0 %v3732
    %v3792 = vpop.f32.mrb[0].mxu0
    %v3793 = vadd.f32 0.0, %v3792
    %v3794 = vpop.f32.mrb[0].mxu0
    %v3795 = vpop.f32.mrb[0].mxu0
    %v3796 = vadd.f32 0.0, %v3795
    %v3797 = vpop.f32.mrb[0].mxu0
    %3798 = vdwg.mxu0
    %v3799 = vsel %vm35, %v3686, 0
    %v3801 = vsel %vm35, %v3687, 0
    %v3803 = vsel %vm35, %v3688, 0
    %v3806 = vsel %vm35, %v3689, 0
    %3808 = vmatprep.subr.bf16.mxu0 0
    %3809 = vmatpush1.bf16.msra.mxu0 %v2779
    %3810 = vmatprep.subr.bf16.mxu0 0
    %3811 = vmatpush1.bf16.msra.mxu0 %v2780
    %3812 = vmatprep.subr.bf16.mxu0 0
    %3813 = vmatpush1.bf16.msra.mxu0 0
    %3814 = vmatprep.subr.bf16.mxu0 0
    %3815 = vmatpush1.bf16.msra.mxu0 0
    %3816 = vmatprep.subr.bf16.mxu0 0
    %3817 = vmatpush1.bf16.msra.mxu0 0
    %3818 = vmatprep.subr.bf16.mxu0 0
    %3819 = vmatpush1.bf16.msra.mxu0 0
    %3820 = vmatprep.subr.bf16.mxu0 0
    %3821 = vmatpush1.bf16.msra.mxu0 0
    %3822 = vmatprep.subr.bf16.mxu0 0
    %3823 = vmatpush1.bf16.msra.mxu0 0
    %3824 = vmatprep.subr.bf16.mxu0 0
    %3825 = vmatpush1.bf16.msra.mxu0 0
    %3826 = vmatprep.subr.bf16.mxu0 0
    %3827 = vmatpush1.bf16.msra.mxu0 0
    %3828 = vmatprep.subr.bf16.mxu0 0
    %3829 = vmatpush1.bf16.msra.mxu0 0
    %3830 = vmatprep.subr.bf16.mxu0 0
    %3831 = vmatpush1.bf16.msra.mxu0 0
    %3832 = vmatprep.subr.bf16.mxu0 0
    %3833 = vmatpush1.bf16.msra.mxu0 0
    %3834 = vmatprep.subr.bf16.mxu0 0
    %3835 = vmatpush1.bf16.msra.mxu0 0
    %3836 = vmatprep.subr.bf16.mxu0 0
    %3837 = vmatpush1.bf16.msra.mxu0 0
    %3838 = vmatprep.subr.bf16.mxu0 0
    %3839 = vmatpush1.bf16.msra.mxu0 0
    %3840 = vmatprep.mubr.bf16.mxu0 0
    %3841 = vmatmul.mubr.bf16.gmra.mrb[0].mxu0 %v3799
    %v3842 = vpop.f32.mrb[0].mxu0
    %v3843 = vadd.f32 %v3769, %v3842
    %v3844 = vpop.f32.mrb[0].mxu0
    %v3845 = vpop.f32.mrb[0].mxu0
    %v3846 = vadd.f32 %v3772, %v3845
    %v3847 = vpop.f32.mrb[0].mxu0
    %3848 = vmatprep.mubr.bf16.mxu0 0
    %3849 = vmatmul.mubr.bf16.gmra.mrb[0].mxu0 %v3801
    %v3850 = vpop.f32.mrb[0].mxu0
    %v3851 = vadd.f32 %v3777, %v3850
    %v3852 = vpop.f32.mrb[0].mxu0
    %v3853 = vpop.f32.mrb[0].mxu0
    %v3854 = vadd.f32 %v3780, %v3853
    %v3855 = vpop.f32.mrb[0].mxu0
    %3856 = vmatprep.mubr.bf16.mxu0 0
    %3857 = vmatmul.mubr.bf16.gmra.mrb[0].mxu0 %v3803
    %v3858 = vpop.f32.mrb[0].mxu0
    %v3859 = vadd.f32 %v3785, %v3858
    %v3860 = vpop.f32.mrb[0].mxu0
    %v3861 = vpop.f32.mrb[0].mxu0
    %v3862 = vadd.f32 %v3788, %v3861
    %v3863 = vpop.f32.mrb[0].mxu0
    %3864 = vmatprep.mubr.bf16.mxu0 0
    %3865 = vmatmul.mubr.bf16.gmra.mrb[0].mxu0 %v3806
    %v3866 = vpop.f32.mrb[0].mxu0
    %v3867 = vadd.f32 %v3793, %v3866
    %v3868 = vpop.f32.mrb[0].mxu0
    %v3869 = vpop.f32.mrb[0].mxu0
    %v3870 = vadd.f32 %v3796, %v3869
    %v3871 = vpop.f32.mrb[0].mxu0
    %3872 = vdwg.mxu0
    %v3873 = vld [vmem:[%s2626] sm:$0xfe]
    %v3878 = vrot.slane %v3873, 1
    %v3879 = vrot.slane %v3687, 1
    %v3880 = vsel %vm321, %v3878, %v3879
    %v3881 = vrot.slane %v3688, 1
    %v3882 = vsel %vm321, %v3879, %v3881
    %v3883 = vrot.slane %v3690, 1
    %v3884 = vsel %vm321, %v3881, %v3883
    %v3886 = vsel %vm35, %v3880, 0
    %v3889 = vsel %vm35, %v3882, 0
    %v3892 = vsel %vm35, %v3884, 0
    %v3895 = vsel %vm35, %v3883, 0
    %3897 = vmatprep.subr.bf16.mxu0 0
    %3898 = vmatpush1.bf16.msra.mxu0 %v2882
    %3899 = vmatprep.subr.bf16.mxu0 0
    %3900 = vmatpush1.bf16.msra.mxu0 %v2883
    %3901 = vmatprep.subr.bf16.mxu0 0
    %3902 = vmatpush1.bf16.msra.mxu0 0
    %3903 = vmatprep.subr.bf16.mxu0 0
    %3904 = vmatpush1.bf16.msra.mxu0 0
    %3905 = vmatprep.subr.bf16.mxu0 0
    %3906 = vmatpush1.bf16.msra.mxu0 0
    %3907 = vmatprep.subr.bf16.mxu0 0
    %3908 = vmatpush1.bf16.msra.mxu0 0
    %3909 = vmatprep.subr.bf16.mxu0 0
    %3910 = vmatpush1.bf16.msra.mxu0 0
    %3911 = vmatprep.subr.bf16.mxu0 0
    %3912 = vmatpush1.bf16.msra.mxu0 0
    %3913 = vmatprep.subr.bf16.mxu0 0
    %3914 = vmatpush1.bf16.msra.mxu0 0
    %3915 = vmatprep.subr.bf16.mxu0 0
    %3916 = vmatpush1.bf16.msra.mxu0 0
    %3917 = vmatprep.subr.bf16.mxu0 0
    %3918 = vmatpush1.bf16.msra.mxu0 0
    %3919 = vmatprep.subr.bf16.mxu0 0
    %3920 = vmatpush1.bf16.msra.mxu0 0
    %3921 = vmatprep.subr.bf16.mxu0 0
    %3922 = vmatpush1.bf16.msra.mxu0 0
    %3923 = vmatprep.subr.bf16.mxu0 0
    %3924 = vmatpush1.bf16.msra.mxu0 0
    %3925 = vmatprep.subr.bf16.mxu0 0
    %3926 = vmatpush1.bf16.msra.mxu0 0
    %3927 = vmatprep.subr.bf16.mxu0 0
    %3928 = vmatpush1.bf16.msra.mxu0 0
    %3929 = vmatprep.mubr.bf16.mxu0 0
    %3930 = vmatmul.mubr.bf16.gmra.mrb[0].mxu0 %v3886
    %v3931 = vpop.f32.mrb[0].mxu0
    %v3932 = vadd.f32 0.0, %v3931
    %v3933 = vpop.f32.mrb[0].mxu0
    %v3934 = vpop.f32.mrb[0].mxu0
    %v3935 = vadd.f32 0.0, %v3934
    %v3936 = vpop.f32.mrb[0].mxu0
    %3937 = vmatprep.mubr.bf16.mxu0 0
    %3938 = vmatmul.mubr.bf16.gmra.mrb[0].mxu0 %v3889
    %v3939 = vpop.f32.mrb[0].mxu0
    %v3940 = vadd.f32 0.0, %v3939
    %v3941 = vpop.f32.mrb[0].mxu0
    %v3942 = vpop.f32.mrb[0].mxu0
    %v3943 = vadd.f32 0.0, %v3942
    %v3944 = vpop.f32.mrb[0].mxu0
    %3945 = vmatprep.mubr.bf16.mxu0 0
    %3946 = vmatmul.mubr.bf16.gmra.mrb[0].mxu0 %v3892
    %v3947 = vpop.f32.mrb[0].mxu0
    %v3948 = vadd.f32 0.0, %v3947
    %v3949 = vpop.f32.mrb[0].mxu0
    %v3950 = vpop.f32.mrb[0].mxu0
    %v3951 = vadd.f32 0.0, %v3950
    %v3952 = vpop.f32.mrb[0].mxu0
    %3953 = vmatprep.mubr.bf16.mxu0 0
    %3954 = vmatmul.mubr.bf16.gmra.mrb[0].mxu0 %v3895
    %v3955 = vpop.f32.mrb[0].mxu0
    %v3956 = vadd.f32 0.0, %v3955
    %v3957 = vpop.f32.mrb[0].mxu0
    %v3958 = vpop.f32.mrb[0].mxu0
    %v3959 = vadd.f32 0.0, %v3958
    %v3960 = vpop.f32.mrb[0].mxu0
    %3961 = vdwg.mxu0
    %v3962 = vadd.f32 %v3843, %v3932
    %v3963 = vadd.f32 %v3846, %v3935
    %v3964 = vadd.f32 %v3851, %v3940
    %v3965 = vadd.f32 %v3854, %v3943
    %v3966 = vadd.f32 %v3859, %v3948
    %v3967 = vadd.f32 %v3862, %v3951
    %v3968 = vadd.f32 %v3867, %v3956
    %v3969 = vadd.f32 %v3870, %v3959
    %v3970 = vld [vmem:[%s2626] sm:$0xf0]
    %v3971 = vld [vmem:[%s2626 + $0x8] sm:$0xff]
    %v3972 = vld [vmem:[%s2626 + $0x10] sm:$0xff]
    %v3973 = vld [vmem:[%s2626 + $0x18] sm:$0xff]
    %v3974 = vld [vmem:[%s2626 + $0x20] sm:$0x7]
    %v3980 = vrot.slane %v3970, 4
    %v3981 = vrot.slane %v3971, 4
    %v3982 = vsel %vm2986, %v3980, %v3981
    %v3983 = vrot.slane %v3972, 4
    %v3984 = vsel %vm2986, %v3981, %v3983
    %v3985 = vrot.slane %v3973, 4
    %v3986 = vsel %vm2986, %v3983, %v3985
    %v3987 = vrot.slane %v3974, 4
    %v3988 = vsel %vm2986, %v3985, %v3987
    %v3990 = vsel %vm35, %v3982, 0
    %v3993 = vsel %vm35, %v3984, 0
    %v3996 = vsel %vm35, %v3986, 0
    %v3999 = vsel %vm35, %v3988, 0
    %4001 = vmatprep.subr.bf16.mxu0 0
    %4002 = vmatpush1.bf16.msra.mxu0 %v3004
    %4003 = vmatprep.subr.bf16.mxu0 0
    %4004 = vmatpush1.bf16.msra.mxu0 %v3005
    %4005 = vmatprep.subr.bf16.mxu0 0
    %4006 = vmatpush1.bf16.msra.mxu0 0
    %4007 = vmatprep.subr.bf16.mxu0 0
    %4008 = vmatpush1.bf16.msra.mxu0 0
    %4009 = vmatprep.subr.bf16.mxu0 0
    %4010 = vmatpush1.bf16.msra.mxu0 0
    %4011 = vmatprep.subr.bf16.mxu0 0
    %4012 = vmatpush1.bf16.msra.mxu0 0
    %4013 = vmatprep.subr.bf16.mxu0 0
    %4014 = vmatpush1.bf16.msra.mxu0 0
    %4015 = vmatprep.subr.bf16.mxu0 0
    %4016 = vmatpush1.bf16.msra.mxu0 0
    %4017 = vmatprep.subr.bf16.mxu0 0
    %4018 = vmatpush1.bf16.msra.mxu0 0
    %4019 = vmatprep.subr.bf16.mxu0 0
    %4020 = vmatpush1.bf16.msra.mxu0 0
    %4021 = vmatprep.subr.bf16.mxu0 0
    %4022 = vmatpush1.bf16.msra.mxu0 0
    %4023 = vmatprep.subr.bf16.mxu0 0
    %4024 = vmatpush1.bf16.msra.mxu0 0
    %4025 = vmatprep.subr.bf16.mxu0 0
    %4026 = vmatpush1.bf16.msra.mxu0 0
    %4027 = vmatprep.subr.bf16.mxu0 0
    %4028 = vmatpush1.bf16.msra.mxu0 0
    %4029 = vmatprep.subr.bf16.mxu0 0
    %4030 = vmatpush1.bf16.msra.mxu0 0
    %4031 = vmatprep.subr.bf16.mxu0 0
    %4032 = vmatpush1.bf16.msra.mxu0 0
    %4033 = vmatprep.mubr.bf16.mxu0 0
    %4034 = vmatmul.mubr.bf16.gmra.mrb[0].mxu0 %v3990
    %v4035 = vpop.f32.mrb[0].mxu0
    %v4036 = vadd.f32 0.0, %v4035
    %v4037 = vpop.f32.mrb[0].mxu0
    %v4038 = vpop.f32.mrb[0].mxu0
    %v4039 = vadd.f32 0.0, %v4038
    %v4040 = vpop.f32.mrb[0].mxu0
    %4041 = vmatprep.mubr.bf16.mxu0 0
    %4042 = vmatmul.mubr.bf16.gmra.mrb[0].mxu0 %v3993
    %v4043 = vpop.f32.mrb[0].mxu0
    %v4044 = vadd.f32 0.0, %v4043
    %v4045 = vpop.f32.mrb[0].mxu0
    %v4046 = vpop.f32.mrb[0].mxu0
    %v4047 = vadd.f32 0.0, %v4046
    %v4048 = vpop.f32.mrb[0].mxu0
    %4049 = vmatprep.mubr.bf16.mxu0 0
    %4050 = vmatmul.mubr.bf16.gmra.mrb[0].mxu0 %v3996
    %v4051 = vpop.f32.mrb[0].mxu0
    %v4052 = vadd.f32 0.0, %v4051
    %v4053 = vpop.f32.mrb[0].mxu0
    %v4054 = vpop.f32.mrb[0].mxu0
    %v4055 = vadd.f32 0.0, %v4054
    %v4056 = vpop.f32.mrb[0].mxu0
    %4057 = vmatprep.mubr.bf16.mxu0 0
    %4058 = vmatmul.mubr.bf16.gmra.mrb[0].mxu0 %v3999
    %v4059 = vpop.f32.mrb[0].mxu0
    %v4060 = vadd.f32 0.0, %v4059
    %v4061 = vpop.f32.mrb[0].mxu0
    %v4062 = vpop.f32.mrb[0].mxu0
    %v4063 = vadd.f32 0.0, %v4062
    %v4064 = vpop.f32.mrb[0].mxu0
    %4065 = vdwg.mxu0
    %v4066 = vadd.f32 %v3962, %v4036
    %v4067 = vadd.f32 %v3963, %v4039
    %v4068 = vadd.f32 %v3964, %v4044
    %v4069 = vadd.f32 %v3965, %v4047
    %v4070 = vadd.f32 %v3966, %v4052
    %v4071 = vadd.f32 %v3967, %v4055
    %v4072 = vadd.f32 %v3968, %v4060
    %v4073 = vadd.f32 %v3969, %v4063
    %v4074 = vld [vmem:[%s2626 + $0x20] sm:$0xf]
    %v4076 = vshrl.u32 %v3970, 16
    %v4078 = vrot.slane %v4076, 4
    %v4079 = vshll.u32 %v3970, 16
    %v4081 = vrot.slane %v4079, 5
    %v4082 = vor.u32 %v4078, %v4081
    %v4084 = vshrl.u32 %v3971, 16
    %v4086 = vrot.slane %v4084, 4
    %v4087 = vshll.u32 %v3971, 16
    %v4089 = vrot.slane %v4087, 5
    %v4090 = vor.u32 %v4086, %v4089
    %v4091 = vsel %vm2490, %v4082, %v4090
    %v4093 = vshrl.u32 %v3972, 16
    %v4095 = vrot.slane %v4093, 4
    %v4096 = vshll.u32 %v3972, 16
    %v4098 = vrot.slane %v4096, 5
    %v4099 = vor.u32 %v4095, %v4098
    %v4100 = vsel %vm2490, %v4090, %v4099
    %v4102 = vshrl.u32 %v3973, 16
    %v4104 = vrot.slane %v4102, 4
    %v4105 = vshll.u32 %v3973, 16
    %v4107 = vrot.slane %v4105, 5
    %v4108 = vor.u32 %v4104, %v4107
    %v4109 = vsel %vm2490, %v4099, %v4108
    %v4111 = vshrl.u32 %v4074, 16
    %v4113 = vrot.slane %v4111, 4
    %v4114 = vshll.u32 %v4074, 16
    %v4116 = vrot.slane %v4114, 5
    %v4117 = vor.u32 %v4113, %v4116
    %v4118 = vsel %vm2490, %v4108, %v4117
    %v4120 = vsel %vm35, %v4091, 0
    %v4123 = vsel %vm35, %v4100, 0
    %v4126 = vsel %vm35, %v4109, 0
    %v4129 = vsel %vm35, %v4118, 0
    %4131 = vmatprep.subr.bf16.mxu0 0
    %4132 = vmatpush1.bf16.msra.mxu0 %v3151
    %4133 = vmatprep.subr.bf16.mxu0 0
    %4134 = vmatpush1.bf16.msra.mxu0 %v3152
    %4135 = vmatprep.subr.bf16.mxu0 0
    %4136 = vmatpush1.bf16.msra.mxu0 0
    %4137 = vmatprep.subr.bf16.mxu0 0
    %4138 = vmatpush1.bf16.msra.mxu0 0
    %4139 = vmatprep.subr.bf16.mxu0 0
    %4140 = vmatpush1.bf16.msra.mxu0 0
    %4141 = vmatprep.subr.bf16.mxu0 0
    %4142 = vmatpush1.bf16.msra.mxu0 0
    %4143 = vmatprep.subr.bf16.mxu0 0
    %4144 = vmatpush1.bf16.msra.mxu0 0
    %4145 = vmatprep.subr.bf16.mxu0 0
    %4146 = vmatpush1.bf16.msra.mxu0 0
    %4147 = vmatprep.subr.bf16.mxu0 0
    %4148 = vmatpush1.bf16.msra.mxu0 0
    %4149 = vmatprep.subr.bf16.mxu0 0
    %4150 = vmatpush1.bf16.msra.mxu0 0
    %4151 = vmatprep.subr.bf16.mxu0 0
    %4152 = vmatpush1.bf16.msra.mxu0 0
    %4153 = vmatprep.subr.bf16.mxu0 0
    %4154 = vmatpush1.bf16.msra.mxu0 0
    %4155 = vmatprep.subr.bf16.mxu0 0
    %4156 = vmatpush1.bf16.msra.mxu0 0
    %4157 = vmatprep.subr.bf16.mxu0 0
    %4158 = vmatpush1.bf16.msra.mxu0 0
    %4159 = vmatprep.subr.bf16.mxu0 0
    %4160 = vmatpush1.bf16.msra.mxu0 0
    %4161 = vmatprep.subr.bf16.mxu0 0
    %4162 = vmatpush1.bf16.msra.mxu0 0
    %4163 = vmatprep.mubr.bf16.mxu0 0
    %4164 = vmatmul.mubr.bf16.gmra.mrb[0].mxu0 %v4120
    %v4165 = vpop.f32.mrb[0].mxu0
    %v4166 = vadd.f32 0.0, %v4165
    %v4167 = vpop.f32.mrb[0].mxu0
    %v4168 = vpop.f32.mrb[0].mxu0
    %v4169 = vadd.f32 0.0, %v4168
    %v4170 = vpop.f32.mrb[0].mxu0
    %4171 = vmatprep.mubr.bf16.mxu0 0
    %4172 = vmatmul.mubr.bf16.gmra.mrb[0].mxu0 %v4123
    %v4173 = vpop.f32.mrb[0].mxu0
    %v4174 = vadd.f32 0.0, %v4173
    %v4175 = vpop.f32.mrb[0].mxu0
    %v4176 = vpop.f32.mrb[0].mxu0
    %v4177 = vadd.f32 0.0, %v4176
    %v4178 = vpop.f32.mrb[0].mxu0
    %4179 = vmatprep.mubr.bf16.mxu0 0
    %4180 = vmatmul.mubr.bf16.gmra.mrb[0].mxu0 %v4126
    %v4181 = vpop.f32.mrb[0].mxu0
    %v4182 = vadd.f32 0.0, %v4181
    %v4183 = vpop.f32.mrb[0].mxu0
    %v4184 = vpop.f32.mrb[0].mxu0
    %v4185 = vadd.f32 0.0, %v4184
    %v4186 = vpop.f32.mrb[0].mxu0
    %4187 = vmatprep.mubr.bf16.mxu0 0
    %4188 = vmatmul.mubr.bf16.gmra.mrb[0].mxu0 %v4129
    %v4189 = vpop.f32.mrb[0].mxu0
    %v4190 = vadd.f32 0.0, %v4189
    %v4191 = vpop.f32.mrb[0].mxu0
    %v4192 = vpop.f32.mrb[0].mxu0
    %v4193 = vadd.f32 0.0, %v4192
    %v4194 = vpop.f32.mrb[0].mxu0
    %4195 = vdwg.mxu0
    %v4196 = vadd.f32 %v4066, %v4166
    %v4197 = vadd.f32 %v4067, %v4169
    %v4198 = vadd.f32 %v4068, %v4174
    %v4199 = vadd.f32 %v4069, %v4177
    %v4200 = vadd.f32 %v4070, %v4182
    %v4201 = vadd.f32 %v4071, %v4185
    %v4202 = vadd.f32 %v4072, %v4190
    %v4203 = vadd.f32 %v4073, %v4193
    %v4204 = vld [vmem:[%s2626] sm:$0xe0]
    %v4207 = vrot.slane %v4204, 5
    %v4208 = vrot.slane %v3971, 5
    %v4209 = vsel %vm3248, %v4207, %v4208
    %v4210 = vrot.slane %v3972, 5
    %v4211 = vsel %vm3248, %v4208, %v4210
    %v4212 = vrot.slane %v3973, 5
    %v4213 = vsel %vm3248, %v4210, %v4212
    %v4214 = vrot.slane %v4074, 5
    %v4215 = vsel %vm3248, %v4212, %v4214
    %v4217 = vsel %vm35, %v4209, 0
    %v4220 = vsel %vm35, %v4211, 0
    %v4223 = vsel %vm35, %v4213, 0
    %v4226 = vsel %vm35, %v4215, 0
    %4228 = vmatprep.subr.bf16.mxu0 0
    %4229 = vmatpush1.bf16.msra.mxu0 %v3266
    %4230 = vmatprep.subr.bf16.mxu0 0
    %4231 = vmatpush1.bf16.msra.mxu0 %v3267
    %4232 = vmatprep.subr.bf16.mxu0 0
    %4233 = vmatpush1.bf16.msra.mxu0 0
    %4234 = vmatprep.subr.bf16.mxu0 0
    %4235 = vmatpush1.bf16.msra.mxu0 0
    %4236 = vmatprep.subr.bf16.mxu0 0
    %4237 = vmatpush1.bf16.msra.mxu0 0
    %4238 = vmatprep.subr.bf16.mxu0 0
    %4239 = vmatpush1.bf16.msra.mxu0 0
    %4240 = vmatprep.subr.bf16.mxu0 0
    %4241 = vmatpush1.bf16.msra.mxu0 0
    %4242 = vmatprep.subr.bf16.mxu0 0
    %4243 = vmatpush1.bf16.msra.mxu0 0
    %4244 = vmatprep.subr.bf16.mxu0 0
    %4245 = vmatpush1.bf16.msra.mxu0 0
    %4246 = vmatprep.subr.bf16.mxu0 0
    %4247 = vmatpush1.bf16.msra.mxu0 0
    %4248 = vmatprep.subr.bf16.mxu0 0
    %4249 = vmatpush1.bf16.msra.mxu0 0
    %4250 = vmatprep.subr.bf16.mxu0 0
    %4251 = vmatpush1.bf16.msra.mxu0 0
    %4252 = vmatprep.subr.bf16.mxu0 0
    %4253 = vmatpush1.bf16.msra.mxu0 0
    %4254 = vmatprep.subr.bf16.mxu0 0
    %4255 = vmatpush1.bf16.msra.mxu0 0
    %4256 = vmatprep.subr.bf16.mxu0 0
    %4257 = vmatpush1.bf16.msra.mxu0 0
    %4258 = vmatprep.subr.bf16.mxu0 0
    %4259 = vmatpush1.bf16.msra.mxu0 0
    %4260 = vmatprep.mubr.bf16.mxu0 0
    %4261 = vmatmul.mubr.bf16.gmra.mrb[0].mxu0 %v4217
    %v4262 = vpop.f32.mrb[0].mxu0
    %v4263 = vadd.f32 0.0, %v4262
    %v4264 = vpop.f32.mrb[0].mxu0
    %v4265 = vpop.f32.mrb[0].mxu0
    %v4266 = vadd.f32 0.0, %v4265
    %v4267 = vpop.f32.mrb[0].mxu0
    %4268 = vmatprep.mubr.bf16.mxu0 0
    %4269 = vmatmul.mubr.bf16.gmra.mrb[0].mxu0 %v4220
    %v4270 = vpop.f32.mrb[0].mxu0
    %v4271 = vadd.f32 0.0, %v4270
    %v4272 = vpop.f32.mrb[0].mxu0
    %v4273 = vpop.f32.mrb[0].mxu0
    %v4274 = vadd.f32 0.0, %v4273
    %v4275 = vpop.f32.mrb[0].mxu0
    %4276 = vmatprep.mubr.bf16.mxu0 0
    %4277 = vmatmul.mubr.bf16.gmra.mrb[0].mxu0 %v4223
    %v4278 = vpop.f32.mrb[0].mxu0
    %v4279 = vadd.f32 0.0, %v4278
    %v4280 = vpop.f32.mrb[0].mxu0
    %v4281 = vpop.f32.mrb[0].mxu0
    %v4282 = vadd.f32 0.0, %v4281
    %v4283 = vpop.f32.mrb[0].mxu0
    %4284 = vmatprep.mubr.bf16.mxu0 0
    %4285 = vmatmul.mubr.bf16.gmra.mrb[0].mxu0 %v4226
    %v4286 = vpop.f32.mrb[0].mxu0
    %v4287 = vadd.f32 0.0, %v4286
    %v4288 = vpop.f32.mrb[0].mxu0
    %v4289 = vpop.f32.mrb[0].mxu0
    %v4290 = vadd.f32 0.0, %v4289
    %v4291 = vpop.f32.mrb[0].mxu0
    %4292 = vdwg.mxu0
    %v4293 = vadd.f32 %v4196, %v4263
    %v4294 = vadd.f32 %v4197, %v4266
    %v4295 = vadd.f32 %v4198, %v4271
    %v4296 = vadd.f32 %v4199, %v4274
    %v4297 = vadd.f32 %v4200, %v4279
    %v4298 = vadd.f32 %v4201, %v4282
    %v4299 = vadd.f32 %v4202, %v4287
    %v4300 = vadd.f32 %v4203, %v4290
    %v4301 = vld [vmem:[%s2626 + $0x20] sm:$0x7f]
    %v4302 = vsel %vm35, %v3971, 0
    %v4304 = vsel %vm35, %v3972, 0
    %v4306 = vsel %vm35, %v3973, 0
    %v4309 = vsel %vm35, %v4301, 0
    %4311 = vmatprep.subr.bf16.mxu0 0
    %4312 = vmatpush1.bf16.msra.mxu0 %v3369
    %4313 = vmatprep.subr.bf16.mxu0 0
    %4314 = vmatpush1.bf16.msra.mxu0 %v3370
    %4315 = vmatprep.subr.bf16.mxu0 0
    %4316 = vmatpush1.bf16.msra.mxu0 0
    %4317 = vmatprep.subr.bf16.mxu0 0
    %4318 = vmatpush1.bf16.msra.mxu0 0
    %4319 = vmatprep.subr.bf16.mxu0 0
    %4320 = vmatpush1.bf16.msra.mxu0 0
    %4321 = vmatprep.subr.bf16.mxu0 0
    %4322 = vmatpush1.bf16.msra.mxu0 0
    %4323 = vmatprep.subr.bf16.mxu0 0
    %4324 = vmatpush1.bf16.msra.mxu0 0
    %4325 = vmatprep.subr.bf16.mxu0 0
    %4326 = vmatpush1.bf16.msra.mxu0 0
    %4327 = vmatprep.subr.bf16.mxu0 0
    %4328 = vmatpush1.bf16.msra.mxu0 0
    %4329 = vmatprep.subr.bf16.mxu0 0
    %4330 = vmatpush1.bf16.msra.mxu0 0
    %4331 = vmatprep.subr.bf16.mxu0 0
    %4332 = vmatpush1.bf16.msra.mxu0 0
    %4333 = vmatprep.subr.bf16.mxu0 0
    %4334 = vmatpush1.bf16.msra.mxu0 0
    %4335 = vmatprep.subr.bf16.mxu0 0
    %4336 = vmatpush1.bf16.msra.mxu0 0
    %4337 = vmatprep.subr.bf16.mxu0 0
    %4338 = vmatpush1.bf16.msra.mxu0 0
    %4339 = vmatprep.subr.bf16.mxu0 0
    %4340 = vmatpush1.bf16.msra.mxu0 0
    %4341 = vmatprep.subr.bf16.mxu0 0
    %4342 = vmatpush1.bf16.msra.mxu0 0
    %4343 = vmatprep.mubr.bf16.mxu0 0
    %4344 = vmatmul.mubr.bf16.gmra.mrb[0].mxu0 %v4302
    %v4345 = vpop.f32.mrb[0].mxu0
    %v4346 = vadd.f32 0.0, %v4345
    %v4347 = vpop.f32.mrb[0].mxu0
    %v4348 = vpop.f32.mrb[0].mxu0
    %v4349 = vadd.f32 0.0, %v4348
    %v4350 = vpop.f32.mrb[0].mxu0
    %4351 = vmatprep.mubr.bf16.mxu0 0
    %4352 = vmatmul.mubr.bf16.gmra.mrb[0].mxu0 %v4304
    %v4353 = vpop.f32.mrb[0].mxu0
    %v4354 = vadd.f32 0.0, %v4353
    %v4355 = vpop.f32.mrb[0].mxu0
    %v4356 = vpop.f32.mrb[0].mxu0
    %v4357 = vadd.f32 0.0, %v4356
    %v4358 = vpop.f32.mrb[0].mxu0
    %4359 = vmatprep.mubr.bf16.mxu0 0
    %4360 = vmatmul.mubr.bf16.gmra.mrb[0].mxu0 %v4306
    %v4361 = vpop.f32.mrb[0].mxu0
    %v4362 = vadd.f32 0.0, %v4361
    %v4363 = vpop.f32.mrb[0].mxu0
    %v4364 = vpop.f32.mrb[0].mxu0
    %v4365 = vadd.f32 0.0, %v4364
    %v4366 = vpop.f32.mrb[0].mxu0
    %4367 = vmatprep.mubr.bf16.mxu0 0
    %4368 = vmatmul.mubr.bf16.gmra.mrb[0].mxu0 %v4309
    %v4369 = vpop.f32.mrb[0].mxu0
    %v4370 = vadd.f32 0.0, %v4369
    %v4371 = vpop.f32.mrb[0].mxu0
    %v4372 = vpop.f32.mrb[0].mxu0
    %v4373 = vadd.f32 0.0, %v4372
    %v4374 = vpop.f32.mrb[0].mxu0
    %4375 = vdwg.mxu0
    %v4376 = vadd.f32 %v4293, %v4346
    %v4377 = vadd.f32 %v4294, %v4349
    %v4378 = vadd.f32 %v4295, %v4354
    %v4379 = vadd.f32 %v4296, %v4357
    %v4380 = vadd.f32 %v4297, %v4362
    %v4381 = vadd.f32 %v4298, %v4365
    %v4382 = vadd.f32 %v4299, %v4370
    %v4383 = vadd.f32 %v4300, %v4373
    %v4384 = vld [vmem:[%s2626 + $0x20] sm:$0xff]
    %v4385 = vrot.slane %v4087, 1
    %v4386 = vor.u32 %v4084, %v4385
    %v4387 = vrot.slane %v4096, 1
    %v4388 = vsel %vm102, %v4386, %v4387
    %v4389 = vor.u32 %v4093, %v4387
    %v4390 = vrot.slane %v4105, 1
    %v4391 = vsel %vm102, %v4389, %v4390
    %v4392 = vor.u32 %v4102, %v4390
    %v4394 = vshll.u32 %v4384, 16
    %v4396 = vrot.slane %v4394, 1
    %v4397 = vsel %vm102, %v4392, %v4396
    %v4398 = vshrl.u32 %v4384, 16
    %v4400 = vor.u32 %v4398, %v4396
    %v4402 = vsel %vm35, %v4388, 0
    %v4405 = vsel %vm35, %v4391, 0
    %v4408 = vsel %vm35, %v4397, 0
    %v4411 = vsel %vm35, %v4400, 0
    %4413 = vmatprep.subr.bf16.mxu0 0
    %4414 = vmatpush1.bf16.msra.mxu0 %v3485
    %4415 = vmatprep.subr.bf16.mxu0 0
    %4416 = vmatpush1.bf16.msra.mxu0 %v3486
    %4417 = vmatprep.subr.bf16.mxu0 0
    %4418 = vmatpush1.bf16.msra.mxu0 0
    %4419 = vmatprep.subr.bf16.mxu0 0
    %4420 = vmatpush1.bf16.msra.mxu0 0
    %4421 = vmatprep.subr.bf16.mxu0 0
    %4422 = vmatpush1.bf16.msra.mxu0 0
    %4423 = vmatprep.subr.bf16.mxu0 0
    %4424 = vmatpush1.bf16.msra.mxu0 0
    %4425 = vmatprep.subr.bf16.mxu0 0
    %4426 = vmatpush1.bf16.msra.mxu0 0
    %4427 = vmatprep.subr.bf16.mxu0 0
    %4428 = vmatpush1.bf16.msra.mxu0 0
    %4429 = vmatprep.subr.bf16.mxu0 0
    %4430 = vmatpush1.bf16.msra.mxu0 0
    %4431 = vmatprep.subr.bf16.mxu0 0
    %4432 = vmatpush1.bf16.msra.mxu0 0
    %4433 = vmatprep.subr.bf16.mxu0 0
    %4434 = vmatpush1.bf16.msra.mxu0 0
    %4435 = vmatprep.subr.bf16.mxu0 0
    %4436 = vmatpush1.bf16.msra.mxu0 0
    %4437 = vmatprep.subr.bf16.mxu0 0
    %4438 = vmatpush1.bf16.msra.mxu0 0
    %4439 = vmatprep.subr.bf16.mxu0 0
    %4440 = vmatpush1.bf16.msra.mxu0 0
    %4441 = vmatprep.subr.bf16.mxu0 0
    %4442 = vmatpush1.bf16.msra.mxu0 0
    %4443 = vmatprep.subr.bf16.mxu0 0
    %4444 = vmatpush1.bf16.msra.mxu0 0
    %4445 = vmatprep.mubr.bf16.mxu0 0
    %4446 = vmatmul.mubr.bf16.gmra.mrb[0].mxu0 %v4402
    %v4447 = vpop.f32.mrb[0].mxu0
    %v4448 = vadd.f32 0.0, %v4447
    %v4449 = vpop.f32.mrb[0].mxu0
    %v4450 = vpop.f32.mrb[0].mxu0
    %v4451 = vadd.f32 0.0, %v4450
    %v4452 = vpop.f32.mrb[0].mxu0
    %4453 = vmatprep.mubr.bf16.mxu0 0
    %4454 = vmatmul.mubr.bf16.gmra.mrb[0].mxu0 %v4405
    %v4455 = vpop.f32.mrb[0].mxu0
    %v4456 = vadd.f32 0.0, %v4455
    %v4457 = vpop.f32.mrb[0].mxu0
    %v4458 = vpop.f32.mrb[0].mxu0
    %v4459 = vadd.f32 0.0, %v4458
    %v4460 = vpop.f32.mrb[0].mxu0
    %4461 = vmatprep.mubr.bf16.mxu0 0
    %4462 = vmatmul.mubr.bf16.gmra.mrb[0].mxu0 %v4408
    %v4463 = vpop.f32.mrb[0].mxu0
    %v4464 = vadd.f32 0.0, %v4463
    %v4465 = vpop.f32.mrb[0].mxu0
    %v4466 = vpop.f32.mrb[0].mxu0
    %v4467 = vadd.f32 0.0, %v4466
    %v4468 = vpop.f32.mrb[0].mxu0
    %4469 = vmatprep.mubr.bf16.mxu0 0
    %4470 = vmatmul.mubr.bf16.gmra.mrb[0].mxu0 %v4411
    %v4471 = vpop.f32.mrb[0].mxu0
    %v4472 = vadd.f32 0.0, %v4471
    %v4473 = vpop.f32.mrb[0].mxu0
    %v4474 = vpop.f32.mrb[0].mxu0
    %v4475 = vadd.f32 0.0, %v4474
    %v4476 = vpop.f32.mrb[0].mxu0
    %4477 = vdwg.mxu0
    %v4478 = vadd.f32 %v4376, %v4448
    %v4479 = vadd.f32 %v4377, %v4451
    %v4480 = vadd.f32 %v4378, %v4456
    %v4481 = vadd.f32 %v4379, %v4459
    %v4482 = vadd.f32 %v4380, %v4464
    %v4483 = vadd.f32 %v4381, %v4467
    %v4484 = vadd.f32 %v4382, %v4472
    %v4485 = vadd.f32 %v4383, %v4475
    %v4486 = vld [vmem:[%s2626 + $0x8] sm:$0xfe]
    %v4489 = vrot.slane %v4486, 1
    %v4490 = vrot.slane %v3972, 1
    %v4491 = vsel %vm321, %v4489, %v4490
    %v4492 = vrot.slane %v3973, 1
    %v4493 = vsel %vm321, %v4490, %v4492
    %v4494 = vrot.slane %v4384, 1
    %v4495 = vsel %vm321, %v4492, %v4494
    %v4497 = vsel %vm35, %v4491, 0
    %v4500 = vsel %vm35, %v4493, 0
    %v4503 = vsel %vm35, %v4495, 0
    %v4506 = vsel %vm35, %v4494, 0
    %4508 = vmatprep.subr.bf16.mxu0 0
    %4509 = vmatpush1.bf16.msra.mxu0 %v3597
    %4510 = vmatprep.subr.bf16.mxu0 0
    %4511 = vmatpush1.bf16.msra.mxu0 %v3598
    %4512 = vmatprep.subr.bf16.mxu0 0
    %4513 = vmatpush1.bf16.msra.mxu0 0
    %4514 = vmatprep.subr.bf16.mxu0 0
    %4515 = vmatpush1.bf16.msra.mxu0 0
    %4516 = vmatprep.subr.bf16.mxu0 0
    %4517 = vmatpush1.bf16.msra.mxu0 0
    %4518 = vmatprep.subr.bf16.mxu0 0
    %4519 = vmatpush1.bf16.msra.mxu0 0
    %4520 = vmatprep.subr.bf16.mxu0 0
    %4521 = vmatpush1.bf16.msra.mxu0 0
    %4522 = vmatprep.subr.bf16.mxu0 0
    %4523 = vmatpush1.bf16.msra.mxu0 0
    %4524 = vmatprep.subr.bf16.mxu0 0
    %4525 = vmatpush1.bf16.msra.mxu0 0
    %4526 = vmatprep.subr.bf16.mxu0 0
    %4527 = vmatpush1.bf16.msra.mxu0 0
    %4528 = vmatprep.subr.bf16.mxu0 0
    %4529 = vmatpush1.bf16.msra.mxu0 0
    %4530 = vmatprep.subr.bf16.mxu0 0
    %4531 = vmatpush1.bf16.msra.mxu0 0
    %4532 = vmatprep.subr.bf16.mxu0 0
    %4533 = vmatpush1.bf16.msra.mxu0 0
    %4534 = vmatprep.subr.bf16.mxu0 0
    %4535 = vmatpush1.bf16.msra.mxu0 0
    %4536 = vmatprep.subr.bf16.mxu0 0
    %4537 = vmatpush1.bf16.msra.mxu0 0
    %4538 = vmatprep.subr.bf16.mxu0 0
    %4539 = vmatpush1.bf16.msra.mxu0 0
    %4540 = vmatprep.mubr.bf16.mxu0 0
    %4541 = vmatmul.mubr.bf16.gmra.mrb[0].mxu0 %v4497
    %v4542 = vpop.f32.mrb[0].mxu0
    %v4543 = vadd.f32 0.0, %v4542
    %v4544 = vpop.f32.mrb[0].mxu0
    %v4545 = vpop.f32.mrb[0].mxu0
    %v4546 = vadd.f32 0.0, %v4545
    %v4547 = vpop.f32.mrb[0].mxu0
    %4548 = vmatprep.mubr.bf16.mxu0 0
    %4549 = vmatmul.mubr.bf16.gmra.mrb[0].mxu0 %v4500
    %v4550 = vpop.f32.mrb[0].mxu0
    %v4551 = vadd.f32 0.0, %v4550
    %v4552 = vpop.f32.mrb[0].mxu0
    %v4553 = vpop.f32.mrb[0].mxu0
    %v4554 = vadd.f32 0.0, %v4553
    %v4555 = vpop.f32.mrb[0].mxu0
    %4556 = vmatprep.mubr.bf16.mxu0 0
    %4557 = vmatmul.mubr.bf16.gmra.mrb[0].mxu0 %v4503
    %v4558 = vpop.f32.mrb[0].mxu0
    %v4559 = vadd.f32 0.0, %v4558
    %v4560 = vpop.f32.mrb[0].mxu0
    %v4561 = vpop.f32.mrb[0].mxu0
    %v4562 = vadd.f32 0.0, %v4561
    %v4563 = vpop.f32.mrb[0].mxu0
    %4564 = vmatprep.mubr.bf16.mxu0 0
    %4565 = vmatmul.mubr.bf16.gmra.mrb[0].mxu0 %v4506
    %v4566 = vpop.f32.mrb[0].mxu0
    %v4567 = vadd.f32 0.0, %v4566
    %v4568 = vpop.f32.mrb[0].mxu0
    %v4569 = vpop.f32.mrb[0].mxu0
    %v4570 = vadd.f32 0.0, %v4569
    %v4571 = vpop.f32.mrb[0].mxu0
    %4572 = vdwg.mxu0
    %v4573 = vadd.f32 %v4478, %v4543
    %v4574 = vadd.f32 %v4479, %v4546
    %v4575 = vadd.f32 %v4480, %v4551
    %v4576 = vadd.f32 %v4481, %v4554
    %v4577 = vadd.f32 %v4482, %v4559
    %v4578 = vadd.f32 %v4483, %v4562
    %v4579 = vadd.f32 %v4484, %v4567
    %v4580 = vadd.f32 %v4485, %v4570
    %v4581 = vmul.f32 %v3678, %v2146
    %v4582 = vmul.f32 %v3679, %v2151
    %v4583 = vmul.f32 %v3680, %v2156
    %v4584 = vmul.f32 %v3681, %v2161
    %v4585 = vmul.f32 %v3682, %v2166
    %v4586 = vmul.f32 %v3683, %v2171
    %v4587 = vmul.f32 %v3684, %v2176
    %v4588 = vmul.f32 %v3685, %v2181
    %v4589 = vsel %vm35, %v4581, 0.0
    %v4590 = vsel %vm35, %v4582, 0.0
    %v4591 = vadd.f32 %v4589, %v4590
    %v4592 = vsel %vm35, %v4583, 0.0
    %v4593 = vadd.f32 %v4591, %v4592
    %v4594 = vsel %vm35, %v4584, 0.0
    %v4595 = vadd.f32 %v4593, %v4594
    %v4596 = vsel %vm35, %v4585, 0.0
    %v4597 = vadd.f32 %v4595, %v4596
    %v4598 = vsel %vm35, %v4586, 0.0
    %v4599 = vadd.f32 %v4597, %v4598
    %v4600 = vsel %vm35, %v4587, 0.0
    %v4601 = vadd.f32 %v4599, %v4600
    %v4602 = vsel %vm2204, %v4588, 0.0
    %v4603 = vadd.f32 %v4601, %v4602
    %v4604 = vrot.slane %v4603, 4
    %v4605 = vadd.f32 %v4603, %v4604
    %v4606 = vrot.slane %v4605, 2
    %v4607 = vadd.f32 %v4605, %v4606
    %v4608 = vrot.slane %v4607, 1
    %v4609 = vadd.f32 %v4607, %v4608
    %v4610 = vmul.f32 %v4573, %v2146
    %v4611 = vmul.f32 %v4574, %v2151
    %v4612 = vmul.f32 %v4575, %v2156
    %v4613 = vmul.f32 %v4576, %v2161
    %v4614 = vmul.f32 %v4577, %v2166
    %v4615 = vmul.f32 %v4578, %v2171
    %v4616 = vmul.f32 %v4579, %v2176
    %v4617 = vmul.f32 %v4580, %v2181
    %v4618 = vsel %vm35, %v4610, 0.0
    %v4619 = vsel %vm35, %v4611, 0.0
    %v4620 = vadd.f32 %v4618, %v4619
    %v4621 = vsel %vm35, %v4612, 0.0
    %v4622 = vadd.f32 %v4620, %v4621
    %v4623 = vsel %vm35, %v4613, 0.0
    %v4624 = vadd.f32 %v4622, %v4623
    %v4625 = vsel %vm35, %v4614, 0.0
    %v4626 = vadd.f32 %v4624, %v4625
    %v4627 = vsel %vm35, %v4615, 0.0
    %v4628 = vadd.f32 %v4626, %v4627
    %v4629 = vsel %vm35, %v4616, 0.0
    %v4630 = vadd.f32 %v4628, %v4629
    %v4631 = vsel %vm2204, %v4617, 0.0
    %v4632 = vadd.f32 %v4630, %v4631
    %v4633 = vrot.slane %v4632, 4
    %v4634 = vadd.f32 %v4632, %v4633
    %v4635 = vrot.slane %v4634, 2
    %v4636 = vadd.f32 %v4634, %v4635
    %v4637 = vrot.slane %v4636, 1
    %v4638 = vadd.f32 %v4636, %v4637
    %v4639 = vadd.f32 %v4609, %v4638
    %v4640 = vmul.f32 %v4639, 0.010416667
    %v4641 = vsub.f32 %v3678, %v4640
    %v4642 = vsub.f32 %v3679, %v4640
    %v4643 = vsub.f32 %v3680, %v4640
    %v4644 = vsub.f32 %v3681, %v4640
    %v4645 = vsub.f32 %v3682, %v4640
    %v4646 = vsub.f32 %v3683, %v4640
    %v4647 = vsub.f32 %v3684, %v4640
    %v4648 = vsub.f32 %v3685, %v4640
    %v4649 = vmul.f32 %v4641, %v4641
    %v4650 = vmul.f32 %v4642, %v4642
    %v4651 = vmul.f32 %v4643, %v4643
    %v4652 = vmul.f32 %v4644, %v4644
    %v4653 = vmul.f32 %v4645, %v4645
    %v4654 = vmul.f32 %v4646, %v4646
    %v4655 = vmul.f32 %v4647, %v4647
    %v4656 = vmul.f32 %v4648, %v4648
    %v4657 = vmul.f32 %v4649, %v2146
    %v4658 = vmul.f32 %v4650, %v2151
    %v4659 = vmul.f32 %v4651, %v2156
    %v4660 = vmul.f32 %v4652, %v2161
    %v4661 = vmul.f32 %v4653, %v2166
    %v4662 = vmul.f32 %v4654, %v2171
    %v4663 = vmul.f32 %v4655, %v2176
    %v4664 = vmul.f32 %v4656, %v2181
    %v4665 = vsel %vm35, %v4657, 0.0
    %v4666 = vsel %vm35, %v4658, 0.0
    %v4667 = vadd.f32 %v4665, %v4666
    %v4668 = vsel %vm35, %v4659, 0.0
    %v4669 = vadd.f32 %v4667, %v4668
    %v4670 = vsel %vm35, %v4660, 0.0
    %v4671 = vadd.f32 %v4669, %v4670
    %v4672 = vsel %vm35, %v4661, 0.0
    %v4673 = vadd.f32 %v4671, %v4672
    %v4674 = vsel %vm35, %v4662, 0.0
    %v4675 = vadd.f32 %v4673, %v4674
    %v4676 = vsel %vm35, %v4663, 0.0
    %v4677 = vadd.f32 %v4675, %v4676
    %v4678 = vsel %vm2204, %v4664, 0.0
    %v4679 = vadd.f32 %v4677, %v4678
    %v4680 = vrot.slane %v4679, 4
    %v4681 = vadd.f32 %v4679, %v4680
    %v4682 = vrot.slane %v4681, 2
    %v4683 = vadd.f32 %v4681, %v4682
    %v4684 = vrot.slane %v4683, 1
    %v4685 = vadd.f32 %v4683, %v4684
    %v4686 = vsub.f32 %v4573, %v4640
    %v4687 = vsub.f32 %v4574, %v4640
    %v4688 = vsub.f32 %v4575, %v4640
    %v4689 = vsub.f32 %v4576, %v4640
    %v4690 = vsub.f32 %v4577, %v4640
    %v4691 = vsub.f32 %v4578, %v4640
    %v4692 = vsub.f32 %v4579, %v4640
    %v4693 = vsub.f32 %v4580, %v4640
    %v4694 = vmul.f32 %v4686, %v4686
    %v4695 = vmul.f32 %v4687, %v4687
    %v4696 = vmul.f32 %v4688, %v4688
    %v4697 = vmul.f32 %v4689, %v4689
    %v4698 = vmul.f32 %v4690, %v4690
    %v4699 = vmul.f32 %v4691, %v4691
    %v4700 = vmul.f32 %v4692, %v4692
    %v4701 = vmul.f32 %v4693, %v4693
    %v4702 = vmul.f32 %v4694, %v2146
    %v4703 = vmul.f32 %v4695, %v2151
    %v4704 = vmul.f32 %v4696, %v2156
    %v4705 = vmul.f32 %v4697, %v2161
    %v4706 = vmul.f32 %v4698, %v2166
    %v4707 = vmul.f32 %v4699, %v2171
    %v4708 = vmul.f32 %v4700, %v2176
    %v4709 = vmul.f32 %v4701, %v2181
    %v4710 = vsel %vm35, %v4702, 0.0
    %v4711 = vsel %vm35, %v4703, 0.0
    %v4712 = vadd.f32 %v4710, %v4711
    %v4713 = vsel %vm35, %v4704, 0.0
    %v4714 = vadd.f32 %v4712, %v4713
    %v4715 = vsel %vm35, %v4705, 0.0
    %v4716 = vadd.f32 %v4714, %v4715
    %v4717 = vsel %vm35, %v4706, 0.0
    %v4718 = vadd.f32 %v4716, %v4717
    %v4719 = vsel %vm35, %v4707, 0.0
    %v4720 = vadd.f32 %v4718, %v4719
    %v4721 = vsel %vm35, %v4708, 0.0
    %v4722 = vadd.f32 %v4720, %v4721
    %v4723 = vsel %vm2204, %v4709, 0.0
    %v4724 = vadd.f32 %v4722, %v4723
    %v4725 = vrot.slane %v4724, 4
    %v4726 = vadd.f32 %v4724, %v4725
    %v4727 = vrot.slane %v4726, 2
    %v4728 = vadd.f32 %v4726, %v4727
    %v4729 = vrot.slane %v4728, 1
    %v4730 = vadd.f32 %v4728, %v4729
    %v4731 = vadd.f32 %v4685, %v4730
    %v4732 = vmul.f32 %v4731, 0.010416667
    %s4733 = scalar_lea.vmem %s2, 1
    %v4734 = vld [vmem:[%s4733] sm:$0x1]
    %v4735 = vadd.f32 %v4732, 1e-05
    %v4736 = vrsqrt.pop %v4735
    %v4737 = vmul.f32 %v4734, %v4736
    %s4738 = scalar_lea.vmem %s3, 1
    %v4739 = vld [vmem:[%s4738] sm:$0x1]
    %v4740 = vmul.f32 %v4640, %v4737
    %v4741 = vsub.f32 %v4739, %v4740
    %v4743 = vlaneseq
    %v4744 = vshrl.u32 %v4743, 7
    %v4745 = vsub.s32 0, %v4744
    %v4746 = vrot.slane %v4737, %v4745
    %v4748 = vmul.f32 %v3678, %v4746
    %v4749 = vmul.f32 %v3679, %v4746
    %v4750 = vmul.f32 %v3680, %v4746
    %v4751 = vmul.f32 %v3681, %v4746
    %v4752 = vmul.f32 %v3682, %v4746
    %v4753 = vmul.f32 %v3683, %v4746
    %v4754 = vmul.f32 %v3684, %v4746
    %v4755 = vmul.f32 %v3685, %v4746
    %v4757 = vlaneseq
    %v4758 = vshrl.u32 %v4757, 7
    %v4759 = vsub.s32 0, %v4758
    %v4760 = vrot.slane %v4741, %v4759
    %v4762 = vadd.f32 %v4748, %v4760
    %v4763 = vadd.f32 %v4749, %v4760
    %v4764 = vadd.f32 %v4750, %v4760
    %v4765 = vadd.f32 %v4751, %v4760
    %v4766 = vadd.f32 %v4752, %v4760
    %v4767 = vadd.f32 %v4753, %v4760
    %v4768 = vadd.f32 %v4754, %v4760
    %v4769 = vadd.f32 %v4755, %v4760
    %v4770 = vrot.slane %v3093, 4
    %v4771 = vsel %vm2986, %v2992, %v4770
    %v4776 = vunpack.c.l.bf16 %v2989
    %v4777 = vunpack.c.h.bf16 %v2989
    %v4778 = vunpack.c.l.bf16 %v2991
    %v4779 = vunpack.c.h.bf16 %v2991
    %v4780 = vunpack.c.l.bf16 %v2993
    %v4781 = vunpack.c.h.bf16 %v2993
    %v4782 = vunpack.c.l.bf16 %v4771
    %v4783 = vunpack.c.h.bf16 %v4771
    %v4792 = vrot.slane %v4776, 1
    %v4793 = vrot.slane %v4777, 1
    %v4794 = vsel %vm2387, %v4792, %v4793
    %v4795 = vrot.slane %v4778, 1
    %v4796 = vsel %vm2387, %v4793, %v4795
    %v4797 = vrot.slane %v4779, 1
    %v4798 = vsel %vm2387, %v4795, %v4797
    %v4799 = vrot.slane %v4780, 1
    %v4800 = vsel %vm2387, %v4797, %v4799
    %v4801 = vrot.slane %v4781, 1
    %v4802 = vsel %vm2387, %v4799, %v4801
    %v4803 = vrot.slane %v4782, 1
    %v4804 = vsel %vm2387, %v4801, %v4803
    %v4805 = vrot.slane %v4783, 1
    %v4806 = vsel %vm2387, %v4803, %v4805
    %v4815 = vadd.f32 %v4762, %v4794
    %v4816 = vadd.f32 %v4763, %v4796
    %v4817 = vadd.f32 %v4764, %v4798
    %v4818 = vadd.f32 %v4765, %v4800
    %v4819 = vadd.f32 %v4766, %v4802
    %v4820 = vadd.f32 %v4767, %v4804
    %v4821 = vadd.f32 %v4768, %v4806
    %v4822 = vadd.f32 %v4769, %v4805
    %v4823 = vmax.f32 %v4815, 0.0
    %v4824 = vmax.f32 %v4816, 0.0
    %v4825 = vmax.f32 %v4817, 0.0
    %v4826 = vmax.f32 %v4818, 0.0
    %v4827 = vmax.f32 %v4819, 0.0
    %v4828 = vmax.f32 %v4820, 0.0
    %v4829 = vmax.f32 %v4821, 0.0
    %v4830 = vmax.f32 %v4822, 0.0
    %v4831 = vmul.f32 %v4823, %v2146
    %v4832 = vmul.f32 %v4824, %v2151
    %v4833 = vmul.f32 %v4825, %v2156
    %v4834 = vmul.f32 %v4826, %v2161
    %v4835 = vmul.f32 %v4827, %v2166
    %v4836 = vmul.f32 %v4828, %v2171
    %v4837 = vmul.f32 %v4829, %v2176
    %v4838 = vmul.f32 %v4830, %v2181
    %v4839 = vpack.c.bf16 %v4832, %v4831
    %v4840 = vpack.c.bf16 %v4834, %v4833
    %v4841 = vpack.c.bf16 %v4836, %v4835
    %v4842 = vpack.c.bf16 %v4838, %v4837
    %v4844 = vshrl.u32 %v4839, 16
    %v4846 = vrot.slane %v4844, 3
    %v4847 = vshll.u32 %v4839, 16
    %v4849 = vrot.slane %v4847, 4
    %v4850 = vor.u32 %v4846, %v4849
    %v4852 = vshrl.u32 %v4840, 16
    %v4854 = vrot.slane %v4852, 3
    %v4855 = vshll.u32 %v4840, 16
    %v4857 = vrot.slane %v4855, 4
    %v4858 = vor.u32 %v4854, %v4857
    %v4859 = vsel %vm2439, %v4850, %v4858
    %v4861 = vshrl.u32 %v4841, 16
    %v4863 = vrot.slane %v4861, 3
    %v4864 = vshll.u32 %v4841, 16
    %v4866 = vrot.slane %v4864, 4
    %v4867 = vor.u32 %v4863, %v4866
    %v4868 = vsel %vm2439, %v4858, %v4867
    %v4870 = vshrl.u32 %v4842, 16
    %v4872 = vrot.slane %v4870, 3
    %v4873 = vshll.u32 %v4842, 16
    %v4875 = vrot.slane %v4873, 4
    %v4876 = vor.u32 %v4872, %v4875
    %v4877 = vsel %vm2439, %v4867, %v4876
    %v4883 = vld [vmem:[#allocation3] sm:$0xf0]
    %v4884 = vsel %vm2482, %v4850, %v4883
    %4885 = vst [vmem:[#allocation3] sm:$0xf0] %v4884
    %4886 = vst.msk [vmem:[#allocation3 + $0x8] sm:$0xff] %vm35, %v4859
    %4887 = vst.msk [vmem:[#allocation3 + $0x10] sm:$0xff] %vm35, %v4868
    %4888 = vst.msk [vmem:[#allocation3 + $0x18] sm:$0xff] %vm35, %v4877
    %v4889 = vld [vmem:[#allocation3 + $0x20] sm:$0xf]
    %v4890 = vsel %vm2491, %v4876, %v4889
    %4891 = vst [vmem:[#allocation3 + $0x20] sm:$0xf] %v4890
    %v4892 = vmul.f32 %v4573, %v4746
    %v4893 = vmul.f32 %v4574, %v4746
    %v4894 = vmul.f32 %v4575, %v4746
    %v4895 = vmul.f32 %v4576, %v4746
    %v4896 = vmul.f32 %v4577, %v4746
    %v4897 = vmul.f32 %v4578, %v4746
    %v4898 = vmul.f32 %v4579, %v4746
    %v4899 = vmul.f32 %v4580, %v4746
    %v4900 = vadd.f32 %v4892, %v4760
    %v4901 = vadd.f32 %v4893, %v4760
    %v4902 = vadd.f32 %v4894, %v4760
    %v4903 = vadd.f32 %v4895, %v4760
    %v4904 = vadd.f32 %v4896, %v4760
    %v4905 = vadd.f32 %v4897, %v4760
    %v4906 = vadd.f32 %v4898, %v4760
    %v4907 = vadd.f32 %v4899, %v4760
    %v4908 = vld [vmem:[%s2626] sm:$0xf0]
    %v4909 = vld [vmem:[%s2626 + $0x8] sm:$0xff]
    %v4910 = vld [vmem:[%s2626 + $0x10] sm:$0xff]
    %v4911 = vld [vmem:[%s2626 + $0x18] sm:$0xff]
    %v4912 = vld [vmem:[%s2626 + $0x20] sm:$0xf]
    %v4918 = vrot.slane %v4908, 4
    %v4919 = vrot.slane %v4909, 4
    %v4920 = vsel %vm2986, %v4918, %v4919
    %v4921 = vrot.slane %v4910, 4
    %v4922 = vsel %vm2986, %v4919, %v4921
    %v4923 = vrot.slane %v4911, 4
    %v4924 = vsel %vm2986, %v4921, %v4923
    %v4925 = vrot.slane %v4912, 4
    %v4926 = vsel %vm2986, %v4923, %v4925
    %v4931 = vunpack.c.l.bf16 %v4920
    %v4932 = vunpack.c.h.bf16 %v4920
    %v4933 = vunpack.c.l.bf16 %v4922
    %v4934 = vunpack.c.h.bf16 %v4922
    %v4935 = vunpack.c.l.bf16 %v4924
    %v4936 = vunpack.c.h.bf16 %v4924
    %v4937 = vunpack.c.l.bf16 %v4926
    %v4938 = vunpack.c.h.bf16 %v4926
    %v4947 = vrot.slane %v4931, 1
    %v4948 = vrot.slane %v4932, 1
    %v4949 = vsel %vm2387, %v4947, %v4948
    %v4950 = vrot.slane %v4933, 1
    %v4951 = vsel %vm2387, %v4948, %v4950
    %v4952 = vrot.slane %v4934, 1
    %v4953 = vsel %vm2387, %v4950, %v4952
    %v4954 = vrot.slane %v4935, 1
    %v4955 = vsel %vm2387, %v4952, %v4954
    %v4956 = vrot.slane %v4936, 1
    %v4957 = vsel %vm2387, %v4954, %v4956
    %v4958 = vrot.slane %v4937, 1
    %v4959 = vsel %vm2387, %v4956, %v4958
    %v4960 = vrot.slane %v4938, 1
    %v4961 = vsel %vm2387, %v4958, %v4960
    %v4970 = vadd.f32 %v4900, %v4949
    %v4971 = vadd.f32 %v4901, %v4951
    %v4972 = vadd.f32 %v4902, %v4953
    %v4973 = vadd.f32 %v4903, %v4955
    %v4974 = vadd.f32 %v4904, %v4957
    %v4975 = vadd.f32 %v4905, %v4959
    %v4976 = vadd.f32 %v4906, %v4961
    %v4977 = vadd.f32 %v4907, %v4960
    %v4978 = vmax.f32 %v4970, 0.0
    %v4979 = vmax.f32 %v4971, 0.0
    %v4980 = vmax.f32 %v4972, 0.0
    %v4981 = vmax.f32 %v4973, 0.0
    %v4982 = vmax.f32 %v4974, 0.0
    %v4983 = vmax.f32 %v4975, 0.0
    %v4984 = vmax.f32 %v4976, 0.0
    %v4985 = vmax.f32 %v4977, 0.0
    %v4986 = vmul.f32 %v4978, %v2146
    %v4987 = vmul.f32 %v4979, %v2151
    %v4988 = vmul.f32 %v4980, %v2156
    %v4989 = vmul.f32 %v4981, %v2161
    %v4990 = vmul.f32 %v4982, %v2166
    %v4991 = vmul.f32 %v4983, %v2171
    %v4992 = vmul.f32 %v4984, %v2176
    %v4993 = vmul.f32 %v4985, %v2181
    %v4994 = vpack.c.bf16 %v4987, %v4986
    %v4995 = vpack.c.bf16 %v4989, %v4988
    %v4996 = vpack.c.bf16 %v4991, %v4990
    %v4997 = vpack.c.bf16 %v4993, %v4992
    %v4999 = vshrl.u32 %v4994, 16
    %v5001 = vrot.slane %v4999, 3
    %v5002 = vshll.u32 %v4994, 16
    %v5004 = vrot.slane %v5002, 4
    %v5005 = vor.u32 %v5001, %v5004
    %v5007 = vshrl.u32 %v4995, 16
    %v5009 = vrot.slane %v5007, 3
    %v5010 = vshll.u32 %v4995, 16
    %v5012 = vrot.slane %v5010, 4
    %v5013 = vor.u32 %v5009, %v5012
    %v5014 = vsel %vm2439, %v5005, %v5013
    %v5016 = vshrl.u32 %v4996, 16
    %v5018 = vrot.slane %v5016, 3
    %v5019 = vshll.u32 %v4996, 16
    %v5021 = vrot.slane %v5019, 4
    %v5022 = vor.u32 %v5018, %v5021
    %v5023 = vsel %vm2439, %v5013, %v5022
    %v5025 = vshrl.u32 %v4997, 16
    %v5027 = vrot.slane %v5025, 3
    %v5028 = vshll.u32 %v4997, 16
    %v5030 = vrot.slane %v5028, 4
    %v5031 = vor.u32 %v5027, %v5030
    %v5032 = vsel %vm2439, %v5022, %v5031
    %s5038 = scalar_lea.vmem [#allocation3], 40
    %v5039 = vld [vmem:[%s5038] sm:$0xf0]
    %v5040 = vsel %vm2482, %v5005, %v5039
    %5041 = vst [vmem:[%s5038] sm:$0xf0] %v5040
    %5042 = vst.msk [vmem:[%s5038 + $0x8] sm:$0xff] %vm35, %v5014
    %5043 = vst.msk [vmem:[%s5038 + $0x10] sm:$0xff] %vm35, %v5023
    %5044 = vst.msk [vmem:[%s5038 + $0x18] sm:$0xff] %vm35, %v5032
    %v5045 = vld [vmem:[%s5038 + $0x20] sm:$0xf]
    %v5046 = vsel %vm2491, %v5031, %v5045
    %5047 = vst [vmem:[%s5038 + $0x20] sm:$0xf] %v5046
    %v5048 = vld [vmem:[#allocation3] sm:$0xff]
    %v5049 = vld [vmem:[#allocation3 + $0x8] sm:$0xff]
    %v5050 = vld [vmem:[#allocation3 + $0x10] sm:$0xff]
    %v5051 = vld [vmem:[#allocation3 + $0x18] sm:$0x7f]
    %s5052 = scalar_lea.vmem [#allocation4], 288
    %v5053 = vld [vmem:[%s5052] sm:$0xf]
    %v5054 = vld [vmem:[%s5052 + $0x4] sm:$0xf]
    %v5055 = vld [vmem:[%s5052 + $0x8] sm:$0xf]
    %v5056 = vld [vmem:[%s5052 + $0xc] sm:$0xf]
    %v5057 = vld [vmem:[#allocation3 + $0x18] sm:$0xff]
    %s5058 = scalar_lea.vmem [#allocation4], 304
    %v5059 = vld [vmem:[%s5058] sm:$0xf]
    %v5060 = vld [vmem:[%s5058 + $0x4] sm:$0xf]
    %v5061 = vld [vmem:[%s5058 + $0x8] sm:$0xf]
    %v5062 = vld [vmem:[%s5058 + $0xc] sm:$0xf]
    %v5064 = vshrl.u32 %v5048, 16
    %v5066 = vshll.u32 %v5048, 16
    %v5068 = vrot.slane %v5066, 1
    %v5069 = vor.u32 %v5064, %v5068
    %v5071 = vshll.u32 %v5049, 16
    %v5073 = vrot.slane %v5071, 1
    %v5074 = vsel %vm102, %v5069, %v5073
    %v5075 = vshrl.u32 %v5049, 16
    %v5077 = vor.u32 %v5075, %v5073
    %v5079 = vshll.u32 %v5050, 16
    %v5081 = vrot.slane %v5079, 1
    %v5082 = vsel %vm102, %v5077, %v5081
    %v5083 = vshrl.u32 %v5050, 16
    %v5085 = vor.u32 %v5083, %v5081
    %v5087 = vshll.u32 %v5057, 16
    %v5089 = vrot.slane %v5087, 1
    %v5090 = vsel %vm102, %v5085, %v5089
    %v5091 = vshrl.u32 %v5057, 16
    %v5093 = vor.u32 %v5091, %v5089
    %v5098 = vunpack.c.l.b16 %v5059
    %v5099 = vunpack.c.l.b16 %v5060
    %v5100 = vunpack.c.l.b16 %v5061
    %v5101 = vunpack.c.l.b16 %v5062
    %v5102 = vpack.c.b16 %v5099, %v5098
    %v5103 = vpack.c.b16 %v5101, %v5100
    %v5107 = vsel %vm35, %v5074, 0
    %v5110 = vsel %vm35, %v5082, 0
    %v5113 = vsel %vm35, %v5090, 0
    %v5116 = vsel %vm35, %v5093, 0
    %5118 = vmatprep.subr.bf16.mxu0 0
    %5119 = vmatpush1.bf16.msra.mxu0 %v5102
    %5120 = vmatprep.subr.bf16.mxu0 0
    %5121 = vmatpush1.bf16.msra.mxu0 %v5103
    %5122 = vmatprep.subr.bf16.mxu0 0
    %5123 = vmatpush1.bf16.msra.mxu0 0
    %5124 = vmatprep.subr.bf16.mxu0 0
    %5125 = vmatpush1.bf16.msra.mxu0 0
    %5126 = vmatprep.subr.bf16.mxu0 0
    %5127 = vmatpush1.bf16.msra.mxu0 0
    %5128 = vmatprep.subr.bf16.mxu0 0
    %5129 = vmatpush1.bf16.msra.mxu0 0
    %5130 = vmatprep.subr.bf16.mxu0 0
    %5131 = vmatpush1.bf16.msra.mxu0 0
    %5132 = vmatprep.subr.bf16.mxu0 0
    %5133 = vmatpush1.bf16.msra.mxu0 0
    %5134 = vmatprep.subr.bf16.mxu0 0
    %5135 = vmatpush1.bf16.msra.mxu0 0
    %5136 = vmatprep.subr.bf16.mxu0 0
    %5137 = vmatpush1.bf16.msra.mxu0 0
    %5138 = vmatprep.subr.bf16.mxu0 0
    %5139 = vmatpush1.bf16.msra.mxu0 0
    %5140 = vmatprep.subr.bf16.mxu0 0
    %5141 = vmatpush1.bf16.msra.mxu0 0
    %5142 = vmatprep.subr.bf16.mxu0 0
    %5143 = vmatpush1.bf16.msra.mxu0 0
    %5144 = vmatprep.subr.bf16.mxu0 0
    %5145 = vmatpush1.bf16.msra.mxu0 0
    %5146 = vmatprep.subr.bf16.mxu0 0
    %5147 = vmatpush1.bf16.msra.mxu0 0
    %5148 = vmatprep.subr.bf16.mxu0 0
    %5149 = vmatpush1.bf16.msra.mxu0 0
    %5150 = vmatprep.mubr.bf16.mxu0 0
    %5151 = vmatmul.mubr.bf16.gmra.mrb[0].mxu0 %v5107
    %v5152 = vpop.f32.mrb[0].mxu0
    %v5153 = vadd.f32 0.0, %v5152
    %v5154 = vpop.f32.mrb[0].mxu0
    %v5155 = vpop.f32.mrb[0].mxu0
    %v5156 = vadd.f32 0.0, %v5155
    %v5157 = vpop.f32.mrb[0].mxu0
    %5158 = vmatprep.mubr.bf16.mxu0 0
    %5159 = vmatmul.mubr.bf16.gmra.mrb[0].mxu0 %v5110
    %v5160 = vpop.f32.mrb[0].mxu0
    %v5161 = vadd.f32 0.0, %v5160
    %v5162 = vpop.f32.mrb[0].mxu0
    %v5163 = vpop.f32.mrb[0].mxu0
    %v5164 = vadd.f32 0.0, %v5163
    %v5165 = vpop.f32.mrb[0].mxu0
    %5166 = vmatprep.mubr.bf16.mxu0 0
    %5167 = vmatmul.mubr.bf16.gmra.mrb[0].mxu0 %v5113
    %v5168 = vpop.f32.mrb[0].mxu0
    %v5169 = vadd.f32 0.0, %v5168
    %v5170 = vpop.f32.mrb[0].mxu0
    %v5171 = vpop.f32.mrb[0].mxu0
    %v5172 = vadd.f32 0.0, %v5171
    %v5173 = vpop.f32.mrb[0].mxu0
    %5174 = vmatprep.mubr.bf16.mxu0 0
    %5175 = vmatmul.mubr.bf16.gmra.mrb[0].mxu0 %v5116
    %v5176 = vpop.f32.mrb[0].mxu0
    %v5177 = vadd.f32 0.0, %v5176
    %v5178 = vpop.f32.mrb[0].mxu0
    %v5179 = vpop.f32.mrb[0].mxu0
    %v5180 = vadd.f32 0.0, %v5179
    %v5181 = vpop.f32.mrb[0].mxu0
    %5182 = vdwg.mxu0
    %v5187 = vunpack.c.l.b16 %v5053
    %v5188 = vunpack.c.l.b16 %v5054
    %v5189 = vunpack.c.l.b16 %v5055
    %v5190 = vunpack.c.l.b16 %v5056
    %v5191 = vpack.c.b16 %v5188, %v5187
    %v5192 = vpack.c.b16 %v5190, %v5189
    %v5195 = vsel %vm35, %v5048, 0
    %v5197 = vsel %vm35, %v5049, 0
    %v5199 = vsel %vm35, %v5050, 0
    %v5202 = vsel %vm35, %v5051, 0
    %5204 = vmatprep.subr.bf16.mxu0 0
    %5205 = vmatpush1.bf16.msra.mxu0 %v5191
    %5206 = vmatprep.subr.bf16.mxu0 0
    %5207 = vmatpush1.bf16.msra.mxu0 %v5192
    %5208 = vmatprep.subr.bf16.mxu0 0
    %5209 = vmatpush1.bf16.msra.mxu0 0
    %5210 = vmatprep.subr.bf16.mxu0 0
    %5211 = vmatpush1.bf16.msra.mxu0 0
    %5212 = vmatprep.subr.bf16.mxu0 0
    %5213 = vmatpush1.bf16.msra.mxu0 0
    %5214 = vmatprep.subr.bf16.mxu0 0
    %5215 = vmatpush1.bf16.msra.mxu0 0
    %5216 = vmatprep.subr.bf16.mxu0 0
    %5217 = vmatpush1.bf16.msra.mxu0 0
    %5218 = vmatprep.subr.bf16.mxu0 0
    %5219 = vmatpush1.bf16.msra.mxu0 0
    %5220 = vmatprep.subr.bf16.mxu0 0
    %5221 = vmatpush1.bf16.msra.mxu0 0
    %5222 = vmatprep.subr.bf16.mxu0 0
    %5223 = vmatpush1.bf16.msra.mxu0 0
    %5224 = vmatprep.subr.bf16.mxu0 0
    %5225 = vmatpush1.bf16.msra.mxu0 0
    %5226 = vmatprep.subr.bf16.mxu0 0
    %5227 = vmatpush1.bf16.msra.mxu0 0
    %5228 = vmatprep.subr.bf16.mxu0 0
    %5229 = vmatpush1.bf16.msra.mxu0 0
    %5230 = vmatprep.subr.bf16.mxu0 0
    %5231 = vmatpush1.bf16.msra.mxu0 0
    %5232 = vmatprep.subr.bf16.mxu0 0
    %5233 = vmatpush1.bf16.msra.mxu0 0
    %5234 = vmatprep.subr.bf16.mxu0 0
    %5235 = vmatpush1.bf16.msra.mxu0 0
    %5236 = vmatprep.mubr.bf16.mxu0 0
    %5237 = vmatmul.mubr.bf16.gmra.mrb[0].mxu0 %v5195
    %v5238 = vpop.f32.mrb[0].mxu0
    %v5239 = vadd.f32 %v5153, %v5238
    %v5240 = vpop.f32.mrb[0].mxu0
    %v5241 = vpop.f32.mrb[0].mxu0
    %v5242 = vadd.f32 %v5156, %v5241
    %v5243 = vpop.f32.mrb[0].mxu0
    %5244 = vmatprep.mubr.bf16.mxu0 0
    %5245 = vmatmul.mubr.bf16.gmra.mrb[0].mxu0 %v5197
    %v5246 = vpop.f32.mrb[0].mxu0
    %v5247 = vadd.f32 %v5161, %v5246
    %v5248 = vpop.f32.mrb[0].mxu0
    %v5249 = vpop.f32.mrb[0].mxu0
    %v5250 = vadd.f32 %v5164, %v5249
    %v5251 = vpop.f32.mrb[0].mxu0
    %5252 = vmatprep.mubr.bf16.mxu0 0
    %5253 = vmatmul.mubr.bf16.gmra.mrb[0].mxu0 %v5199
    %v5254 = vpop.f32.mrb[0].mxu0
    %v5255 = vadd.f32 %v5169, %v5254
    %v5256 = vpop.f32.mrb[0].mxu0
    %v5257 = vpop.f32.mrb[0].mxu0
    %v5258 = vadd.f32 %v5172, %v5257
    %v5259 = vpop.f32.mrb[0].mxu0
    %5260 = vmatprep.mubr.bf16.mxu0 0
    %5261 = vmatmul.mubr.bf16.gmra.mrb[0].mxu0 %v5202
    %v5262 = vpop.f32.mrb[0].mxu0
    %v5263 = vadd.f32 %v5177, %v5262
    %v5264 = vpop.f32.mrb[0].mxu0
    %v5265 = vpop.f32.mrb[0].mxu0
    %v5266 = vadd.f32 %v5180, %v5265
    %v5267 = vpop.f32.mrb[0].mxu0
    %5268 = vdwg.mxu0
    %v5269 = vld [vmem:[#allocation3] sm:$0xfe]
    %s5270 = scalar_lea.vmem [#allocation4], 320
    %v5271 = vld [vmem:[%s5270] sm:$0xf]
    %v5272 = vld [vmem:[%s5270 + $0x4] sm:$0xf]
    %v5273 = vld [vmem:[%s5270 + $0x8] sm:$0xf]
    %v5274 = vld [vmem:[%s5270 + $0xc] sm:$0xf]
    %v5279 = vrot.slane %v5269, 1
    %v5280 = vrot.slane %v5049, 1
    %v5281 = vsel %vm321, %v5279, %v5280
    %v5282 = vrot.slane %v5050, 1
    %v5283 = vsel %vm321, %v5280, %v5282
    %v5284 = vrot.slane %v5057, 1
    %v5285 = vsel %vm321, %v5282, %v5284
    %v5290 = vunpack.c.l.b16 %v5271
    %v5291 = vunpack.c.l.b16 %v5272
    %v5292 = vunpack.c.l.b16 %v5273
    %v5293 = vunpack.c.l.b16 %v5274
    %v5294 = vpack.c.b16 %v5291, %v5290
    %v5295 = vpack.c.b16 %v5293, %v5292
    %v5299 = vsel %vm35, %v5281, 0
    %v5302 = vsel %vm35, %v5283, 0
    %v5305 = vsel %vm35, %v5285, 0
    %v5308 = vsel %vm35, %v5284, 0
    %5310 = vmatprep.subr.bf16.mxu0 0
    %5311 = vmatpush1.bf16.msra.mxu0 %v5294
    %5312 = vmatprep.subr.bf16.mxu0 0
    %5313 = vmatpush1.bf16.msra.mxu0 %v5295
    %5314 = vmatprep.subr.bf16.mxu0 0
    %5315 = vmatpush1.bf16.msra.mxu0 0
    %5316 = vmatprep.subr.bf16.mxu0 0
    %5317 = vmatpush1.bf16.msra.mxu0 0
    %5318 = vmatprep.subr.bf16.mxu0 0
    %5319 = vmatpush1.bf16.msra.mxu0 0
    %5320 = vmatprep.subr.bf16.mxu0 0
    %5321 = vmatpush1.bf16.msra.mxu0 0
    %5322 = vmatprep.subr.bf16.mxu0 0
    %5323 = vmatpush1.bf16.msra.mxu0 0
    %5324 = vmatprep.subr.bf16.mxu0 0
    %5325 = vmatpush1.bf16.msra.mxu0 0
    %5326 = vmatprep.subr.bf16.mxu0 0
    %5327 = vmatpush1.bf16.msra.mxu0 0
    %5328 = vmatprep.subr.bf16.mxu0 0
    %5329 = vmatpush1.bf16.msra.mxu0 0
    %5330 = vmatprep.subr.bf16.mxu0 0
    %5331 = vmatpush1.bf16.msra.mxu0 0
    %5332 = vmatprep.subr.bf16.mxu0 0
    %5333 = vmatpush1.bf16.msra.mxu0 0
    %5334 = vmatprep.subr.bf16.mxu0 0
    %5335 = vmatpush1.bf16.msra.mxu0 0
    %5336 = vmatprep.subr.bf16.mxu0 0
    %5337 = vmatpush1.bf16.msra.mxu0 0
    %5338 = vmatprep.subr.bf16.mxu0 0
    %5339 = vmatpush1.bf16.msra.mxu0 0
    %5340 = vmatprep.subr.bf16.mxu0 0
    %5341 = vmatpush1.bf16.msra.mxu0 0
    %5342 = vmatprep.mubr.bf16.mxu0 0
    %5343 = vmatmul.mubr.bf16.gmra.mrb[0].mxu0 %v5299
    %v5344 = vpop.f32.mrb[0].mxu0
    %v5345 = vadd.f32 0.0, %v5344
    %v5346 = vpop.f32.mrb[0].mxu0
    %v5347 = vpop.f32.mrb[0].mxu0
    %v5348 = vadd.f32 0.0, %v5347
    %v5349 = vpop.f32.mrb[0].mxu0
    %5350 = vmatprep.mubr.bf16.mxu0 0
    %5351 = vmatmul.mubr.bf16.gmra.mrb[0].mxu0 %v5302
    %v5352 = vpop.f32.mrb[0].mxu0
    %v5353 = vadd.f32 0.0, %v5352
    %v5354 = vpop.f32.mrb[0].mxu0
    %v5355 = vpop.f32.mrb[0].mxu0
    %v5356 = vadd.f32 0.0, %v5355
    %v5357 = vpop.f32.mrb[0].mxu0
    %5358 = vmatprep.mubr.bf16.mxu0 0
    %5359 = vmatmul.mubr.bf16.gmra.mrb[0].mxu0 %v5305
    %v5360 = vpop.f32.mrb[0].mxu0
    %v5361 = vadd.f32 0.0, %v5360
    %v5362 = vpop.f32.mrb[0].mxu0
    %v5363 = vpop.f32.mrb[0].mxu0
    %v5364 = vadd.f32 0.0, %v5363
    %v5365 = vpop.f32.mrb[0].mxu0
    %5366 = vmatprep.mubr.bf16.mxu0 0
    %5367 = vmatmul.mubr.bf16.gmra.mrb[0].mxu0 %v5308
    %v5368 = vpop.f32.mrb[0].mxu0
    %v5369 = vadd.f32 0.0, %v5368
    %v5370 = vpop.f32.mrb[0].mxu0
    %v5371 = vpop.f32.mrb[0].mxu0
    %v5372 = vadd.f32 0.0, %v5371
    %v5373 = vpop.f32.mrb[0].mxu0
    %5374 = vdwg.mxu0
    %v5375 = vadd.f32 %v5239, %v5345
    %v5376 = vadd.f32 %v5242, %v5348
    %v5377 = vadd.f32 %v5247, %v5353
    %v5378 = vadd.f32 %v5250, %v5356
    %v5379 = vadd.f32 %v5255, %v5361
    %v5380 = vadd.f32 %v5258, %v5364
    %v5381 = vadd.f32 %v5263, %v5369
    %v5382 = vadd.f32 %v5266, %v5372
    %v5383 = vld [vmem:[#allocation3] sm:$0xf0]
    %v5384 = vld [vmem:[#allocation3 + $0x8] sm:$0xff]
    %v5385 = vld [vmem:[#allocation3 + $0x10] sm:$0xff]
    %v5386 = vld [vmem:[#allocation3 + $0x18] sm:$0xff]
    %v5387 = vld [vmem:[#allocation3 + $0x20] sm:$0x7]
    %s5388 = scalar_lea.vmem [#allocation4], 336
    %v5389 = vld [vmem:[%s5388] sm:$0xf]
    %v5390 = vld [vmem:[%s5388 + $0x4] sm:$0xf]
    %v5391 = vld [vmem:[%s5388 + $0x8] sm:$0xf]
    %v5392 = vld [vmem:[%s5388 + $0xc] sm:$0xf]
    %v5398 = vrot.slane %v5383, 4
    %v5399 = vrot.slane %v5384, 4
    %v5400 = vsel %vm2986, %v5398, %v5399
    %v5401 = vrot.slane %v5385, 4
    %v5402 = vsel %vm2986, %v5399, %v5401
    %v5403 = vrot.slane %v5386, 4
    %v5404 = vsel %vm2986, %v5401, %v5403
    %v5405 = vrot.slane %v5387, 4
    %v5406 = vsel %vm2986, %v5403, %v5405
    %v5411 = vunpack.c.l.b16 %v5389
    %v5412 = vunpack.c.l.b16 %v5390
    %v5413 = vunpack.c.l.b16 %v5391
    %v5414 = vunpack.c.l.b16 %v5392
    %v5415 = vpack.c.b16 %v5412, %v5411
    %v5416 = vpack.c.b16 %v5414, %v5413
    %v5420 = vsel %vm35, %v5400, 0
    %v5423 = vsel %vm35, %v5402, 0
    %v5426 = vsel %vm35, %v5404, 0
    %v5429 = vsel %vm35, %v5406, 0
    %5431 = vmatprep.subr.bf16.mxu0 0
    %5432 = vmatpush1.bf16.msra.mxu0 %v5415
    %5433 = vmatprep.subr.bf16.mxu0 0
    %5434 = vmatpush1.bf16.msra.mxu0 %v5416
    %5435 = vmatprep.subr.bf16.mxu0 0
    %5436 = vmatpush1.bf16.msra.mxu0 0
    %5437 = vmatprep.subr.bf16.mxu0 0
    %5438 = vmatpush1.bf16.msra.mxu0 0
    %5439 = vmatprep.subr.bf16.mxu0 0
    %5440 = vmatpush1.bf16.msra.mxu0 0
    %5441 = vmatprep.subr.bf16.mxu0 0
    %5442 = vmatpush1.bf16.msra.mxu0 0
    %5443 = vmatprep.subr.bf16.mxu0 0
    %5444 = vmatpush1.bf16.msra.mxu0 0
    %5445 = vmatprep.subr.bf16.mxu0 0
    %5446 = vmatpush1.bf16.msra.mxu0 0
    %5447 = vmatprep.subr.bf16.mxu0 0
    %5448 = vmatpush1.bf16.msra.mxu0 0
    %5449 = vmatprep.subr.bf16.mxu0 0
    %5450 = vmatpush1.bf16.msra.mxu0 0
    %5451 = vmatprep.subr.bf16.mxu0 0
    %5452 = vmatpush1.bf16.msra.mxu0 0
    %5453 = vmatprep.subr.bf16.mxu0 0
    %5454 = vmatpush1.bf16.msra.mxu0 0
    %5455 = vmatprep.subr.bf16.mxu0 0
    %5456 = vmatpush1.bf16.msra.mxu0 0
    %5457 = vmatprep.subr.bf16.mxu0 0
    %5458 = vmatpush1.bf16.msra.mxu0 0
    %5459 = vmatprep.subr.bf16.mxu0 0
    %5460 = vmatpush1.bf16.msra.mxu0 0
    %5461 = vmatprep.subr.bf16.mxu0 0
    %5462 = vmatpush1.bf16.msra.mxu0 0
    %5463 = vmatprep.mubr.bf16.mxu0 0
    %5464 = vmatmul.mubr.bf16.gmra.mrb[0].mxu0 %v5420
    %v5465 = vpop.f32.mrb[0].mxu0
    %v5466 = vadd.f32 0.0, %v5465
    %v5467 = vpop.f32.mrb[0].mxu0
    %v5468 = vpop.f32.mrb[0].mxu0
    %v5469 = vadd.f32 0.0, %v5468
    %v5470 = vpop.f32.mrb[0].mxu0
    %5471 = vmatprep.mubr.bf16.mxu0 0
    %5472 = vmatmul.mubr.bf16.gmra.mrb[0].mxu0 %v5423
    %v5473 = vpop.f32.mrb[0].mxu0
    %v5474 = vadd.f32 0.0, %v5473
    %v5475 = vpop.f32.mrb[0].mxu0
    %v5476 = vpop.f32.mrb[0].mxu0
    %v5477 = vadd.f32 0.0, %v5476
    %v5478 = vpop.f32.mrb[0].mxu0
    %5479 = vmatprep.mubr.bf16.mxu0 0
    %5480 = vmatmul.mubr.bf16.gmra.mrb[0].mxu0 %v5426
    %v5481 = vpop.f32.mrb[0].mxu0
    %v5482 = vadd.f32 0.0, %v5481
    %v5483 = vpop.f32.mrb[0].mxu0
    %v5484 = vpop.f32.mrb[0].mxu0
    %v5485 = vadd.f32 0.0, %v5484
    %v5486 = vpop.f32.mrb[0].mxu0
    %5487 = vmatprep.mubr.bf16.mxu0 0
    %5488 = vmatmul.mubr.bf16.gmra.mrb[0].mxu0 %v5429
    %v5489 = vpop.f32.mrb[0].mxu0
    %v5490 = vadd.f32 0.0, %v5489
    %v5491 = vpop.f32.mrb[0].mxu0
    %v5492 = vpop.f32.mrb[0].mxu0
    %v5493 = vadd.f32 0.0, %v5492
    %v5494 = vpop.f32.mrb[0].mxu0
    %5495 = vdwg.mxu0
    %v5496 = vadd.f32 %v5375, %v5466
    %v5497 = vadd.f32 %v5376, %v5469
    %v5498 = vadd.f32 %v5377, %v5474
    %v5499 = vadd.f32 %v5378, %v5477
    %v5500 = vadd.f32 %v5379, %v5482
    %v5501 = vadd.f32 %v5380, %v5485
    %v5502 = vadd.f32 %v5381, %v5490
    %v5503 = vadd.f32 %v5382, %v5493
    %v5504 = vld [vmem:[#allocation3 + $0x20] sm:$0xf]
    %s5505 = scalar_lea.vmem [#allocation4], 352
    %v5506 = vld [vmem:[%s5505] sm:$0xf]
    %v5507 = vld [vmem:[%s5505 + $0x4] sm:$0xf]
    %v5508 = vld [vmem:[%s5505 + $0x8] sm:$0xf]
    %v5509 = vld [vmem:[%s5505 + $0xc] sm:$0xf]
    %v5511 = vshrl.u32 %v5383, 16
    %v5513 = vrot.slane %v5511, 4
    %v5514 = vshll.u32 %v5383, 16
    %v5516 = vrot.slane %v5514, 5
    %v5517 = vor.u32 %v5513, %v5516
    %v5519 = vshrl.u32 %v5384, 16
    %v5521 = vrot.slane %v5519, 4
    %v5522 = vshll.u32 %v5384, 16
    %v5524 = vrot.slane %v5522, 5
    %v5525 = vor.u32 %v5521, %v5524
    %v5526 = vsel %vm2490, %v5517, %v5525
    %v5528 = vshrl.u32 %v5385, 16
    %v5530 = vrot.slane %v5528, 4
    %v5531 = vshll.u32 %v5385, 16
    %v5533 = vrot.slane %v5531, 5
    %v5534 = vor.u32 %v5530, %v5533
    %v5535 = vsel %vm2490, %v5525, %v5534
    %v5537 = vshrl.u32 %v5386, 16
    %v5539 = vrot.slane %v5537, 4
    %v5540 = vshll.u32 %v5386, 16
    %v5542 = vrot.slane %v5540, 5
    %v5543 = vor.u32 %v5539, %v5542
    %v5544 = vsel %vm2490, %v5534, %v5543
    %v5546 = vshrl.u32 %v5504, 16
    %v5548 = vrot.slane %v5546, 4
    %v5549 = vshll.u32 %v5504, 16
    %v5551 = vrot.slane %v5549, 5
    %v5552 = vor.u32 %v5548, %v5551
    %v5553 = vsel %vm2490, %v5543, %v5552
    %v5558 = vunpack.c.l.b16 %v5506
    %v5559 = vunpack.c.l.b16 %v5507
    %v5560 = vunpack.c.l.b16 %v5508
    %v5561 = vunpack.c.l.b16 %v5509
    %v5562 = vpack.c.b16 %v5559, %v5558
    %v5563 = vpack.c.b16 %v5561, %v5560
    %v5567 = vsel %vm35, %v5526, 0
    %v5570 = vsel %vm35, %v5535, 0
    %v5573 = vsel %vm35, %v5544, 0
    %v5576 = vsel %vm35, %v5553, 0
    %5578 = vmatprep.subr.bf16.mxu0 0
    %5579 = vmatpush1.bf16.msra.mxu0 %v5562
    %5580 = vmatprep.subr.bf16.mxu0 0
    %5581 = vmatpush1.bf16.msra.mxu0 %v5563
    %5582 = vmatprep.subr.bf16.mxu0 0
    %5583 = vmatpush1.bf16.msra.mxu0 0
    %5584 = vmatprep.subr.bf16.mxu0 0
    %5585 = vmatpush1.bf16.msra.mxu0 0
    %5586 = vmatprep.subr.bf16.mxu0 0
    %5587 = vmatpush1.bf16.msra.mxu0 0
    %5588 = vmatprep.subr.bf16.mxu0 0
    %5589 = vmatpush1.bf16.msra.mxu0 0
    %5590 = vmatprep.subr.bf16.mxu0 0
    %5591 = vmatpush1.bf16.msra.mxu0 0
    %5592 = vmatprep.subr.bf16.mxu0 0
    %5593 = vmatpush1.bf16.msra.mxu0 0
    %5594 = vmatprep.subr.bf16.mxu0 0
    %5595 = vmatpush1.bf16.msra.mxu0 0
    %5596 = vmatprep.subr.bf16.mxu0 0
    %5597 = vmatpush1.bf16.msra.mxu0 0
    %5598 = vmatprep.subr.bf16.mxu0 0
    %5599 = vmatpush1.bf16.msra.mxu0 0
    %5600 = vmatprep.subr.bf16.mxu0 0
    %5601 = vmatpush1.bf16.msra.mxu0 0
    %5602 = vmatprep.subr.bf16.mxu0 0
    %5603 = vmatpush1.bf16.msra.mxu0 0
    %5604 = vmatprep.subr.bf16.mxu0 0
    %5605 = vmatpush1.bf16.msra.mxu0 0
    %5606 = vmatprep.subr.bf16.mxu0 0
    %5607 = vmatpush1.bf16.msra.mxu0 0
    %5608 = vmatprep.subr.bf16.mxu0 0
    %5609 = vmatpush1.bf16.msra.mxu0 0
    %5610 = vmatprep.mubr.bf16.mxu0 0
    %5611 = vmatmul.mubr.bf16.gmra.mrb[0].mxu0 %v5567
    %v5612 = vpop.f32.mrb[0].mxu0
    %v5613 = vadd.f32 0.0, %v5612
    %v5614 = vpop.f32.mrb[0].mxu0
    %v5615 = vpop.f32.mrb[0].mxu0
    %v5616 = vadd.f32 0.0, %v5615
    %v5617 = vpop.f32.mrb[0].mxu0
    %5618 = vmatprep.mubr.bf16.mxu0 0
    %5619 = vmatmul.mubr.bf16.gmra.mrb[0].mxu0 %v5570
    %v5620 = vpop.f32.mrb[0].mxu0
    %v5621 = vadd.f32 0.0, %v5620
    %v5622 = vpop.f32.mrb[0].mxu0
    %v5623 = vpop.f32.mrb[0].mxu0
    %v5624 = vadd.f32 0.0, %v5623
    %v5625 = vpop.f32.mrb[0].mxu0
    %5626 = vmatprep.mubr.bf16.mxu0 0
    %5627 = vmatmul.mubr.bf16.gmra.mrb[0].mxu0 %v5573
    %v5628 = vpop.f32.mrb[0].mxu0
    %v5629 = vadd.f32 0.0, %v5628
    %v5630 = vpop.f32.mrb[0].mxu0
    %v5631 = vpop.f32.mrb[0].mxu0
    %v5632 = vadd.f32 0.0, %v5631
    %v5633 = vpop.f32.mrb[0].mxu0
    %5634 = vmatprep.mubr.bf16.mxu0 0
    %5635 = vmatmul.mubr.bf16.gmra.mrb[0].mxu0 %v5576
    %v5636 = vpop.f32.mrb[0].mxu0
    %v5637 = vadd.f32 0.0, %v5636
    %v5638 = vpop.f32.mrb[0].mxu0
    %v5639 = vpop.f32.mrb[0].mxu0
    %v5640 = vadd.f32 0.0, %v5639
    %v5641 = vpop.f32.mrb[0].mxu0
    %5642 = vdwg.mxu0
    %v5643 = vadd.f32 %v5496, %v5613
    %v5644 = vadd.f32 %v5497, %v5616
    %v5645 = vadd.f32 %v5498, %v5621
    %v5646 = vadd.f32 %v5499, %v5624
    %v5647 = vadd.f32 %v5500, %v5629
    %v5648 = vadd.f32 %v5501, %v5632
    %v5649 = vadd.f32 %v5502, %v5637
    %v5650 = vadd.f32 %v5503, %v5640
    %v5651 = vld [vmem:[#allocation3] sm:$0xe0]
    %s5652 = scalar_lea.vmem [#allocation4], 368
    %v5653 = vld [vmem:[%s5652] sm:$0xf]
    %v5654 = vld [vmem:[%s5652 + $0x4] sm:$0xf]
    %v5655 = vld [vmem:[%s5652 + $0x8] sm:$0xf]
    %v5656 = vld [vmem:[%s5652 + $0xc] sm:$0xf]
    %v5659 = vrot.slane %v5651, 5
    %v5660 = vrot.slane %v5384, 5
    %v5661 = vsel %vm3248, %v5659, %v5660
    %v5662 = vrot.slane %v5385, 5
    %v5663 = vsel %vm3248, %v5660, %v5662
    %v5664 = vrot.slane %v5386, 5
    %v5665 = vsel %vm3248, %v5662, %v5664
    %v5666 = vrot.slane %v5504, 5
    %v5667 = vsel %vm3248, %v5664, %v5666
    %v5672 = vunpack.c.l.b16 %v5653
    %v5673 = vunpack.c.l.b16 %v5654
    %v5674 = vunpack.c.l.b16 %v5655
    %v5675 = vunpack.c.l.b16 %v5656
    %v5676 = vpack.c.b16 %v5673, %v5672
    %v5677 = vpack.c.b16 %v5675, %v5674
    %v5681 = vsel %vm35, %v5661, 0
    %v5684 = vsel %vm35, %v5663, 0
    %v5687 = vsel %vm35, %v5665, 0
    %v5690 = vsel %vm35, %v5667, 0
    %5692 = vmatprep.subr.bf16.mxu0 0
    %5693 = vmatpush1.bf16.msra.mxu0 %v5676
    %5694 = vmatprep.subr.bf16.mxu0 0
    %5695 = vmatpush1.bf16.msra.mxu0 %v5677
    %5696 = vmatprep.subr.bf16.mxu0 0
    %5697 = vmatpush1.bf16.msra.mxu0 0
    %5698 = vmatprep.subr.bf16.mxu0 0
    %5699 = vmatpush1.bf16.msra.mxu0 0
    %5700 = vmatprep.subr.bf16.mxu0 0
    %5701 = vmatpush1.bf16.msra.mxu0 0
    %5702 = vmatprep.subr.bf16.mxu0 0
    %5703 = vmatpush1.bf16.msra.mxu0 0
    %5704 = vmatprep.subr.bf16.mxu0 0
    %5705 = vmatpush1.bf16.msra.mxu0 0
    %5706 = vmatprep.subr.bf16.mxu0 0
    %5707 = vmatpush1.bf16.msra.mxu0 0
    %5708 = vmatprep.subr.bf16.mxu0 0
    %5709 = vmatpush1.bf16.msra.mxu0 0
    %5710 = vmatprep.subr.bf16.mxu0 0
    %5711 = vmatpush1.bf16.msra.mxu0 0
    %5712 = vmatprep.subr.bf16.mxu0 0
    %5713 = vmatpush1.bf16.msra.mxu0 0
    %5714 = vmatprep.subr.bf16.mxu0 0
    %5715 = vmatpush1.bf16.msra.mxu0 0
    %5716 = vmatprep.subr.bf16.mxu0 0
    %5717 = vmatpush1.bf16.msra.mxu0 0
    %5718 = vmatprep.subr.bf16.mxu0 0
    %5719 = vmatpush1.bf16.msra.mxu0 0
    %5720 = vmatprep.subr.bf16.mxu0 0
    %5721 = vmatpush1.bf16.msra.mxu0 0
    %5722 = vmatprep.subr.bf16.mxu0 0
    %5723 = vmatpush1.bf16.msra.mxu0 0
    %5724 = vmatprep.mubr.bf16.mxu0 0
    %5725 = vmatmul.mubr.bf16.gmra.mrb[0].mxu0 %v5681
    %v5726 = vpop.f32.mrb[0].mxu0
    %v5727 = vadd.f32 0.0, %v5726
    %v5728 = vpop.f32.mrb[0].mxu0
    %v5729 = vpop.f32.mrb[0].mxu0
    %v5730 = vadd.f32 0.0, %v5729
    %v5731 = vpop.f32.mrb[0].mxu0
    %5732 = vmatprep.mubr.bf16.mxu0 0
    %5733 = vmatmul.mubr.bf16.gmra.mrb[0].mxu0 %v5684
    %v5734 = vpop.f32.mrb[0].mxu0
    %v5735 = vadd.f32 0.0, %v5734
    %v5736 = vpop.f32.mrb[0].mxu0
    %v5737 = vpop.f32.mrb[0].mxu0
    %v5738 = vadd.f32 0.0, %v5737
    %v5739 = vpop.f32.mrb[0].mxu0
    %5740 = vmatprep.mubr.bf16.mxu0 0
    %5741 = vmatmul.mubr.bf16.gmra.mrb[0].mxu0 %v5687
    %v5742 = vpop.f32.mrb[0].mxu0
    %v5743 = vadd.f32 0.0, %v5742
    %v5744 = vpop.f32.mrb[0].mxu0
    %v5745 = vpop.f32.mrb[0].mxu0
    %v5746 = vadd.f32 0.0, %v5745
    %v5747 = vpop.f32.mrb[0].mxu0
    %5748 = vmatprep.mubr.bf16.mxu0 0
    %5749 = vmatmul.mubr.bf16.gmra.mrb[0].mxu0 %v5690
    %v5750 = vpop.f32.mrb[0].mxu0
    %v5751 = vadd.f32 0.0, %v5750
    %v5752 = vpop.f32.mrb[0].mxu0
    %v5753 = vpop.f32.mrb[0].mxu0
    %v5754 = vadd.f32 0.0, %v5753
    %v5755 = vpop.f32.mrb[0].mxu0
    %5756 = vdwg.mxu0
    %v5757 = vadd.f32 %v5643, %v5727
    %v5758 = vadd.f32 %v5644, %v5730
    %v5759 = vadd.f32 %v5645, %v5735
    %v5760 = vadd.f32 %v5646, %v5738
    %v5761 = vadd.f32 %v5647, %v5743
    %v5762 = vadd.f32 %v5648, %v5746
    %v5763 = vadd.f32 %v5649, %v5751
    %v5764 = vadd.f32 %v5650, %v5754
    %v5765 = vld [vmem:[#allocation3 + $0x20] sm:$0x7f]
    %s5766 = scalar_lea.vmem [#allocation4], 384
    %v5767 = vld [vmem:[%s5766] sm:$0xf]
    %v5768 = vld [vmem:[%s5766 + $0x4] sm:$0xf]
    %v5769 = vld [vmem:[%s5766 + $0x8] sm:$0xf]
    %v5770 = vld [vmem:[%s5766 + $0xc] sm:$0xf]
    %v5775 = vunpack.c.l.b16 %v5767
    %v5776 = vunpack.c.l.b16 %v5768
    %v5777 = vunpack.c.l.b16 %v5769
    %v5778 = vunpack.c.l.b16 %v5770
    %v5779 = vpack.c.b16 %v5776, %v5775
    %v5780 = vpack.c.b16 %v5778, %v5777
    %v5783 = vsel %vm35, %v5384, 0
    %v5785 = vsel %vm35, %v5385, 0
    %v5787 = vsel %vm35, %v5386, 0
    %v5790 = vsel %vm35, %v5765, 0
    %5792 = vmatprep.subr.bf16.mxu0 0
    %5793 = vmatpush1.bf16.msra.mxu0 %v5779
    %5794 = vmatprep.subr.bf16.mxu0 0
    %5795 = vmatpush1.bf16.msra.mxu0 %v5780
    %5796 = vmatprep.subr.bf16.mxu0 0
    %5797 = vmatpush1.bf16.msra.mxu0 0
    %5798 = vmatprep.subr.bf16.mxu0 0
    %5799 = vmatpush1.bf16.msra.mxu0 0
    %5800 = vmatprep.subr.bf16.mxu0 0
    %5801 = vmatpush1.bf16.msra.mxu0 0
    %5802 = vmatprep.subr.bf16.mxu0 0
    %5803 = vmatpush1.bf16.msra.mxu0 0
    %5804 = vmatprep.subr.bf16.mxu0 0
    %5805 = vmatpush1.bf16.msra.mxu0 0
    %5806 = vmatprep.subr.bf16.mxu0 0
    %5807 = vmatpush1.bf16.msra.mxu0 0
    %5808 = vmatprep.subr.bf16.mxu0 0
    %5809 = vmatpush1.bf16.msra.mxu0 0
    %5810 = vmatprep.subr.bf16.mxu0 0
    %5811 = vmatpush1.bf16.msra.mxu0 0
    %5812 = vmatprep.subr.bf16.mxu0 0
    %5813 = vmatpush1.bf16.msra.mxu0 0
    %5814 = vmatprep.subr.bf16.mxu0 0
    %5815 = vmatpush1.bf16.msra.mxu0 0
    %5816 = vmatprep.subr.bf16.mxu0 0
    %5817 = vmatpush1.bf16.msra.mxu0 0
    %5818 = vmatprep.subr.bf16.mxu0 0
    %5819 = vmatpush1.bf16.msra.mxu0 0
    %5820 = vmatprep.subr.bf16.mxu0 0
    %5821 = vmatpush1.bf16.msra.mxu0 0
    %5822 = vmatprep.subr.bf16.mxu0 0
    %5823 = vmatpush1.bf16.msra.mxu0 0
    %5824 = vmatprep.mubr.bf16.mxu0 0
    %5825 = vmatmul.mubr.bf16.gmra.mrb[0].mxu0 %v5783
    %v5826 = vpop.f32.mrb[0].mxu0
    %v5827 = vadd.f32 0.0, %v5826
    %v5828 = vpop.f32.mrb[0].mxu0
    %v5829 = vpop.f32.mrb[0].mxu0
    %v5830 = vadd.f32 0.0, %v5829
    %v5831 = vpop.f32.mrb[0].mxu0
    %5832 = vmatprep.mubr.bf16.mxu0 0
    %5833 = vmatmul.mubr.bf16.gmra.mrb[0].mxu0 %v5785
    %v5834 = vpop.f32.mrb[0].mxu0
    %v5835 = vadd.f32 0.0, %v5834
    %v5836 = vpop.f32.mrb[0].mxu0
    %v5837 = vpop.f32.mrb[0].mxu0
    %v5838 = vadd.f32 0.0, %v5837
    %v5839 = vpop.f32.mrb[0].mxu0
    %5840 = vmatprep.mubr.bf16.mxu0 0
    %5841 = vmatmul.mubr.bf16.gmra.mrb[0].mxu0 %v5787
    %v5842 = vpop.f32.mrb[0].mxu0
    %v5843 = vadd.f32 0.0, %v5842
    %v5844 = vpop.f32.mrb[0].mxu0
    %v5845 = vpop.f32.mrb[0].mxu0
    %v5846 = vadd.f32 0.0, %v5845
    %v5847 = vpop.f32.mrb[0].mxu0
    %5848 = vmatprep.mubr.bf16.mxu0 0
    %5849 = vmatmul.mubr.bf16.gmra.mrb[0].mxu0 %v5790
    %v5850 = vpop.f32.mrb[0].mxu0
    %v5851 = vadd.f32 0.0, %v5850
    %v5852 = vpop.f32.mrb[0].mxu0
    %v5853 = vpop.f32.mrb[0].mxu0
    %v5854 = vadd.f32 0.0, %v5853
    %v5855 = vpop.f32.mrb[0].mxu0
    %5856 = vdwg.mxu0
    %v5857 = vadd.f32 %v5757, %v5827
    %v5858 = vadd.f32 %v5758, %v5830
    %v5859 = vadd.f32 %v5759, %v5835
    %v5860 = vadd.f32 %v5760, %v5838
    %v5861 = vadd.f32 %v5761, %v5843
    %v5862 = vadd.f32 %v5762, %v5846
    %v5863 = vadd.f32 %v5763, %v5851
    %v5864 = vadd.f32 %v5764, %v5854
    %v5865 = vld [vmem:[#allocation3 + $0x20] sm:$0xff]
    %s5866 = scalar_lea.vmem [#allocation4], 400
    %v5867 = vld [vmem:[%s5866] sm:$0xf]
    %v5868 = vld [vmem:[%s5866 + $0x4] sm:$0xf]
    %v5869 = vld [vmem:[%s5866 + $0x8] sm:$0xf]
    %v5870 = vld [vmem:[%s5866 + $0xc] sm:$0xf]
    %v5871 = vrot.slane %v5522, 1
    %v5872 = vor.u32 %v5519, %v5871
    %v5873 = vrot.slane %v5531, 1
    %v5874 = vsel %vm102, %v5872, %v5873
    %v5875 = vor.u32 %v5528, %v5873
    %v5876 = vrot.slane %v5540, 1
    %v5877 = vsel %vm102, %v5875, %v5876
    %v5878 = vor.u32 %v5537, %v5876
    %v5880 = vshll.u32 %v5865, 16
    %v5882 = vrot.slane %v5880, 1
    %v5883 = vsel %vm102, %v5878, %v5882
    %v5884 = vshrl.u32 %v5865, 16
    %v5886 = vor.u32 %v5884, %v5882
    %v5891 = vunpack.c.l.b16 %v5867
    %v5892 = vunpack.c.l.b16 %v5868
    %v5893 = vunpack.c.l.b16 %v5869
    %v5894 = vunpack.c.l.b16 %v5870
    %v5895 = vpack.c.b16 %v5892, %v5891
    %v5896 = vpack.c.b16 %v5894, %v5893
    %v5900 = vsel %vm35, %v5874, 0
    %v5903 = vsel %vm35, %v5877, 0
    %v5906 = vsel %vm35, %v5883, 0
    %v5909 = vsel %vm35, %v5886, 0
    %5911 = vmatprep.subr.bf16.mxu0 0
    %5912 = vmatpush1.bf16.msra.mxu0 %v5895
    %5913 = vmatprep.subr.bf16.mxu0 0
    %5914 = vmatpush1.bf16.msra.mxu0 %v5896
    %5915 = vmatprep.subr.bf16.mxu0 0
    %5916 = vmatpush1.bf16.msra.mxu0 0
    %5917 = vmatprep.subr.bf16.mxu0 0
    %5918 = vmatpush1.bf16.msra.mxu0 0
    %5919 = vmatprep.subr.bf16.mxu0 0
    %5920 = vmatpush1.bf16.msra.mxu0 0
    %5921 = vmatprep.subr.bf16.mxu0 0
    %5922 = vmatpush1.bf16.msra.mxu0 0
    %5923 = vmatprep.subr.bf16.mxu0 0
    %5924 = vmatpush1.bf16.msra.mxu0 0
    %5925 = vmatprep.subr.bf16.mxu0 0
    %5926 = vmatpush1.bf16.msra.mxu0 0
    %5927 = vmatprep.subr.bf16.mxu0 0
    %5928 = vmatpush1.bf16.msra.mxu0 0
    %5929 = vmatprep.subr.bf16.mxu0 0
    %5930 = vmatpush1.bf16.msra.mxu0 0
    %5931 = vmatprep.subr.bf16.mxu0 0
    %5932 = vmatpush1.bf16.msra.mxu0 0
    %5933 = vmatprep.subr.bf16.mxu0 0
    %5934 = vmatpush1.bf16.msra.mxu0 0
    %5935 = vmatprep.subr.bf16.mxu0 0
    %5936 = vmatpush1.bf16.msra.mxu0 0
    %5937 = vmatprep.subr.bf16.mxu0 0
    %5938 = vmatpush1.bf16.msra.mxu0 0
    %5939 = vmatprep.subr.bf16.mxu0 0
    %5940 = vmatpush1.bf16.msra.mxu0 0
    %5941 = vmatprep.subr.bf16.mxu0 0
    %5942 = vmatpush1.bf16.msra.mxu0 0
    %5943 = vmatprep.mubr.bf16.mxu0 0
    %5944 = vmatmul.mubr.bf16.gmra.mrb[0].mxu0 %v5900
    %v5945 = vpop.f32.mrb[0].mxu0
    %v5946 = vadd.f32 0.0, %v5945
    %v5947 = vpop.f32.mrb[0].mxu0
    %v5948 = vpop.f32.mrb[0].mxu0
    %v5949 = vadd.f32 0.0, %v5948
    %v5950 = vpop.f32.mrb[0].mxu0
    %5951 = vmatprep.mubr.bf16.mxu0 0
    %5952 = vmatmul.mubr.bf16.gmra.mrb[0].mxu0 %v5903
    %v5953 = vpop.f32.mrb[0].mxu0
    %v5954 = vadd.f32 0.0, %v5953
    %v5955 = vpop.f32.mrb[0].mxu0
    %v5956 = vpop.f32.mrb[0].mxu0
    %v5957 = vadd.f32 0.0, %v5956
    %v5958 = vpop.f32.mrb[0].mxu0
    %5959 = vmatprep.mubr.bf16.mxu0 0
    %5960 = vmatmul.mubr.bf16.gmra.mrb[0].mxu0 %v5906
    %v5961 = vpop.f32.mrb[0].mxu0
    %v5962 = vadd.f32 0.0, %v5961
    %v5963 = vpop.f32.mrb[0].mxu0
    %v5964 = vpop.f32.mrb[0].mxu0
    %v5965 = vadd.f32 0.0, %v5964
    %v5966 = vpop.f32.mrb[0].mxu0
    %5967 = vmatprep.mubr.bf16.mxu0 0
    %5968 = vmatmul.mubr.bf16.gmra.mrb[0].mxu0 %v5909
    %v5969 = vpop.f32.mrb[0].mxu0
    %v5970 = vadd.f32 0.0, %v5969
    %v5971 = vpop.f32.mrb[0].mxu0
    %v5972 = vpop.f32.mrb[0].mxu0
    %v5973 = vadd.f32 0.0, %v5972
    %v5974 = vpop.f32.mrb[0].mxu0
    %5975 = vdwg.mxu0
    %v5976 = vadd.f32 %v5857, %v5946
    %v5977 = vadd.f32 %v5858, %v5949
    %v5978 = vadd.f32 %v5859, %v5954
    %v5979 = vadd.f32 %v5860, %v5957
    %v5980 = vadd.f32 %v5861, %v5962
    %v5981 = vadd.f32 %v5862, %v5965
    %v5982 = vadd.f32 %v5863, %v5970
    %v5983 = vadd.f32 %v5864, %v5973
    %v5984 = vld [vmem:[#allocation3 + $0x8] sm:$0xfe]
    %s5985 = scalar_lea.vmem [#allocation4], 416
    %v5986 = vld [vmem:[%s5985] sm:$0xf]
    %v5987 = vld [vmem:[%s5985 + $0x4] sm:$0xf]
    %v5988 = vld [vmem:[%s5985 + $0x8] sm:$0xf]
    %v5989 = vld [vmem:[%s5985 + $0xc] sm:$0xf]
    %v5992 = vrot.slane %v5984, 1
    %v5993 = vrot.slane %v5385, 1
    %v5994 = vsel %vm321, %v5992, %v5993
    %v5995 = vrot.slane %v5386, 1
    %v5996 = vsel %vm321, %v5993, %v5995
    %v5997 = vrot.slane %v5865, 1
    %v5998 = vsel %vm321, %v5995, %v5997
    %v6003 = vunpack.c.l.b16 %v5986
    %v6004 = vunpack.c.l.b16 %v5987
    %v6005 = vunpack.c.l.b16 %v5988
    %v6006 = vunpack.c.l.b16 %v5989
    %v6007 = vpack.c.b16 %v6004, %v6003
    %v6008 = vpack.c.b16 %v6006, %v6005
    %v6012 = vsel %vm35, %v5994, 0
    %v6015 = vsel %vm35, %v5996, 0
    %v6018 = vsel %vm35, %v5998, 0
    %v6021 = vsel %vm35, %v5997, 0
    %6023 = vmatprep.subr.bf16.mxu0 0
    %6024 = vmatpush1.bf16.msra.mxu0 %v6007
    %6025 = vmatprep.subr.bf16.mxu0 0
    %6026 = vmatpush1.bf16.msra.mxu0 %v6008
    %6027 = vmatprep.subr.bf16.mxu0 0
    %6028 = vmatpush1.bf16.msra.mxu0 0
    %6029 = vmatprep.subr.bf16.mxu0 0
    %6030 = vmatpush1.bf16.msra.mxu0 0
    %6031 = vmatprep.subr.bf16.mxu0 0
    %6032 = vmatpush1.bf16.msra.mxu0 0
    %6033 = vmatprep.subr.bf16.mxu0 0
    %6034 = vmatpush1.bf16.msra.mxu0 0
    %6035 = vmatprep.subr.bf16.mxu0 0
    %6036 = vmatpush1.bf16.msra.mxu0 0
    %6037 = vmatprep.subr.bf16.mxu0 0
    %6038 = vmatpush1.bf16.msra.mxu0 0
    %6039 = vmatprep.subr.bf16.mxu0 0
    %6040 = vmatpush1.bf16.msra.mxu0 0
    %6041 = vmatprep.subr.bf16.mxu0 0
    %6042 = vmatpush1.bf16.msra.mxu0 0
    %6043 = vmatprep.subr.bf16.mxu0 0
    %6044 = vmatpush1.bf16.msra.mxu0 0
    %6045 = vmatprep.subr.bf16.mxu0 0
    %6046 = vmatpush1.bf16.msra.mxu0 0
    %6047 = vmatprep.subr.bf16.mxu0 0
    %6048 = vmatpush1.bf16.msra.mxu0 0
    %6049 = vmatprep.subr.bf16.mxu0 0
    %6050 = vmatpush1.bf16.msra.mxu0 0
    %6051 = vmatprep.subr.bf16.mxu0 0
    %6052 = vmatpush1.bf16.msra.mxu0 0
    %6053 = vmatprep.subr.bf16.mxu0 0
    %6054 = vmatpush1.bf16.msra.mxu0 0
    %6055 = vmatprep.mubr.bf16.mxu0 0
    %6056 = vmatmul.mubr.bf16.gmra.mrb[0].mxu0 %v6012
    %v6057 = vpop.f32.mrb[0].mxu0
    %v6058 = vadd.f32 0.0, %v6057
    %v6059 = vpop.f32.mrb[0].mxu0
    %v6060 = vpop.f32.mrb[0].mxu0
    %v6061 = vadd.f32 0.0, %v6060
    %v6062 = vpop.f32.mrb[0].mxu0
    %6063 = vmatprep.mubr.bf16.mxu0 0
    %6064 = vmatmul.mubr.bf16.gmra.mrb[0].mxu0 %v6015
    %v6065 = vpop.f32.mrb[0].mxu0
    %v6066 = vadd.f32 0.0, %v6065
    %v6067 = vpop.f32.mrb[0].mxu0
    %v6068 = vpop.f32.mrb[0].mxu0
    %v6069 = vadd.f32 0.0, %v6068
    %v6070 = vpop.f32.mrb[0].mxu0
    %6071 = vmatprep.mubr.bf16.mxu0 0
    %6072 = vmatmul.mubr.bf16.gmra.mrb[0].mxu0 %v6018
    %v6073 = vpop.f32.mrb[0].mxu0
    %v6074 = vadd.f32 0.0, %v6073
    %v6075 = vpop.f32.mrb[0].mxu0
    %v6076 = vpop.f32.mrb[0].mxu0
    %v6077 = vadd.f32 0.0, %v6076
    %v6078 = vpop.f32.mrb[0].mxu0
    %6079 = vmatprep.mubr.bf16.mxu0 0
    %6080 = vmatmul.mubr.bf16.gmra.mrb[0].mxu0 %v6021
    %v6081 = vpop.f32.mrb[0].mxu0
    %v6082 = vadd.f32 0.0, %v6081
    %v6083 = vpop.f32.mrb[0].mxu0
    %v6084 = vpop.f32.mrb[0].mxu0
    %v6085 = vadd.f32 0.0, %v6084
    %v6086 = vpop.f32.mrb[0].mxu0
    %6087 = vdwg.mxu0
    %v6088 = vadd.f32 %v5976, %v6058
    %v6089 = vadd.f32 %v5977, %v6061
    %v6090 = vadd.f32 %v5978, %v6066
    %v6091 = vadd.f32 %v5979, %v6069
    %v6092 = vadd.f32 %v5980, %v6074
    %v6093 = vadd.f32 %v5981, %v6077
    %v6094 = vadd.f32 %v5982, %v6082
    %v6095 = vadd.f32 %v5983, %v6085
    %v6096 = vld [vmem:[%s5038] sm:$0xff]
    %v6097 = vld [vmem:[%s5038 + $0x8] sm:$0xff]
    %v6098 = vld [vmem:[%s5038 + $0x10] sm:$0xff]
    %v6099 = vld [vmem:[%s5038 + $0x18] sm:$0x7f]
    %v6100 = vld [vmem:[%s5038 + $0x18] sm:$0xff]
    %v6102 = vshrl.u32 %v6096, 16
    %v6104 = vshll.u32 %v6096, 16
    %v6106 = vrot.slane %v6104, 1
    %v6107 = vor.u32 %v6102, %v6106
    %v6109 = vshll.u32 %v6097, 16
    %v6111 = vrot.slane %v6109, 1
    %v6112 = vsel %vm102, %v6107, %v6111
    %v6113 = vshrl.u32 %v6097, 16
    %v6115 = vor.u32 %v6113, %v6111
    %v6117 = vshll.u32 %v6098, 16
    %v6119 = vrot.slane %v6117, 1
    %v6120 = vsel %vm102, %v6115, %v6119
    %v6121 = vshrl.u32 %v6098, 16
    %v6123 = vor.u32 %v6121, %v6119
    %v6125 = vshll.u32 %v6100, 16
    %v6127 = vrot.slane %v6125, 1
    %v6128 = vsel %vm102, %v6123, %v6127
    %v6129 = vshrl.u32 %v6100, 16
    %v6131 = vor.u32 %v6129, %v6127
    %v6133 = vsel %vm35, %v6112, 0
    %v6136 = vsel %vm35, %v6120, 0
    %v6139 = vsel %vm35, %v6128, 0
    %v6142 = vsel %vm35, %v6131, 0
    %6144 = vmatprep.subr.bf16.mxu0 0
    %6145 = vmatpush1.bf16.msra.mxu0 %v5102
    %6146 = vmatprep.subr.bf16.mxu0 0
    %6147 = vmatpush1.bf16.msra.mxu0 %v5103
    %6148 = vmatprep.subr.bf16.mxu0 0
    %6149 = vmatpush1.bf16.msra.mxu0 0
    %6150 = vmatprep.subr.bf16.mxu0 0
    %6151 = vmatpush1.bf16.msra.mxu0 0
    %6152 = vmatprep.subr.bf16.mxu0 0
    %6153 = vmatpush1.bf16.msra.mxu0 0
    %6154 = vmatprep.subr.bf16.mxu0 0
    %6155 = vmatpush1.bf16.msra.mxu0 0
    %6156 = vmatprep.subr.bf16.mxu0 0
    %6157 = vmatpush1.bf16.msra.mxu0 0
    %6158 = vmatprep.subr.bf16.mxu0 0
    %6159 = vmatpush1.bf16.msra.mxu0 0
    %6160 = vmatprep.subr.bf16.mxu0 0
    %6161 = vmatpush1.bf16.msra.mxu0 0
    %6162 = vmatprep.subr.bf16.mxu0 0
    %6163 = vmatpush1.bf16.msra.mxu0 0
    %6164 = vmatprep.subr.bf16.mxu0 0
    %6165 = vmatpush1.bf16.msra.mxu0 0
    %6166 = vmatprep.subr.bf16.mxu0 0
    %6167 = vmatpush1.bf16.msra.mxu0 0
    %6168 = vmatprep.subr.bf16.mxu0 0
    %6169 = vmatpush1.bf16.msra.mxu0 0
    %6170 = vmatprep.subr.bf16.mxu0 0
    %6171 = vmatpush1.bf16.msra.mxu0 0
    %6172 = vmatprep.subr.bf16.mxu0 0
    %6173 = vmatpush1.bf16.msra.mxu0 0
    %6174 = vmatprep.subr.bf16.mxu0 0
    %6175 = vmatpush1.bf16.msra.mxu0 0
    %6176 = vmatprep.mubr.bf16.mxu0 0
    %6177 = vmatmul.mubr.bf16.gmra.mrb[0].mxu0 %v6133
    %v6178 = vpop.f32.mrb[0].mxu0
    %v6179 = vadd.f32 0.0, %v6178
    %v6180 = vpop.f32.mrb[0].mxu0
    %v6181 = vpop.f32.mrb[0].mxu0
    %v6182 = vadd.f32 0.0, %v6181
    %v6183 = vpop.f32.mrb[0].mxu0
    %6184 = vmatprep.mubr.bf16.mxu0 0
    %6185 = vmatmul.mubr.bf16.gmra.mrb[0].mxu0 %v6136
    %v6186 = vpop.f32.mrb[0].mxu0
    %v6187 = vadd.f32 0.0, %v6186
    %v6188 = vpop.f32.mrb[0].mxu0
    %v6189 = vpop.f32.mrb[0].mxu0
    %v6190 = vadd.f32 0.0, %v6189
    %v6191 = vpop.f32.mrb[0].mxu0
    %6192 = vmatprep.mubr.bf16.mxu0 0
    %6193 = vmatmul.mubr.bf16.gmra.mrb[0].mxu0 %v6139
    %v6194 = vpop.f32.mrb[0].mxu0
    %v6195 = vadd.f32 0.0, %v6194
    %v6196 = vpop.f32.mrb[0].mxu0
    %v6197 = vpop.f32.mrb[0].mxu0
    %v6198 = vadd.f32 0.0, %v6197
    %v6199 = vpop.f32.mrb[0].mxu0
    %6200 = vmatprep.mubr.bf16.mxu0 0
    %6201 = vmatmul.mubr.bf16.gmra.mrb[0].mxu0 %v6142
    %v6202 = vpop.f32.mrb[0].mxu0
    %v6203 = vadd.f32 0.0, %v6202
    %v6204 = vpop.f32.mrb[0].mxu0
    %v6205 = vpop.f32.mrb[0].mxu0
    %v6206 = vadd.f32 0.0, %v6205
    %v6207 = vpop.f32.mrb[0].mxu0
    %6208 = vdwg.mxu0
    %v6209 = vsel %vm35, %v6096, 0
    %v6211 = vsel %vm35, %v6097, 0
    %v6213 = vsel %vm35, %v6098, 0
    %v6216 = vsel %vm35, %v6099, 0
    %6218 = vmatprep.subr.bf16.mxu0 0
    %6219 = vmatpush1.bf16.msra.mxu0 %v5191
    %6220 = vmatprep.subr.bf16.mxu0 0
    %6221 = vmatpush1.bf16.msra.mxu0 %v5192
    %6222 = vmatprep.subr.bf16.mxu0 0
    %6223 = vmatpush1.bf16.msra.mxu0 0
    %6224 = vmatprep.subr.bf16.mxu0 0
    %6225 = vmatpush1.bf16.msra.mxu0 0
    %6226 = vmatprep.subr.bf16.mxu0 0
    %6227 = vmatpush1.bf16.msra.mxu0 0
    %6228 = vmatprep.subr.bf16.mxu0 0
    %6229 = vmatpush1.bf16.msra.mxu0 0
    %6230 = vmatprep.subr.bf16.mxu0 0
    %6231 = vmatpush1.bf16.msra.mxu0 0
    %6232 = vmatprep.subr.bf16.mxu0 0
    %6233 = vmatpush1.bf16.msra.mxu0 0
    %6234 = vmatprep.subr.bf16.mxu0 0
    %6235 = vmatpush1.bf16.msra.mxu0 0
    %6236 = vmatprep.subr.bf16.mxu0 0
    %6237 = vmatpush1.bf16.msra.mxu0 0
    %6238 = vmatprep.subr.bf16.mxu0 0
    %6239 = vmatpush1.bf16.msra.mxu0 0
    %6240 = vmatprep.subr.bf16.mxu0 0
    %6241 = vmatpush1.bf16.msra.mxu0 0
    %6242 = vmatprep.subr.bf16.mxu0 0
    %6243 = vmatpush1.bf16.msra.mxu0 0
    %6244 = vmatprep.subr.bf16.mxu0 0
    %6245 = vmatpush1.bf16.msra.mxu0 0
    %6246 = vmatprep.subr.bf16.mxu0 0
    %6247 = vmatpush1.bf16.msra.mxu0 0
    %6248 = vmatprep.subr.bf16.mxu0 0
    %6249 = vmatpush1.bf16.msra.mxu0 0
    %6250 = vmatprep.mubr.bf16.mxu0 0
    %6251 = vmatmul.mubr.bf16.gmra.mrb[0].mxu0 %v6209
    %v6252 = vpop.f32.mrb[0].mxu0
    %v6253 = vadd.f32 %v6179, %v6252
    %v6254 = vpop.f32.mrb[0].mxu0
    %v6255 = vpop.f32.mrb[0].mxu0
    %v6256 = vadd.f32 %v6182, %v6255
    %v6257 = vpop.f32.mrb[0].mxu0
    %6258 = vmatprep.mubr.bf16.mxu0 0
    %6259 = vmatmul.mubr.bf16.gmra.mrb[0].mxu0 %v6211
    %v6260 = vpop.f32.mrb[0].mxu0
    %v6261 = vadd.f32 %v6187, %v6260
    %v6262 = vpop.f32.mrb[0].mxu0
    %v6263 = vpop.f32.mrb[0].mxu0
    %v6264 = vadd.f32 %v6190, %v6263
    %v6265 = vpop.f32.mrb[0].mxu0
    %6266 = vmatprep.mubr.bf16.mxu0 0
    %6267 = vmatmul.mubr.bf16.gmra.mrb[0].mxu0 %v6213
    %v6268 = vpop.f32.mrb[0].mxu0
    %v6269 = vadd.f32 %v6195, %v6268
    %v6270 = vpop.f32.mrb[0].mxu0
    %v6271 = vpop.f32.mrb[0].mxu0
    %v6272 = vadd.f32 %v6198, %v6271
    %v6273 = vpop.f32.mrb[0].mxu0
    %6274 = vmatprep.mubr.bf16.mxu0 0
    %6275 = vmatmul.mubr.bf16.gmra.mrb[0].mxu0 %v6216
    %v6276 = vpop.f32.mrb[0].mxu0
    %v6277 = vadd.f32 %v6203, %v6276
    %v6278 = vpop.f32.mrb[0].mxu0
    %v6279 = vpop.f32.mrb[0].mxu0
    %v6280 = vadd.f32 %v6206, %v6279
    %v6281 = vpop.f32.mrb[0].mxu0
    %6282 = vdwg.mxu0
    %v6283 = vld [vmem:[%s5038] sm:$0xfe]
    %v6288 = vrot.slane %v6283, 1
    %v6289 = vrot.slane %v6097, 1
    %v6290 = vsel %vm321, %v6288, %v6289
    %v6291 = vrot.slane %v6098, 1
    %v6292 = vsel %vm321, %v6289, %v6291
    %v6293 = vrot.slane %v6100, 1
    %v6294 = vsel %vm321, %v6291, %v6293
    %v6296 = vsel %vm35, %v6290, 0
    %v6299 = vsel %vm35, %v6292, 0
    %v6302 = vsel %vm35, %v6294, 0
    %v6305 = vsel %vm35, %v6293, 0
    %6307 = vmatprep.subr.bf16.mxu0 0
    %6308 = vmatpush1.bf16.msra.mxu0 %v5294
    %6309 = vmatprep.subr.bf16.mxu0 0
    %6310 = vmatpush1.bf16.msra.mxu0 %v5295
    %6311 = vmatprep.subr.bf16.mxu0 0
    %6312 = vmatpush1.bf16.msra.mxu0 0
    %6313 = vmatprep.subr.bf16.mxu0 0
    %6314 = vmatpush1.bf16.msra.mxu0 0
    %6315 = vmatprep.subr.bf16.mxu0 0
    %6316 = vmatpush1.bf16.msra.mxu0 0
    %6317 = vmatprep.subr.bf16.mxu0 0
    %6318 = vmatpush1.bf16.msra.mxu0 0
    %6319 = vmatprep.subr.bf16.mxu0 0
    %6320 = vmatpush1.bf16.msra.mxu0 0
    %6321 = vmatprep.subr.bf16.mxu0 0
    %6322 = vmatpush1.bf16.msra.mxu0 0
    %6323 = vmatprep.subr.bf16.mxu0 0
    %6324 = vmatpush1.bf16.msra.mxu0 0
    %6325 = vmatprep.subr.bf16.mxu0 0
    %6326 = vmatpush1.bf16.msra.mxu0 0
    %6327 = vmatprep.subr.bf16.mxu0 0
    %6328 = vmatpush1.bf16.msra.mxu0 0
    %6329 = vmatprep.subr.bf16.mxu0 0
    %6330 = vmatpush1.bf16.msra.mxu0 0
    %6331 = vmatprep.subr.bf16.mxu0 0
    %6332 = vmatpush1.bf16.msra.mxu0 0
    %6333 = vmatprep.subr.bf16.mxu0 0
    %6334 = vmatpush1.bf16.msra.mxu0 0
    %6335 = vmatprep.subr.bf16.mxu0 0
    %6336 = vmatpush1.bf16.msra.mxu0 0
    %6337 = vmatprep.subr.bf16.mxu0 0
    %6338 = vmatpush1.bf16.msra.mxu0 0
    %6339 = vmatprep.mubr.bf16.mxu0 0
    %6340 = vmatmul.mubr.bf16.gmra.mrb[0].mxu0 %v6296
    %v6341 = vpop.f32.mrb[0].mxu0
    %v6342 = vadd.f32 0.0, %v6341
    %v6343 = vpop.f32.mrb[0].mxu0
    %v6344 = vpop.f32.mrb[0].mxu0
    %v6345 = vadd.f32 0.0, %v6344
    %v6346 = vpop.f32.mrb[0].mxu0
    %6347 = vmatprep.mubr.bf16.mxu0 0
    %6348 = vmatmul.mubr.bf16.gmra.mrb[0].mxu0 %v6299
    %v6349 = vpop.f32.mrb[0].mxu0
    %v6350 = vadd.f32 0.0, %v6349
    %v6351 = vpop.f32.mrb[0].mxu0
    %v6352 = vpop.f32.mrb[0].mxu0
    %v6353 = vadd.f32 0.0, %v6352
    %v6354 = vpop.f32.mrb[0].mxu0
    %6355 = vmatprep.mubr.bf16.mxu0 0
    %6356 = vmatmul.mubr.bf16.gmra.mrb[0].mxu0 %v6302
    %v6357 = vpop.f32.mrb[0].mxu0
    %v6358 = vadd.f32 0.0, %v6357
    %v6359 = vpop.f32.mrb[0].mxu0
    %v6360 = vpop.f32.mrb[0].mxu0
    %v6361 = vadd.f32 0.0, %v6360
    %v6362 = vpop.f32.mrb[0].mxu0
    %6363 = vmatprep.mubr.bf16.mxu0 0
    %6364 = vmatmul.mubr.bf16.gmra.mrb[0].mxu0 %v6305
    %v6365 = vpop.f32.mrb[0].mxu0
    %v6366 = vadd.f32 0.0, %v6365
    %v6367 = vpop.f32.mrb[0].mxu0
    %v6368 = vpop.f32.mrb[0].mxu0
    %v6369 = vadd.f32 0.0, %v6368
    %v6370 = vpop.f32.mrb[0].mxu0
    %6371 = vdwg.mxu0
    %v6372 = vadd.f32 %v6253, %v6342
    %v6373 = vadd.f32 %v6256, %v6345
    %v6374 = vadd.f32 %v6261, %v6350
    %v6375 = vadd.f32 %v6264, %v6353
    %v6376 = vadd.f32 %v6269, %v6358
    %v6377 = vadd.f32 %v6272, %v6361
    %v6378 = vadd.f32 %v6277, %v6366
    %v6379 = vadd.f32 %v6280, %v6369
    %v6380 = vld [vmem:[%s5038] sm:$0xf0]
    %v6381 = vld [vmem:[%s5038 + $0x8] sm:$0xff]
    %v6382 = vld [vmem:[%s5038 + $0x10] sm:$0xff]
    %v6383 = vld [vmem:[%s5038 + $0x18] sm:$0xff]
    %v6384 = vld [vmem:[%s5038 + $0x20] sm:$0x7]
    %v6390 = vrot.slane %v6380, 4
    %v6391 = vrot.slane %v6381, 4
    %v6392 = vsel %vm2986, %v6390, %v6391
    %v6393 = vrot.slane %v6382, 4
    %v6394 = vsel %vm2986, %v6391, %v6393
    %v6395 = vrot.slane %v6383, 4
    %v6396 = vsel %vm2986, %v6393, %v6395
    %v6397 = vrot.slane %v6384, 4
    %v6398 = vsel %vm2986, %v6395, %v6397
    %v6400 = vsel %vm35, %v6392, 0
    %v6403 = vsel %vm35, %v6394, 0
    %v6406 = vsel %vm35, %v6396, 0
    %v6409 = vsel %vm35, %v6398, 0
    %6411 = vmatprep.subr.bf16.mxu0 0
    %6412 = vmatpush1.bf16.msra.mxu0 %v5415
    %6413 = vmatprep.subr.bf16.mxu0 0
    %6414 = vmatpush1.bf16.msra.mxu0 %v5416
    %6415 = vmatprep.subr.bf16.mxu0 0
    %6416 = vmatpush1.bf16.msra.mxu0 0
    %6417 = vmatprep.subr.bf16.mxu0 0
    %6418 = vmatpush1.bf16.msra.mxu0 0
    %6419 = vmatprep.subr.bf16.mxu0 0
    %6420 = vmatpush1.bf16.msra.mxu0 0
    %6421 = vmatprep.subr.bf16.mxu0 0
    %6422 = vmatpush1.bf16.msra.mxu0 0
    %6423 = vmatprep.subr.bf16.mxu0 0
    %6424 = vmatpush1.bf16.msra.mxu0 0
    %6425 = vmatprep.subr.bf16.mxu0 0
    %6426 = vmatpush1.bf16.msra.mxu0 0
    %6427 = vmatprep.subr.bf16.mxu0 0
    %6428 = vmatpush1.bf16.msra.mxu0 0
    %6429 = vmatprep.subr.bf16.mxu0 0
    %6430 = vmatpush1.bf16.msra.mxu0 0
    %6431 = vmatprep.subr.bf16.mxu0 0
    %6432 = vmatpush1.bf16.msra.mxu0 0
    %6433 = vmatprep.subr.bf16.mxu0 0
    %6434 = vmatpush1.bf16.msra.mxu0 0
    %6435 = vmatprep.subr.bf16.mxu0 0
    %6436 = vmatpush1.bf16.msra.mxu0 0
    %6437 = vmatprep.subr.bf16.mxu0 0
    %6438 = vmatpush1.bf16.msra.mxu0 0
    %6439 = vmatprep.subr.bf16.mxu0 0
    %6440 = vmatpush1.bf16.msra.mxu0 0
    %6441 = vmatprep.subr.bf16.mxu0 0
    %6442 = vmatpush1.bf16.msra.mxu0 0
    %6443 = vmatprep.mubr.bf16.mxu0 0
    %6444 = vmatmul.mubr.bf16.gmra.mrb[0].mxu0 %v6400
    %v6445 = vpop.f32.mrb[0].mxu0
    %v6446 = vadd.f32 0.0, %v6445
    %v6447 = vpop.f32.mrb[0].mxu0
    %v6448 = vpop.f32.mrb[0].mxu0
    %v6449 = vadd.f32 0.0, %v6448
    %v6450 = vpop.f32.mrb[0].mxu0
    %6451 = vmatprep.mubr.bf16.mxu0 0
    %6452 = vmatmul.mubr.bf16.gmra.mrb[0].mxu0 %v6403
    %v6453 = vpop.f32.mrb[0].mxu0
    %v6454 = vadd.f32 0.0, %v6453
    %v6455 = vpop.f32.mrb[0].mxu0
    %v6456 = vpop.f32.mrb[0].mxu0
    %v6457 = vadd.f32 0.0, %v6456
    %v6458 = vpop.f32.mrb[0].mxu0
    %6459 = vmatprep.mubr.bf16.mxu0 0
    %6460 = vmatmul.mubr.bf16.gmra.mrb[0].mxu0 %v6406
    %v6461 = vpop.f32.mrb[0].mxu0
    %v6462 = vadd.f32 0.0, %v6461
    %v6463 = vpop.f32.mrb[0].mxu0
    %v6464 = vpop.f32.mrb[0].mxu0
    %v6465 = vadd.f32 0.0, %v6464
    %v6466 = vpop.f32.mrb[0].mxu0
    %6467 = vmatprep.mubr.bf16.mxu0 0
    %6468 = vmatmul.mubr.bf16.gmra.mrb[0].mxu0 %v6409
    %v6469 = vpop.f32.mrb[0].mxu0
    %v6470 = vadd.f32 0.0, %v6469
    %v6471 = vpop.f32.mrb[0].mxu0
    %v6472 = vpop.f32.mrb[0].mxu0
    %v6473 = vadd.f32 0.0, %v6472
    %v6474 = vpop.f32.mrb[0].mxu0
    %6475 = vdwg.mxu0
    %v6476 = vadd.f32 %v6372, %v6446
    %v6477 = vadd.f32 %v6373, %v6449
    %v6478 = vadd.f32 %v6374, %v6454
    %v6479 = vadd.f32 %v6375, %v6457
    %v6480 = vadd.f32 %v6376, %v6462
    %v6481 = vadd.f32 %v6377, %v6465
    %v6482 = vadd.f32 %v6378, %v6470
    %v6483 = vadd.f32 %v6379, %v6473
    %v6484 = vld [vmem:[%s5038 + $0x20] sm:$0xf]
    %v6486 = vshrl.u32 %v6380, 16
    %v6488 = vrot.slane %v6486, 4
    %v6489 = vshll.u32 %v6380, 16
    %v6491 = vrot.slane %v6489, 5
    %v6492 = vor.u32 %v6488, %v6491
    %v6494 = vshrl.u32 %v6381, 16
    %v6496 = vrot.slane %v6494, 4
    %v6497 = vshll.u32 %v6381, 16
    %v6499 = vrot.slane %v6497, 5
    %v6500 = vor.u32 %v6496, %v6499
    %v6501 = vsel %vm2490, %v6492, %v6500
    %v6503 = vshrl.u32 %v6382, 16
    %v6505 = vrot.slane %v6503, 4
    %v6506 = vshll.u32 %v6382, 16
    %v6508 = vrot.slane %v6506, 5
    %v6509 = vor.u32 %v6505, %v6508
    %v6510 = vsel %vm2490, %v6500, %v6509
    %v6512 = vshrl.u32 %v6383, 16
    %v6514 = vrot.slane %v6512, 4
    %v6515 = vshll.u32 %v6383, 16
    %v6517 = vrot.slane %v6515, 5
    %v6518 = vor.u32 %v6514, %v6517
    %v6519 = vsel %vm2490, %v6509, %v6518
    %v6521 = vshrl.u32 %v6484, 16
    %v6523 = vrot.slane %v6521, 4
    %v6524 = vshll.u32 %v6484, 16
    %v6526 = vrot.slane %v6524, 5
    %v6527 = vor.u32 %v6523, %v6526
    %v6528 = vsel %vm2490, %v6518, %v6527
    %v6530 = vsel %vm35, %v6501, 0
    %v6533 = vsel %vm35, %v6510, 0
    %v6536 = vsel %vm35, %v6519, 0
    %v6539 = vsel %vm35, %v6528, 0
    %6541 = vmatprep.subr.bf16.mxu0 0
    %6542 = vmatpush1.bf16.msra.mxu0 %v5562
    %6543 = vmatprep.subr.bf16.mxu0 0
    %6544 = vmatpush1.bf16.msra.mxu0 %v5563
    %6545 = vmatprep.subr.bf16.mxu0 0
    %6546 = vmatpush1.bf16.msra.mxu0 0
    %6547 = vmatprep.subr.bf16.mxu0 0
    %6548 = vmatpush1.bf16.msra.mxu0 0
    %6549 = vmatprep.subr.bf16.mxu0 0
    %6550 = vmatpush1.bf16.msra.mxu0 0
    %6551 = vmatprep.subr.bf16.mxu0 0
    %6552 = vmatpush1.bf16.msra.mxu0 0
    %6553 = vmatprep.subr.bf16.mxu0 0
    %6554 = vmatpush1.bf16.msra.mxu0 0
    %6555 = vmatprep.subr.bf16.mxu0 0
    %6556 = vmatpush1.bf16.msra.mxu0 0
    %6557 = vmatprep.subr.bf16.mxu0 0
    %6558 = vmatpush1.bf16.msra.mxu0 0
    %6559 = vmatprep.subr.bf16.mxu0 0
    %6560 = vmatpush1.bf16.msra.mxu0 0
    %6561 = vmatprep.subr.bf16.mxu0 0
    %6562 = vmatpush1.bf16.msra.mxu0 0
    %6563 = vmatprep.subr.bf16.mxu0 0
    %6564 = vmatpush1.bf16.msra.mxu0 0
    %6565 = vmatprep.subr.bf16.mxu0 0
    %6566 = vmatpush1.bf16.msra.mxu0 0
    %6567 = vmatprep.subr.bf16.mxu0 0
    %6568 = vmatpush1.bf16.msra.mxu0 0
    %6569 = vmatprep.subr.bf16.mxu0 0
    %6570 = vmatpush1.bf16.msra.mxu0 0
    %6571 = vmatprep.subr.bf16.mxu0 0
    %6572 = vmatpush1.bf16.msra.mxu0 0
    %6573 = vmatprep.mubr.bf16.mxu0 0
    %6574 = vmatmul.mubr.bf16.gmra.mrb[0].mxu0 %v6530
    %v6575 = vpop.f32.mrb[0].mxu0
    %v6576 = vadd.f32 0.0, %v6575
    %v6577 = vpop.f32.mrb[0].mxu0
    %v6578 = vpop.f32.mrb[0].mxu0
    %v6579 = vadd.f32 0.0, %v6578
    %v6580 = vpop.f32.mrb[0].mxu0
    %6581 = vmatprep.mubr.bf16.mxu0 0
    %6582 = vmatmul.mubr.bf16.gmra.mrb[0].mxu0 %v6533
    %v6583 = vpop.f32.mrb[0].mxu0
    %v6584 = vadd.f32 0.0, %v6583
    %v6585 = vpop.f32.mrb[0].mxu0
    %v6586 = vpop.f32.mrb[0].mxu0
    %v6587 = vadd.f32 0.0, %v6586
    %v6588 = vpop.f32.mrb[0].mxu0
    %6589 = vmatprep.mubr.bf16.mxu0 0
    %6590 = vmatmul.mubr.bf16.gmra.mrb[0].mxu0 %v6536
    %v6591 = vpop.f32.mrb[0].mxu0
    %v6592 = vadd.f32 0.0, %v6591
    %v6593 = vpop.f32.mrb[0].mxu0
    %v6594 = vpop.f32.mrb[0].mxu0
    %v6595 = vadd.f32 0.0, %v6594
    %v6596 = vpop.f32.mrb[0].mxu0
    %6597 = vmatprep.mubr.bf16.mxu0 0
    %6598 = vmatmul.mubr.bf16.gmra.mrb[0].mxu0 %v6539
    %v6599 = vpop.f32.mrb[0].mxu0
    %v6600 = vadd.f32 0.0, %v6599
    %v6601 = vpop.f32.mrb[0].mxu0
    %v6602 = vpop.f32.mrb[0].mxu0
    %v6603 = vadd.f32 0.0, %v6602
    %v6604 = vpop.f32.mrb[0].mxu0
    %6605 = vdwg.mxu0
    %v6606 = vadd.f32 %v6476, %v6576
    %v6607 = vadd.f32 %v6477, %v6579
    %v6608 = vadd.f32 %v6478, %v6584
    %v6609 = vadd.f32 %v6479, %v6587
    %v6610 = vadd.f32 %v6480, %v6592
    %v6611 = vadd.f32 %v6481, %v6595
    %v6612 = vadd.f32 %v6482, %v6600
    %v6613 = vadd.f32 %v6483, %v6603
    %v6614 = vld [vmem:[%s5038] sm:$0xe0]
    %v6617 = vrot.slane %v6614, 5
    %v6618 = vrot.slane %v6381, 5
    %v6619 = vsel %vm3248, %v6617, %v6618
    %v6620 = vrot.slane %v6382, 5
    %v6621 = vsel %vm3248, %v6618, %v6620
    %v6622 = vrot.slane %v6383, 5
    %v6623 = vsel %vm3248, %v6620, %v6622
    %v6624 = vrot.slane %v6484, 5
    %v6625 = vsel %vm3248, %v6622, %v6624
    %v6627 = vsel %vm35, %v6619, 0
    %v6630 = vsel %vm35, %v6621, 0
    %v6633 = vsel %vm35, %v6623, 0
    %v6636 = vsel %vm35, %v6625, 0
    %6638 = vmatprep.subr.bf16.mxu0 0
    %6639 = vmatpush1.bf16.msra.mxu0 %v5676
    %6640 = vmatprep.subr.bf16.mxu0 0
    %6641 = vmatpush1.bf16.msra.mxu0 %v5677
    %6642 = vmatprep.subr.bf16.mxu0 0
    %6643 = vmatpush1.bf16.msra.mxu0 0
    %6644 = vmatprep.subr.bf16.mxu0 0
    %6645 = vmatpush1.bf16.msra.mxu0 0
    %6646 = vmatprep.subr.bf16.mxu0 0
    %6647 = vmatpush1.bf16.msra.mxu0 0
    %6648 = vmatprep.subr.bf16.mxu0 0
    %6649 = vmatpush1.bf16.msra.mxu0 0
    %6650 = vmatprep.subr.bf16.mxu0 0
    %6651 = vmatpush1.bf16.msra.mxu0 0
    %6652 = vmatprep.subr.bf16.mxu0 0
    %6653 = vmatpush1.bf16.msra.mxu0 0
    %6654 = vmatprep.subr.bf16.mxu0 0
    %6655 = vmatpush1.bf16.msra.mxu0 0
    %6656 = vmatprep.subr.bf16.mxu0 0
    %6657 = vmatpush1.bf16.msra.mxu0 0
    %6658 = vmatprep.subr.bf16.mxu0 0
    %6659 = vmatpush1.bf16.msra.mxu0 0
    %6660 = vmatprep.subr.bf16.mxu0 0
    %6661 = vmatpush1.bf16.msra.mxu0 0
    %6662 = vmatprep.subr.bf16.mxu0 0
    %6663 = vmatpush1.bf16.msra.mxu0 0
    %6664 = vmatprep.subr.bf16.mxu0 0
    %6665 = vmatpush1.bf16.msra.mxu0 0
    %6666 = vmatprep.subr.bf16.mxu0 0
    %6667 = vmatpush1.bf16.msra.mxu0 0
    %6668 = vmatprep.subr.bf16.mxu0 0
    %6669 = vmatpush1.bf16.msra.mxu0 0
    %6670 = vmatprep.mubr.bf16.mxu0 0
    %6671 = vmatmul.mubr.bf16.gmra.mrb[0].mxu0 %v6627
    %v6672 = vpop.f32.mrb[0].mxu0
    %v6673 = vadd.f32 0.0, %v6672
    %v6674 = vpop.f32.mrb[0].mxu0
    %v6675 = vpop.f32.mrb[0].mxu0
    %v6676 = vadd.f32 0.0, %v6675
    %v6677 = vpop.f32.mrb[0].mxu0
    %6678 = vmatprep.mubr.bf16.mxu0 0
    %6679 = vmatmul.mubr.bf16.gmra.mrb[0].mxu0 %v6630
    %v6680 = vpop.f32.mrb[0].mxu0
    %v6681 = vadd.f32 0.0, %v6680
    %v6682 = vpop.f32.mrb[0].mxu0
    %v6683 = vpop.f32.mrb[0].mxu0
    %v6684 = vadd.f32 0.0, %v6683
    %v6685 = vpop.f32.mrb[0].mxu0
    %6686 = vmatprep.mubr.bf16.mxu0 0
    %6687 = vmatmul.mubr.bf16.gmra.mrb[0].mxu0 %v6633
    %v6688 = vpop.f32.mrb[0].mxu0
    %v6689 = vadd.f32 0.0, %v6688
    %v6690 = vpop.f32.mrb[0].mxu0
    %v6691 = vpop.f32.mrb[0].mxu0
    %v6692 = vadd.f32 0.0, %v6691
    %v6693 = vpop.f32.mrb[0].mxu0
    %6694 = vmatprep.mubr.bf16.mxu0 0
    %6695 = vmatmul.mubr.bf16.gmra.mrb[0].mxu0 %v6636
    %v6696 = vpop.f32.mrb[0].mxu0
    %v6697 = vadd.f32 0.0, %v6696
    %v6698 = vpop.f32.mrb[0].mxu0
    %v6699 = vpop.f32.mrb[0].mxu0
    %v6700 = vadd.f32 0.0, %v6699
    %v6701 = vpop.f32.mrb[0].mxu0
    %6702 = vdwg.mxu0
    %v6703 = vadd.f32 %v6606, %v6673
    %v6704 = vadd.f32 %v6607, %v6676
    %v6705 = vadd.f32 %v6608, %v6681
    %v6706 = vadd.f32 %v6609, %v6684
    %v6707 = vadd.f32 %v6610, %v6689
    %v6708 = vadd.f32 %v6611, %v6692
    %v6709 = vadd.f32 %v6612, %v6697
    %v6710 = vadd.f32 %v6613, %v6700
    %v6711 = vld [vmem:[%s5038 + $0x20] sm:$0x7f]
    %v6712 = vsel %vm35, %v6381, 0
    %v6714 = vsel %vm35, %v6382, 0
    %v6716 = vsel %vm35, %v6383, 0
    %v6719 = vsel %vm35, %v6711, 0
    %6721 = vmatprep.subr.bf16.mxu0 0
    %6722 = vmatpush1.bf16.msra.mxu0 %v5779
    %6723 = vmatprep.subr.bf16.mxu0 0
    %6724 = vmatpush1.bf16.msra.mxu0 %v5780
    %6725 = vmatprep.subr.bf16.mxu0 0
    %6726 = vmatpush1.bf16.msra.mxu0 0
    %6727 = vmatprep.subr.bf16.mxu0 0
    %6728 = vmatpush1.bf16.msra.mxu0 0
    %6729 = vmatprep.subr.bf16.mxu0 0
    %6730 = vmatpush1.bf16.msra.mxu0 0
    %6731 = vmatprep.subr.bf16.mxu0 0
    %6732 = vmatpush1.bf16.msra.mxu0 0
    %6733 = vmatprep.subr.bf16.mxu0 0
    %6734 = vmatpush1.bf16.msra.mxu0 0
    %6735 = vmatprep.subr.bf16.mxu0 0
    %6736 = vmatpush1.bf16.msra.mxu0 0
    %6737 = vmatprep.subr.bf16.mxu0 0
    %6738 = vmatpush1.bf16.msra.mxu0 0
    %6739 = vmatprep.subr.bf16.mxu0 0
    %6740 = vmatpush1.bf16.msra.mxu0 0
    %6741 = vmatprep.subr.bf16.mxu0 0
    %6742 = vmatpush1.bf16.msra.mxu0 0
    %6743 = vmatprep.subr.bf16.mxu0 0
    %6744 = vmatpush1.bf16.msra.mxu0 0
    %6745 = vmatprep.subr.bf16.mxu0 0
    %6746 = vmatpush1.bf16.msra.mxu0 0
    %6747 = vmatprep.subr.bf16.mxu0 0
    %6748 = vmatpush1.bf16.msra.mxu0 0
    %6749 = vmatprep.subr.bf16.mxu0 0
    %6750 = vmatpush1.bf16.msra.mxu0 0
    %6751 = vmatprep.subr.bf16.mxu0 0
    %6752 = vmatpush1.bf16.msra.mxu0 0
    %6753 = vmatprep.mubr.bf16.mxu0 0
    %6754 = vmatmul.mubr.bf16.gmra.mrb[0].mxu0 %v6712
    %v6755 = vpop.f32.mrb[0].mxu0
    %v6756 = vadd.f32 0.0, %v6755
    %v6757 = vpop.f32.mrb[0].mxu0
    %v6758 = vpop.f32.mrb[0].mxu0
    %v6759 = vadd.f32 0.0, %v6758
    %v6760 = vpop.f32.mrb[0].mxu0
    %6761 = vmatprep.mubr.bf16.mxu0 0
    %6762 = vmatmul.mubr.bf16.gmra.mrb[0].mxu0 %v6714
    %v6763 = vpop.f32.mrb[0].mxu0
    %v6764 = vadd.f32 0.0, %v6763
    %v6765 = vpop.f32.mrb[0].mxu0
    %v6766 = vpop.f32.mrb[0].mxu0
    %v6767 = vadd.f32 0.0, %v6766
    %v6768 = vpop.f32.mrb[0].mxu0
    %6769 = vmatprep.mubr.bf16.mxu0 0
    %6770 = vmatmul.mubr.bf16.gmra.mrb[0].mxu0 %v6716
    %v6771 = vpop.f32.mrb[0].mxu0
    %v6772 = vadd.f32 0.0, %v6771
    %v6773 = vpop.f32.mrb[0].mxu0
    %v6774 = vpop.f32.mrb[0].mxu0
    %v6775 = vadd.f32 0.0, %v6774
    %v6776 = vpop.f32.mrb[0].mxu0
    %6777 = vmatprep.mubr.bf16.mxu0 0
    %6778 = vmatmul.mubr.bf16.gmra.mrb[0].mxu0 %v6719
    %v6779 = vpop.f32.mrb[0].mxu0
    %v6780 = vadd.f32 0.0, %v6779
    %v6781 = vpop.f32.mrb[0].mxu0
    %v6782 = vpop.f32.mrb[0].mxu0
    %v6783 = vadd.f32 0.0, %v6782
    %v6784 = vpop.f32.mrb[0].mxu0
    %6785 = vdwg.mxu0
    %v6786 = vadd.f32 %v6703, %v6756
    %v6787 = vadd.f32 %v6704, %v6759
    %v6788 = vadd.f32 %v6705, %v6764
    %v6789 = vadd.f32 %v6706, %v6767
    %v6790 = vadd.f32 %v6707, %v6772
    %v6791 = vadd.f32 %v6708, %v6775
    %v6792 = vadd.f32 %v6709, %v6780
    %v6793 = vadd.f32 %v6710, %v6783
    %v6794 = vld [vmem:[%s5038 + $0x20] sm:$0xff]
    %v6795 = vrot.slane %v6497, 1
    %v6796 = vor.u32 %v6494, %v6795
    %v6797 = vrot.slane %v6506, 1
    %v6798 = vsel %vm102, %v6796, %v6797
    %v6799 = vor.u32 %v6503, %v6797
    %v6800 = vrot.slane %v6515, 1
    %v6801 = vsel %vm102, %v6799, %v6800
    %v6802 = vor.u32 %v6512, %v6800
    %v6804 = vshll.u32 %v6794, 16
    %v6806 = vrot.slane %v6804, 1
    %v6807 = vsel %vm102, %v6802, %v6806
    %v6808 = vshrl.u32 %v6794, 16
    %v6810 = vor.u32 %v6808, %v6806
    %v6812 = vsel %vm35, %v6798, 0
    %v6815 = vsel %vm35, %v6801, 0
    %v6818 = vsel %vm35, %v6807, 0
    %v6821 = vsel %vm35, %v6810, 0
    %6823 = vmatprep.subr.bf16.mxu0 0
    %6824 = vmatpush1.bf16.msra.mxu0 %v5895
    %6825 = vmatprep.subr.bf16.mxu0 0
    %6826 = vmatpush1.bf16.msra.mxu0 %v5896
    %6827 = vmatprep.subr.bf16.mxu0 0
    %6828 = vmatpush1.bf16.msra.mxu0 0
    %6829 = vmatprep.subr.bf16.mxu0 0
    %6830 = vmatpush1.bf16.msra.mxu0 0
    %6831 = vmatprep.subr.bf16.mxu0 0
    %6832 = vmatpush1.bf16.msra.mxu0 0
    %6833 = vmatprep.subr.bf16.mxu0 0
    %6834 = vmatpush1.bf16.msra.mxu0 0
    %6835 = vmatprep.subr.bf16.mxu0 0
    %6836 = vmatpush1.bf16.msra.mxu0 0
    %6837 = vmatprep.subr.bf16.mxu0 0
    %6838 = vmatpush1.bf16.msra.mxu0 0
    %6839 = vmatprep.subr.bf16.mxu0 0
    %6840 = vmatpush1.bf16.msra.mxu0 0
    %6841 = vmatprep.subr.bf16.mxu0 0
    %6842 = vmatpush1.bf16.msra.mxu0 0
    %6843 = vmatprep.subr.bf16.mxu0 0
    %6844 = vmatpush1.bf16.msra.mxu0 0
    %6845 = vmatprep.subr.bf16.mxu0 0
    %6846 = vmatpush1.bf16.msra.mxu0 0
    %6847 = vmatprep.subr.bf16.mxu0 0
    %6848 = vmatpush1.bf16.msra.mxu0 0
    %6849 = vmatprep.subr.bf16.mxu0 0
    %6850 = vmatpush1.bf16.msra.mxu0 0
    %6851 = vmatprep.subr.bf16.mxu0 0
    %6852 = vmatpush1.bf16.msra.mxu0 0
    %6853 = vmatprep.subr.bf16.mxu0 0
    %6854 = vmatpush1.bf16.msra.mxu0 0
    %6855 = vmatprep.mubr.bf16.mxu0 0
    %6856 = vmatmul.mubr.bf16.gmra.mrb[0].mxu0 %v6812
    %v6857 = vpop.f32.mrb[0].mxu0
    %v6858 = vadd.f32 0.0, %v6857
    %v6859 = vpop.f32.mrb[0].mxu0
    %v6860 = vpop.f32.mrb[0].mxu0
    %v6861 = vadd.f32 0.0, %v6860
    %v6862 = vpop.f32.mrb[0].mxu0
    %6863 = vmatprep.mubr.bf16.mxu0 0
    %6864 = vmatmul.mubr.bf16.gmra.mrb[0].mxu0 %v6815
    %v6865 = vpop.f32.mrb[0].mxu0
    %v6866 = vadd.f32 0.0, %v6865
    %v6867 = vpop.f32.mrb[0].mxu0
    %v6868 = vpop.f32.mrb[0].mxu0
    %v6869 = vadd.f32 0.0, %v6868
    %v6870 = vpop.f32.mrb[0].mxu0
    %6871 = vmatprep.mubr.bf16.mxu0 0
    %6872 = vmatmul.mubr.bf16.gmra.mrb[0].mxu0 %v6818
    %v6873 = vpop.f32.mrb[0].mxu0
    %v6874 = vadd.f32 0.0, %v6873
    %v6875 = vpop.f32.mrb[0].mxu0
    %v6876 = vpop.f32.mrb[0].mxu0
    %v6877 = vadd.f32 0.0, %v6876
    %v6878 = vpop.f32.mrb[0].mxu0
    %6879 = vmatprep.mubr.bf16.mxu0 0
    %6880 = vmatmul.mubr.bf16.gmra.mrb[0].mxu0 %v6821
    %v6881 = vpop.f32.mrb[0].mxu0
    %v6882 = vadd.f32 0.0, %v6881
    %v6883 = vpop.f32.mrb[0].mxu0
    %v6884 = vpop.f32.mrb[0].mxu0
    %v6885 = vadd.f32 0.0, %v6884
    %v6886 = vpop.f32.mrb[0].mxu0
    %6887 = vdwg.mxu0
    %v6888 = vadd.f32 %v6786, %v6858
    %v6889 = vadd.f32 %v6787, %v6861
    %v6890 = vadd.f32 %v6788, %v6866
    %v6891 = vadd.f32 %v6789, %v6869
    %v6892 = vadd.f32 %v6790, %v6874
    %v6893 = vadd.f32 %v6791, %v6877
    %v6894 = vadd.f32 %v6792, %v6882
    %v6895 = vadd.f32 %v6793, %v6885
    %v6896 = vld [vmem:[%s5038 + $0x8] sm:$0xfe]
    %v6899 = vrot.slane %v6896, 1
    %v6900 = vrot.slane %v6382, 1
    %v6901 = vsel %vm321, %v6899, %v6900
    %v6902 = vrot.slane %v6383, 1
    %v6903 = vsel %vm321, %v6900, %v6902
    %v6904 = vrot.slane %v6794, 1
    %v6905 = vsel %vm321, %v6902, %v6904
    %v6907 = vsel %vm35, %v6901, 0
    %v6910 = vsel %vm35, %v6903, 0
    %v6913 = vsel %vm35, %v6905, 0
    %v6916 = vsel %vm35, %v6904, 0
    %6918 = vmatprep.subr.bf16.mxu0 0
    %6919 = vmatpush1.bf16.msra.mxu0 %v6007
    %6920 = vmatprep.subr.bf16.mxu0 0
    %6921 = vmatpush1.bf16.msra.mxu0 %v6008
    %6922 = vmatprep.subr.bf16.mxu0 0
    %6923 = vmatpush1.bf16.msra.mxu0 0
    %6924 = vmatprep.subr.bf16.mxu0 0
    %6925 = vmatpush1.bf16.msra.mxu0 0
    %6926 = vmatprep.subr.bf16.mxu0 0
    %6927 = vmatpush1.bf16.msra.mxu0 0
    %6928 = vmatprep.subr.bf16.mxu0 0
    %6929 = vmatpush1.bf16.msra.mxu0 0
    %6930 = vmatprep.subr.bf16.mxu0 0
    %6931 = vmatpush1.bf16.msra.mxu0 0
    %6932 = vmatprep.subr.bf16.mxu0 0
    %6933 = vmatpush1.bf16.msra.mxu0 0
    %6934 = vmatprep.subr.bf16.mxu0 0
    %6935 = vmatpush1.bf16.msra.mxu0 0
    %6936 = vmatprep.subr.bf16.mxu0 0
    %6937 = vmatpush1.bf16.msra.mxu0 0
    %6938 = vmatprep.subr.bf16.mxu0 0
    %6939 = vmatpush1.bf16.msra.mxu0 0
    %6940 = vmatprep.subr.bf16.mxu0 0
    %6941 = vmatpush1.bf16.msra.mxu0 0
    %6942 = vmatprep.subr.bf16.mxu0 0
    %6943 = vmatpush1.bf16.msra.mxu0 0
    %6944 = vmatprep.subr.bf16.mxu0 0
    %6945 = vmatpush1.bf16.msra.mxu0 0
    %6946 = vmatprep.subr.bf16.mxu0 0
    %6947 = vmatpush1.bf16.msra.mxu0 0
    %6948 = vmatprep.subr.bf16.mxu0 0
    %6949 = vmatpush1.bf16.msra.mxu0 0
    %6950 = vmatprep.mubr.bf16.mxu0 0
    %6951 = vmatmul.mubr.bf16.gmra.mrb[0].mxu0 %v6907
    %v6952 = vpop.f32.mrb[0].mxu0
    %v6953 = vadd.f32 0.0, %v6952
    %v6954 = vpop.f32.mrb[0].mxu0
    %v6955 = vpop.f32.mrb[0].mxu0
    %v6956 = vadd.f32 0.0, %v6955
    %v6957 = vpop.f32.mrb[0].mxu0
    %6958 = vmatprep.mubr.bf16.mxu0 0
    %6959 = vmatmul.mubr.bf16.gmra.mrb[0].mxu0 %v6910
    %v6960 = vpop.f32.mrb[0].mxu0
    %v6961 = vadd.f32 0.0, %v6960
    %v6962 = vpop.f32.mrb[0].mxu0
    %v6963 = vpop.f32.mrb[0].mxu0
    %v6964 = vadd.f32 0.0, %v6963
    %v6965 = vpop.f32.mrb[0].mxu0
    %6966 = vmatprep.mubr.bf16.mxu0 0
    %6967 = vmatmul.mubr.bf16.gmra.mrb[0].mxu0 %v6913
    %v6968 = vpop.f32.mrb[0].mxu0
    %v6969 = vadd.f32 0.0, %v6968
    %v6970 = vpop.f32.mrb[0].mxu0
    %v6971 = vpop.f32.mrb[0].mxu0
    %v6972 = vadd.f32 0.0, %v6971
    %v6973 = vpop.f32.mrb[0].mxu0
    %6974 = vmatprep.mubr.bf16.mxu0 0
    %6975 = vmatmul.mubr.bf16.gmra.mrb[0].mxu0 %v6916
    %v6976 = vpop.f32.mrb[0].mxu0
    %v6977 = vadd.f32 0.0, %v6976
    %v6978 = vpop.f32.mrb[0].mxu0
    %v6979 = vpop.f32.mrb[0].mxu0
    %v6980 = vadd.f32 0.0, %v6979
    %v6981 = vpop.f32.mrb[0].mxu0
    %6982 = vdwg.mxu0
    %v6983 = vadd.f32 %v6888, %v6953
    %v6984 = vadd.f32 %v6889, %v6956
    %v6985 = vadd.f32 %v6890, %v6961
    %v6986 = vadd.f32 %v6891, %v6964
    %v6987 = vadd.f32 %v6892, %v6969
    %v6988 = vadd.f32 %v6893, %v6972
    %v6989 = vadd.f32 %v6894, %v6977
    %v6990 = vadd.f32 %v6895, %v6980
    %v6991 = vmul.f32 %v6088, %v2146
    %v6992 = vmul.f32 %v6089, %v2151
    %v6993 = vmul.f32 %v6090, %v2156
    %v6994 = vmul.f32 %v6091, %v2161
    %v6995 = vmul.f32 %v6092, %v2166
    %v6996 = vmul.f32 %v6093, %v2171
    %v6997 = vmul.f32 %v6094, %v2176
    %v6998 = vmul.f32 %v6095, %v2181
    %v6999 = vsel %vm35, %v6991, 0.0
    %v7000 = vsel %vm35, %v6992, 0.0
    %v7001 = vadd.f32 %v6999, %v7000
    %v7002 = vsel %vm35, %v6993, 0.0
    %v7003 = vadd.f32 %v7001, %v7002
    %v7004 = vsel %vm35, %v6994, 0.0
    %v7005 = vadd.f32 %v7003, %v7004
    %v7006 = vsel %vm35, %v6995, 0.0
    %v7007 = vadd.f32 %v7005, %v7006
    %v7008 = vsel %vm35, %v6996, 0.0
    %v7009 = vadd.f32 %v7007, %v7008
    %v7010 = vsel %vm35, %v6997, 0.0
    %v7011 = vadd.f32 %v7009, %v7010
    %v7012 = vsel %vm2204, %v6998, 0.0
    %v7013 = vadd.f32 %v7011, %v7012
    %v7014 = vrot.slane %v7013, 4
    %v7015 = vadd.f32 %v7013, %v7014
    %v7016 = vrot.slane %v7015, 2
    %v7017 = vadd.f32 %v7015, %v7016
    %v7018 = vrot.slane %v7017, 1
    %v7019 = vadd.f32 %v7017, %v7018
    %v7020 = vmul.f32 %v6983, %v2146
    %v7021 = vmul.f32 %v6984, %v2151
    %v7022 = vmul.f32 %v6985, %v2156
    %v7023 = vmul.f32 %v6986, %v2161
    %v7024 = vmul.f32 %v6987, %v2166
    %v7025 = vmul.f32 %v6988, %v2171
    %v7026 = vmul.f32 %v6989, %v2176
    %v7027 = vmul.f32 %v6990, %v2181
    %v7028 = vsel %vm35, %v7020, 0.0
    %v7029 = vsel %vm35, %v7021, 0.0
    %v7030 = vadd.f32 %v7028, %v7029
    %v7031 = vsel %vm35, %v7022, 0.0
    %v7032 = vadd.f32 %v7030, %v7031
    %v7033 = vsel %vm35, %v7023, 0.0
    %v7034 = vadd.f32 %v7032, %v7033
    %v7035 = vsel %vm35, %v7024, 0.0
    %v7036 = vadd.f32 %v7034, %v7035
    %v7037 = vsel %vm35, %v7025, 0.0
    %v7038 = vadd.f32 %v7036, %v7037
    %v7039 = vsel %vm35, %v7026, 0.0
    %v7040 = vadd.f32 %v7038, %v7039
    %v7041 = vsel %vm2204, %v7027, 0.0
    %v7042 = vadd.f32 %v7040, %v7041
    %v7043 = vrot.slane %v7042, 4
    %v7044 = vadd.f32 %v7042, %v7043
    %v7045 = vrot.slane %v7044, 2
    %v7046 = vadd.f32 %v7044, %v7045
    %v7047 = vrot.slane %v7046, 1
    %v7048 = vadd.f32 %v7046, %v7047
    %v7049 = vadd.f32 %v7019, %v7048
    %v7050 = vmul.f32 %v7049, 0.010416667
    %v7051 = vsub.f32 %v6088, %v7050
    %v7052 = vsub.f32 %v6089, %v7050
    %v7053 = vsub.f32 %v6090, %v7050
    %v7054 = vsub.f32 %v6091, %v7050
    %v7055 = vsub.f32 %v6092, %v7050
    %v7056 = vsub.f32 %v6093, %v7050
    %v7057 = vsub.f32 %v6094, %v7050
    %v7058 = vsub.f32 %v6095, %v7050
    %v7059 = vmul.f32 %v7051, %v7051
    %v7060 = vmul.f32 %v7052, %v7052
    %v7061 = vmul.f32 %v7053, %v7053
    %v7062 = vmul.f32 %v7054, %v7054
    %v7063 = vmul.f32 %v7055, %v7055
    %v7064 = vmul.f32 %v7056, %v7056
    %v7065 = vmul.f32 %v7057, %v7057
    %v7066 = vmul.f32 %v7058, %v7058
    %v7067 = vmul.f32 %v7059, %v2146
    %v7068 = vmul.f32 %v7060, %v2151
    %v7069 = vmul.f32 %v7061, %v2156
    %v7070 = vmul.f32 %v7062, %v2161
    %v7071 = vmul.f32 %v7063, %v2166
    %v7072 = vmul.f32 %v7064, %v2171
    %v7073 = vmul.f32 %v7065, %v2176
    %v7074 = vmul.f32 %v7066, %v2181
    %v7075 = vsel %vm35, %v7067, 0.0
    %v7076 = vsel %vm35, %v7068, 0.0
    %v7077 = vadd.f32 %v7075, %v7076
    %v7078 = vsel %vm35, %v7069, 0.0
    %v7079 = vadd.f32 %v7077, %v7078
    %v7080 = vsel %vm35, %v7070, 0.0
    %v7081 = vadd.f32 %v7079, %v7080
    %v7082 = vsel %vm35, %v7071, 0.0
    %v7083 = vadd.f32 %v7081, %v7082
    %v7084 = vsel %vm35, %v7072, 0.0
    %v7085 = vadd.f32 %v7083, %v7084
    %v7086 = vsel %vm35, %v7073, 0.0
    %v7087 = vadd.f32 %v7085, %v7086
    %v7088 = vsel %vm2204, %v7074, 0.0
    %v7089 = vadd.f32 %v7087, %v7088
    %v7090 = vrot.slane %v7089, 4
    %v7091 = vadd.f32 %v7089, %v7090
    %v7092 = vrot.slane %v7091, 2
    %v7093 = vadd.f32 %v7091, %v7092
    %v7094 = vrot.slane %v7093, 1
    %v7095 = vadd.f32 %v7093, %v7094
    %v7096 = vsub.f32 %v6983, %v7050
    %v7097 = vsub.f32 %v6984, %v7050
    %v7098 = vsub.f32 %v6985, %v7050
    %v7099 = vsub.f32 %v6986, %v7050
    %v7100 = vsub.f32 %v6987, %v7050
    %v7101 = vsub.f32 %v6988, %v7050
    %v7102 = vsub.f32 %v6989, %v7050
    %v7103 = vsub.f32 %v6990, %v7050
    %v7104 = vmul.f32 %v7096, %v7096
    %v7105 = vmul.f32 %v7097, %v7097
    %v7106 = vmul.f32 %v7098, %v7098
    %v7107 = vmul.f32 %v7099, %v7099
    %v7108 = vmul.f32 %v7100, %v7100
    %v7109 = vmul.f32 %v7101, %v7101
    %v7110 = vmul.f32 %v7102, %v7102
    %v7111 = vmul.f32 %v7103, %v7103
    %v7112 = vmul.f32 %v7104, %v2146
    %v7113 = vmul.f32 %v7105, %v2151
    %v7114 = vmul.f32 %v7106, %v2156
    %v7115 = vmul.f32 %v7107, %v2161
    %v7116 = vmul.f32 %v7108, %v2166
    %v7117 = vmul.f32 %v7109, %v2171
    %v7118 = vmul.f32 %v7110, %v2176
    %v7119 = vmul.f32 %v7111, %v2181
    %v7120 = vsel %vm35, %v7112, 0.0
    %v7121 = vsel %vm35, %v7113, 0.0
    %v7122 = vadd.f32 %v7120, %v7121
    %v7123 = vsel %vm35, %v7114, 0.0
    %v7124 = vadd.f32 %v7122, %v7123
    %v7125 = vsel %vm35, %v7115, 0.0
    %v7126 = vadd.f32 %v7124, %v7125
    %v7127 = vsel %vm35, %v7116, 0.0
    %v7128 = vadd.f32 %v7126, %v7127
    %v7129 = vsel %vm35, %v7117, 0.0
    %v7130 = vadd.f32 %v7128, %v7129
    %v7131 = vsel %vm35, %v7118, 0.0
    %v7132 = vadd.f32 %v7130, %v7131
    %v7133 = vsel %vm2204, %v7119, 0.0
    %v7134 = vadd.f32 %v7132, %v7133
    %v7135 = vrot.slane %v7134, 4
    %v7136 = vadd.f32 %v7134, %v7135
    %v7137 = vrot.slane %v7136, 2
    %v7138 = vadd.f32 %v7136, %v7137
    %v7139 = vrot.slane %v7138, 1
    %v7140 = vadd.f32 %v7138, %v7139
    %v7141 = vadd.f32 %v7095, %v7140
    %v7142 = vmul.f32 %v7141, 0.010416667
    %s7143 = scalar_lea.vmem %s2, 2
    %v7144 = vld [vmem:[%s7143] sm:$0x1]
    %v7145 = vadd.f32 %v7142, 1e-05
    %v7146 = vrsqrt.pop %v7145
    %v7147 = vmul.f32 %v7144, %v7146
    %s7148 = scalar_lea.vmem %s3, 2
    %v7149 = vld [vmem:[%s7148] sm:$0x1]
    %v7150 = vmul.f32 %v7050, %v7147
    %v7151 = vsub.f32 %v7149, %v7150
    %v7153 = vlaneseq
    %v7154 = vshrl.u32 %v7153, 7
    %v7155 = vsub.s32 0, %v7154
    %v7156 = vrot.slane %v7147, %v7155
    %v7158 = vmul.f32 %v6088, %v7156
    %v7159 = vmul.f32 %v6089, %v7156
    %v7160 = vmul.f32 %v6090, %v7156
    %v7161 = vmul.f32 %v6091, %v7156
    %v7162 = vmul.f32 %v6092, %v7156
    %v7163 = vmul.f32 %v6093, %v7156
    %v7164 = vmul.f32 %v6094, %v7156
    %v7165 = vmul.f32 %v6095, %v7156
    %v7167 = vlaneseq
    %v7168 = vshrl.u32 %v7167, 7
    %v7169 = vsub.s32 0, %v7168
    %v7170 = vrot.slane %v7151, %v7169
    %v7172 = vadd.f32 %v7158, %v7170
    %v7173 = vadd.f32 %v7159, %v7170
    %v7174 = vadd.f32 %v7160, %v7170
    %v7175 = vadd.f32 %v7161, %v7170
    %v7176 = vadd.f32 %v7162, %v7170
    %v7177 = vadd.f32 %v7163, %v7170
    %v7178 = vadd.f32 %v7164, %v7170
    %v7179 = vadd.f32 %v7165, %v7170
    %v7180 = vrot.slane %v5504, 4
    %v7181 = vsel %vm2986, %v5403, %v7180
    %v7186 = vunpack.c.l.bf16 %v5400
    %v7187 = vunpack.c.h.bf16 %v5400
    %v7188 = vunpack.c.l.bf16 %v5402
    %v7189 = vunpack.c.h.bf16 %v5402
    %v7190 = vunpack.c.l.bf16 %v5404
    %v7191 = vunpack.c.h.bf16 %v5404
    %v7192 = vunpack.c.l.bf16 %v7181
    %v7193 = vunpack.c.h.bf16 %v7181
    %v7202 = vrot.slane %v7186, 1
    %v7203 = vrot.slane %v7187, 1
    %v7204 = vsel %vm2387, %v7202, %v7203
    %v7205 = vrot.slane %v7188, 1
    %v7206 = vsel %vm2387, %v7203, %v7205
    %v7207 = vrot.slane %v7189, 1
    %v7208 = vsel %vm2387, %v7205, %v7207
    %v7209 = vrot.slane %v7190, 1
    %v7210 = vsel %vm2387, %v7207, %v7209
    %v7211 = vrot.slane %v7191, 1
    %v7212 = vsel %vm2387, %v7209, %v7211
    %v7213 = vrot.slane %v7192, 1
    %v7214 = vsel %vm2387, %v7211, %v7213
    %v7215 = vrot.slane %v7193, 1
    %v7216 = vsel %vm2387, %v7213, %v7215
    %v7225 = vadd.f32 %v7172, %v7204
    %v7226 = vadd.f32 %v7173, %v7206
    %v7227 = vadd.f32 %v7174, %v7208
    %v7228 = vadd.f32 %v7175, %v7210
    %v7229 = vadd.f32 %v7176, %v7212
    %v7230 = vadd.f32 %v7177, %v7214
    %v7231 = vadd.f32 %v7178, %v7216
    %v7232 = vadd.f32 %v7179, %v7215
    %v7233 = vmax.f32 %v7225, 0.0
    %v7234 = vmax.f32 %v7226, 0.0
    %v7235 = vmax.f32 %v7227, 0.0
    %v7236 = vmax.f32 %v7228, 0.0
    %v7237 = vmax.f32 %v7229, 0.0
    %v7238 = vmax.f32 %v7230, 0.0
    %v7239 = vmax.f32 %v7231, 0.0
    %v7240 = vmax.f32 %v7232, 0.0
    %v7241 = vmul.f32 %v7233, %v2146
    %v7242 = vmul.f32 %v7234, %v2151
    %v7243 = vmul.f32 %v7235, %v2156
    %v7244 = vmul.f32 %v7236, %v2161
    %v7245 = vmul.f32 %v7237, %v2166
    %v7246 = vmul.f32 %v7238, %v2171
    %v7247 = vmul.f32 %v7239, %v2176
    %v7248 = vmul.f32 %v7240, %v2181
    %v7249 = vpack.c.bf16 %v7242, %v7241
    %v7250 = vpack.c.bf16 %v7244, %v7243
    %v7251 = vpack.c.bf16 %v7246, %v7245
    %v7252 = vpack.c.bf16 %v7248, %v7247
    %v7257 = vunpack.c.l.b16 %v7249
    %v7258 = vunpack.c.h.b16 %v7249
    %v7259 = vunpack.c.l.b16 %v7250
    %v7260 = vunpack.c.h.b16 %v7250
    %v7261 = vunpack.c.l.b16 %v7251
    %v7262 = vunpack.c.h.b16 %v7251
    %v7263 = vunpack.c.l.b16 %v7252
    %v7264 = vunpack.c.h.b16 %v7252
    %v7265 = vpack.c.b16 %v7257, %v7257
    %v7266 = vpack.c.b16 %v7258, %v7258
    %v7267 = vpack.c.b16 %v7259, %v7259
    %v7268 = vpack.c.b16 %v7260, %v7260
    %v7269 = vpack.c.b16 %v7261, %v7261
    %v7270 = vpack.c.b16 %v7262, %v7262
    %v7271 = vpack.c.b16 %v7263, %v7263
    %v7272 = vpack.c.b16 %v7264, %v7264
    %vm7273 = vsmask.f32 256
    %vm7274 = vsmask.f32 4368
    %vm7275 = vmor %vm7273, %vm7274
    %v7277 = vshrl.u32 %v7265, 16
    %v7279 = vrot.slane %v7277, 7
    %v7280 = vshll.u32 %v7265, 16
    %v7282 = vor.u32 %v7279, %v7280
    %v7283 = vrot.slane %v7279, 4
    %v7285 = vshrl.u32 %v7266, 16
    %v7287 = vrot.slane %v7285, 7
    %v7288 = vshll.u32 %v7266, 16
    %v7290 = vor.u32 %v7287, %v7288
    %v7291 = vsel %vm7275, %v7283, %v7290
    %v7292 = vrot.slane %v7287, 4
    %v7294 = vshrl.u32 %v7267, 16
    %v7296 = vrot.slane %v7294, 7
    %v7297 = vshll.u32 %v7267, 16
    %v7299 = vor.u32 %v7296, %v7297
    %v7300 = vsel %vm7275, %v7292, %v7299
    %v7301 = vrot.slane %v7296, 4
    %v7303 = vshrl.u32 %v7268, 16
    %v7305 = vrot.slane %v7303, 7
    %v7306 = vshll.u32 %v7268, 16
    %v7308 = vor.u32 %v7305, %v7306
    %v7309 = vsel %vm7275, %v7301, %v7308
    %v7310 = vrot.slane %v7305, 4
    %v7312 = vshrl.u32 %v7269, 16
    %v7314 = vrot.slane %v7312, 7
    %v7315 = vshll.u32 %v7269, 16
    %v7317 = vor.u32 %v7314, %v7315
    %v7318 = vsel %vm7275, %v7310, %v7317
    %v7319 = vrot.slane %v7314, 4
    %v7321 = vshrl.u32 %v7270, 16
    %v7323 = vrot.slane %v7321, 7
    %v7324 = vshll.u32 %v7270, 16
    %v7326 = vor.u32 %v7323, %v7324
    %v7327 = vsel %vm7275, %v7319, %v7326
    %v7328 = vrot.slane %v7323, 4
    %v7330 = vshrl.u32 %v7271, 16
    %v7332 = vrot.slane %v7330, 7
    %v7333 = vshll.u32 %v7271, 16
    %v7335 = vor.u32 %v7332, %v7333
    %v7336 = vsel %vm7275, %v7328, %v7335
    %v7337 = vrot.slane %v7332, 4
    %v7339 = vshrl.u32 %v7272, 16
    %v7341 = vrot.slane %v7339, 7
    %v7342 = vshll.u32 %v7272, 16
    %v7344 = vor.u32 %v7341, %v7342
    %v7345 = vsel %vm7275, %v7337, %v7344
    %vm7354 = vsmask.f32 7938
    %vm7355 = vmand %vm2489, %vm7354
    %v7356 = vld [vmem:[%s5 + $0x4] sm:$0xf]
    %v7357 = vsel %vm7355, %v7282, %v7356
    %7358 = vst [vmem:[%s5 + $0x4] sm:$0xf] %v7357
    %vm7359 = vcmask 257024
    %7360 = vst.msk [vmem:[%s5 + $0x8] sm:$0xf] %vm7359, %v7291
    %7361 = vst.msk [vmem:[%s5 + $0xc] sm:$0xf] %vm7359, %v7300
    %7362 = vst.msk [vmem:[%s5 + $0x10] sm:$0xf] %vm7359, %v7309
    %7363 = vst.msk [vmem:[%s5 + $0x14] sm:$0xf] %vm7359, %v7318
    %7364 = vst.msk [vmem:[%s5 + $0x18] sm:$0xf] %vm7359, %v7327
    %7365 = vst.msk [vmem:[%s5 + $0x1c] sm:$0xf] %vm7359, %v7336
    %v7366 = vld [vmem:[%s5 + $0x20] sm:$0xf]
    %v7367 = vsel %vm2491, %v7345, %v7366
    %7368 = vst [vmem:[%s5 + $0x20] sm:$0xf] %v7367
    %v7369 = vmul.f32 %v6983, %v7156
    %v7370 = vmul.f32 %v6984, %v7156
    %v7371 = vmul.f32 %v6985, %v7156
    %v7372 = vmul.f32 %v6986, %v7156
    %v7373 = vmul.f32 %v6987, %v7156
    %v7374 = vmul.f32 %v6988, %v7156
    %v7375 = vmul.f32 %v6989, %v7156
    %v7376 = vmul.f32 %v6990, %v7156
    %v7377 = vadd.f32 %v7369, %v7170
    %v7378 = vadd.f32 %v7370, %v7170
    %v7379 = vadd.f32 %v7371, %v7170
    %v7380 = vadd.f32 %v7372, %v7170
    %v7381 = vadd.f32 %v7373, %v7170
    %v7382 = vadd.f32 %v7374, %v7170
    %v7383 = vadd.f32 %v7375, %v7170
    %v7384 = vadd.f32 %v7376, %v7170
    %v7385 = vld [vmem:[%s5038] sm:$0xf0]
    %v7386 = vld [vmem:[%s5038 + $0x8] sm:$0xff]
    %v7387 = vld [vmem:[%s5038 + $0x10] sm:$0xff]
    %v7388 = vld [vmem:[%s5038 + $0x18] sm:$0xff]
    %v7389 = vld [vmem:[%s5038 + $0x20] sm:$0xf]
    %v7395 = vrot.slane %v7385, 4
    %v7396 = vrot.slane %v7386, 4
    %v7397 = vsel %vm2986, %v7395, %v7396
    %v7398 = vrot.slane %v7387, 4
    %v7399 = vsel %vm2986, %v7396, %v7398
    %v7400 = vrot.slane %v7388, 4
    %v7401 = vsel %vm2986, %v7398, %v7400
    %v7402 = vrot.slane %v7389, 4
    %v7403 = vsel %vm2986, %v7400, %v7402
    %v7408 = vunpack.c.l.bf16 %v7397
    %v7409 = vunpack.c.h.bf16 %v7397
    %v7410 = vunpack.c.l.bf16 %v7399
    %v7411 = vunpack.c.h.bf16 %v7399
    %v7412 = vunpack.c.l.bf16 %v7401
    %v7413 = vunpack.c.h.bf16 %v7401
    %v7414 = vunpack.c.l.bf16 %v7403
    %v7415 = vunpack.c.h.bf16 %v7403
    %v7424 = vrot.slane %v7408, 1
    %v7425 = vrot.slane %v7409, 1
    %v7426 = vsel %vm2387, %v7424, %v7425
    %v7427 = vrot.slane %v7410, 1
    %v7428 = vsel %vm2387, %v7425, %v7427
    %v7429 = vrot.slane %v7411, 1
    %v7430 = vsel %vm2387, %v7427, %v7429
    %v7431 = vrot.slane %v7412, 1
    %v7432 = vsel %vm2387, %v7429, %v7431
    %v7433 = vrot.slane %v7413, 1
    %v7434 = vsel %vm2387, %v7431, %v7433
    %v7435 = vrot.slane %v7414, 1
    %v7436 = vsel %vm2387, %v7433, %v7435
    %v7437 = vrot.slane %v7415, 1
    %v7438 = vsel %vm2387, %v7435, %v7437
    %v7447 = vadd.f32 %v7377, %v7426
    %v7448 = vadd.f32 %v7378, %v7428
    %v7449 = vadd.f32 %v7379, %v7430
    %v7450 = vadd.f32 %v7380, %v7432
    %v7451 = vadd.f32 %v7381, %v7434
    %v7452 = vadd.f32 %v7382, %v7436
    %v7453 = vadd.f32 %v7383, %v7438
    %v7454 = vadd.f32 %v7384, %v7437
    %v7455 = vmax.f32 %v7447, 0.0
    %v7456 = vmax.f32 %v7448, 0.0
    %v7457 = vmax.f32 %v7449, 0.0
    %v7458 = vmax.f32 %v7450, 0.0
    %v7459 = vmax.f32 %v7451, 0.0
    %v7460 = vmax.f32 %v7452, 0.0
    %v7461 = vmax.f32 %v7453, 0.0
    %v7462 = vmax.f32 %v7454, 0.0
    %v7463 = vmul.f32 %v7455, %v2146
    %v7464 = vmul.f32 %v7456, %v2151
    %v7465 = vmul.f32 %v7457, %v2156
    %v7466 = vmul.f32 %v7458, %v2161
    %v7467 = vmul.f32 %v7459, %v2166
    %v7468 = vmul.f32 %v7460, %v2171
    %v7469 = vmul.f32 %v7461, %v2176
    %v7470 = vmul.f32 %v7462, %v2181
    %v7471 = vpack.c.bf16 %v7464, %v7463
    %v7472 = vpack.c.bf16 %v7466, %v7465
    %v7473 = vpack.c.bf16 %v7468, %v7467
    %v7474 = vpack.c.bf16 %v7470, %v7469
    %v7479 = vunpack.c.l.b16 %v7471
    %v7480 = vunpack.c.h.b16 %v7471
    %v7481 = vunpack.c.l.b16 %v7472
    %v7482 = vunpack.c.h.b16 %v7472
    %v7483 = vunpack.c.l.b16 %v7473
    %v7484 = vunpack.c.h.b16 %v7473
    %v7485 = vunpack.c.l.b16 %v7474
    %v7486 = vunpack.c.h.b16 %v7474
    %v7487 = vpack.c.b16 %v7479, %v7479
    %v7488 = vpack.c.b16 %v7480, %v7480
    %v7489 = vpack.c.b16 %v7481, %v7481
    %v7490 = vpack.c.b16 %v7482, %v7482
    %v7491 = vpack.c.b16 %v7483, %v7483
    %v7492 = vpack.c.b16 %v7484, %v7484
    %v7493 = vpack.c.b16 %v7485, %v7485
    %v7494 = vpack.c.b16 %v7486, %v7486
    %v7496 = vshrl.u32 %v7487, 16
    %v7498 = vrot.slane %v7496, 7
    %v7499 = vshll.u32 %v7487, 16
    %v7501 = vor.u32 %v7498, %v7499
    %v7502 = vrot.slane %v7498, 4
    %v7504 = vshrl.u32 %v7488, 16
    %v7506 = vrot.slane %v7504, 7
    %v7507 = vshll.u32 %v7488, 16
    %v7509 = vor.u32 %v7506, %v7507
    %v7510 = vsel %vm7275, %v7502, %v7509
    %v7511 = vrot.slane %v7506, 4
    %v7513 = vshrl.u32 %v7489, 16
    %v7515 = vrot.slane %v7513, 7
    %v7516 = vshll.u32 %v7489, 16
    %v7518 = vor.u32 %v7515, %v7516
    %v7519 = vsel %vm7275, %v7511, %v7518
    %v7520 = vrot.slane %v7515, 4
    %v7522 = vshrl.u32 %v7490, 16
    %v7524 = vrot.slane %v7522, 7
    %v7525 = vshll.u32 %v7490, 16
    %v7527 = vor.u32 %v7524, %v7525
    %v7528 = vsel %vm7275, %v7520, %v7527
    %v7529 = vrot.slane %v7524, 4
    %v7531 = vshrl.u32 %v7491, 16
    %v7533 = vrot.slane %v7531, 7
    %v7534 = vshll.u32 %v7491, 16
    %v7536 = vor.u32 %v7533, %v7534
    %v7537 = vsel %vm7275, %v7529, %v7536
    %v7538 = vrot.slane %v7533, 4
    %v7540 = vshrl.u32 %v7492, 16
    %v7542 = vrot.slane %v7540, 7
    %v7543 = vshll.u32 %v7492, 16
    %v7545 = vor.u32 %v7542, %v7543
    %v7546 = vsel %vm7275, %v7538, %v7545
    %v7547 = vrot.slane %v7542, 4
    %v7549 = vshrl.u32 %v7493, 16
    %v7551 = vrot.slane %v7549, 7
    %v7552 = vshll.u32 %v7493, 16
    %v7554 = vor.u32 %v7551, %v7552
    %v7555 = vsel %vm7275, %v7547, %v7554
    %v7556 = vrot.slane %v7551, 4
    %v7558 = vshrl.u32 %v7494, 16
    %v7560 = vrot.slane %v7558, 7
    %v7561 = vshll.u32 %v7494, 16
    %v7563 = vor.u32 %v7560, %v7561
    %v7564 = vsel %vm7275, %v7556, %v7563
    %s7573 = scalar_lea.vmem %s5, 40
    %v7574 = vld [vmem:[%s7573 + $0x4] sm:$0xf]
    %v7575 = vsel %vm7355, %v7501, %v7574
    %7576 = vst [vmem:[%s7573 + $0x4] sm:$0xf] %v7575
    %7577 = vst.msk [vmem:[%s7573 + $0x8] sm:$0xf] %vm7359, %v7510
    %7578 = vst.msk [vmem:[%s7573 + $0xc] sm:$0xf] %vm7359, %v7519
    %7579 = vst.msk [vmem:[%s7573 + $0x10] sm:$0xf] %vm7359, %v7528
    %7580 = vst.msk [vmem:[%s7573 + $0x14] sm:$0xf] %vm7359, %v7537
    %7581 = vst.msk [vmem:[%s7573 + $0x18] sm:$0xf] %vm7359, %v7546
    %7582 = vst.msk [vmem:[%s7573 + $0x1c] sm:$0xf] %vm7359, %v7555
    %v7583 = vld [vmem:[%s7573 + $0x20] sm:$0xf]
    %v7584 = vsel %vm2491, %v7564, %v7583
    %7585 = vst [vmem:[%s7573 + $0x20] sm:$0xf] %v7584
    // Predicated region
    $region26: #{tpu_custom_call.1} parent=1 // pred_check
      _
    $region27: #{tpu_custom_call.1} parent=1 // pred_check_branch
      %7587 = sbr.rel (0) target = $region29
    $region28: #{tpu_custom_call.1} parent=1 // pred_region
      _
    $region29: #{tpu_custom_call.1} parent=1 // pred_fallthru
      _
    // Predicated region
    $region30: #{tpu_custom_call.1} parent=1 // pred_check
      _
    $region31: #{tpu_custom_call.1} parent=1 // pred_check_branch
      %7589 = sbr.rel (0) target = $region33
    $region32: #{tpu_custom_call.1} parent=1 // pred_region
      _
    $region33: #{tpu_custom_call.1} parent=1 // pred_fallthru
      _
    %7590 = vsyncpa [#allocation5], 1

</llo_original>
